<compile_context>
chip_gen: v7x
topology: tpu7x:2x2x1
jax: 0.10.0
libtpu: 0.0.40
codegen_flags: <defaults>
</compile_context>

<pallas_src>
import jax
import jax.numpy as jnp
from jax.experimental import pallas as pl
from jax.experimental.pallas import tpu as pltpu


def _round_up(v, m):
    return (v + m - 1) // m * m


def _bsconvu_kernel(x_ref, wpw_ref, wdw_ref, b_ref, o_ref):
    # x_ref:   (BS, Hp, Wp, Cin_p)  bf16/f32, spatially pre-padded (1-halo + aligned right pad)
    # wpw_ref: (Cin_p, Cout_mm)     pointwise weight, lane-dense N (padded cols are zero)
    # wdw_ref: (9, Cout)            f32 depthwise taps, k = kh*3 + kw
    # b_ref:   (1, Cout)            f32 depthwise bias
    # o_ref:   (BS, H, W, Cout)     f32 output (exactly Cout channels -> no write amplification)
    BS, Hp, Wp, Cin = x_ref.shape
    _, H, W, Cout = o_ref.shape
    Cout_mm = wpw_ref.shape[1]
    del Cin, Cout_mm

    # ---- pointwise 1x1 conv: one lane-dense MXU matmul over the whole batch block ----
    # The spatial halo is zero and pw has no bias, so pw(0) == 0: y already carries the
    # zero halo the depthwise conv (padding=1) needs.  Padded Cin columns contribute 0.
    x2d = x_ref[...].reshape(BS * Hp * Wp, x_ref.shape[-1])          # layout-trivial (Wp % sub == 0)
    y = jnp.dot(x2d, wpw_ref[...], preferred_element_type=jnp.float32)
    y = y.reshape(BS, Hp, Wp, wpw_ref.shape[1])                      # f32

    wdw = wdw_ref[...]                                               # (9, Cout), read once
    bias = b_ref[...]                                                # (1, Cout)

    # ---- depthwise 3x3 conv, f32, streamed per output row ----
    for b in range(BS):                                              # BS is small & static (1 or 2)
        # Build the three kw-shifted views once per batch element and reuse them for
        # all 3 kh taps (kw=0 is aligned; kw=1,2 cost one sublane relayout each).
        # Also drops the padded MXU output lanes down to the real Cout.
        ysh = [y[b, :, kw:kw + W, :Cout] for kw in range(3)]         # each (Hp, W, Cout)
        for i in range(H):                                           # static row index
            acc = ysh[0][i] * wdw[0:1, :]                            # (W, Cout) register accumulator
            for k in range(1, 9):
                kh, kw = divmod(k, 3)
                acc = acc + ysh[kw][i + kh] * wdw[k:k + 1, :]
            o_ref[b, i] = (acc + bias).astype(o_ref.dtype)


def bsconvu_pallas(x_nchw, w_pw, w_dw, bias, *, mxu_dtype=jnp.bfloat16):
    """x_nchw: (N, Cin, H, W); w_pw: (Cout, Cin, 1, 1); w_dw: (Cout, 1, 3, 3); bias: (Cout,)"""
    N, Cin, H, W = x_nchw.shape
    Cout = w_pw.shape[0]
    KH, KW = w_dw.shape[2], w_dw.shape[3]
    assert (KH, KW) == (3, 3) and w_dw.shape[1] == 1

    LANE = 128
    sub = 8 * (4 // jnp.dtype(mxu_dtype).itemsize)   # sublane packing granularity (16 for bf16)
    cin_p = _round_up(Cin, sub)                      # K pad only to sublane granularity (no 128 pad)
    cout_mm = _round_up(Cout, LANE)                  # lane-dense N for the tiny pointwise weight only
    hp = H + 2                                       # 1-row halo top/bottom
    wp = _round_up(W + 2, sub)                       # 1-col halo left + aligned right pad

    # NCHW -> NHWC, spatial halo + small K pad, cast MXU operand to bf16 (one fused XLA pass).
    x = jnp.transpose(x_nchw, (0, 2, 3, 1))                               # (N, H, W, Cin)
    x = jnp.pad(x, ((0, 0), (1, 1), (1, wp - (W + 1)), (0, cin_p - Cin))).astype(mxu_dtype)

    wpw = jnp.transpose(w_pw[:, :, 0, 0], (1, 0))                         # (Cin, Cout)
    wpw = jnp.pad(wpw, ((0, cin_p - Cin), (0, cout_mm - Cout))).astype(mxu_dtype)
    wdw = jnp.transpose(w_dw[:, 0].reshape(Cout, KH * KW), (1, 0)).astype(jnp.float32)  # (9, Cout)
    b2d = bias.reshape(1, Cout).astype(jnp.float32)

    # Batch folding: 1 grid step on single-TC v5e/v6e (fold N into the matmul M dim);
    # N-way "parallel" batch grid on dual-TC v7x so both cores get work.
    try:
        kind = jax.devices()[0].device_kind.lower()
    except Exception:  # pragma: no cover
        kind = ""
    two_tc = ("v7" in kind) or ("7x" in kind)
    nb = N if (two_tc and N > 1) else 1
    bs = N // nb

    # Advisory cost with REAL channel counts.
    flops = (2 * Cin * Cout + 2 * KH * KW * Cout + Cout) * N * H * W
    bytes_accessed = (x.size * jnp.dtype(mxu_dtype).itemsize
                      + wpw.size * jnp.dtype(mxu_dtype).itemsize
                      + wdw.size * 4 + b2d.size * 4
                      + N * H * W * Cout * 4)
    cost = pl.CostEstimate(flops=flops, transcendentals=0, bytes_accessed=bytes_accessed)

    # TODO(synk): for large feature maps / Cout>=128, add an H-row-tile grid axis (1-row halo)
    # and a Cout-tile axis, sizing tiles against v7x's 64 MiB physical VMEM (not 128 MiB).
    out_nhwc = pl.pallas_call(
        _bsconvu_kernel,
        out_shape=jax.ShapeDtypeStruct((N, H, W, Cout), jnp.float32),
        grid_spec=pltpu.PrefetchScalarGridSpec(
            num_scalar_prefetch=0,
            grid=(nb,),
            in_specs=[
                pl.BlockSpec((bs, hp, wp, cin_p), lambda b: (b, 0, 0, 0)),
                pl.BlockSpec((cin_p, cout_mm), lambda b: (0, 0)),
                pl.BlockSpec((KH * KW, Cout), lambda b: (0, 0)),
                pl.BlockSpec((1, Cout), lambda b: (0, 0)),
            ],
            out_specs=pl.BlockSpec((bs, H, W, Cout), lambda b: (b, 0, 0, 0)),
        ),
        compiler_params=pltpu.CompilerParams(
            dimension_semantics=("parallel",),
            vmem_limit_bytes=32 * 1024 * 1024,
        ),
        cost_estimate=cost,
    )(x, wpw, wdw, b2d)

    # NHWC -> NCHW to match the PyTorch output convention (channels already exactly Cout).
    return jnp.transpose(out_nhwc, (0, 3, 1, 2))


def bsconvu_reference(x_nchw, w_pw, w_dw, bias):
    """Pure-JAX f32 reference using lax convolutions (NCHW, like PyTorch)."""
    y = jax.lax.conv_general_dilated(
        x_nchw, w_pw, window_strides=(1, 1), padding="VALID",
        dimension_numbers=("NCHW", "OIHW", "NCHW"))
    out = jax.lax.conv_general_dilated(
        y, w_dw, window_strides=(1, 1), padding=((1, 1), (1, 1)),
        dimension_numbers=("NCHW", "OIHW", "NCHW"),
        feature_group_count=w_dw.shape[0])
    return out + bias[None, :, None, None]


if __name__ == "__main__":
    key = jax.random.PRNGKey(0)
    k_x, k_pw, k_dw, k_b = jax.random.split(key, 4)

    N, Cin, H, W = 2, 4, 16, 16
    Cout = 8

    x = jax.random.normal(k_x, (N, Cin, H, W), dtype=jnp.float32)
    # Deterministic synthetic parameters (same shapes as the PyTorch module).
    w_pw = jax.random.normal(k_pw, (Cout, Cin, 1, 1), dtype=jnp.float32) * 0.1
    w_dw = jax.random.normal(k_dw, (Cout, 1, 3, 3), dtype=jnp.float32) * 0.1
    bias = jax.random.normal(k_b, (Cout,), dtype=jnp.float32) * 0.1

    out = jax.block_until_ready(bsconvu_pallas(x, w_pw, w_dw, bias))
    ref = jax.block_until_ready(bsconvu_reference(x, w_pw, w_dw, bias))

    assert out.shape == (N, Cout, H, W), out.shape
    # Pointwise MXU operands are bf16 (per perf review); compare at bf16-operand precision.
    assert jnp.allclose(out, ref, atol=2e-2, rtol=2e-2), float(jnp.max(jnp.abs(out - ref)))

    print("KERNEL_OK")
</pallas_src>

<mosaic_0001>
module attributes {stable_mosaic.version = 11 : i64} {
  func.func @_bsconvu_kernel(%arg0: i32, %arg1: memref<2x18x32x16xbf16, #tpu.memory_space<vmem>>, %arg2: memref<16x128xbf16, #tpu.memory_space<vmem>>, %arg3: memref<9x8xf32, #tpu.memory_space<vmem>>, %arg4: memref<1x8xf32, #tpu.memory_space<vmem>>, %arg5: memref<2x16x16x8xf32, #tpu.memory_space<vmem>>) attributes {dimension_semantics = [#tpu.dimension_semantics<parallel>], iteration_bounds = array<i64: 1>, scalar_prefetch = 0 : i64, scratch_operands = 0 : i64, tpu.core_type = #tpu.core_type<tc>, window_params = [{transform_indices = @transform_0, window_bounds = array<i64: 2, 18, 32, 16>}, {pipeline_mode = #tpu.pipeline_mode<synchronous>, transform_indices = @transform_1, window_bounds = array<i64: 16, 128>}, {pipeline_mode = #tpu.pipeline_mode<synchronous>, transform_indices = @transform_2, window_bounds = array<i64: 9, 8>}, {pipeline_mode = #tpu.pipeline_mode<synchronous>, transform_indices = @transform_3, window_bounds = array<i64: 1, 8>}, {transform_indices = @transform_4, window_bounds = array<i64: 2, 16, 16, 8>}]} {
    %c0 = arith.constant 0 : index
    %c0_0 = arith.constant 0 : index
    %c0_1 = arith.constant 0 : index
    %c0_2 = arith.constant 0 : index
    %0 = vector.load %arg1[%c0, %c0_0, %c0_1, %c0_2] : memref<2x18x32x16xbf16, #tpu.memory_space<vmem>>, vector<2x18x32x16xbf16>
    %1 = vector.shape_cast %0 : vector<2x18x32x16xbf16> to vector<1152x16xbf16>
    %c0_3 = arith.constant 0 : index
    %c0_4 = arith.constant 0 : index
    %2 = vector.load %arg2[%c0_3, %c0_4] : memref<16x128xbf16, #tpu.memory_space<vmem>>, vector<16x128xbf16>
    %cst = arith.constant dense<0.000000e+00> : vector<1152x128xf32>
    %3 = tpu.matmul %1, %2, %cst {dimension_numbers = #tpu.dot_dimension_numbers<[1], [0], [0], [1], [0, 0, 1, 1], [], []>} : vector<1152x16xbf16>, vector<16x128xbf16>, vector<1152x128xf32> -> vector<1152x128xf32>
    %4 = vector.shape_cast %3 : vector<1152x128xf32> to vector<2x18x32x128xf32>
    %c0_5 = arith.constant 0 : index
    %c0_6 = arith.constant 0 : index
    %5 = vector.load %arg3[%c0_5, %c0_6] : memref<9x8xf32, #tpu.memory_space<vmem>>, vector<9x8xf32>
    %c0_7 = arith.constant 0 : index
    %c0_8 = arith.constant 0 : index
    %6 = vector.load %arg4[%c0_7, %c0_8] : memref<1x8xf32, #tpu.memory_space<vmem>>, vector<1x8xf32>
    %7 = vector.extract_strided_slice %4 {offsets = [0, 0, 0, 0], sizes = [1, 18, 16, 8], strides = [1, 1, 1, 1]} : vector<2x18x32x128xf32> to vector<1x18x16x8xf32>
    %8 = vector.shape_cast %7 : vector<1x18x16x8xf32> to vector<18x16x8xf32>
    %9 = vector.extract_strided_slice %4 {offsets = [0, 0, 1, 0], sizes = [1, 18, 16, 8], strides = [1, 1, 1, 1]} : vector<2x18x32x128xf32> to vector<1x18x16x8xf32>
    %10 = vector.shape_cast %9 : vector<1x18x16x8xf32> to vector<18x16x8xf32>
    %11 = vector.extract_strided_slice %4 {offsets = [0, 0, 2, 0], sizes = [1, 18, 16, 8], strides = [1, 1, 1, 1]} : vector<2x18x32x128xf32> to vector<1x18x16x8xf32>
    %12 = vector.shape_cast %11 : vector<1x18x16x8xf32> to vector<18x16x8xf32>
    %13 = vector.extract_strided_slice %8 {offsets = [0, 0, 0], sizes = [1, 16, 8], strides = [1, 1, 1]} : vector<18x16x8xf32> to vector<1x16x8xf32>
    %14 = vector.shape_cast %13 : vector<1x16x8xf32> to vector<16x8xf32>
    %15 = vector.extract_strided_slice %5 {offsets = [0, 0], sizes = [1, 8], strides = [1, 1]} : vector<9x8xf32> to vector<1x8xf32>
    %16 = vector.broadcast %15 : vector<1x8xf32> to vector<16x8xf32>
    %17 = arith.mulf %14, %16 : vector<16x8xf32>
    %18 = vector.extract_strided_slice %10 {offsets = [0, 0, 0], sizes = [1, 16, 8], strides = [1, 1, 1]} : vector<18x16x8xf32> to vector<1x16x8xf32>
    %19 = vector.shape_cast %18 : vector<1x16x8xf32> to vector<16x8xf32>
    %20 = vector.extract_strided_slice %5 {offsets = [1, 0], sizes = [1, 8], strides = [1, 1]} : vector<9x8xf32> to vector<1x8xf32>
    %21 = vector.broadcast %20 : vector<1x8xf32> to vector<16x8xf32>
    %22 = arith.mulf %19, %21 : vector<16x8xf32>
    %23 = arith.addf %17, %22 : vector<16x8xf32>
    %24 = vector.extract_strided_slice %12 {offsets = [0, 0, 0], sizes = [1, 16, 8], strides = [1, 1, 1]} : vector<18x16x8xf32> to vector<1x16x8xf32>
    %25 = vector.shape_cast %24 : vector<1x16x8xf32> to vector<16x8xf32>
    %26 = vector.extract_strided_slice %5 {offsets = [2, 0], sizes = [1, 8], strides = [1, 1]} : vector<9x8xf32> to vector<1x8xf32>
    %27 = vector.broadcast %26 : vector<1x8xf32> to vector<16x8xf32>
    %28 = arith.mulf %25, %27 : vector<16x8xf32>
    %29 = arith.addf %23, %28 : vector<16x8xf32>
    %30 = vector.extract_strided_slice %8 {offsets = [1, 0, 0], sizes = [1, 16, 8], strides = [1, 1, 1]} : vector<18x16x8xf32> to vector<1x16x8xf32>
    %31 = vector.shape_cast %30 : vector<1x16x8xf32> to vector<16x8xf32>
    %32 = vector.extract_strided_slice %5 {offsets = [3, 0], sizes = [1, 8], strides = [1, 1]} : vector<9x8xf32> to vector<1x8xf32>
    %33 = vector.broadcast %32 : vector<1x8xf32> to vector<16x8xf32>
    %34 = arith.mulf %31, %33 : vector<16x8xf32>
    %35 = arith.addf %29, %34 : vector<16x8xf32>
    %36 = vector.extract_strided_slice %10 {offsets = [1, 0, 0], sizes = [1, 16, 8], strides = [1, 1, 1]} : vector<18x16x8xf32> to vector<1x16x8xf32>
    %37 = vector.shape_cast %36 : vector<1x16x8xf32> to vector<16x8xf32>
    %38 = vector.extract_strided_slice %5 {offsets = [4, 0], sizes = [1, 8], strides = [1, 1]} : vector<9x8xf32> to vector<1x8xf32>
    %39 = vector.broadcast %38 : vector<1x8xf32> to vector<16x8xf32>
    %40 = arith.mulf %37, %39 : vector<16x8xf32>
    %41 = arith.addf %35, %40 : vector<16x8xf32>
    %42 = vector.extract_strided_slice %12 {offsets = [1, 0, 0], sizes = [1, 16, 8], strides = [1, 1, 1]} : vector<18x16x8xf32> to vector<1x16x8xf32>
    %43 = vector.shape_cast %42 : vector<1x16x8xf32> to vector<16x8xf32>
    %44 = vector.extract_strided_slice %5 {offsets = [5, 0], sizes = [1, 8], strides = [1, 1]} : vector<9x8xf32> to vector<1x8xf32>
    %45 = vector.broadcast %44 : vector<1x8xf32> to vector<16x8xf32>
    %46 = arith.mulf %43, %45 : vector<16x8xf32>
    %47 = arith.addf %41, %46 : vector<16x8xf32>
    %48 = vector.extract_strided_slice %8 {offsets = [2, 0, 0], sizes = [1, 16, 8], strides = [1, 1, 1]} : vector<18x16x8xf32> to vector<1x16x8xf32>
    %49 = vector.shape_cast %48 : vector<1x16x8xf32> to vector<16x8xf32>
    %50 = vector.extract_strided_slice %5 {offsets = [6, 0], sizes = [1, 8], strides = [1, 1]} : vector<9x8xf32> to vector<1x8xf32>
    %51 = vector.broadcast %50 : vector<1x8xf32> to vector<16x8xf32>
    %52 = arith.mulf %49, %51 : vector<16x8xf32>
    %53 = arith.addf %47, %52 : vector<16x8xf32>
    %54 = vector.extract_strided_slice %10 {offsets = [2, 0, 0], sizes = [1, 16, 8], strides = [1, 1, 1]} : vector<18x16x8xf32> to vector<1x16x8xf32>
    %55 = vector.shape_cast %54 : vector<1x16x8xf32> to vector<16x8xf32>
    %56 = vector.extract_strided_slice %5 {offsets = [7, 0], sizes = [1, 8], strides = [1, 1]} : vector<9x8xf32> to vector<1x8xf32>
    %57 = vector.broadcast %56 : vector<1x8xf32> to vector<16x8xf32>
    %58 = arith.mulf %55, %57 : vector<16x8xf32>
    %59 = arith.addf %53, %58 : vector<16x8xf32>
    %60 = vector.extract_strided_slice %12 {offsets = [2, 0, 0], sizes = [1, 16, 8], strides = [1, 1, 1]} : vector<18x16x8xf32> to vector<1x16x8xf32>
    %61 = vector.shape_cast %60 : vector<1x16x8xf32> to vector<16x8xf32>
    %62 = vector.extract_strided_slice %5 {offsets = [8, 0], sizes = [1, 8], strides = [1, 1]} : vector<9x8xf32> to vector<1x8xf32>
    %63 = vector.broadcast %62 : vector<1x8xf32> to vector<16x8xf32>
    %64 = arith.mulf %61, %63 : vector<16x8xf32>
    %65 = arith.addf %59, %64 : vector<16x8xf32>
    %66 = vector.broadcast %6 : vector<1x8xf32> to vector<16x8xf32>
    %67 = arith.addf %65, %66 : vector<16x8xf32>
    %c0_9 = arith.constant 0 : index
    %c0_10 = arith.constant 0 : index
    %c0_11 = arith.constant 0 : index
    %c0_12 = arith.constant 0 : index
    %68 = vector.load %arg5[%c0_9, %c0_10, %c0_11, %c0_12] : memref<2x16x16x8xf32, #tpu.memory_space<vmem>>, vector<1x1x16x8xf32>
    %69 = vector.shape_cast %68 : vector<1x1x16x8xf32> to vector<16x8xf32>
    %70 = vector.shape_cast %67 : vector<16x8xf32> to vector<1x1x16x8xf32>
    tpu.vector_store %arg5[%c0_9, %c0_10, %c0_11, %c0_12], %70 {strides = array<i32>} : memref<2x16x16x8xf32, #tpu.memory_space<vmem>>, vector<1x1x16x8xf32>,
    %71 = vector.extract_strided_slice %8 {offsets = [1, 0, 0], sizes = [1, 16, 8], strides = [1, 1, 1]} : vector<18x16x8xf32> to vector<1x16x8xf32>
    %72 = vector.shape_cast %71 : vector<1x16x8xf32> to vector<16x8xf32>
    %73 = vector.extract_strided_slice %5 {offsets = [0, 0], sizes = [1, 8], strides = [1, 1]} : vector<9x8xf32> to vector<1x8xf32>
    %74 = vector.broadcast %73 : vector<1x8xf32> to vector<16x8xf32>
    %75 = arith.mulf %72, %74 : vector<16x8xf32>
    %76 = vector.extract_strided_slice %10 {offsets = [1, 0, 0], sizes = [1, 16, 8], strides = [1, 1, 1]} : vector<18x16x8xf32> to vector<1x16x8xf32>
    %77 = vector.shape_cast %76 : vector<1x16x8xf32> to vector<16x8xf32>
    %78 = vector.extract_strided_slice %5 {offsets = [1, 0], sizes = [1, 8], strides = [1, 1]} : vector<9x8xf32> to vector<1x8xf32>
    %79 = vector.broadcast %78 : vector<1x8xf32> to vector<16x8xf32>
    %80 = arith.mulf %77, %79 : vector<16x8xf32>
    %81 = arith.addf %75, %80 : vector<16x8xf32>
    %82 = vector.extract_strided_slice %12 {offsets = [1, 0, 0], sizes = [1, 16, 8], strides = [1, 1, 1]} : vector<18x16x8xf32> to vector<1x16x8xf32>
    %83 = vector.shape_cast %82 : vector<1x16x8xf32> to vector<16x8xf32>
    %84 = vector.extract_strided_slice %5 {offsets = [2, 0], sizes = [1, 8], strides = [1, 1]} : vector<9x8xf32> to vector<1x8xf32>
    %85 = vector.broadcast %84 : vector<1x8xf32> to vector<16x8xf32>
    %86 = arith.mulf %83, %85 : vector<16x8xf32>
    %87 = arith.addf %81, %86 : vector<16x8xf32>
    %88 = vector.extract_strided_slice %8 {offsets = [2, 0, 0], sizes = [1, 16, 8], strides = [1, 1, 1]} : vector<18x16x8xf32> to vector<1x16x8xf32>
    %89 = vector.shape_cast %88 : vector<1x16x8xf32> to vector<16x8xf32>
    %90 = vector.extract_strided_slice %5 {offsets = [3, 0], sizes = [1, 8], strides = [1, 1]} : vector<9x8xf32> to vector<1x8xf32>
    %91 = vector.broadcast %90 : vector<1x8xf32> to vector<16x8xf32>
    %92 = arith.mulf %89, %91 : vector<16x8xf32>
    %93 = arith.addf %87, %92 : vector<16x8xf32>
    %94 = vector.extract_strided_slice %10 {offsets = [2, 0, 0], sizes = [1, 16, 8], strides = [1, 1, 1]} : vector<18x16x8xf32> to vector<1x16x8xf32>
    %95 = vector.shape_cast %94 : vector<1x16x8xf32> to vector<16x8xf32>
    %96 = vector.extract_strided_slice %5 {offsets = [4, 0], sizes = [1, 8], strides = [1, 1]} : vector<9x8xf32> to vector<1x8xf32>
    %97 = vector.broadcast %96 : vector<1x8xf32> to vector<16x8xf32>
    %98 = arith.mulf %95, %97 : vector<16x8xf32>
    %99 = arith.addf %93, %98 : vector<16x8xf32>
    %100 = vector.extract_strided_slice %12 {offsets = [2, 0, 0], sizes = [1, 16, 8], strides = [1, 1, 1]} : vector<18x16x8xf32> to vector<1x16x8xf32>
    %101 = vector.shape_cast %100 : vector<1x16x8xf32> to vector<16x8xf32>
    %102 = vector.extract_strided_slice %5 {offsets = [5, 0], sizes = [1, 8], strides = [1, 1]} : vector<9x8xf32> to vector<1x8xf32>
    %103 = vector.broadcast %102 : vector<1x8xf32> to vector<16x8xf32>
    %104 = arith.mulf %101, %103 : vector<16x8xf32>
    %105 = arith.addf %99, %104 : vector<16x8xf32>
    %106 = vector.extract_strided_slice %8 {offsets = [3, 0, 0], sizes = [1, 16, 8], strides = [1, 1, 1]} : vector<18x16x8xf32> to vector<1x16x8xf32>
    %107 = vector.shape_cast %106 : vector<1x16x8xf32> to vector<16x8xf32>
    %108 = vector.extract_strided_slice %5 {offsets = [6, 0], sizes = [1, 8], strides = [1, 1]} : vector<9x8xf32> to vector<1x8xf32>
    %109 = vector.broadcast %108 : vector<1x8xf32> to vector<16x8xf32>
    %110 = arith.mulf %107, %109 : vector<16x8xf32>
    %111 = arith.addf %105, %110 : vector<16x8xf32>
    %112 = vector.extract_strided_slice %10 {offsets = [3, 0, 0], sizes = [1, 16, 8], strides = [1, 1, 1]} : vector<18x16x8xf32> to vector<1x16x8xf32>
    %113 = vector.shape_cast %112 : vector<1x16x8xf32> to vector<16x8xf32>
    %114 = vector.extract_strided_slice %5 {offsets = [7, 0], sizes = [1, 8], strides = [1, 1]} : vector<9x8xf32> to vector<1x8xf32>
    %115 = vector.broadcast %114 : vector<1x8xf32> to vector<16x8xf32>
    %116 = arith.mulf %113, %115 : vector<16x8xf32>
    %117 = arith.addf %111, %116 : vector<16x8xf32>
    %118 = vector.extract_strided_slice %12 {offsets = [3, 0, 0], sizes = [1, 16, 8], strides = [1, 1, 1]} : vector<18x16x8xf32> to vector<1x16x8xf32>
    %119 = vector.shape_cast %118 : vector<1x16x8xf32> to vector<16x8xf32>
    %120 = vector.extract_strided_slice %5 {offsets = [8, 0], sizes = [1, 8], strides = [1, 1]} : vector<9x8xf32> to vector<1x8xf32>
    %121 = vector.broadcast %120 : vector<1x8xf32> to vector<16x8xf32>
    %122 = arith.mulf %119, %121 : vector<16x8xf32>
    %123 = arith.addf %117, %122 : vector<16x8xf32>
    %124 = vector.broadcast %6 : vector<1x8xf32> to vector<16x8xf32>
    %125 = arith.addf %123, %124 : vector<16x8xf32>
    %c0_13 = arith.constant 0 : index
    %c1 = arith.constant 1 : index
    %c0_14 = arith.constant 0 : index
    %c0_15 = arith.constant 0 : index
    %126 = vector.load %arg5[%c0_13, %c1, %c0_14, %c0_15] : memref<2x16x16x8xf32, #tpu.memory_space<vmem>>, vector<1x1x16x8xf32>
    %127 = vector.shape_cast %126 : vector<1x1x16x8xf32> to vector<16x8xf32>
    %128 = vector.shape_cast %125 : vector<16x8xf32> to vector<1x1x16x8xf32>
    tpu.vector_store %arg5[%c0_13, %c1, %c0_14, %c0_15], %128 {strides = array<i32>} : memref<2x16x16x8xf32, #tpu.memory_space<vmem>>, vector<1x1x16x8xf32>,
    %129 = vector.extract_strided_slice %8 {offsets = [2, 0, 0], sizes = [1, 16, 8], strides = [1, 1, 1]} : vector<18x16x8xf32> to vector<1x16x8xf32>
    %130 = vector.shape_cast %129 : vector<1x16x8xf32> to vector<16x8xf32>
    %131 = vector.extract_strided_slice %5 {offsets = [0, 0], sizes = [1, 8], strides = [1, 1]} : vector<9x8xf32> to vector<1x8xf32>
    %132 = vector.broadcast %131 : vector<1x8xf32> to vector<16x8xf32>
    %133 = arith.mulf %130, %132 : vector<16x8xf32>
    %134 = vector.extract_strided_slice %10 {offsets = [2, 0, 0], sizes = [1, 16, 8], strides = [1, 1, 1]} : vector<18x16x8xf32> to vector<1x16x8xf32>
    %135 = vector.shape_cast %134 : vector<1x16x8xf32> to vector<16x8xf32>
    %136 = vector.extract_strided_slice %5 {offsets = [1, 0], sizes = [1, 8], strides = [1, 1]} : vector<9x8xf32> to vector<1x8xf32>
    %137 = vector.broadcast %136 : vector<1x8xf32> to vector<16x8xf32>
    %138 = arith.mulf %135, %137 : vector<16x8xf32>
    %139 = arith.addf %133, %138 : vector<16x8xf32>
    %140 = vector.extract_strided_slice %12 {offsets = [2, 0, 0], sizes = [1, 16, 8], strides = [1, 1, 1]} : vector<18x16x8xf32> to vector<1x16x8xf32>
    %141 = vector.shape_cast %140 : vector<1x16x8xf32> to vector<16x8xf32>
    %142 = vector.extract_strided_slice %5 {offsets = [2, 0], sizes = [1, 8], strides = [1, 1]} : vector<9x8xf32> to vector<1x8xf32>
    %143 = vector.broadcast %142 : vector<1x8xf32> to vector<16x8xf32>
    %144 = arith.mulf %141, %143 : vector<16x8xf32>
    %145 = arith.addf %139, %144 : vector<16x8xf32>
    %146 = vector.extract_strided_slice %8 {offsets = [3, 0, 0], sizes = [1, 16, 8], strides = [1, 1, 1]} : vector<18x16x8xf32> to vector<1x16x8xf32>
    %147 = vector.shape_cast %146 : vector<1x16x8xf32> to vector<16x8xf32>
    %148 = vector.extract_strided_slice %5 {offsets = [3, 0], sizes = [1, 8], strides = [1, 1]} : vector<9x8xf32> to vector<1x8xf32>
    %149 = vector.broadcast %148 : vector<1x8xf32> to vector<16x8xf32>
    %150 = arith.mulf %147, %149 : vector<16x8xf32>
    %151 = arith.addf %145, %150 : vector<16x8xf32>
    %152 = vector.extract_strided_slice %10 {offsets = [3, 0, 0], sizes = [1, 16, 8], strides = [1, 1, 1]} : vector<18x16x8xf32> to vector<1x16x8xf32>
    %153 = vector.shape_cast %152 : vector<1x16x8xf32> to vector<16x8xf32>
    %154 = vector.extract_strided_slice %5 {offsets = [4, 0], sizes = [1, 8], strides = [1, 1]} : vector<9x8xf32> to vector<1x8xf32>
    %155 = vector.broadcast %154 : vector<1x8xf32> to vector<16x8xf32>
    %156 = arith.mulf %153, %155 : vector<16x8xf32>
    %157 = arith.addf %151, %156 : vector<16x8xf32>
    %158 = vector.extract_strided_slice %12 {offsets = [3, 0, 0], sizes = [1, 16, 8], strides = [1, 1, 1]} : vector<18x16x8xf32> to vector<1x16x8xf32>
    %159 = vector.shape_cast %158 : vector<1x16x8xf32> to vector<16x8xf32>
    %160 = vector.extract_strided_slice %5 {offsets = [5, 0], sizes = [1, 8], strides = [1, 1]} : vector<9x8xf32> to vector<1x8xf32>
    %161 = vector.broadcast %160 : vector<1x8xf32> to vector<16x8xf32>
    %162 = arith.mulf %159, %161 : vector<16x8xf32>
    %163 = arith.addf %157, %162 : vector<16x8xf32>
    %164 = vector.extract_strided_slice %8 {offsets = [4, 0, 0], sizes = [1, 16, 8], strides = [1, 1, 1]} : vector<18x16x8xf32> to vector<1x16x8xf32>
    %165 = vector.shape_cast %164 : vector<1x16x8xf32> to vector<16x8xf32>
    %166 = vector.extract_strided_slice %5 {offsets = [6, 0], sizes = [1, 8], strides = [1, 1]} : vector<9x8xf32> to vector<1x8xf32>
    %167 = vector.broadcast %166 : vector<1x8xf32> to vector<16x8xf32>
    %168 = arith.mulf %165, %167 : vector<16x8xf32>
    %169 = arith.addf %163, %168 : vector<16x8xf32>
    %170 = vector.extract_strided_slice %10 {offsets = [4, 0, 0], sizes = [1, 16, 8], strides = [1, 1, 1]} : vector<18x16x8xf32> to vector<1x16x8xf32>
    %171 = vector.shape_cast %170 : vector<1x16x8xf32> to vector<16x8xf32>
    %172 = vector.extract_strided_slice %5 {offsets = [7, 0], sizes = [1, 8], strides = [1, 1]} : vector<9x8xf32> to vector<1x8xf32>
    %173 = vector.broadcast %172 : vector<1x8xf32> to vector<16x8xf32>
    %174 = arith.mulf %171, %173 : vector<16x8xf32>
    %175 = arith.addf %169, %174 : vector<16x8xf32>
    %176 = vector.extract_strided_slice %12 {offsets = [4, 0, 0], sizes = [1, 16, 8], strides = [1, 1, 1]} : vector<18x16x8xf32> to vector<1x16x8xf32>
    %177 = vector.shape_cast %176 : vector<1x16x8xf32> to vector<16x8xf32>
    %178 = vector.extract_strided_slice %5 {offsets = [8, 0], sizes = [1, 8], strides = [1, 1]} : vector<9x8xf32> to vector<1x8xf32>
    %179 = vector.broadcast %178 : vector<1x8xf32> to vector<16x8xf32>
    %180 = arith.mulf %177, %179 : vector<16x8xf32>
    %181 = arith.addf %175, %180 : vector<16x8xf32>
    %182 = vector.broadcast %6 : vector<1x8xf32> to vector<16x8xf32>
    %183 = arith.addf %181, %182 : vector<16x8xf32>
    %c0_16 = arith.constant 0 : index
    %c2 = arith.constant 2 : index
    %c0_17 = arith.constant 0 : index
    %c0_18 = arith.constant 0 : index
    %184 = vector.load %arg5[%c0_16, %c2, %c0_17, %c0_18] : memref<2x16x16x8xf32, #tpu.memory_space<vmem>>, vector<1x1x16x8xf32>
    %185 = vector.shape_cast %184 : vector<1x1x16x8xf32> to vector<16x8xf32>
    %186 = vector.shape_cast %183 : vector<16x8xf32> to vector<1x1x16x8xf32>
    tpu.vector_store %arg5[%c0_16, %c2, %c0_17, %c0_18], %186 {strides = array<i32>} : memref<2x16x16x8xf32, #tpu.memory_space<vmem>>, vector<1x1x16x8xf32>,
    %187 = vector.extract_strided_slice %8 {offsets = [3, 0, 0], sizes = [1, 16, 8], strides = [1, 1, 1]} : vector<18x16x8xf32> to vector<1x16x8xf32>
    %188 = vector.shape_cast %187 : vector<1x16x8xf32> to vector<16x8xf32>
    %189 = vector.extract_strided_slice %5 {offsets = [0, 0], sizes = [1, 8], strides = [1, 1]} : vector<9x8xf32> to vector<1x8xf32>
    %190 = vector.broadcast %189 : vector<1x8xf32> to vector<16x8xf32>
    %191 = arith.mulf %188, %190 : vector<16x8xf32>
    %192 = vector.extract_strided_slice %10 {offsets = [3, 0, 0], sizes = [1, 16, 8], strides = [1, 1, 1]} : vector<18x16x8xf32> to vector<1x16x8xf32>
    %193 = vector.shape_cast %192 : vector<1x16x8xf32> to vector<16x8xf32>
    %194 = vector.extract_strided_slice %5 {offsets = [1, 0], sizes = [1, 8], strides = [1, 1]} : vector<9x8xf32> to vector<1x8xf32>
    %195 = vector.broadcast %194 : vector<1x8xf32> to vector<16x8xf32>
    %196 = arith.mulf %193, %195 : vector<16x8xf32>
    %197 = arith.addf %191, %196 : vector<16x8xf32>
    %198 = vector.extract_strided_slice %12 {offsets = [3, 0, 0], sizes = [1, 16, 8], strides = [1, 1, 1]} : vector<18x16x8xf32> to vector<1x16x8xf32>
    %199 = vector.shape_cast %198 : vector<1x16x8xf32> to vector<16x8xf32>
    %200 = vector.extract_strided_slice %5 {offsets = [2, 0], sizes = [1, 8], strides = [1, 1]} : vector<9x8xf32> to vector<1x8xf32>
    %201 = vector.broadcast %200 : vector<1x8xf32> to vector<16x8xf32>
    %202 = arith.mulf %199, %201 : vector<16x8xf32>
    %203 = arith.addf %197, %202 : vector<16x8xf32>
    %204 = vector.extract_strided_slice %8 {offsets = [4, 0, 0], sizes = [1, 16, 8], strides = [1, 1, 1]} : vector<18x16x8xf32> to vector<1x16x8xf32>
    %205 = vector.shape_cast %204 : vector<1x16x8xf32> to vector<16x8xf32>
    %206 = vector.extract_strided_slice %5 {offsets = [3, 0], sizes = [1, 8], strides = [1, 1]} : vector<9x8xf32> to vector<1x8xf32>
    %207 = vector.broadcast %206 : vector<1x8xf32> to vector<16x8xf32>
    %208 = arith.mulf %205, %207 : vector<16x8xf32>
    %209 = arith.addf %203, %208 : vector<16x8xf32>
    %210 = vector.extract_strided_slice %10 {offsets = [4, 0, 0], sizes = [1, 16, 8], strides = [1, 1, 1]} : vector<18x16x8xf32> to vector<1x16x8xf32>
    %211 = vector.shape_cast %210 : vector<1x16x8xf32> to vector<16x8xf32>
    %212 = vector.extract_strided_slice %5 {offsets = [4, 0], sizes = [1, 8], strides = [1, 1]} : vector<9x8xf32> to vector<1x8xf32>
    %213 = vector.broadcast %212 : vector<1x8xf32> to vector<16x8xf32>
    %214 = arith.mulf %211, %213 : vector<16x8xf32>
    %215 = arith.addf %209, %214 : vector<16x8xf32>
    %216 = vector.extract_strided_slice %12 {offsets = [4, 0, 0], sizes = [1, 16, 8], strides = [1, 1, 1]} : vector<18x16x8xf32> to vector<1x16x8xf32>
    %217 = vector.shape_cast %216 : vector<1x16x8xf32> to vector<16x8xf32>
    %218 = vector.extract_strided_slice %5 {offsets = [5, 0], sizes = [1, 8], strides = [1, 1]} : vector<9x8xf32> to vector<1x8xf32>
    %219 = vector.broadcast %218 : vector<1x8xf32> to vector<16x8xf32>
    %220 = arith.mulf %217, %219 : vector<16x8xf32>
    %221 = arith.addf %215, %220 : vector<16x8xf32>
    %222 = vector.extract_strided_slice %8 {offsets = [5, 0, 0], sizes = [1, 16, 8], strides = [1, 1, 1]} : vector<18x16x8xf32> to vector<1x16x8xf32>
    %223 = vector.shape_cast %222 : vector<1x16x8xf32> to vector<16x8xf32>
    %224 = vector.extract_strided_slice %5 {offsets = [6, 0], sizes = [1, 8], strides = [1, 1]} : vector<9x8xf32> to vector<1x8xf32>
    %225 = vector.broadcast %224 : vector<1x8xf32> to vector<16x8xf32>
    %226 = arith.mulf %223, %225 : vector<16x8xf32>
    %227 = arith.addf %221, %226 : vector<16x8xf32>
    %228 = vector.extract_strided_slice %10 {offsets = [5, 0, 0], sizes = [1, 16, 8], strides = [1, 1, 1]} : vector<18x16x8xf32> to vector<1x16x8xf32>
    %229 = vector.shape_cast %228 : vector<1x16x8xf32> to vector<16x8xf32>
    %230 = vector.extract_strided_slice %5 {offsets = [7, 0], sizes = [1, 8], strides = [1, 1]} : vector<9x8xf32> to vector<1x8xf32>
    %231 = vector.broadcast %230 : vector<1x8xf32> to vector<16x8xf32>
    %232 = arith.mulf %229, %231 : vector<16x8xf32>
    %233 = arith.addf %227, %232 : vector<16x8xf32>
    %234 = vector.extract_strided_slice %12 {offsets = [5, 0, 0], sizes = [1, 16, 8], strides = [1, 1, 1]} : vector<18x16x8xf32> to vector<1x16x8xf32>
    %235 = vector.shape_cast %234 : vector<1x16x8xf32> to vector<16x8xf32>
    %236 = vector.extract_strided_slice %5 {offsets = [8, 0], sizes = [1, 8], strides = [1, 1]} : vector<9x8xf32> to vector<1x8xf32>
    %237 = vector.broadcast %236 : vector<1x8xf32> to vector<16x8xf32>
    %238 = arith.mulf %235, %237 : vector<16x8xf32>
    %239 = arith.addf %233, %238 : vector<16x8xf32>
    %240 = vector.broadcast %6 : vector<1x8xf32> to vector<16x8xf32>
    %241 = arith.addf %239, %240 : vector<16x8xf32>
    %c0_19 = arith.constant 0 : index
    %c3 = arith.constant 3 : index
    %c0_20 = arith.constant 0 : index
    %c0_21 = arith.constant 0 : index
    %242 = vector.load %arg5[%c0_19, %c3, %c0_20, %c0_21] : memref<2x16x16x8xf32, #tpu.memory_space<vmem>>, vector<1x1x16x8xf32>
    %243 = vector.shape_cast %242 : vector<1x1x16x8xf32> to vector<16x8xf32>
    %244 = vector.shape_cast %241 : vector<16x8xf32> to vector<1x1x16x8xf32>
    tpu.vector_store %arg5[%c0_19, %c3, %c0_20, %c0_21], %244 {strides = array<i32>} : memref<2x16x16x8xf32, #tpu.memory_space<vmem>>, vector<1x1x16x8xf32>,
    %245 = vector.extract_strided_slice %8 {offsets = [4, 0, 0], sizes = [1, 16, 8], strides = [1, 1, 1]} : vector<18x16x8xf32> to vector<1x16x8xf32>
    %246 = vector.shape_cast %245 : vector<1x16x8xf32> to vector<16x8xf32>
    %247 = vector.extract_strided_slice %5 {offsets = [0, 0], sizes = [1, 8], strides = [1, 1]} : vector<9x8xf32> to vector<1x8xf32>
    %248 = vector.broadcast %247 : vector<1x8xf32> to vector<16x8xf32>
    %249 = arith.mulf %246, %248 : vector<16x8xf32>
    %250 = vector.extract_strided_slice %10 {offsets = [4, 0, 0], sizes = [1, 16, 8], strides = [1, 1, 1]} : vector<18x16x8xf32> to vector<1x16x8xf32>
    %251 = vector.shape_cast %250 : vector<1x16x8xf32> to vector<16x8xf32>
    %252 = vector.extract_strided_slice %5 {offsets = [1, 0], sizes = [1, 8], strides = [1, 1]} : vector<9x8xf32> to vector<1x8xf32>
    %253 = vector.broadcast %252 : vector<1x8xf32> to vector<16x8xf32>
    %254 = arith.mulf %251, %253 : vector<16x8xf32>
    %255 = arith.addf %249, %254 : vector<16x8xf32>
    %256 = vector.extract_strided_slice %12 {offsets = [4, 0, 0], sizes = [1, 16, 8], strides = [1, 1, 1]} : vector<18x16x8xf32> to vector<1x16x8xf32>
    %257 = vector.shape_cast %256 : vector<1x16x8xf32> to vector<16x8xf32>
    %258 = vector.extract_strided_slice %5 {offsets = [2, 0], sizes = [1, 8], strides = [1, 1]} : vector<9x8xf32> to vector<1x8xf32>
    %259 = vector.broadcast %258 : vector<1x8xf32> to vector<16x8xf32>
    %260 = arith.mulf %257, %259 : vector<16x8xf32>
    %261 = arith.addf %255, %260 : vector<16x8xf32>
    %262 = vector.extract_strided_slice %8 {offsets = [5, 0, 0], sizes = [1, 16, 8], strides = [1, 1, 1]} : vector<18x16x8xf32> to vector<1x16x8xf32>
    %263 = vector.shape_cast %262 : vector<1x16x8xf32> to vector<16x8xf32>
    %264 = vector.extract_strided_slice %5 {offsets = [3, 0], sizes = [1, 8], strides = [1, 1]} : vector<9x8xf32> to vector<1x8xf32>
    %265 = vector.broadcast %264 : vector<1x8xf32> to vector<16x8xf32>
    %266 = arith.mulf %263, %265 : vector<16x8xf32>
    %267 = arith.addf %261, %266 : vector<16x8xf32>
    %268 = vector.extract_strided_slice %10 {offsets = [5, 0, 0], sizes = [1, 16, 8], strides = [1, 1, 1]} : vector<18x16x8xf32> to vector<1x16x8xf32>
    %269 = vector.shape_cast %268 : vector<1x16x8xf32> to vector<16x8xf32>
    %270 = vector.extract_strided_slice %5 {offsets = [4, 0], sizes = [1, 8], strides = [1, 1]} : vector<9x8xf32> to vector<1x8xf32>
    %271 = vector.broadcast %270 : vector<1x8xf32> to vector<16x8xf32>
    %272 = arith.mulf %269, %271 : vector<16x8xf32>
    %273 = arith.addf %267, %272 : vector<16x8xf32>
    %274 = vector.extract_strided_slice %12 {offsets = [5, 0, 0], sizes = [1, 16, 8], strides = [1, 1, 1]} : vector<18x16x8xf32> to vector<1x16x8xf32>
    %275 = vector.shape_cast %274 : vector<1x16x8xf32> to vector<16x8xf32>
    %276 = vector.extract_strided_slice %5 {offsets = [5, 0], sizes = [1, 8], strides = [1, 1]} : vector<9x8xf32> to vector<1x8xf32>
    %277 = vector.broadcast %276 : vector<1x8xf32> to vector<16x8xf32>
    %278 = arith.mulf %275, %277 : vector<16x8xf32>
    %279 = arith.addf %273, %278 : vector<16x8xf32>
    %280 = vector.extract_strided_slice %8 {offsets = [6, 0, 0], sizes = [1, 16, 8], strides = [1, 1, 1]} : vector<18x16x8xf32> to vector<1x16x8xf32>
    %281 = vector.shape_cast %280 : vector<1x16x8xf32> to vector<16x8xf32>
    %282 = vector.extract_strided_slice %5 {offsets = [6, 0], sizes = [1, 8], strides = [1, 1]} : vector<9x8xf32> to vector<1x8xf32>
    %283 = vector.broadcast %282 : vector<1x8xf32> to vector<16x8xf32>
    %284 = arith.mulf %281, %283 : vector<16x8xf32>
    %285 = arith.addf %279, %284 : vector<16x8xf32>
    %286 = vector.extract_strided_slice %10 {offsets = [6, 0, 0], sizes = [1, 16, 8], strides = [1, 1, 1]} : vector<18x16x8xf32> to vector<1x16x8xf32>
    %287 = vector.shape_cast %286 : vector<1x16x8xf32> to vector<16x8xf32>
    %288 = vector.extract_strided_slice %5 {offsets = [7, 0], sizes = [1, 8], strides = [1, 1]} : vector<9x8xf32> to vector<1x8xf32>
    %289 = vector.broadcast %288 : vector<1x8xf32> to vector<16x8xf32>
    %290 = arith.mulf %287, %289 : vector<16x8xf32>
    %291 = arith.addf %285, %290 : vector<16x8xf32>
    %292 = vector.extract_strided_slice %12 {offsets = [6, 0, 0], sizes = [1, 16, 8], strides = [1, 1, 1]} : vector<18x16x8xf32> to vector<1x16x8xf32>
    %293 = vector.shape_cast %292 : vector<1x16x8xf32> to vector<16x8xf32>
    %294 = vector.extract_strided_slice %5 {offsets = [8, 0], sizes = [1, 8], strides = [1, 1]} : vector<9x8xf32> to vector<1x8xf32>
    %295 = vector.broadcast %294 : vector<1x8xf32> to vector<16x8xf32>
    %296 = arith.mulf %293, %295 : vector<16x8xf32>
    %297 = arith.addf %291, %296 : vector<16x8xf32>
    %298 = vector.broadcast %6 : vector<1x8xf32> to vector<16x8xf32>
    %299 = arith.addf %297, %298 : vector<16x8xf32>
    %c0_22 = arith.constant 0 : index
    %c4 = arith.constant 4 : index
    %c0_23 = arith.constant 0 : index
    %c0_24 = arith.constant 0 : index
    %300 = vector.load %arg5[%c0_22, %c4, %c0_23, %c0_24] : memref<2x16x16x8xf32, #tpu.memory_space<vmem>>, vector<1x1x16x8xf32>
    %301 = vector.shape_cast %300 : vector<1x1x16x8xf32> to vector<16x8xf32>
    %302 = vector.shape_cast %299 : vector<16x8xf32> to vector<1x1x16x8xf32>
    tpu.vector_store %arg5[%c0_22, %c4, %c0_23, %c0_24], %302 {strides = array<i32>} : memref<2x16x16x8xf32, #tpu.memory_space<vmem>>, vector<1x1x16x8xf32>,
    %303 = vector.extract_strided_slice %8 {offsets = [5, 0, 0], sizes = [1, 16, 8], strides = [1, 1, 1]} : vector<18x16x8xf32> to vector<1x16x8xf32>
    %304 = vector.shape_cast %303 : vector<1x16x8xf32> to vector<16x8xf32>
    %305 = vector.extract_strided_slice %5 {offsets = [0, 0], sizes = [1, 8], strides = [1, 1]} : vector<9x8xf32> to vector<1x8xf32>
    %306 = vector.broadcast %305 : vector<1x8xf32> to vector<16x8xf32>
    %307 = arith.mulf %304, %306 : vector<16x8xf32>
    %308 = vector.extract_strided_slice %10 {offsets = [5, 0, 0], sizes = [1, 16, 8], strides = [1, 1, 1]} : vector<18x16x8xf32> to vector<1x16x8xf32>
    %309 = vector.shape_cast %308 : vector<1x16x8xf32> to vector<16x8xf32>
    %310 = vector.extract_strided_slice %5 {offsets = [1, 0], sizes = [1, 8], strides = [1, 1]} : vector<9x8xf32> to vector<1x8xf32>
    %311 = vector.broadcast %310 : vector<1x8xf32> to vector<16x8xf32>
    %312 = arith.mulf %309, %311 : vector<16x8xf32>
    %313 = arith.addf %307, %312 : vector<16x8xf32>
    %314 = vector.extract_strided_slice %12 {offsets = [5, 0, 0], sizes = [1, 16, 8], strides = [1, 1, 1]} : vector<18x16x8xf32> to vector<1x16x8xf32>
    %315 = vector.shape_cast %314 : vector<1x16x8xf32> to vector<16x8xf32>
    %316 = vector.extract_strided_slice %5 {offsets = [2, 0], sizes = [1, 8], strides = [1, 1]} : vector<9x8xf32> to vector<1x8xf32>
    %317 = vector.broadcast %316 : vector<1x8xf32> to vector<16x8xf32>
    %318 = arith.mulf %315, %317 : vector<16x8xf32>
    %319 = arith.addf %313, %318 : vector<16x8xf32>
    %320 = vector.extract_strided_slice %8 {offsets = [6, 0, 0], sizes = [1, 16, 8], strides = [1, 1, 1]} : vector<18x16x8xf32> to vector<1x16x8xf32>
    %321 = vector.shape_cast %320 : vector<1x16x8xf32> to vector<16x8xf32>
    %322 = vector.extract_strided_slice %5 {offsets = [3, 0], sizes = [1, 8], strides = [1, 1]} : vector<9x8xf32> to vector<1x8xf32>
    %323 = vector.broadcast %322 : vector<1x8xf32> to vector<16x8xf32>
    %324 = arith.mulf %321, %323 : vector<16x8xf32>
    %325 = arith.addf %319, %324 : vector<16x8xf32>
    %326 = vector.extract_strided_slice %10 {offsets = [6, 0, 0], sizes = [1, 16, 8], strides = [1, 1, 1]} : vector<18x16x8xf32> to vector<1x16x8xf32>
    %327 = vector.shape_cast %326 : vector<1x16x8xf32> to vector<16x8xf32>
    %328 = vector.extract_strided_slice %5 {offsets = [4, 0], sizes = [1, 8], strides = [1, 1]} : vector<9x8xf32> to vector<1x8xf32>
    %329 = vector.broadcast %328 : vector<1x8xf32> to vector<16x8xf32>
    %330 = arith.mulf %327, %329 : vector<16x8xf32>
    %331 = arith.addf %325, %330 : vector<16x8xf32>
    %332 = vector.extract_strided_slice %12 {offsets = [6, 0, 0], sizes = [1, 16, 8], strides = [1, 1, 1]} : vector<18x16x8xf32> to vector<1x16x8xf32>
    %333 = vector.shape_cast %332 : vector<1x16x8xf32> to vector<16x8xf32>
    %334 = vector.extract_strided_slice %5 {offsets = [5, 0], sizes = [1, 8], strides = [1, 1]} : vector<9x8xf32> to vector<1x8xf32>
    %335 = vector.broadcast %334 : vector<1x8xf32> to vector<16x8xf32>
    %336 = arith.mulf %333, %335 : vector<16x8xf32>
    %337 = arith.addf %331, %336 : vector<16x8xf32>
    %338 = vector.extract_strided_slice %8 {offsets = [7, 0, 0], sizes = [1, 16, 8], strides = [1, 1, 1]} : vector<18x16x8xf32> to vector<1x16x8xf32>
    %339 = vector.shape_cast %338 : vector<1x16x8xf32> to vector<16x8xf32>
    %340 = vector.extract_strided_slice %5 {offsets = [6, 0], sizes = [1, 8], strides = [1, 1]} : vector<9x8xf32> to vector<1x8xf32>
    %341 = vector.broadcast %340 : vector<1x8xf32> to vector<16x8xf32>
    %342 = arith.mulf %339, %341 : vector<16x8xf32>
    %343 = arith.addf %337, %342 : vector<16x8xf32>
    %344 = vector.extract_strided_slice %10 {offsets = [7, 0, 0], sizes = [1, 16, 8], strides = [1, 1, 1]} : vector<18x16x8xf32> to vector<1x16x8xf32>
    %345 = vector.shape_cast %344 : vector<1x16x8xf32> to vector<16x8xf32>
    %346 = vector.extract_strided_slice %5 {offsets = [7, 0], sizes = [1, 8], strides = [1, 1]} : vector<9x8xf32> to vector<1x8xf32>
    %347 = vector.broadcast %346 : vector<1x8xf32> to vector<16x8xf32>
    %348 = arith.mulf %345, %347 : vector<16x8xf32>
    %349 = arith.addf %343, %348 : vector<16x8xf32>
    %350 = vector.extract_strided_slice %12 {offsets = [7, 0, 0], sizes = [1, 16, 8], strides = [1, 1, 1]} : vector<18x16x8xf32> to vector<1x16x8xf32>
    %351 = vector.shape_cast %350 : vector<1x16x8xf32> to vector<16x8xf32>
    %352 = vector.extract_strided_slice %5 {offsets = [8, 0], sizes = [1, 8], strides = [1, 1]} : vector<9x8xf32> to vector<1x8xf32>
    %353 = vector.broadcast %352 : vector<1x8xf32> to vector<16x8xf32>
    %354 = arith.mulf %351, %353 : vector<16x8xf32>
    %355 = arith.addf %349, %354 : vector<16x8xf32>
    %356 = vector.broadcast %6 : vector<1x8xf32> to vector<16x8xf32>
    %357 = arith.addf %355, %356 : vector<16x8xf32>
    %c0_25 = arith.constant 0 : index
    %c5 = arith.constant 5 : index
    %c0_26 = arith.constant 0 : index
    %c0_27 = arith.constant 0 : index
    %358 = vector.load %arg5[%c0_25, %c5, %c0_26, %c0_27] : memref<2x16x16x8xf32, #tpu.memory_space<vmem>>, vector<1x1x16x8xf32>
    %359 = vector.shape_cast %358 : vector<1x1x16x8xf32> to vector<16x8xf32>
    %360 = vector.shape_cast %357 : vector<16x8xf32> to vector<1x1x16x8xf32>
    tpu.vector_store %arg5[%c0_25, %c5, %c0_26, %c0_27], %360 {strides = array<i32>} : memref<2x16x16x8xf32, #tpu.memory_space<vmem>>, vector<1x1x16x8xf32>,
    %361 = vector.extract_strided_slice %8 {offsets = [6, 0, 0], sizes = [1, 16, 8], strides = [1, 1, 1]} : vector<18x16x8xf32> to vector<1x16x8xf32>
    %362 = vector.shape_cast %361 : vector<1x16x8xf32> to vector<16x8xf32>
    %363 = vector.extract_strided_slice %5 {offsets = [0, 0], sizes = [1, 8], strides = [1, 1]} : vector<9x8xf32> to vector<1x8xf32>
    %364 = vector.broadcast %363 : vector<1x8xf32> to vector<16x8xf32>
    %365 = arith.mulf %362, %364 : vector<16x8xf32>
    %366 = vector.extract_strided_slice %10 {offsets = [6, 0, 0], sizes = [1, 16, 8], strides = [1, 1, 1]} : vector<18x16x8xf32> to vector<1x16x8xf32>
    %367 = vector.shape_cast %366 : vector<1x16x8xf32> to vector<16x8xf32>
    %368 = vector.extract_strided_slice %5 {offsets = [1, 0], sizes = [1, 8], strides = [1, 1]} : vector<9x8xf32> to vector<1x8xf32>
    %369 = vector.broadcast %368 : vector<1x8xf32> to vector<16x8xf32>
    %370 = arith.mulf %367, %369 : vector<16x8xf32>
    %371 = arith.addf %365, %370 : vector<16x8xf32>
    %372 = vector.extract_strided_slice %12 {offsets = [6, 0, 0], sizes = [1, 16, 8], strides = [1, 1, 1]} : vector<18x16x8xf32> to vector<1x16x8xf32>
    %373 = vector.shape_cast %372 : vector<1x16x8xf32> to vector<16x8xf32>
    %374 = vector.extract_strided_slice %5 {offsets = [2, 0], sizes = [1, 8], strides = [1, 1]} : vector<9x8xf32> to vector<1x8xf32>
    %375 = vector.broadcast %374 : vector<1x8xf32> to vector<16x8xf32>
    %376 = arith.mulf %373, %375 : vector<16x8xf32>
    %377 = arith.addf %371, %376 : vector<16x8xf32>
    %378 = vector.extract_strided_slice %8 {offsets = [7, 0, 0], sizes = [1, 16, 8], strides = [1, 1, 1]} : vector<18x16x8xf32> to vector<1x16x8xf32>
    %379 = vector.shape_cast %378 : vector<1x16x8xf32> to vector<16x8xf32>
    %380 = vector.extract_strided_slice %5 {offsets = [3, 0], sizes = [1, 8], strides = [1, 1]} : vector<9x8xf32> to vector<1x8xf32>
    %381 = vector.broadcast %380 : vector<1x8xf32> to vector<16x8xf32>
    %382 = arith.mulf %379, %381 : vector<16x8xf32>
    %383 = arith.addf %377, %382 : vector<16x8xf32>
    %384 = vector.extract_strided_slice %10 {offsets = [7, 0, 0], sizes = [1, 16, 8], strides = [1, 1, 1]} : vector<18x16x8xf32> to vector<1x16x8xf32>
    %385 = vector.shape_cast %384 : vector<1x16x8xf32> to vector<16x8xf32>
    %386 = vector.extract_strided_slice %5 {offsets = [4, 0], sizes = [1, 8], strides = [1, 1]} : vector<9x8xf32> to vector<1x8xf32>
    %387 = vector.broadcast %386 : vector<1x8xf32> to vector<16x8xf32>
    %388 = arith.mulf %385, %387 : vector<16x8xf32>
    %389 = arith.addf %383, %388 : vector<16x8xf32>
    %390 = vector.extract_strided_slice %12 {offsets = [7, 0, 0], sizes = [1, 16, 8], strides = [1, 1, 1]} : vector<18x16x8xf32> to vector<1x16x8xf32>
    %391 = vector.shape_cast %390 : vector<1x16x8xf32> to vector<16x8xf32>
    %392 = vector.extract_strided_slice %5 {offsets = [5, 0], sizes = [1, 8], strides = [1, 1]} : vector<9x8xf32> to vector<1x8xf32>
    %393 = vector.broadcast %392 : vector<1x8xf32> to vector<16x8xf32>
    %394 = arith.mulf %391, %393 : vector<16x8xf32>
    %395 = arith.addf %389, %394 : vector<16x8xf32>
    %396 = vector.extract_strided_slice %8 {offsets = [8, 0, 0], sizes = [1, 16, 8], strides = [1, 1, 1]} : vector<18x16x8xf32> to vector<1x16x8xf32>
    %397 = vector.shape_cast %396 : vector<1x16x8xf32> to vector<16x8xf32>
    %398 = vector.extract_strided_slice %5 {offsets = [6, 0], sizes = [1, 8], strides = [1, 1]} : vector<9x8xf32> to vector<1x8xf32>
    %399 = vector.broadcast %398 : vector<1x8xf32> to vector<16x8xf32>
    %400 = arith.mulf %397, %399 : vector<16x8xf32>
    %401 = arith.addf %395, %400 : vector<16x8xf32>
    %402 = vector.extract_strided_slice %10 {offsets = [8, 0, 0], sizes = [1, 16, 8], strides = [1, 1, 1]} : vector<18x16x8xf32> to vector<1x16x8xf32>
    %403 = vector.shape_cast %402 : vector<1x16x8xf32> to vector<16x8xf32>
    %404 = vector.extract_strided_slice %5 {offsets = [7, 0], sizes = [1, 8], strides = [1, 1]} : vector<9x8xf32> to vector<1x8xf32>
    %405 = vector.broadcast %404 : vector<1x8xf32> to vector<16x8xf32>
    %406 = arith.mulf %403, %405 : vector<16x8xf32>
    %407 = arith.addf %401, %406 : vector<16x8xf32>
    %408 = vector.extract_strided_slice %12 {offsets = [8, 0, 0], sizes = [1, 16, 8], strides = [1, 1, 1]} : vector<18x16x8xf32> to vector<1x16x8xf32>
    %409 = vector.shape_cast %408 : vector<1x16x8xf32> to vector<16x8xf32>
    %410 = vector.extract_strided_slice %5 {offsets = [8, 0], sizes = [1, 8], strides = [1, 1]} : vector<9x8xf32> to vector<1x8xf32>
    %411 = vector.broadcast %410 : vector<1x8xf32> to vector<16x8xf32>
    %412 = arith.mulf %409, %411 : vector<16x8xf32>
    %413 = arith.addf %407, %412 : vector<16x8xf32>
    %414 = vector.broadcast %6 : vector<1x8xf32> to vector<16x8xf32>
    %415 = arith.addf %413, %414 : vector<16x8xf32>
    %c0_28 = arith.constant 0 : index
    %c6 = arith.constant 6 : index
    %c0_29 = arith.constant 0 : index
    %c0_30 = arith.constant 0 : index
    %416 = vector.load %arg5[%c0_28, %c6, %c0_29, %c0_30] : memref<2x16x16x8xf32, #tpu.memory_space<vmem>>, vector<1x1x16x8xf32>
    %417 = vector.shape_cast %416 : vector<1x1x16x8xf32> to vector<16x8xf32>
    %418 = vector.shape_cast %415 : vector<16x8xf32> to vector<1x1x16x8xf32>
    tpu.vector_store %arg5[%c0_28, %c6, %c0_29, %c0_30], %418 {strides = array<i32>} : memref<2x16x16x8xf32, #tpu.memory_space<vmem>>, vector<1x1x16x8xf32>,
    %419 = vector.extract_strided_slice %8 {offsets = [7, 0, 0], sizes = [1, 16, 8], strides = [1, 1, 1]} : vector<18x16x8xf32> to vector<1x16x8xf32>
    %420 = vector.shape_cast %419 : vector<1x16x8xf32> to vector<16x8xf32>
    %421 = vector.extract_strided_slice %5 {offsets = [0, 0], sizes = [1, 8], strides = [1, 1]} : vector<9x8xf32> to vector<1x8xf32>
    %422 = vector.broadcast %421 : vector<1x8xf32> to vector<16x8xf32>
    %423 = arith.mulf %420, %422 : vector<16x8xf32>
    %424 = vector.extract_strided_slice %10 {offsets = [7, 0, 0], sizes = [1, 16, 8], strides = [1, 1, 1]} : vector<18x16x8xf32> to vector<1x16x8xf32>
    %425 = vector.shape_cast %424 : vector<1x16x8xf32> to vector<16x8xf32>
    %426 = vector.extract_strided_slice %5 {offsets = [1, 0], sizes = [1, 8], strides = [1, 1]} : vector<9x8xf32> to vector<1x8xf32>
    %427 = vector.broadcast %426 : vector<1x8xf32> to vector<16x8xf32>
    %428 = arith.mulf %425, %427 : vector<16x8xf32>
    %429 = arith.addf %423, %428 : vector<16x8xf32>
    %430 = vector.extract_strided_slice %12 {offsets = [7, 0, 0], sizes = [1, 16, 8], strides = [1, 1, 1]} : vector<18x16x8xf32> to vector<1x16x8xf32>
    %431 = vector.shape_cast %430 : vector<1x16x8xf32> to vector<16x8xf32>
    %432 = vector.extract_strided_slice %5 {offsets = [2, 0], sizes = [1, 8], strides = [1, 1]} : vector<9x8xf32> to vector<1x8xf32>
    %433 = vector.broadcast %432 : vector<1x8xf32> to vector<16x8xf32>
    %434 = arith.mulf %431, %433 : vector<16x8xf32>
    %435 = arith.addf %429, %434 : vector<16x8xf32>
    %436 = vector.extract_strided_slice %8 {offsets = [8, 0, 0], sizes = [1, 16, 8], strides = [1, 1, 1]} : vector<18x16x8xf32> to vector<1x16x8xf32>
    %437 = vector.shape_cast %436 : vector<1x16x8xf32> to vector<16x8xf32>
    %438 = vector.extract_strided_slice %5 {offsets = [3, 0], sizes = [1, 8], strides = [1, 1]} : vector<9x8xf32> to vector<1x8xf32>
    %439 = vector.broadcast %438 : vector<1x8xf32> to vector<16x8xf32>
    %440 = arith.mulf %437, %439 : vector<16x8xf32>
    %441 = arith.addf %435, %440 : vector<16x8xf32>
    %442 = vector.extract_strided_slice %10 {offsets = [8, 0, 0], sizes = [1, 16, 8], strides = [1, 1, 1]} : vector<18x16x8xf32> to vector<1x16x8xf32>
    %443 = vector.shape_cast %442 : vector<1x16x8xf32> to vector<16x8xf32>
    %444 = vector.extract_strided_slice %5 {offsets = [4, 0], sizes = [1, 8], strides = [1, 1]} : vector<9x8xf32> to vector<1x8xf32>
    %445 = vector.broadcast %444 : vector<1x8xf32> to vector<16x8xf32>
    %446 = arith.mulf %443, %445 : vector<16x8xf32>
    %447 = arith.addf %441, %446 : vector<16x8xf32>
    %448 = vector.extract_strided_slice %12 {offsets = [8, 0, 0], sizes = [1, 16, 8], strides = [1, 1, 1]} : vector<18x16x8xf32> to vector<1x16x8xf32>
    %449 = vector.shape_cast %448 : vector<1x16x8xf32> to vector<16x8xf32>
    %450 = vector.extract_strided_slice %5 {offsets = [5, 0], sizes = [1, 8], strides = [1, 1]} : vector<9x8xf32> to vector<1x8xf32>
    %451 = vector.broadcast %450 : vector<1x8xf32> to vector<16x8xf32>
    %452 = arith.mulf %449, %451 : vector<16x8xf32>
    %453 = arith.addf %447, %452 : vector<16x8xf32>
    %454 = vector.extract_strided_slice %8 {offsets = [9, 0, 0], sizes = [1, 16, 8], strides = [1, 1, 1]} : vector<18x16x8xf32> to vector<1x16x8xf32>
    %455 = vector.shape_cast %454 : vector<1x16x8xf32> to vector<16x8xf32>
    %456 = vector.extract_strided_slice %5 {offsets = [6, 0], sizes = [1, 8], strides = [1, 1]} : vector<9x8xf32> to vector<1x8xf32>
    %457 = vector.broadcast %456 : vector<1x8xf32> to vector<16x8xf32>
    %458 = arith.mulf %455, %457 : vector<16x8xf32>
    %459 = arith.addf %453, %458 : vector<16x8xf32>
    %460 = vector.extract_strided_slice %10 {offsets = [9, 0, 0], sizes = [1, 16, 8], strides = [1, 1, 1]} : vector<18x16x8xf32> to vector<1x16x8xf32>
    %461 = vector.shape_cast %460 : vector<1x16x8xf32> to vector<16x8xf32>
    %462 = vector.extract_strided_slice %5 {offsets = [7, 0], sizes = [1, 8], strides = [1, 1]} : vector<9x8xf32> to vector<1x8xf32>
    %463 = vector.broadcast %462 : vector<1x8xf32> to vector<16x8xf32>
    %464 = arith.mulf %461, %463 : vector<16x8xf32>
    %465 = arith.addf %459, %464 : vector<16x8xf32>
    %466 = vector.extract_strided_slice %12 {offsets = [9, 0, 0], sizes = [1, 16, 8], strides = [1, 1, 1]} : vector<18x16x8xf32> to vector<1x16x8xf32>
    %467 = vector.shape_cast %466 : vector<1x16x8xf32> to vector<16x8xf32>
    %468 = vector.extract_strided_slice %5 {offsets = [8, 0], sizes = [1, 8], strides = [1, 1]} : vector<9x8xf32> to vector<1x8xf32>
    %469 = vector.broadcast %468 : vector<1x8xf32> to vector<16x8xf32>
    %470 = arith.mulf %467, %469 : vector<16x8xf32>
    %471 = arith.addf %465, %470 : vector<16x8xf32>
    %472 = vector.broadcast %6 : vector<1x8xf32> to vector<16x8xf32>
    %473 = arith.addf %471, %472 : vector<16x8xf32>
    %c0_31 = arith.constant 0 : index
    %c7 = arith.constant 7 : index
    %c0_32 = arith.constant 0 : index
    %c0_33 = arith.constant 0 : index
    %474 = vector.load %arg5[%c0_31, %c7, %c0_32, %c0_33] : memref<2x16x16x8xf32, #tpu.memory_space<vmem>>, vector<1x1x16x8xf32>
    %475 = vector.shape_cast %474 : vector<1x1x16x8xf32> to vector<16x8xf32>
    %476 = vector.shape_cast %473 : vector<16x8xf32> to vector<1x1x16x8xf32>
    tpu.vector_store %arg5[%c0_31, %c7, %c0_32, %c0_33], %476 {strides = array<i32>} : memref<2x16x16x8xf32, #tpu.memory_space<vmem>>, vector<1x1x16x8xf32>,
    %477 = vector.extract_strided_slice %8 {offsets = [8, 0, 0], sizes = [1, 16, 8], strides = [1, 1, 1]} : vector<18x16x8xf32> to vector<1x16x8xf32>
    %478 = vector.shape_cast %477 : vector<1x16x8xf32> to vector<16x8xf32>
    %479 = vector.extract_strided_slice %5 {offsets = [0, 0], sizes = [1, 8], strides = [1, 1]} : vector<9x8xf32> to vector<1x8xf32>
    %480 = vector.broadcast %479 : vector<1x8xf32> to vector<16x8xf32>
    %481 = arith.mulf %478, %480 : vector<16x8xf32>
    %482 = vector.extract_strided_slice %10 {offsets = [8, 0, 0], sizes = [1, 16, 8], strides = [1, 1, 1]} : vector<18x16x8xf32> to vector<1x16x8xf32>
    %483 = vector.shape_cast %482 : vector<1x16x8xf32> to vector<16x8xf32>
    %484 = vector.extract_strided_slice %5 {offsets = [1, 0], sizes = [1, 8], strides = [1, 1]} : vector<9x8xf32> to vector<1x8xf32>
    %485 = vector.broadcast %484 : vector<1x8xf32> to vector<16x8xf32>
    %486 = arith.mulf %483, %485 : vector<16x8xf32>
    %487 = arith.addf %481, %486 : vector<16x8xf32>
    %488 = vector.extract_strided_slice %12 {offsets = [8, 0, 0], sizes = [1, 16, 8], strides = [1, 1, 1]} : vector<18x16x8xf32> to vector<1x16x8xf32>
    %489 = vector.shape_cast %488 : vector<1x16x8xf32> to vector<16x8xf32>
    %490 = vector.extract_strided_slice %5 {offsets = [2, 0], sizes = [1, 8], strides = [1, 1]} : vector<9x8xf32> to vector<1x8xf32>
    %491 = vector.broadcast %490 : vector<1x8xf32> to vector<16x8xf32>
    %492 = arith.mulf %489, %491 : vector<16x8xf32>
    %493 = arith.addf %487, %492 : vector<16x8xf32>
    %494 = vector.extract_strided_slice %8 {offsets = [9, 0, 0], sizes = [1, 16, 8], strides = [1, 1, 1]} : vector<18x16x8xf32> to vector<1x16x8xf32>
    %495 = vector.shape_cast %494 : vector<1x16x8xf32> to vector<16x8xf32>
    %496 = vector.extract_strided_slice %5 {offsets = [3, 0], sizes = [1, 8], strides = [1, 1]} : vector<9x8xf32> to vector<1x8xf32>
    %497 = vector.broadcast %496 : vector<1x8xf32> to vector<16x8xf32>
    %498 = arith.mulf %495, %497 : vector<16x8xf32>
    %499 = arith.addf %493, %498 : vector<16x8xf32>
    %500 = vector.extract_strided_slice %10 {offsets = [9, 0, 0], sizes = [1, 16, 8], strides = [1, 1, 1]} : vector<18x16x8xf32> to vector<1x16x8xf32>
    %501 = vector.shape_cast %500 : vector<1x16x8xf32> to vector<16x8xf32>
    %502 = vector.extract_strided_slice %5 {offsets = [4, 0], sizes = [1, 8], strides = [1, 1]} : vector<9x8xf32> to vector<1x8xf32>
    %503 = vector.broadcast %502 : vector<1x8xf32> to vector<16x8xf32>
    %504 = arith.mulf %501, %503 : vector<16x8xf32>
    %505 = arith.addf %499, %504 : vector<16x8xf32>
    %506 = vector.extract_strided_slice %12 {offsets = [9, 0, 0], sizes = [1, 16, 8], strides = [1, 1, 1]} : vector<18x16x8xf32> to vector<1x16x8xf32>
    %507 = vector.shape_cast %506 : vector<1x16x8xf32> to vector<16x8xf32>
    %508 = vector.extract_strided_slice %5 {offsets = [5, 0], sizes = [1, 8], strides = [1, 1]} : vector<9x8xf32> to vector<1x8xf32>
    %509 = vector.broadcast %508 : vector<1x8xf32> to vector<16x8xf32>
    %510 = arith.mulf %507, %509 : vector<16x8xf32>
    %511 = arith.addf %505, %510 : vector<16x8xf32>
    %512 = vector.extract_strided_slice %8 {offsets = [10, 0, 0], sizes = [1, 16, 8], strides = [1, 1, 1]} : vector<18x16x8xf32> to vector<1x16x8xf32>
    %513 = vector.shape_cast %512 : vector<1x16x8xf32> to vector<16x8xf32>
    %514 = vector.extract_strided_slice %5 {offsets = [6, 0], sizes = [1, 8], strides = [1, 1]} : vector<9x8xf32> to vector<1x8xf32>
    %515 = vector.broadcast %514 : vector<1x8xf32> to vector<16x8xf32>
    %516 = arith.mulf %513, %515 : vector<16x8xf32>
    %517 = arith.addf %511, %516 : vector<16x8xf32>
    %518 = vector.extract_strided_slice %10 {offsets = [10, 0, 0], sizes = [1, 16, 8], strides = [1, 1, 1]} : vector<18x16x8xf32> to vector<1x16x8xf32>
    %519 = vector.shape_cast %518 : vector<1x16x8xf32> to vector<16x8xf32>
    %520 = vector.extract_strided_slice %5 {offsets = [7, 0], sizes = [1, 8], strides = [1, 1]} : vector<9x8xf32> to vector<1x8xf32>
    %521 = vector.broadcast %520 : vector<1x8xf32> to vector<16x8xf32>
    %522 = arith.mulf %519, %521 : vector<16x8xf32>
    %523 = arith.addf %517, %522 : vector<16x8xf32>
    %524 = vector.extract_strided_slice %12 {offsets = [10, 0, 0], sizes = [1, 16, 8], strides = [1, 1, 1]} : vector<18x16x8xf32> to vector<1x16x8xf32>
    %525 = vector.shape_cast %524 : vector<1x16x8xf32> to vector<16x8xf32>
    %526 = vector.extract_strided_slice %5 {offsets = [8, 0], sizes = [1, 8], strides = [1, 1]} : vector<9x8xf32> to vector<1x8xf32>
    %527 = vector.broadcast %526 : vector<1x8xf32> to vector<16x8xf32>
    %528 = arith.mulf %525, %527 : vector<16x8xf32>
    %529 = arith.addf %523, %528 : vector<16x8xf32>
    %530 = vector.broadcast %6 : vector<1x8xf32> to vector<16x8xf32>
    %531 = arith.addf %529, %530 : vector<16x8xf32>
    %c0_34 = arith.constant 0 : index
    %c8 = arith.constant 8 : index
    %c0_35 = arith.constant 0 : index
    %c0_36 = arith.constant 0 : index
    %532 = vector.load %arg5[%c0_34, %c8, %c0_35, %c0_36] : memref<2x16x16x8xf32, #tpu.memory_space<vmem>>, vector<1x1x16x8xf32>
    %533 = vector.shape_cast %532 : vector<1x1x16x8xf32> to vector<16x8xf32>
    %534 = vector.shape_cast %531 : vector<16x8xf32> to vector<1x1x16x8xf32>
    tpu.vector_store %arg5[%c0_34, %c8, %c0_35, %c0_36], %534 {strides = array<i32>} : memref<2x16x16x8xf32, #tpu.memory_space<vmem>>, vector<1x1x16x8xf32>,
    %535 = vector.extract_strided_slice %8 {offsets = [9, 0, 0], sizes = [1, 16, 8], strides = [1, 1, 1]} : vector<18x16x8xf32> to vector<1x16x8xf32>
    %536 = vector.shape_cast %535 : vector<1x16x8xf32> to vector<16x8xf32>
    %537 = vector.extract_strided_slice %5 {offsets = [0, 0], sizes = [1, 8], strides = [1, 1]} : vector<9x8xf32> to vector<1x8xf32>
    %538 = vector.broadcast %537 : vector<1x8xf32> to vector<16x8xf32>
    %539 = arith.mulf %536, %538 : vector<16x8xf32>
    %540 = vector.extract_strided_slice %10 {offsets = [9, 0, 0], sizes = [1, 16, 8], strides = [1, 1, 1]} : vector<18x16x8xf32> to vector<1x16x8xf32>
    %541 = vector.shape_cast %540 : vector<1x16x8xf32> to vector<16x8xf32>
    %542 = vector.extract_strided_slice %5 {offsets = [1, 0], sizes = [1, 8], strides = [1, 1]} : vector<9x8xf32> to vector<1x8xf32>
    %543 = vector.broadcast %542 : vector<1x8xf32> to vector<16x8xf32>
    %544 = arith.mulf %541, %543 : vector<16x8xf32>
    %545 = arith.addf %539, %544 : vector<16x8xf32>
    %546 = vector.extract_strided_slice %12 {offsets = [9, 0, 0], sizes = [1, 16, 8], strides = [1, 1, 1]} : vector<18x16x8xf32> to vector<1x16x8xf32>
    %547 = vector.shape_cast %546 : vector<1x16x8xf32> to vector<16x8xf32>
    %548 = vector.extract_strided_slice %5 {offsets = [2, 0], sizes = [1, 8], strides = [1, 1]} : vector<9x8xf32> to vector<1x8xf32>
    %549 = vector.broadcast %548 : vector<1x8xf32> to vector<16x8xf32>
    %550 = arith.mulf %547, %549 : vector<16x8xf32>
    %551 = arith.addf %545, %550 : vector<16x8xf32>
    %552 = vector.extract_strided_slice %8 {offsets = [10, 0, 0], sizes = [1, 16, 8], strides = [1, 1, 1]} : vector<18x16x8xf32> to vector<1x16x8xf32>
    %553 = vector.shape_cast %552 : vector<1x16x8xf32> to vector<16x8xf32>
    %554 = vector.extract_strided_slice %5 {offsets = [3, 0], sizes = [1, 8], strides = [1, 1]} : vector<9x8xf32> to vector<1x8xf32>
    %555 = vector.broadcast %554 : vector<1x8xf32> to vector<16x8xf32>
    %556 = arith.mulf %553, %555 : vector<16x8xf32>
    %557 = arith.addf %551, %556 : vector<16x8xf32>
    %558 = vector.extract_strided_slice %10 {offsets = [10, 0, 0], sizes = [1, 16, 8], strides = [1, 1, 1]} : vector<18x16x8xf32> to vector<1x16x8xf32>
    %559 = vector.shape_cast %558 : vector<1x16x8xf32> to vector<16x8xf32>
    %560 = vector.extract_strided_slice %5 {offsets = [4, 0], sizes = [1, 8], strides = [1, 1]} : vector<9x8xf32> to vector<1x8xf32>
    %561 = vector.broadcast %560 : vector<1x8xf32> to vector<16x8xf32>
    %562 = arith.mulf %559, %561 : vector<16x8xf32>
    %563 = arith.addf %557, %562 : vector<16x8xf32>
    %564 = vector.extract_strided_slice %12 {offsets = [10, 0, 0], sizes = [1, 16, 8], strides = [1, 1, 1]} : vector<18x16x8xf32> to vector<1x16x8xf32>
    %565 = vector.shape_cast %564 : vector<1x16x8xf32> to vector<16x8xf32>
    %566 = vector.extract_strided_slice %5 {offsets = [5, 0], sizes = [1, 8], strides = [1, 1]} : vector<9x8xf32> to vector<1x8xf32>
    %567 = vector.broadcast %566 : vector<1x8xf32> to vector<16x8xf32>
    %568 = arith.mulf %565, %567 : vector<16x8xf32>
    %569 = arith.addf %563, %568 : vector<16x8xf32>
    %570 = vector.extract_strided_slice %8 {offsets = [11, 0, 0], sizes = [1, 16, 8], strides = [1, 1, 1]} : vector<18x16x8xf32> to vector<1x16x8xf32>
    %571 = vector.shape_cast %570 : vector<1x16x8xf32> to vector<16x8xf32>
    %572 = vector.extract_strided_slice %5 {offsets = [6, 0], sizes = [1, 8], strides = [1, 1]} : vector<9x8xf32> to vector<1x8xf32>
    %573 = vector.broadcast %572 : vector<1x8xf32> to vector<16x8xf32>
    %574 = arith.mulf %571, %573 : vector<16x8xf32>
    %575 = arith.addf %569, %574 : vector<16x8xf32>
    %576 = vector.extract_strided_slice %10 {offsets = [11, 0, 0], sizes = [1, 16, 8], strides = [1, 1, 1]} : vector<18x16x8xf32> to vector<1x16x8xf32>
    %577 = vector.shape_cast %576 : vector<1x16x8xf32> to vector<16x8xf32>
    %578 = vector.extract_strided_slice %5 {offsets = [7, 0], sizes = [1, 8], strides = [1, 1]} : vector<9x8xf32> to vector<1x8xf32>
    %579 = vector.broadcast %578 : vector<1x8xf32> to vector<16x8xf32>
    %580 = arith.mulf %577, %579 : vector<16x8xf32>
    %581 = arith.addf %575, %580 : vector<16x8xf32>
    %582 = vector.extract_strided_slice %12 {offsets = [11, 0, 0], sizes = [1, 16, 8], strides = [1, 1, 1]} : vector<18x16x8xf32> to vector<1x16x8xf32>
    %583 = vector.shape_cast %582 : vector<1x16x8xf32> to vector<16x8xf32>
    %584 = vector.extract_strided_slice %5 {offsets = [8, 0], sizes = [1, 8], strides = [1, 1]} : vector<9x8xf32> to vector<1x8xf32>
    %585 = vector.broadcast %584 : vector<1x8xf32> to vector<16x8xf32>
    %586 = arith.mulf %583, %585 : vector<16x8xf32>
    %587 = arith.addf %581, %586 : vector<16x8xf32>
    %588 = vector.broadcast %6 : vector<1x8xf32> to vector<16x8xf32>
    %589 = arith.addf %587, %588 : vector<16x8xf32>
    %c0_37 = arith.constant 0 : index
    %c9 = arith.constant 9 : index
    %c0_38 = arith.constant 0 : index
    %c0_39 = arith.constant 0 : index
    %590 = vector.load %arg5[%c0_37, %c9, %c0_38, %c0_39] : memref<2x16x16x8xf32, #tpu.memory_space<vmem>>, vector<1x1x16x8xf32>
    %591 = vector.shape_cast %590 : vector<1x1x16x8xf32> to vector<16x8xf32>
    %592 = vector.shape_cast %589 : vector<16x8xf32> to vector<1x1x16x8xf32>
    tpu.vector_store %arg5[%c0_37, %c9, %c0_38, %c0_39], %592 {strides = array<i32>} : memref<2x16x16x8xf32, #tpu.memory_space<vmem>>, vector<1x1x16x8xf32>,
    %593 = vector.extract_strided_slice %8 {offsets = [10, 0, 0], sizes = [1, 16, 8], strides = [1, 1, 1]} : vector<18x16x8xf32> to vector<1x16x8xf32>
    %594 = vector.shape_cast %593 : vector<1x16x8xf32> to vector<16x8xf32>
    %595 = vector.extract_strided_slice %5 {offsets = [0, 0], sizes = [1, 8], strides = [1, 1]} : vector<9x8xf32> to vector<1x8xf32>
    %596 = vector.broadcast %595 : vector<1x8xf32> to vector<16x8xf32>
    %597 = arith.mulf %594, %596 : vector<16x8xf32>
    %598 = vector.extract_strided_slice %10 {offsets = [10, 0, 0], sizes = [1, 16, 8], strides = [1, 1, 1]} : vector<18x16x8xf32> to vector<1x16x8xf32>
    %599 = vector.shape_cast %598 : vector<1x16x8xf32> to vector<16x8xf32>
    %600 = vector.extract_strided_slice %5 {offsets = [1, 0], sizes = [1, 8], strides = [1, 1]} : vector<9x8xf32> to vector<1x8xf32>
    %601 = vector.broadcast %600 : vector<1x8xf32> to vector<16x8xf32>
    %602 = arith.mulf %599, %601 : vector<16x8xf32>
    %603 = arith.addf %597, %602 : vector<16x8xf32>
    %604 = vector.extract_strided_slice %12 {offsets = [10, 0, 0], sizes = [1, 16, 8], strides = [1, 1, 1]} : vector<18x16x8xf32> to vector<1x16x8xf32>
    %605 = vector.shape_cast %604 : vector<1x16x8xf32> to vector<16x8xf32>
    %606 = vector.extract_strided_slice %5 {offsets = [2, 0], sizes = [1, 8], strides = [1, 1]} : vector<9x8xf32> to vector<1x8xf32>
    %607 = vector.broadcast %606 : vector<1x8xf32> to vector<16x8xf32>
    %608 = arith.mulf %605, %607 : vector<16x8xf32>
    %609 = arith.addf %603, %608 : vector<16x8xf32>
    %610 = vector.extract_strided_slice %8 {offsets = [11, 0, 0], sizes = [1, 16, 8], strides = [1, 1, 1]} : vector<18x16x8xf32> to vector<1x16x8xf32>
    %611 = vector.shape_cast %610 : vector<1x16x8xf32> to vector<16x8xf32>
    %612 = vector.extract_strided_slice %5 {offsets = [3, 0], sizes = [1, 8], strides = [1, 1]} : vector<9x8xf32> to vector<1x8xf32>
    %613 = vector.broadcast %612 : vector<1x8xf32> to vector<16x8xf32>
    %614 = arith.mulf %611, %613 : vector<16x8xf32>
    %615 = arith.addf %609, %614 : vector<16x8xf32>
    %616 = vector.extract_strided_slice %10 {offsets = [11, 0, 0], sizes = [1, 16, 8], strides = [1, 1, 1]} : vector<18x16x8xf32> to vector<1x16x8xf32>
    %617 = vector.shape_cast %616 : vector<1x16x8xf32> to vector<16x8xf32>
    %618 = vector.extract_strided_slice %5 {offsets = [4, 0], sizes = [1, 8], strides = [1, 1]} : vector<9x8xf32> to vector<1x8xf32>
    %619 = vector.broadcast %618 : vector<1x8xf32> to vector<16x8xf32>
    %620 = arith.mulf %617, %619 : vector<16x8xf32>
    %621 = arith.addf %615, %620 : vector<16x8xf32>
    %622 = vector.extract_strided_slice %12 {offsets = [11, 0, 0], sizes = [1, 16, 8], strides = [1, 1, 1]} : vector<18x16x8xf32> to vector<1x16x8xf32>
    %623 = vector.shape_cast %622 : vector<1x16x8xf32> to vector<16x8xf32>
    %624 = vector.extract_strided_slice %5 {offsets = [5, 0], sizes = [1, 8], strides = [1, 1]} : vector<9x8xf32> to vector<1x8xf32>
    %625 = vector.broadcast %624 : vector<1x8xf32> to vector<16x8xf32>
    %626 = arith.mulf %623, %625 : vector<16x8xf32>
    %627 = arith.addf %621, %626 : vector<16x8xf32>
    %628 = vector.extract_strided_slice %8 {offsets = [12, 0, 0], sizes = [1, 16, 8], strides = [1, 1, 1]} : vector<18x16x8xf32> to vector<1x16x8xf32>
    %629 = vector.shape_cast %628 : vector<1x16x8xf32> to vector<16x8xf32>
    %630 = vector.extract_strided_slice %5 {offsets = [6, 0], sizes = [1, 8], strides = [1, 1]} : vector<9x8xf32> to vector<1x8xf32>
    %631 = vector.broadcast %630 : vector<1x8xf32> to vector<16x8xf32>
    %632 = arith.mulf %629, %631 : vector<16x8xf32>
    %633 = arith.addf %627, %632 : vector<16x8xf32>
    %634 = vector.extract_strided_slice %10 {offsets = [12, 0, 0], sizes = [1, 16, 8], strides = [1, 1, 1]} : vector<18x16x8xf32> to vector<1x16x8xf32>
    %635 = vector.shape_cast %634 : vector<1x16x8xf32> to vector<16x8xf32>
    %636 = vector.extract_strided_slice %5 {offsets = [7, 0], sizes = [1, 8], strides = [1, 1]} : vector<9x8xf32> to vector<1x8xf32>
    %637 = vector.broadcast %636 : vector<1x8xf32> to vector<16x8xf32>
    %638 = arith.mulf %635, %637 : vector<16x8xf32>
    %639 = arith.addf %633, %638 : vector<16x8xf32>
    %640 = vector.extract_strided_slice %12 {offsets = [12, 0, 0], sizes = [1, 16, 8], strides = [1, 1, 1]} : vector<18x16x8xf32> to vector<1x16x8xf32>
    %641 = vector.shape_cast %640 : vector<1x16x8xf32> to vector<16x8xf32>
    %642 = vector.extract_strided_slice %5 {offsets = [8, 0], sizes = [1, 8], strides = [1, 1]} : vector<9x8xf32> to vector<1x8xf32>
    %643 = vector.broadcast %642 : vector<1x8xf32> to vector<16x8xf32>
    %644 = arith.mulf %641, %643 : vector<16x8xf32>
    %645 = arith.addf %639, %644 : vector<16x8xf32>
    %646 = vector.broadcast %6 : vector<1x8xf32> to vector<16x8xf32>
    %647 = arith.addf %645, %646 : vector<16x8xf32>
    %c0_40 = arith.constant 0 : index
    %c10 = arith.constant 10 : index
    %c0_41 = arith.constant 0 : index
    %c0_42 = arith.constant 0 : index
    %648 = vector.load %arg5[%c0_40, %c10, %c0_41, %c0_42] : memref<2x16x16x8xf32, #tpu.memory_space<vmem>>, vector<1x1x16x8xf32>
    %649 = vector.shape_cast %648 : vector<1x1x16x8xf32> to vector<16x8xf32>
    %650 = vector.shape_cast %647 : vector<16x8xf32> to vector<1x1x16x8xf32>
    tpu.vector_store %arg5[%c0_40, %c10, %c0_41, %c0_42], %650 {strides = array<i32>} : memref<2x16x16x8xf32, #tpu.memory_space<vmem>>, vector<1x1x16x8xf32>,
    %651 = vector.extract_strided_slice %8 {offsets = [11, 0, 0], sizes = [1, 16, 8], strides = [1, 1, 1]} : vector<18x16x8xf32> to vector<1x16x8xf32>
    %652 = vector.shape_cast %651 : vector<1x16x8xf32> to vector<16x8xf32>
    %653 = vector.extract_strided_slice %5 {offsets = [0, 0], sizes = [1, 8], strides = [1, 1]} : vector<9x8xf32> to vector<1x8xf32>
    %654 = vector.broadcast %653 : vector<1x8xf32> to vector<16x8xf32>
    %655 = arith.mulf %652, %654 : vector<16x8xf32>
    %656 = vector.extract_strided_slice %10 {offsets = [11, 0, 0], sizes = [1, 16, 8], strides = [1, 1, 1]} : vector<18x16x8xf32> to vector<1x16x8xf32>
    %657 = vector.shape_cast %656 : vector<1x16x8xf32> to vector<16x8xf32>
    %658 = vector.extract_strided_slice %5 {offsets = [1, 0], sizes = [1, 8], strides = [1, 1]} : vector<9x8xf32> to vector<1x8xf32>
    %659 = vector.broadcast %658 : vector<1x8xf32> to vector<16x8xf32>
    %660 = arith.mulf %657, %659 : vector<16x8xf32>
    %661 = arith.addf %655, %660 : vector<16x8xf32>
    %662 = vector.extract_strided_slice %12 {offsets = [11, 0, 0], sizes = [1, 16, 8], strides = [1, 1, 1]} : vector<18x16x8xf32> to vector<1x16x8xf32>
    %663 = vector.shape_cast %662 : vector<1x16x8xf32> to vector<16x8xf32>
    %664 = vector.extract_strided_slice %5 {offsets = [2, 0], sizes = [1, 8], strides = [1, 1]} : vector<9x8xf32> to vector<1x8xf32>
    %665 = vector.broadcast %664 : vector<1x8xf32> to vector<16x8xf32>
    %666 = arith.mulf %663, %665 : vector<16x8xf32>
    %667 = arith.addf %661, %666 : vector<16x8xf32>
    %668 = vector.extract_strided_slice %8 {offsets = [12, 0, 0], sizes = [1, 16, 8], strides = [1, 1, 1]} : vector<18x16x8xf32> to vector<1x16x8xf32>
    %669 = vector.shape_cast %668 : vector<1x16x8xf32> to vector<16x8xf32>
    %670 = vector.extract_strided_slice %5 {offsets = [3, 0], sizes = [1, 8], strides = [1, 1]} : vector<9x8xf32> to vector<1x8xf32>
    %671 = vector.broadcast %670 : vector<1x8xf32> to vector<16x8xf32>
    %672 = arith.mulf %669, %671 : vector<16x8xf32>
    %673 = arith.addf %667, %672 : vector<16x8xf32>
    %674 = vector.extract_strided_slice %10 {offsets = [12, 0, 0], sizes = [1, 16, 8], strides = [1, 1, 1]} : vector<18x16x8xf32> to vector<1x16x8xf32>
    %675 = vector.shape_cast %674 : vector<1x16x8xf32> to vector<16x8xf32>
    %676 = vector.extract_strided_slice %5 {offsets = [4, 0], sizes = [1, 8], strides = [1, 1]} : vector<9x8xf32> to vector<1x8xf32>
    %677 = vector.broadcast %676 : vector<1x8xf32> to vector<16x8xf32>
    %678 = arith.mulf %675, %677 : vector<16x8xf32>
    %679 = arith.addf %673, %678 : vector<16x8xf32>
    %680 = vector.extract_strided_slice %12 {offsets = [12, 0, 0], sizes = [1, 16, 8], strides = [1, 1, 1]} : vector<18x16x8xf32> to vector<1x16x8xf32>
    %681 = vector.shape_cast %680 : vector<1x16x8xf32> to vector<16x8xf32>
    %682 = vector.extract_strided_slice %5 {offsets = [5, 0], sizes = [1, 8], strides = [1, 1]} : vector<9x8xf32> to vector<1x8xf32>
    %683 = vector.broadcast %682 : vector<1x8xf32> to vector<16x8xf32>
    %684 = arith.mulf %681, %683 : vector<16x8xf32>
    %685 = arith.addf %679, %684 : vector<16x8xf32>
    %686 = vector.extract_strided_slice %8 {offsets = [13, 0, 0], sizes = [1, 16, 8], strides = [1, 1, 1]} : vector<18x16x8xf32> to vector<1x16x8xf32>
    %687 = vector.shape_cast %686 : vector<1x16x8xf32> to vector<16x8xf32>
    %688 = vector.extract_strided_slice %5 {offsets = [6, 0], sizes = [1, 8], strides = [1, 1]} : vector<9x8xf32> to vector<1x8xf32>
    %689 = vector.broadcast %688 : vector<1x8xf32> to vector<16x8xf32>
    %690 = arith.mulf %687, %689 : vector<16x8xf32>
    %691 = arith.addf %685, %690 : vector<16x8xf32>
    %692 = vector.extract_strided_slice %10 {offsets = [13, 0, 0], sizes = [1, 16, 8], strides = [1, 1, 1]} : vector<18x16x8xf32> to vector<1x16x8xf32>
    %693 = vector.shape_cast %692 : vector<1x16x8xf32> to vector<16x8xf32>
    %694 = vector.extract_strided_slice %5 {offsets = [7, 0], sizes = [1, 8], strides = [1, 1]} : vector<9x8xf32> to vector<1x8xf32>
    %695 = vector.broadcast %694 : vector<1x8xf32> to vector<16x8xf32>
    %696 = arith.mulf %693, %695 : vector<16x8xf32>
    %697 = arith.addf %691, %696 : vector<16x8xf32>
    %698 = vector.extract_strided_slice %12 {offsets = [13, 0, 0], sizes = [1, 16, 8], strides = [1, 1, 1]} : vector<18x16x8xf32> to vector<1x16x8xf32>
    %699 = vector.shape_cast %698 : vector<1x16x8xf32> to vector<16x8xf32>
    %700 = vector.extract_strided_slice %5 {offsets = [8, 0], sizes = [1, 8], strides = [1, 1]} : vector<9x8xf32> to vector<1x8xf32>
    %701 = vector.broadcast %700 : vector<1x8xf32> to vector<16x8xf32>
    %702 = arith.mulf %699, %701 : vector<16x8xf32>
    %703 = arith.addf %697, %702 : vector<16x8xf32>
    %704 = vector.broadcast %6 : vector<1x8xf32> to vector<16x8xf32>
    %705 = arith.addf %703, %704 : vector<16x8xf32>
    %c0_43 = arith.constant 0 : index
    %c11 = arith.constant 11 : index
    %c0_44 = arith.constant 0 : index
    %c0_45 = arith.constant 0 : index
    %706 = vector.load %arg5[%c0_43, %c11, %c0_44, %c0_45] : memref<2x16x16x8xf32, #tpu.memory_space<vmem>>, vector<1x1x16x8xf32>
    %707 = vector.shape_cast %706 : vector<1x1x16x8xf32> to vector<16x8xf32>
    %708 = vector.shape_cast %705 : vector<16x8xf32> to vector<1x1x16x8xf32>
    tpu.vector_store %arg5[%c0_43, %c11, %c0_44, %c0_45], %708 {strides = array<i32>} : memref<2x16x16x8xf32, #tpu.memory_space<vmem>>, vector<1x1x16x8xf32>,
    %709 = vector.extract_strided_slice %8 {offsets = [12, 0, 0], sizes = [1, 16, 8], strides = [1, 1, 1]} : vector<18x16x8xf32> to vector<1x16x8xf32>
    %710 = vector.shape_cast %709 : vector<1x16x8xf32> to vector<16x8xf32>
    %711 = vector.extract_strided_slice %5 {offsets = [0, 0], sizes = [1, 8], strides = [1, 1]} : vector<9x8xf32> to vector<1x8xf32>
    %712 = vector.broadcast %711 : vector<1x8xf32> to vector<16x8xf32>
    %713 = arith.mulf %710, %712 : vector<16x8xf32>
    %714 = vector.extract_strided_slice %10 {offsets = [12, 0, 0], sizes = [1, 16, 8], strides = [1, 1, 1]} : vector<18x16x8xf32> to vector<1x16x8xf32>
    %715 = vector.shape_cast %714 : vector<1x16x8xf32> to vector<16x8xf32>
    %716 = vector.extract_strided_slice %5 {offsets = [1, 0], sizes = [1, 8], strides = [1, 1]} : vector<9x8xf32> to vector<1x8xf32>
    %717 = vector.broadcast %716 : vector<1x8xf32> to vector<16x8xf32>
    %718 = arith.mulf %715, %717 : vector<16x8xf32>
    %719 = arith.addf %713, %718 : vector<16x8xf32>
    %720 = vector.extract_strided_slice %12 {offsets = [12, 0, 0], sizes = [1, 16, 8], strides = [1, 1, 1]} : vector<18x16x8xf32> to vector<1x16x8xf32>
    %721 = vector.shape_cast %720 : vector<1x16x8xf32> to vector<16x8xf32>
    %722 = vector.extract_strided_slice %5 {offsets = [2, 0], sizes = [1, 8], strides = [1, 1]} : vector<9x8xf32> to vector<1x8xf32>
    %723 = vector.broadcast %722 : vector<1x8xf32> to vector<16x8xf32>
    %724 = arith.mulf %721, %723 : vector<16x8xf32>
    %725 = arith.addf %719, %724 : vector<16x8xf32>
    %726 = vector.extract_strided_slice %8 {offsets = [13, 0, 0], sizes = [1, 16, 8], strides = [1, 1, 1]} : vector<18x16x8xf32> to vector<1x16x8xf32>
    %727 = vector.shape_cast %726 : vector<1x16x8xf32> to vector<16x8xf32>
    %728 = vector.extract_strided_slice %5 {offsets = [3, 0], sizes = [1, 8], strides = [1, 1]} : vector<9x8xf32> to vector<1x8xf32>
    %729 = vector.broadcast %728 : vector<1x8xf32> to vector<16x8xf32>
    %730 = arith.mulf %727, %729 : vector<16x8xf32>
    %731 = arith.addf %725, %730 : vector<16x8xf32>
    %732 = vector.extract_strided_slice %10 {offsets = [13, 0, 0], sizes = [1, 16, 8], strides = [1, 1, 1]} : vector<18x16x8xf32> to vector<1x16x8xf32>
    %733 = vector.shape_cast %732 : vector<1x16x8xf32> to vector<16x8xf32>
    %734 = vector.extract_strided_slice %5 {offsets = [4, 0], sizes = [1, 8], strides = [1, 1]} : vector<9x8xf32> to vector<1x8xf32>
    %735 = vector.broadcast %734 : vector<1x8xf32> to vector<16x8xf32>
    %736 = arith.mulf %733, %735 : vector<16x8xf32>
    %737 = arith.addf %731, %736 : vector<16x8xf32>
    %738 = vector.extract_strided_slice %12 {offsets = [13, 0, 0], sizes = [1, 16, 8], strides = [1, 1, 1]} : vector<18x16x8xf32> to vector<1x16x8xf32>
    %739 = vector.shape_cast %738 : vector<1x16x8xf32> to vector<16x8xf32>
    %740 = vector.extract_strided_slice %5 {offsets = [5, 0], sizes = [1, 8], strides = [1, 1]} : vector<9x8xf32> to vector<1x8xf32>
    %741 = vector.broadcast %740 : vector<1x8xf32> to vector<16x8xf32>
    %742 = arith.mulf %739, %741 : vector<16x8xf32>
    %743 = arith.addf %737, %742 : vector<16x8xf32>
    %744 = vector.extract_strided_slice %8 {offsets = [14, 0, 0], sizes = [1, 16, 8], strides = [1, 1, 1]} : vector<18x16x8xf32> to vector<1x16x8xf32>
    %745 = vector.shape_cast %744 : vector<1x16x8xf32> to vector<16x8xf32>
    %746 = vector.extract_strided_slice %5 {offsets = [6, 0], sizes = [1, 8], strides = [1, 1]} : vector<9x8xf32> to vector<1x8xf32>
    %747 = vector.broadcast %746 : vector<1x8xf32> to vector<16x8xf32>
    %748 = arith.mulf %745, %747 : vector<16x8xf32>
    %749 = arith.addf %743, %748 : vector<16x8xf32>
    %750 = vector.extract_strided_slice %10 {offsets = [14, 0, 0], sizes = [1, 16, 8], strides = [1, 1, 1]} : vector<18x16x8xf32> to vector<1x16x8xf32>
    %751 = vector.shape_cast %750 : vector<1x16x8xf32> to vector<16x8xf32>
    %752 = vector.extract_strided_slice %5 {offsets = [7, 0], sizes = [1, 8], strides = [1, 1]} : vector<9x8xf32> to vector<1x8xf32>
    %753 = vector.broadcast %752 : vector<1x8xf32> to vector<16x8xf32>
    %754 = arith.mulf %751, %753 : vector<16x8xf32>
    %755 = arith.addf %749, %754 : vector<16x8xf32>
    %756 = vector.extract_strided_slice %12 {offsets = [14, 0, 0], sizes = [1, 16, 8], strides = [1, 1, 1]} : vector<18x16x8xf32> to vector<1x16x8xf32>
    %757 = vector.shape_cast %756 : vector<1x16x8xf32> to vector<16x8xf32>
    %758 = vector.extract_strided_slice %5 {offsets = [8, 0], sizes = [1, 8], strides = [1, 1]} : vector<9x8xf32> to vector<1x8xf32>
    %759 = vector.broadcast %758 : vector<1x8xf32> to vector<16x8xf32>
    %760 = arith.mulf %757, %759 : vector<16x8xf32>
    %761 = arith.addf %755, %760 : vector<16x8xf32>
    %762 = vector.broadcast %6 : vector<1x8xf32> to vector<16x8xf32>
    %763 = arith.addf %761, %762 : vector<16x8xf32>
    %c0_46 = arith.constant 0 : index
    %c12 = arith.constant 12 : index
    %c0_47 = arith.constant 0 : index
    %c0_48 = arith.constant 0 : index
    %764 = vector.load %arg5[%c0_46, %c12, %c0_47, %c0_48] : memref<2x16x16x8xf32, #tpu.memory_space<vmem>>, vector<1x1x16x8xf32>
    %765 = vector.shape_cast %764 : vector<1x1x16x8xf32> to vector<16x8xf32>
    %766 = vector.shape_cast %763 : vector<16x8xf32> to vector<1x1x16x8xf32>
    tpu.vector_store %arg5[%c0_46, %c12, %c0_47, %c0_48], %766 {strides = array<i32>} : memref<2x16x16x8xf32, #tpu.memory_space<vmem>>, vector<1x1x16x8xf32>,
    %767 = vector.extract_strided_slice %8 {offsets = [13, 0, 0], sizes = [1, 16, 8], strides = [1, 1, 1]} : vector<18x16x8xf32> to vector<1x16x8xf32>
    %768 = vector.shape_cast %767 : vector<1x16x8xf32> to vector<16x8xf32>
    %769 = vector.extract_strided_slice %5 {offsets = [0, 0], sizes = [1, 8], strides = [1, 1]} : vector<9x8xf32> to vector<1x8xf32>
    %770 = vector.broadcast %769 : vector<1x8xf32> to vector<16x8xf32>
    %771 = arith.mulf %768, %770 : vector<16x8xf32>
    %772 = vector.extract_strided_slice %10 {offsets = [13, 0, 0], sizes = [1, 16, 8], strides = [1, 1, 1]} : vector<18x16x8xf32> to vector<1x16x8xf32>
    %773 = vector.shape_cast %772 : vector<1x16x8xf32> to vector<16x8xf32>
    %774 = vector.extract_strided_slice %5 {offsets = [1, 0], sizes = [1, 8], strides = [1, 1]} : vector<9x8xf32> to vector<1x8xf32>
    %775 = vector.broadcast %774 : vector<1x8xf32> to vector<16x8xf32>
    %776 = arith.mulf %773, %775 : vector<16x8xf32>
    %777 = arith.addf %771, %776 : vector<16x8xf32>
    %778 = vector.extract_strided_slice %12 {offsets = [13, 0, 0], sizes = [1, 16, 8], strides = [1, 1, 1]} : vector<18x16x8xf32> to vector<1x16x8xf32>
    %779 = vector.shape_cast %778 : vector<1x16x8xf32> to vector<16x8xf32>
    %780 = vector.extract_strided_slice %5 {offsets = [2, 0], sizes = [1, 8], strides = [1, 1]} : vector<9x8xf32> to vector<1x8xf32>
    %781 = vector.broadcast %780 : vector<1x8xf32> to vector<16x8xf32>
    %782 = arith.mulf %779, %781 : vector<16x8xf32>
    %783 = arith.addf %777, %782 : vector<16x8xf32>
    %784 = vector.extract_strided_slice %8 {offsets = [14, 0, 0], sizes = [1, 16, 8], strides = [1, 1, 1]} : vector<18x16x8xf32> to vector<1x16x8xf32>
    %785 = vector.shape_cast %784 : vector<1x16x8xf32> to vector<16x8xf32>
    %786 = vector.extract_strided_slice %5 {offsets = [3, 0], sizes = [1, 8], strides = [1, 1]} : vector<9x8xf32> to vector<1x8xf32>
    %787 = vector.broadcast %786 : vector<1x8xf32> to vector<16x8xf32>
    %788 = arith.mulf %785, %787 : vector<16x8xf32>
    %789 = arith.addf %783, %788 : vector<16x8xf32>
    %790 = vector.extract_strided_slice %10 {offsets = [14, 0, 0], sizes = [1, 16, 8], strides = [1, 1, 1]} : vector<18x16x8xf32> to vector<1x16x8xf32>
    %791 = vector.shape_cast %790 : vector<1x16x8xf32> to vector<16x8xf32>
    %792 = vector.extract_strided_slice %5 {offsets = [4, 0], sizes = [1, 8], strides = [1, 1]} : vector<9x8xf32> to vector<1x8xf32>
    %793 = vector.broadcast %792 : vector<1x8xf32> to vector<16x8xf32>
    %794 = arith.mulf %791, %793 : vector<16x8xf32>
    %795 = arith.addf %789, %794 : vector<16x8xf32>
    %796 = vector.extract_strided_slice %12 {offsets = [14, 0, 0], sizes = [1, 16, 8], strides = [1, 1, 1]} : vector<18x16x8xf32> to vector<1x16x8xf32>
    %797 = vector.shape_cast %796 : vector<1x16x8xf32> to vector<16x8xf32>
    %798 = vector.extract_strided_slice %5 {offsets = [5, 0], sizes = [1, 8], strides = [1, 1]} : vector<9x8xf32> to vector<1x8xf32>
    %799 = vector.broadcast %798 : vector<1x8xf32> to vector<16x8xf32>
    %800 = arith.mulf %797, %799 : vector<16x8xf32>
    %801 = arith.addf %795, %800 : vector<16x8xf32>
    %802 = vector.extract_strided_slice %8 {offsets = [15, 0, 0], sizes = [1, 16, 8], strides = [1, 1, 1]} : vector<18x16x8xf32> to vector<1x16x8xf32>
    %803 = vector.shape_cast %802 : vector<1x16x8xf32> to vector<16x8xf32>
    %804 = vector.extract_strided_slice %5 {offsets = [6, 0], sizes = [1, 8], strides = [1, 1]} : vector<9x8xf32> to vector<1x8xf32>
    %805 = vector.broadcast %804 : vector<1x8xf32> to vector<16x8xf32>
    %806 = arith.mulf %803, %805 : vector<16x8xf32>
    %807 = arith.addf %801, %806 : vector<16x8xf32>
    %808 = vector.extract_strided_slice %10 {offsets = [15, 0, 0], sizes = [1, 16, 8], strides = [1, 1, 1]} : vector<18x16x8xf32> to vector<1x16x8xf32>
    %809 = vector.shape_cast %808 : vector<1x16x8xf32> to vector<16x8xf32>
    %810 = vector.extract_strided_slice %5 {offsets = [7, 0], sizes = [1, 8], strides = [1, 1]} : vector<9x8xf32> to vector<1x8xf32>
    %811 = vector.broadcast %810 : vector<1x8xf32> to vector<16x8xf32>
    %812 = arith.mulf %809, %811 : vector<16x8xf32>
    %813 = arith.addf %807, %812 : vector<16x8xf32>
    %814 = vector.extract_strided_slice %12 {offsets = [15, 0, 0], sizes = [1, 16, 8], strides = [1, 1, 1]} : vector<18x16x8xf32> to vector<1x16x8xf32>
    %815 = vector.shape_cast %814 : vector<1x16x8xf32> to vector<16x8xf32>
    %816 = vector.extract_strided_slice %5 {offsets = [8, 0], sizes = [1, 8], strides = [1, 1]} : vector<9x8xf32> to vector<1x8xf32>
    %817 = vector.broadcast %816 : vector<1x8xf32> to vector<16x8xf32>
    %818 = arith.mulf %815, %817 : vector<16x8xf32>
    %819 = arith.addf %813, %818 : vector<16x8xf32>
    %820 = vector.broadcast %6 : vector<1x8xf32> to vector<16x8xf32>
    %821 = arith.addf %819, %820 : vector<16x8xf32>
    %c0_49 = arith.constant 0 : index
    %c13 = arith.constant 13 : index
    %c0_50 = arith.constant 0 : index
    %c0_51 = arith.constant 0 : index
    %822 = vector.load %arg5[%c0_49, %c13, %c0_50, %c0_51] : memref<2x16x16x8xf32, #tpu.memory_space<vmem>>, vector<1x1x16x8xf32>
    %823 = vector.shape_cast %822 : vector<1x1x16x8xf32> to vector<16x8xf32>
    %824 = vector.shape_cast %821 : vector<16x8xf32> to vector<1x1x16x8xf32>
    tpu.vector_store %arg5[%c0_49, %c13, %c0_50, %c0_51], %824 {strides = array<i32>} : memref<2x16x16x8xf32, #tpu.memory_space<vmem>>, vector<1x1x16x8xf32>,
    %825 = vector.extract_strided_slice %8 {offsets = [14, 0, 0], sizes = [1, 16, 8], strides = [1, 1, 1]} : vector<18x16x8xf32> to vector<1x16x8xf32>
    %826 = vector.shape_cast %825 : vector<1x16x8xf32> to vector<16x8xf32>
    %827 = vector.extract_strided_slice %5 {offsets = [0, 0], sizes = [1, 8], strides = [1, 1]} : vector<9x8xf32> to vector<1x8xf32>
    %828 = vector.broadcast %827 : vector<1x8xf32> to vector<16x8xf32>
    %829 = arith.mulf %826, %828 : vector<16x8xf32>
    %830 = vector.extract_strided_slice %10 {offsets = [14, 0, 0], sizes = [1, 16, 8], strides = [1, 1, 1]} : vector<18x16x8xf32> to vector<1x16x8xf32>
    %831 = vector.shape_cast %830 : vector<1x16x8xf32> to vector<16x8xf32>
    %832 = vector.extract_strided_slice %5 {offsets = [1, 0], sizes = [1, 8], strides = [1, 1]} : vector<9x8xf32> to vector<1x8xf32>
    %833 = vector.broadcast %832 : vector<1x8xf32> to vector<16x8xf32>
    %834 = arith.mulf %831, %833 : vector<16x8xf32>
    %835 = arith.addf %829, %834 : vector<16x8xf32>
    %836 = vector.extract_strided_slice %12 {offsets = [14, 0, 0], sizes = [1, 16, 8], strides = [1, 1, 1]} : vector<18x16x8xf32> to vector<1x16x8xf32>
    %837 = vector.shape_cast %836 : vector<1x16x8xf32> to vector<16x8xf32>
    %838 = vector.extract_strided_slice %5 {offsets = [2, 0], sizes = [1, 8], strides = [1, 1]} : vector<9x8xf32> to vector<1x8xf32>
    %839 = vector.broadcast %838 : vector<1x8xf32> to vector<16x8xf32>
    %840 = arith.mulf %837, %839 : vector<16x8xf32>
    %841 = arith.addf %835, %840 : vector<16x8xf32>
    %842 = vector.extract_strided_slice %8 {offsets = [15, 0, 0], sizes = [1, 16, 8], strides = [1, 1, 1]} : vector<18x16x8xf32> to vector<1x16x8xf32>
    %843 = vector.shape_cast %842 : vector<1x16x8xf32> to vector<16x8xf32>
    %844 = vector.extract_strided_slice %5 {offsets = [3, 0], sizes = [1, 8], strides = [1, 1]} : vector<9x8xf32> to vector<1x8xf32>
    %845 = vector.broadcast %844 : vector<1x8xf32> to vector<16x8xf32>
    %846 = arith.mulf %843, %845 : vector<16x8xf32>
    %847 = arith.addf %841, %846 : vector<16x8xf32>
    %848 = vector.extract_strided_slice %10 {offsets = [15, 0, 0], sizes = [1, 16, 8], strides = [1, 1, 1]} : vector<18x16x8xf32> to vector<1x16x8xf32>
    %849 = vector.shape_cast %848 : vector<1x16x8xf32> to vector<16x8xf32>
    %850 = vector.extract_strided_slice %5 {offsets = [4, 0], sizes = [1, 8], strides = [1, 1]} : vector<9x8xf32> to vector<1x8xf32>
    %851 = vector.broadcast %850 : vector<1x8xf32> to vector<16x8xf32>
    %852 = arith.mulf %849, %851 : vector<16x8xf32>
    %853 = arith.addf %847, %852 : vector<16x8xf32>
    %854 = vector.extract_strided_slice %12 {offsets = [15, 0, 0], sizes = [1, 16, 8], strides = [1, 1, 1]} : vector<18x16x8xf32> to vector<1x16x8xf32>
    %855 = vector.shape_cast %854 : vector<1x16x8xf32> to vector<16x8xf32>
    %856 = vector.extract_strided_slice %5 {offsets = [5, 0], sizes = [1, 8], strides = [1, 1]} : vector<9x8xf32> to vector<1x8xf32>
    %857 = vector.broadcast %856 : vector<1x8xf32> to vector<16x8xf32>
    %858 = arith.mulf %855, %857 : vector<16x8xf32>
    %859 = arith.addf %853, %858 : vector<16x8xf32>
    %860 = vector.extract_strided_slice %8 {offsets = [16, 0, 0], sizes = [1, 16, 8], strides = [1, 1, 1]} : vector<18x16x8xf32> to vector<1x16x8xf32>
    %861 = vector.shape_cast %860 : vector<1x16x8xf32> to vector<16x8xf32>
    %862 = vector.extract_strided_slice %5 {offsets = [6, 0], sizes = [1, 8], strides = [1, 1]} : vector<9x8xf32> to vector<1x8xf32>
    %863 = vector.broadcast %862 : vector<1x8xf32> to vector<16x8xf32>
    %864 = arith.mulf %861, %863 : vector<16x8xf32>
    %865 = arith.addf %859, %864 : vector<16x8xf32>
    %866 = vector.extract_strided_slice %10 {offsets = [16, 0, 0], sizes = [1, 16, 8], strides = [1, 1, 1]} : vector<18x16x8xf32> to vector<1x16x8xf32>
    %867 = vector.shape_cast %866 : vector<1x16x8xf32> to vector<16x8xf32>
    %868 = vector.extract_strided_slice %5 {offsets = [7, 0], sizes = [1, 8], strides = [1, 1]} : vector<9x8xf32> to vector<1x8xf32>
    %869 = vector.broadcast %868 : vector<1x8xf32> to vector<16x8xf32>
    %870 = arith.mulf %867, %869 : vector<16x8xf32>
    %871 = arith.addf %865, %870 : vector<16x8xf32>
    %872 = vector.extract_strided_slice %12 {offsets = [16, 0, 0], sizes = [1, 16, 8], strides = [1, 1, 1]} : vector<18x16x8xf32> to vector<1x16x8xf32>
    %873 = vector.shape_cast %872 : vector<1x16x8xf32> to vector<16x8xf32>
    %874 = vector.extract_strided_slice %5 {offsets = [8, 0], sizes = [1, 8], strides = [1, 1]} : vector<9x8xf32> to vector<1x8xf32>
    %875 = vector.broadcast %874 : vector<1x8xf32> to vector<16x8xf32>
    %876 = arith.mulf %873, %875 : vector<16x8xf32>
    %877 = arith.addf %871, %876 : vector<16x8xf32>
    %878 = vector.broadcast %6 : vector<1x8xf32> to vector<16x8xf32>
    %879 = arith.addf %877, %878 : vector<16x8xf32>
    %c0_52 = arith.constant 0 : index
    %c14 = arith.constant 14 : index
    %c0_53 = arith.constant 0 : index
    %c0_54 = arith.constant 0 : index
    %880 = vector.load %arg5[%c0_52, %c14, %c0_53, %c0_54] : memref<2x16x16x8xf32, #tpu.memory_space<vmem>>, vector<1x1x16x8xf32>
    %881 = vector.shape_cast %880 : vector<1x1x16x8xf32> to vector<16x8xf32>
    %882 = vector.shape_cast %879 : vector<16x8xf32> to vector<1x1x16x8xf32>
    tpu.vector_store %arg5[%c0_52, %c14, %c0_53, %c0_54], %882 {strides = array<i32>} : memref<2x16x16x8xf32, #tpu.memory_space<vmem>>, vector<1x1x16x8xf32>,
    %883 = vector.extract_strided_slice %8 {offsets = [15, 0, 0], sizes = [1, 16, 8], strides = [1, 1, 1]} : vector<18x16x8xf32> to vector<1x16x8xf32>
    %884 = vector.shape_cast %883 : vector<1x16x8xf32> to vector<16x8xf32>
    %885 = vector.extract_strided_slice %5 {offsets = [0, 0], sizes = [1, 8], strides = [1, 1]} : vector<9x8xf32> to vector<1x8xf32>
    %886 = vector.broadcast %885 : vector<1x8xf32> to vector<16x8xf32>
    %887 = arith.mulf %884, %886 : vector<16x8xf32>
    %888 = vector.extract_strided_slice %10 {offsets = [15, 0, 0], sizes = [1, 16, 8], strides = [1, 1, 1]} : vector<18x16x8xf32> to vector<1x16x8xf32>
    %889 = vector.shape_cast %888 : vector<1x16x8xf32> to vector<16x8xf32>
    %890 = vector.extract_strided_slice %5 {offsets = [1, 0], sizes = [1, 8], strides = [1, 1]} : vector<9x8xf32> to vector<1x8xf32>
    %891 = vector.broadcast %890 : vector<1x8xf32> to vector<16x8xf32>
    %892 = arith.mulf %889, %891 : vector<16x8xf32>
    %893 = arith.addf %887, %892 : vector<16x8xf32>
    %894 = vector.extract_strided_slice %12 {offsets = [15, 0, 0], sizes = [1, 16, 8], strides = [1, 1, 1]} : vector<18x16x8xf32> to vector<1x16x8xf32>
    %895 = vector.shape_cast %894 : vector<1x16x8xf32> to vector<16x8xf32>
    %896 = vector.extract_strided_slice %5 {offsets = [2, 0], sizes = [1, 8], strides = [1, 1]} : vector<9x8xf32> to vector<1x8xf32>
    %897 = vector.broadcast %896 : vector<1x8xf32> to vector<16x8xf32>
    %898 = arith.mulf %895, %897 : vector<16x8xf32>
    %899 = arith.addf %893, %898 : vector<16x8xf32>
    %900 = vector.extract_strided_slice %8 {offsets = [16, 0, 0], sizes = [1, 16, 8], strides = [1, 1, 1]} : vector<18x16x8xf32> to vector<1x16x8xf32>
    %901 = vector.shape_cast %900 : vector<1x16x8xf32> to vector<16x8xf32>
    %902 = vector.extract_strided_slice %5 {offsets = [3, 0], sizes = [1, 8], strides = [1, 1]} : vector<9x8xf32> to vector<1x8xf32>
    %903 = vector.broadcast %902 : vector<1x8xf32> to vector<16x8xf32>
    %904 = arith.mulf %901, %903 : vector<16x8xf32>
    %905 = arith.addf %899, %904 : vector<16x8xf32>
    %906 = vector.extract_strided_slice %10 {offsets = [16, 0, 0], sizes = [1, 16, 8], strides = [1, 1, 1]} : vector<18x16x8xf32> to vector<1x16x8xf32>
    %907 = vector.shape_cast %906 : vector<1x16x8xf32> to vector<16x8xf32>
    %908 = vector.extract_strided_slice %5 {offsets = [4, 0], sizes = [1, 8], strides = [1, 1]} : vector<9x8xf32> to vector<1x8xf32>
    %909 = vector.broadcast %908 : vector<1x8xf32> to vector<16x8xf32>
    %910 = arith.mulf %907, %909 : vector<16x8xf32>
    %911 = arith.addf %905, %910 : vector<16x8xf32>
    %912 = vector.extract_strided_slice %12 {offsets = [16, 0, 0], sizes = [1, 16, 8], strides = [1, 1, 1]} : vector<18x16x8xf32> to vector<1x16x8xf32>
    %913 = vector.shape_cast %912 : vector<1x16x8xf32> to vector<16x8xf32>
    %914 = vector.extract_strided_slice %5 {offsets = [5, 0], sizes = [1, 8], strides = [1, 1]} : vector<9x8xf32> to vector<1x8xf32>
    %915 = vector.broadcast %914 : vector<1x8xf32> to vector<16x8xf32>
    %916 = arith.mulf %913, %915 : vector<16x8xf32>
    %917 = arith.addf %911, %916 : vector<16x8xf32>
    %918 = vector.extract_strided_slice %8 {offsets = [17, 0, 0], sizes = [1, 16, 8], strides = [1, 1, 1]} : vector<18x16x8xf32> to vector<1x16x8xf32>
    %919 = vector.shape_cast %918 : vector<1x16x8xf32> to vector<16x8xf32>
    %920 = vector.extract_strided_slice %5 {offsets = [6, 0], sizes = [1, 8], strides = [1, 1]} : vector<9x8xf32> to vector<1x8xf32>
    %921 = vector.broadcast %920 : vector<1x8xf32> to vector<16x8xf32>
    %922 = arith.mulf %919, %921 : vector<16x8xf32>
    %923 = arith.addf %917, %922 : vector<16x8xf32>
    %924 = vector.extract_strided_slice %10 {offsets = [17, 0, 0], sizes = [1, 16, 8], strides = [1, 1, 1]} : vector<18x16x8xf32> to vector<1x16x8xf32>
    %925 = vector.shape_cast %924 : vector<1x16x8xf32> to vector<16x8xf32>
    %926 = vector.extract_strided_slice %5 {offsets = [7, 0], sizes = [1, 8], strides = [1, 1]} : vector<9x8xf32> to vector<1x8xf32>
    %927 = vector.broadcast %926 : vector<1x8xf32> to vector<16x8xf32>
    %928 = arith.mulf %925, %927 : vector<16x8xf32>
    %929 = arith.addf %923, %928 : vector<16x8xf32>
    %930 = vector.extract_strided_slice %12 {offsets = [17, 0, 0], sizes = [1, 16, 8], strides = [1, 1, 1]} : vector<18x16x8xf32> to vector<1x16x8xf32>
    %931 = vector.shape_cast %930 : vector<1x16x8xf32> to vector<16x8xf32>
    %932 = vector.extract_strided_slice %5 {offsets = [8, 0], sizes = [1, 8], strides = [1, 1]} : vector<9x8xf32> to vector<1x8xf32>
    %933 = vector.broadcast %932 : vector<1x8xf32> to vector<16x8xf32>
    %934 = arith.mulf %931, %933 : vector<16x8xf32>
    %935 = arith.addf %929, %934 : vector<16x8xf32>
    %936 = vector.broadcast %6 : vector<1x8xf32> to vector<16x8xf32>
    %937 = arith.addf %935, %936 : vector<16x8xf32>
    %c0_55 = arith.constant 0 : index
    %c15 = arith.constant 15 : index
    %c0_56 = arith.constant 0 : index
    %c0_57 = arith.constant 0 : index
    %938 = vector.load %arg5[%c0_55, %c15, %c0_56, %c0_57] : memref<2x16x16x8xf32, #tpu.memory_space<vmem>>, vector<1x1x16x8xf32>
    %939 = vector.shape_cast %938 : vector<1x1x16x8xf32> to vector<16x8xf32>
    %940 = vector.shape_cast %937 : vector<16x8xf32> to vector<1x1x16x8xf32>
    tpu.vector_store %arg5[%c0_55, %c15, %c0_56, %c0_57], %940 {strides = array<i32>} : memref<2x16x16x8xf32, #tpu.memory_space<vmem>>, vector<1x1x16x8xf32>,
    %941 = vector.extract_strided_slice %4 {offsets = [1, 0, 0, 0], sizes = [1, 18, 16, 8], strides = [1, 1, 1, 1]} : vector<2x18x32x128xf32> to vector<1x18x16x8xf32>
    %942 = vector.shape_cast %941 : vector<1x18x16x8xf32> to vector<18x16x8xf32>
    %943 = vector.extract_strided_slice %4 {offsets = [1, 0, 1, 0], sizes = [1, 18, 16, 8], strides = [1, 1, 1, 1]} : vector<2x18x32x128xf32> to vector<1x18x16x8xf32>
    %944 = vector.shape_cast %943 : vector<1x18x16x8xf32> to vector<18x16x8xf32>
    %945 = vector.extract_strided_slice %4 {offsets = [1, 0, 2, 0], sizes = [1, 18, 16, 8], strides = [1, 1, 1, 1]} : vector<2x18x32x128xf32> to vector<1x18x16x8xf32>
    %946 = vector.shape_cast %945 : vector<1x18x16x8xf32> to vector<18x16x8xf32>
    %947 = vector.extract_strided_slice %942 {offsets = [0, 0, 0], sizes = [1, 16, 8], strides = [1, 1, 1]} : vector<18x16x8xf32> to vector<1x16x8xf32>
    %948 = vector.shape_cast %947 : vector<1x16x8xf32> to vector<16x8xf32>
    %949 = vector.extract_strided_slice %5 {offsets = [0, 0], sizes = [1, 8], strides = [1, 1]} : vector<9x8xf32> to vector<1x8xf32>
    %950 = vector.broadcast %949 : vector<1x8xf32> to vector<16x8xf32>
    %951 = arith.mulf %948, %950 : vector<16x8xf32>
    %952 = vector.extract_strided_slice %944 {offsets = [0, 0, 0], sizes = [1, 16, 8], strides = [1, 1, 1]} : vector<18x16x8xf32> to vector<1x16x8xf32>
    %953 = vector.shape_cast %952 : vector<1x16x8xf32> to vector<16x8xf32>
    %954 = vector.extract_strided_slice %5 {offsets = [1, 0], sizes = [1, 8], strides = [1, 1]} : vector<9x8xf32> to vector<1x8xf32>
    %955 = vector.broadcast %954 : vector<1x8xf32> to vector<16x8xf32>
    %956 = arith.mulf %953, %955 : vector<16x8xf32>
    %957 = arith.addf %951, %956 : vector<16x8xf32>
    %958 = vector.extract_strided_slice %946 {offsets = [0, 0, 0], sizes = [1, 16, 8], strides = [1, 1, 1]} : vector<18x16x8xf32> to vector<1x16x8xf32>
    %959 = vector.shape_cast %958 : vector<1x16x8xf32> to vector<16x8xf32>
    %960 = vector.extract_strided_slice %5 {offsets = [2, 0], sizes = [1, 8], strides = [1, 1]} : vector<9x8xf32> to vector<1x8xf32>
    %961 = vector.broadcast %960 : vector<1x8xf32> to vector<16x8xf32>
    %962 = arith.mulf %959, %961 : vector<16x8xf32>
    %963 = arith.addf %957, %962 : vector<16x8xf32>
    %964 = vector.extract_strided_slice %942 {offsets = [1, 0, 0], sizes = [1, 16, 8], strides = [1, 1, 1]} : vector<18x16x8xf32> to vector<1x16x8xf32>
    %965 = vector.shape_cast %964 : vector<1x16x8xf32> to vector<16x8xf32>
    %966 = vector.extract_strided_slice %5 {offsets = [3, 0], sizes = [1, 8], strides = [1, 1]} : vector<9x8xf32> to vector<1x8xf32>
    %967 = vector.broadcast %966 : vector<1x8xf32> to vector<16x8xf32>
    %968 = arith.mulf %965, %967 : vector<16x8xf32>
    %969 = arith.addf %963, %968 : vector<16x8xf32>
    %970 = vector.extract_strided_slice %944 {offsets = [1, 0, 0], sizes = [1, 16, 8], strides = [1, 1, 1]} : vector<18x16x8xf32> to vector<1x16x8xf32>
    %971 = vector.shape_cast %970 : vector<1x16x8xf32> to vector<16x8xf32>
    %972 = vector.extract_strided_slice %5 {offsets = [4, 0], sizes = [1, 8], strides = [1, 1]} : vector<9x8xf32> to vector<1x8xf32>
    %973 = vector.broadcast %972 : vector<1x8xf32> to vector<16x8xf32>
    %974 = arith.mulf %971, %973 : vector<16x8xf32>
    %975 = arith.addf %969, %974 : vector<16x8xf32>
    %976 = vector.extract_strided_slice %946 {offsets = [1, 0, 0], sizes = [1, 16, 8], strides = [1, 1, 1]} : vector<18x16x8xf32> to vector<1x16x8xf32>
    %977 = vector.shape_cast %976 : vector<1x16x8xf32> to vector<16x8xf32>
    %978 = vector.extract_strided_slice %5 {offsets = [5, 0], sizes = [1, 8], strides = [1, 1]} : vector<9x8xf32> to vector<1x8xf32>
    %979 = vector.broadcast %978 : vector<1x8xf32> to vector<16x8xf32>
    %980 = arith.mulf %977, %979 : vector<16x8xf32>
    %981 = arith.addf %975, %980 : vector<16x8xf32>
    %982 = vector.extract_strided_slice %942 {offsets = [2, 0, 0], sizes = [1, 16, 8], strides = [1, 1, 1]} : vector<18x16x8xf32> to vector<1x16x8xf32>
    %983 = vector.shape_cast %982 : vector<1x16x8xf32> to vector<16x8xf32>
    %984 = vector.extract_strided_slice %5 {offsets = [6, 0], sizes = [1, 8], strides = [1, 1]} : vector<9x8xf32> to vector<1x8xf32>
    %985 = vector.broadcast %984 : vector<1x8xf32> to vector<16x8xf32>
    %986 = arith.mulf %983, %985 : vector<16x8xf32>
    %987 = arith.addf %981, %986 : vector<16x8xf32>
    %988 = vector.extract_strided_slice %944 {offsets = [2, 0, 0], sizes = [1, 16, 8], strides = [1, 1, 1]} : vector<18x16x8xf32> to vector<1x16x8xf32>
    %989 = vector.shape_cast %988 : vector<1x16x8xf32> to vector<16x8xf32>
    %990 = vector.extract_strided_slice %5 {offsets = [7, 0], sizes = [1, 8], strides = [1, 1]} : vector<9x8xf32> to vector<1x8xf32>
    %991 = vector.broadcast %990 : vector<1x8xf32> to vector<16x8xf32>
    %992 = arith.mulf %989, %991 : vector<16x8xf32>
    %993 = arith.addf %987, %992 : vector<16x8xf32>
    %994 = vector.extract_strided_slice %946 {offsets = [2, 0, 0], sizes = [1, 16, 8], strides = [1, 1, 1]} : vector<18x16x8xf32> to vector<1x16x8xf32>
    %995 = vector.shape_cast %994 : vector<1x16x8xf32> to vector<16x8xf32>
    %996 = vector.extract_strided_slice %5 {offsets = [8, 0], sizes = [1, 8], strides = [1, 1]} : vector<9x8xf32> to vector<1x8xf32>
    %997 = vector.broadcast %996 : vector<1x8xf32> to vector<16x8xf32>
    %998 = arith.mulf %995, %997 : vector<16x8xf32>
    %999 = arith.addf %993, %998 : vector<16x8xf32>
    %1000 = vector.broadcast %6 : vector<1x8xf32> to vector<16x8xf32>
    %1001 = arith.addf %999, %1000 : vector<16x8xf32>
    %c1_58 = arith.constant 1 : index
    %c0_59 = arith.constant 0 : index
    %c0_60 = arith.constant 0 : index
    %c0_61 = arith.constant 0 : index
    %1002 = vector.load %arg5[%c1_58, %c0_59, %c0_60, %c0_61] : memref<2x16x16x8xf32, #tpu.memory_space<vmem>>, vector<1x1x16x8xf32>
    %1003 = vector.shape_cast %1002 : vector<1x1x16x8xf32> to vector<16x8xf32>
    %1004 = vector.shape_cast %1001 : vector<16x8xf32> to vector<1x1x16x8xf32>
    tpu.vector_store %arg5[%c1_58, %c0_59, %c0_60, %c0_61], %1004 {strides = array<i32>} : memref<2x16x16x8xf32, #tpu.memory_space<vmem>>, vector<1x1x16x8xf32>,
    %1005 = vector.extract_strided_slice %942 {offsets = [1, 0, 0], sizes = [1, 16, 8], strides = [1, 1, 1]} : vector<18x16x8xf32> to vector<1x16x8xf32>
    %1006 = vector.shape_cast %1005 : vector<1x16x8xf32> to vector<16x8xf32>
    %1007 = vector.extract_strided_slice %5 {offsets = [0, 0], sizes = [1, 8], strides = [1, 1]} : vector<9x8xf32> to vector<1x8xf32>
    %1008 = vector.broadcast %1007 : vector<1x8xf32> to vector<16x8xf32>
    %1009 = arith.mulf %1006, %1008 : vector<16x8xf32>
    %1010 = vector.extract_strided_slice %944 {offsets = [1, 0, 0], sizes = [1, 16, 8], strides = [1, 1, 1]} : vector<18x16x8xf32> to vector<1x16x8xf32>
    %1011 = vector.shape_cast %1010 : vector<1x16x8xf32> to vector<16x8xf32>
    %1012 = vector.extract_strided_slice %5 {offsets = [1, 0], sizes = [1, 8], strides = [1, 1]} : vector<9x8xf32> to vector<1x8xf32>
    %1013 = vector.broadcast %1012 : vector<1x8xf32> to vector<16x8xf32>
    %1014 = arith.mulf %1011, %1013 : vector<16x8xf32>
    %1015 = arith.addf %1009, %1014 : vector<16x8xf32>
    %1016 = vector.extract_strided_slice %946 {offsets = [1, 0, 0], sizes = [1, 16, 8], strides = [1, 1, 1]} : vector<18x16x8xf32> to vector<1x16x8xf32>
    %1017 = vector.shape_cast %1016 : vector<1x16x8xf32> to vector<16x8xf32>
    %1018 = vector.extract_strided_slice %5 {offsets = [2, 0], sizes = [1, 8], strides = [1, 1]} : vector<9x8xf32> to vector<1x8xf32>
    %1019 = vector.broadcast %1018 : vector<1x8xf32> to vector<16x8xf32>
    %1020 = arith.mulf %1017, %1019 : vector<16x8xf32>
    %1021 = arith.addf %1015, %1020 : vector<16x8xf32>
    %1022 = vector.extract_strided_slice %942 {offsets = [2, 0, 0], sizes = [1, 16, 8], strides = [1, 1, 1]} : vector<18x16x8xf32> to vector<1x16x8xf32>
    %1023 = vector.shape_cast %1022 : vector<1x16x8xf32> to vector<16x8xf32>
    %1024 = vector.extract_strided_slice %5 {offsets = [3, 0], sizes = [1, 8], strides = [1, 1]} : vector<9x8xf32> to vector<1x8xf32>
    %1025 = vector.broadcast %1024 : vector<1x8xf32> to vector<16x8xf32>
    %1026 = arith.mulf %1023, %1025 : vector<16x8xf32>
    %1027 = arith.addf %1021, %1026 : vector<16x8xf32>
    %1028 = vector.extract_strided_slice %944 {offsets = [2, 0, 0], sizes = [1, 16, 8], strides = [1, 1, 1]} : vector<18x16x8xf32> to vector<1x16x8xf32>
    %1029 = vector.shape_cast %1028 : vector<1x16x8xf32> to vector<16x8xf32>
    %1030 = vector.extract_strided_slice %5 {offsets = [4, 0], sizes = [1, 8], strides = [1, 1]} : vector<9x8xf32> to vector<1x8xf32>
    %1031 = vector.broadcast %1030 : vector<1x8xf32> to vector<16x8xf32>
    %1032 = arith.mulf %1029, %1031 : vector<16x8xf32>
    %1033 = arith.addf %1027, %1032 : vector<16x8xf32>
    %1034 = vector.extract_strided_slice %946 {offsets = [2, 0, 0], sizes = [1, 16, 8], strides = [1, 1, 1]} : vector<18x16x8xf32> to vector<1x16x8xf32>
    %1035 = vector.shape_cast %1034 : vector<1x16x8xf32> to vector<16x8xf32>
    %1036 = vector.extract_strided_slice %5 {offsets = [5, 0], sizes = [1, 8], strides = [1, 1]} : vector<9x8xf32> to vector<1x8xf32>
    %1037 = vector.broadcast %1036 : vector<1x8xf32> to vector<16x8xf32>
    %1038 = arith.mulf %1035, %1037 : vector<16x8xf32>
    %1039 = arith.addf %1033, %1038 : vector<16x8xf32>
    %1040 = vector.extract_strided_slice %942 {offsets = [3, 0, 0], sizes = [1, 16, 8], strides = [1, 1, 1]} : vector<18x16x8xf32> to vector<1x16x8xf32>
    %1041 = vector.shape_cast %1040 : vector<1x16x8xf32> to vector<16x8xf32>
    %1042 = vector.extract_strided_slice %5 {offsets = [6, 0], sizes = [1, 8], strides = [1, 1]} : vector<9x8xf32> to vector<1x8xf32>
    %1043 = vector.broadcast %1042 : vector<1x8xf32> to vector<16x8xf32>
    %1044 = arith.mulf %1041, %1043 : vector<16x8xf32>
    %1045 = arith.addf %1039, %1044 : vector<16x8xf32>
    %1046 = vector.extract_strided_slice %944 {offsets = [3, 0, 0], sizes = [1, 16, 8], strides = [1, 1, 1]} : vector<18x16x8xf32> to vector<1x16x8xf32>
    %1047 = vector.shape_cast %1046 : vector<1x16x8xf32> to vector<16x8xf32>
    %1048 = vector.extract_strided_slice %5 {offsets = [7, 0], sizes = [1, 8], strides = [1, 1]} : vector<9x8xf32> to vector<1x8xf32>
    %1049 = vector.broadcast %1048 : vector<1x8xf32> to vector<16x8xf32>
    %1050 = arith.mulf %1047, %1049 : vector<16x8xf32>
    %1051 = arith.addf %1045, %1050 : vector<16x8xf32>
    %1052 = vector.extract_strided_slice %946 {offsets = [3, 0, 0], sizes = [1, 16, 8], strides = [1, 1, 1]} : vector<18x16x8xf32> to vector<1x16x8xf32>
    %1053 = vector.shape_cast %1052 : vector<1x16x8xf32> to vector<16x8xf32>
    %1054 = vector.extract_strided_slice %5 {offsets = [8, 0], sizes = [1, 8], strides = [1, 1]} : vector<9x8xf32> to vector<1x8xf32>
    %1055 = vector.broadcast %1054 : vector<1x8xf32> to vector<16x8xf32>
    %1056 = arith.mulf %1053, %1055 : vector<16x8xf32>
    %1057 = arith.addf %1051, %1056 : vector<16x8xf32>
    %1058 = vector.broadcast %6 : vector<1x8xf32> to vector<16x8xf32>
    %1059 = arith.addf %1057, %1058 : vector<16x8xf32>
    %c1_62 = arith.constant 1 : index
    %c1_63 = arith.constant 1 : index
    %c0_64 = arith.constant 0 : index
    %c0_65 = arith.constant 0 : index
    %1060 = vector.load %arg5[%c1_62, %c1_63, %c0_64, %c0_65] : memref<2x16x16x8xf32, #tpu.memory_space<vmem>>, vector<1x1x16x8xf32>
    %1061 = vector.shape_cast %1060 : vector<1x1x16x8xf32> to vector<16x8xf32>
    %1062 = vector.shape_cast %1059 : vector<16x8xf32> to vector<1x1x16x8xf32>
    tpu.vector_store %arg5[%c1_62, %c1_63, %c0_64, %c0_65], %1062 {strides = array<i32>} : memref<2x16x16x8xf32, #tpu.memory_space<vmem>>, vector<1x1x16x8xf32>,
    %1063 = vector.extract_strided_slice %942 {offsets = [2, 0, 0], sizes = [1, 16, 8], strides = [1, 1, 1]} : vector<18x16x8xf32> to vector<1x16x8xf32>
    %1064 = vector.shape_cast %1063 : vector<1x16x8xf32> to vector<16x8xf32>
    %1065 = vector.extract_strided_slice %5 {offsets = [0, 0], sizes = [1, 8], strides = [1, 1]} : vector<9x8xf32> to vector<1x8xf32>
    %1066 = vector.broadcast %1065 : vector<1x8xf32> to vector<16x8xf32>
    %1067 = arith.mulf %1064, %1066 : vector<16x8xf32>
    %1068 = vector.extract_strided_slice %944 {offsets = [2, 0, 0], sizes = [1, 16, 8], strides = [1, 1, 1]} : vector<18x16x8xf32> to vector<1x16x8xf32>
    %1069 = vector.shape_cast %1068 : vector<1x16x8xf32> to vector<16x8xf32>
    %1070 = vector.extract_strided_slice %5 {offsets = [1, 0], sizes = [1, 8], strides = [1, 1]} : vector<9x8xf32> to vector<1x8xf32>
    %1071 = vector.broadcast %1070 : vector<1x8xf32> to vector<16x8xf32>
    %1072 = arith.mulf %1069, %1071 : vector<16x8xf32>
    %1073 = arith.addf %1067, %1072 : vector<16x8xf32>
    %1074 = vector.extract_strided_slice %946 {offsets = [2, 0, 0], sizes = [1, 16, 8], strides = [1, 1, 1]} : vector<18x16x8xf32> to vector<1x16x8xf32>
    %1075 = vector.shape_cast %1074 : vector<1x16x8xf32> to vector<16x8xf32>
    %1076 = vector.extract_strided_slice %5 {offsets = [2, 0], sizes = [1, 8], strides = [1, 1]} : vector<9x8xf32> to vector<1x8xf32>
    %1077 = vector.broadcast %1076 : vector<1x8xf32> to vector<16x8xf32>
    %1078 = arith.mulf %1075, %1077 : vector<16x8xf32>
    %1079 = arith.addf %1073, %1078 : vector<16x8xf32>
    %1080 = vector.extract_strided_slice %942 {offsets = [3, 0, 0], sizes = [1, 16, 8], strides = [1, 1, 1]} : vector<18x16x8xf32> to vector<1x16x8xf32>
    %1081 = vector.shape_cast %1080 : vector<1x16x8xf32> to vector<16x8xf32>
    %1082 = vector.extract_strided_slice %5 {offsets = [3, 0], sizes = [1, 8], strides = [1, 1]} : vector<9x8xf32> to vector<1x8xf32>
    %1083 = vector.broadcast %1082 : vector<1x8xf32> to vector<16x8xf32>
    %1084 = arith.mulf %1081, %1083 : vector<16x8xf32>
    %1085 = arith.addf %1079, %1084 : vector<16x8xf32>
    %1086 = vector.extract_strided_slice %944 {offsets = [3, 0, 0], sizes = [1, 16, 8], strides = [1, 1, 1]} : vector<18x16x8xf32> to vector<1x16x8xf32>
    %1087 = vector.shape_cast %1086 : vector<1x16x8xf32> to vector<16x8xf32>
    %1088 = vector.extract_strided_slice %5 {offsets = [4, 0], sizes = [1, 8], strides = [1, 1]} : vector<9x8xf32> to vector<1x8xf32>
    %1089 = vector.broadcast %1088 : vector<1x8xf32> to vector<16x8xf32>
    %1090 = arith.mulf %1087, %1089 : vector<16x8xf32>
    %1091 = arith.addf %1085, %1090 : vector<16x8xf32>
    %1092 = vector.extract_strided_slice %946 {offsets = [3, 0, 0], sizes = [1, 16, 8], strides = [1, 1, 1]} : vector<18x16x8xf32> to vector<1x16x8xf32>
    %1093 = vector.shape_cast %1092 : vector<1x16x8xf32> to vector<16x8xf32>
    %1094 = vector.extract_strided_slice %5 {offsets = [5, 0], sizes = [1, 8], strides = [1, 1]} : vector<9x8xf32> to vector<1x8xf32>
    %1095 = vector.broadcast %1094 : vector<1x8xf32> to vector<16x8xf32>
    %1096 = arith.mulf %1093, %1095 : vector<16x8xf32>
    %1097 = arith.addf %1091, %1096 : vector<16x8xf32>
    %1098 = vector.extract_strided_slice %942 {offsets = [4, 0, 0], sizes = [1, 16, 8], strides = [1, 1, 1]} : vector<18x16x8xf32> to vector<1x16x8xf32>
    %1099 = vector.shape_cast %1098 : vector<1x16x8xf32> to vector<16x8xf32>
    %1100 = vector.extract_strided_slice %5 {offsets = [6, 0], sizes = [1, 8], strides = [1, 1]} : vector<9x8xf32> to vector<1x8xf32>
    %1101 = vector.broadcast %1100 : vector<1x8xf32> to vector<16x8xf32>
    %1102 = arith.mulf %1099, %1101 : vector<16x8xf32>
    %1103 = arith.addf %1097, %1102 : vector<16x8xf32>
    %1104 = vector.extract_strided_slice %944 {offsets = [4, 0, 0], sizes = [1, 16, 8], strides = [1, 1, 1]} : vector<18x16x8xf32> to vector<1x16x8xf32>
    %1105 = vector.shape_cast %1104 : vector<1x16x8xf32> to vector<16x8xf32>
    %1106 = vector.extract_strided_slice %5 {offsets = [7, 0], sizes = [1, 8], strides = [1, 1]} : vector<9x8xf32> to vector<1x8xf32>
    %1107 = vector.broadcast %1106 : vector<1x8xf32> to vector<16x8xf32>
    %1108 = arith.mulf %1105, %1107 : vector<16x8xf32>
    %1109 = arith.addf %1103, %1108 : vector<16x8xf32>
    %1110 = vector.extract_strided_slice %946 {offsets = [4, 0, 0], sizes = [1, 16, 8], strides = [1, 1, 1]} : vector<18x16x8xf32> to vector<1x16x8xf32>
    %1111 = vector.shape_cast %1110 : vector<1x16x8xf32> to vector<16x8xf32>
    %1112 = vector.extract_strided_slice %5 {offsets = [8, 0], sizes = [1, 8], strides = [1, 1]} : vector<9x8xf32> to vector<1x8xf32>
    %1113 = vector.broadcast %1112 : vector<1x8xf32> to vector<16x8xf32>
    %1114 = arith.mulf %1111, %1113 : vector<16x8xf32>
    %1115 = arith.addf %1109, %1114 : vector<16x8xf32>
    %1116 = vector.broadcast %6 : vector<1x8xf32> to vector<16x8xf32>
    %1117 = arith.addf %1115, %1116 : vector<16x8xf32>
    %c1_66 = arith.constant 1 : index
    %c2_67 = arith.constant 2 : index
    %c0_68 = arith.constant 0 : index
    %c0_69 = arith.constant 0 : index
    %1118 = vector.load %arg5[%c1_66, %c2_67, %c0_68, %c0_69] : memref<2x16x16x8xf32, #tpu.memory_space<vmem>>, vector<1x1x16x8xf32>
    %1119 = vector.shape_cast %1118 : vector<1x1x16x8xf32> to vector<16x8xf32>
    %1120 = vector.shape_cast %1117 : vector<16x8xf32> to vector<1x1x16x8xf32>
    tpu.vector_store %arg5[%c1_66, %c2_67, %c0_68, %c0_69], %1120 {strides = array<i32>} : memref<2x16x16x8xf32, #tpu.memory_space<vmem>>, vector<1x1x16x8xf32>,
    %1121 = vector.extract_strided_slice %942 {offsets = [3, 0, 0], sizes = [1, 16, 8], strides = [1, 1, 1]} : vector<18x16x8xf32> to vector<1x16x8xf32>
    %1122 = vector.shape_cast %1121 : vector<1x16x8xf32> to vector<16x8xf32>
    %1123 = vector.extract_strided_slice %5 {offsets = [0, 0], sizes = [1, 8], strides = [1, 1]} : vector<9x8xf32> to vector<1x8xf32>
    %1124 = vector.broadcast %1123 : vector<1x8xf32> to vector<16x8xf32>
    %1125 = arith.mulf %1122, %1124 : vector<16x8xf32>
    %1126 = vector.extract_strided_slice %944 {offsets = [3, 0, 0], sizes = [1, 16, 8], strides = [1, 1, 1]} : vector<18x16x8xf32> to vector<1x16x8xf32>
    %1127 = vector.shape_cast %1126 : vector<1x16x8xf32> to vector<16x8xf32>
    %1128 = vector.extract_strided_slice %5 {offsets = [1, 0], sizes = [1, 8], strides = [1, 1]} : vector<9x8xf32> to vector<1x8xf32>
    %1129 = vector.broadcast %1128 : vector<1x8xf32> to vector<16x8xf32>
    %1130 = arith.mulf %1127, %1129 : vector<16x8xf32>
    %1131 = arith.addf %1125, %1130 : vector<16x8xf32>
    %1132 = vector.extract_strided_slice %946 {offsets = [3, 0, 0], sizes = [1, 16, 8], strides = [1, 1, 1]} : vector<18x16x8xf32> to vector<1x16x8xf32>
    %1133 = vector.shape_cast %1132 : vector<1x16x8xf32> to vector<16x8xf32>
    %1134 = vector.extract_strided_slice %5 {offsets = [2, 0], sizes = [1, 8], strides = [1, 1]} : vector<9x8xf32> to vector<1x8xf32>
    %1135 = vector.broadcast %1134 : vector<1x8xf32> to vector<16x8xf32>
    %1136 = arith.mulf %1133, %1135 : vector<16x8xf32>
    %1137 = arith.addf %1131, %1136 : vector<16x8xf32>
    %1138 = vector.extract_strided_slice %942 {offsets = [4, 0, 0], sizes = [1, 16, 8], strides = [1, 1, 1]} : vector<18x16x8xf32> to vector<1x16x8xf32>
    %1139 = vector.shape_cast %1138 : vector<1x16x8xf32> to vector<16x8xf32>
    %1140 = vector.extract_strided_slice %5 {offsets = [3, 0], sizes = [1, 8], strides = [1, 1]} : vector<9x8xf32> to vector<1x8xf32>
    %1141 = vector.broadcast %1140 : vector<1x8xf32> to vector<16x8xf32>
    %1142 = arith.mulf %1139, %1141 : vector<16x8xf32>
    %1143 = arith.addf %1137, %1142 : vector<16x8xf32>
    %1144 = vector.extract_strided_slice %944 {offsets = [4, 0, 0], sizes = [1, 16, 8], strides = [1, 1, 1]} : vector<18x16x8xf32> to vector<1x16x8xf32>
    %1145 = vector.shape_cast %1144 : vector<1x16x8xf32> to vector<16x8xf32>
    %1146 = vector.extract_strided_slice %5 {offsets = [4, 0], sizes = [1, 8], strides = [1, 1]} : vector<9x8xf32> to vector<1x8xf32>
    %1147 = vector.broadcast %1146 : vector<1x8xf32> to vector<16x8xf32>
    %1148 = arith.mulf %1145, %1147 : vector<16x8xf32>
    %1149 = arith.addf %1143, %1148 : vector<16x8xf32>
    %1150 = vector.extract_strided_slice %946 {offsets = [4, 0, 0], sizes = [1, 16, 8], strides = [1, 1, 1]} : vector<18x16x8xf32> to vector<1x16x8xf32>
    %1151 = vector.shape_cast %1150 : vector<1x16x8xf32> to vector<16x8xf32>
    %1152 = vector.extract_strided_slice %5 {offsets = [5, 0], sizes = [1, 8], strides = [1, 1]} : vector<9x8xf32> to vector<1x8xf32>
    %1153 = vector.broadcast %1152 : vector<1x8xf32> to vector<16x8xf32>
    %1154 = arith.mulf %1151, %1153 : vector<16x8xf32>
    %1155 = arith.addf %1149, %1154 : vector<16x8xf32>
    %1156 = vector.extract_strided_slice %942 {offsets = [5, 0, 0], sizes = [1, 16, 8], strides = [1, 1, 1]} : vector<18x16x8xf32> to vector<1x16x8xf32>
    %1157 = vector.shape_cast %1156 : vector<1x16x8xf32> to vector<16x8xf32>
    %1158 = vector.extract_strided_slice %5 {offsets = [6, 0], sizes = [1, 8], strides = [1, 1]} : vector<9x8xf32> to vector<1x8xf32>
    %1159 = vector.broadcast %1158 : vector<1x8xf32> to vector<16x8xf32>
    %1160 = arith.mulf %1157, %1159 : vector<16x8xf32>
    %1161 = arith.addf %1155, %1160 : vector<16x8xf32>
    %1162 = vector.extract_strided_slice %944 {offsets = [5, 0, 0], sizes = [1, 16, 8], strides = [1, 1, 1]} : vector<18x16x8xf32> to vector<1x16x8xf32>
    %1163 = vector.shape_cast %1162 : vector<1x16x8xf32> to vector<16x8xf32>
    %1164 = vector.extract_strided_slice %5 {offsets = [7, 0], sizes = [1, 8], strides = [1, 1]} : vector<9x8xf32> to vector<1x8xf32>
    %1165 = vector.broadcast %1164 : vector<1x8xf32> to vector<16x8xf32>
    %1166 = arith.mulf %1163, %1165 : vector<16x8xf32>
    %1167 = arith.addf %1161, %1166 : vector<16x8xf32>
    %1168 = vector.extract_strided_slice %946 {offsets = [5, 0, 0], sizes = [1, 16, 8], strides = [1, 1, 1]} : vector<18x16x8xf32> to vector<1x16x8xf32>
    %1169 = vector.shape_cast %1168 : vector<1x16x8xf32> to vector<16x8xf32>
    %1170 = vector.extract_strided_slice %5 {offsets = [8, 0], sizes = [1, 8], strides = [1, 1]} : vector<9x8xf32> to vector<1x8xf32>
    %1171 = vector.broadcast %1170 : vector<1x8xf32> to vector<16x8xf32>
    %1172 = arith.mulf %1169, %1171 : vector<16x8xf32>
    %1173 = arith.addf %1167, %1172 : vector<16x8xf32>
    %1174 = vector.broadcast %6 : vector<1x8xf32> to vector<16x8xf32>
    %1175 = arith.addf %1173, %1174 : vector<16x8xf32>
    %c1_70 = arith.constant 1 : index
    %c3_71 = arith.constant 3 : index
    %c0_72 = arith.constant 0 : index
    %c0_73 = arith.constant 0 : index
    %1176 = vector.load %arg5[%c1_70, %c3_71, %c0_72, %c0_73] : memref<2x16x16x8xf32, #tpu.memory_space<vmem>>, vector<1x1x16x8xf32>
    %1177 = vector.shape_cast %1176 : vector<1x1x16x8xf32> to vector<16x8xf32>
    %1178 = vector.shape_cast %1175 : vector<16x8xf32> to vector<1x1x16x8xf32>
    tpu.vector_store %arg5[%c1_70, %c3_71, %c0_72, %c0_73], %1178 {strides = array<i32>} : memref<2x16x16x8xf32, #tpu.memory_space<vmem>>, vector<1x1x16x8xf32>,
    %1179 = vector.extract_strided_slice %942 {offsets = [4, 0, 0], sizes = [1, 16, 8], strides = [1, 1, 1]} : vector<18x16x8xf32> to vector<1x16x8xf32>
    %1180 = vector.shape_cast %1179 : vector<1x16x8xf32> to vector<16x8xf32>
    %1181 = vector.extract_strided_slice %5 {offsets = [0, 0], sizes = [1, 8], strides = [1, 1]} : vector<9x8xf32> to vector<1x8xf32>
    %1182 = vector.broadcast %1181 : vector<1x8xf32> to vector<16x8xf32>
    %1183 = arith.mulf %1180, %1182 : vector<16x8xf32>
    %1184 = vector.extract_strided_slice %944 {offsets = [4, 0, 0], sizes = [1, 16, 8], strides = [1, 1, 1]} : vector<18x16x8xf32> to vector<1x16x8xf32>
    %1185 = vector.shape_cast %1184 : vector<1x16x8xf32> to vector<16x8xf32>
    %1186 = vector.extract_strided_slice %5 {offsets = [1, 0], sizes = [1, 8], strides = [1, 1]} : vector<9x8xf32> to vector<1x8xf32>
    %1187 = vector.broadcast %1186 : vector<1x8xf32> to vector<16x8xf32>
    %1188 = arith.mulf %1185, %1187 : vector<16x8xf32>
    %1189 = arith.addf %1183, %1188 : vector<16x8xf32>
    %1190 = vector.extract_strided_slice %946 {offsets = [4, 0, 0], sizes = [1, 16, 8], strides = [1, 1, 1]} : vector<18x16x8xf32> to vector<1x16x8xf32>
    %1191 = vector.shape_cast %1190 : vector<1x16x8xf32> to vector<16x8xf32>
    %1192 = vector.extract_strided_slice %5 {offsets = [2, 0], sizes = [1, 8], strides = [1, 1]} : vector<9x8xf32> to vector<1x8xf32>
    %1193 = vector.broadcast %1192 : vector<1x8xf32> to vector<16x8xf32>
    %1194 = arith.mulf %1191, %1193 : vector<16x8xf32>
    %1195 = arith.addf %1189, %1194 : vector<16x8xf32>
    %1196 = vector.extract_strided_slice %942 {offsets = [5, 0, 0], sizes = [1, 16, 8], strides = [1, 1, 1]} : vector<18x16x8xf32> to vector<1x16x8xf32>
    %1197 = vector.shape_cast %1196 : vector<1x16x8xf32> to vector<16x8xf32>
    %1198 = vector.extract_strided_slice %5 {offsets = [3, 0], sizes = [1, 8], strides = [1, 1]} : vector<9x8xf32> to vector<1x8xf32>
    %1199 = vector.broadcast %1198 : vector<1x8xf32> to vector<16x8xf32>
    %1200 = arith.mulf %1197, %1199 : vector<16x8xf32>
    %1201 = arith.addf %1195, %1200 : vector<16x8xf32>
    %1202 = vector.extract_strided_slice %944 {offsets = [5, 0, 0], sizes = [1, 16, 8], strides = [1, 1, 1]} : vector<18x16x8xf32> to vector<1x16x8xf32>
    %1203 = vector.shape_cast %1202 : vector<1x16x8xf32> to vector<16x8xf32>
    %1204 = vector.extract_strided_slice %5 {offsets = [4, 0], sizes = [1, 8], strides = [1, 1]} : vector<9x8xf32> to vector<1x8xf32>
    %1205 = vector.broadcast %1204 : vector<1x8xf32> to vector<16x8xf32>
    %1206 = arith.mulf %1203, %1205 : vector<16x8xf32>
    %1207 = arith.addf %1201, %1206 : vector<16x8xf32>
    %1208 = vector.extract_strided_slice %946 {offsets = [5, 0, 0], sizes = [1, 16, 8], strides = [1, 1, 1]} : vector<18x16x8xf32> to vector<1x16x8xf32>
    %1209 = vector.shape_cast %1208 : vector<1x16x8xf32> to vector<16x8xf32>
    %1210 = vector.extract_strided_slice %5 {offsets = [5, 0], sizes = [1, 8], strides = [1, 1]} : vector<9x8xf32> to vector<1x8xf32>
    %1211 = vector.broadcast %1210 : vector<1x8xf32> to vector<16x8xf32>
    %1212 = arith.mulf %1209, %1211 : vector<16x8xf32>
    %1213 = arith.addf %1207, %1212 : vector<16x8xf32>
    %1214 = vector.extract_strided_slice %942 {offsets = [6, 0, 0], sizes = [1, 16, 8], strides = [1, 1, 1]} : vector<18x16x8xf32> to vector<1x16x8xf32>
    %1215 = vector.shape_cast %1214 : vector<1x16x8xf32> to vector<16x8xf32>
    %1216 = vector.extract_strided_slice %5 {offsets = [6, 0], sizes = [1, 8], strides = [1, 1]} : vector<9x8xf32> to vector<1x8xf32>
    %1217 = vector.broadcast %1216 : vector<1x8xf32> to vector<16x8xf32>
    %1218 = arith.mulf %1215, %1217 : vector<16x8xf32>
    %1219 = arith.addf %1213, %1218 : vector<16x8xf32>
    %1220 = vector.extract_strided_slice %944 {offsets = [6, 0, 0], sizes = [1, 16, 8], strides = [1, 1, 1]} : vector<18x16x8xf32> to vector<1x16x8xf32>
    %1221 = vector.shape_cast %1220 : vector<1x16x8xf32> to vector<16x8xf32>
    %1222 = vector.extract_strided_slice %5 {offsets = [7, 0], sizes = [1, 8], strides = [1, 1]} : vector<9x8xf32> to vector<1x8xf32>
    %1223 = vector.broadcast %1222 : vector<1x8xf32> to vector<16x8xf32>
    %1224 = arith.mulf %1221, %1223 : vector<16x8xf32>
    %1225 = arith.addf %1219, %1224 : vector<16x8xf32>
    %1226 = vector.extract_strided_slice %946 {offsets = [6, 0, 0], sizes = [1, 16, 8], strides = [1, 1, 1]} : vector<18x16x8xf32> to vector<1x16x8xf32>
    %1227 = vector.shape_cast %1226 : vector<1x16x8xf32> to vector<16x8xf32>
    %1228 = vector.extract_strided_slice %5 {offsets = [8, 0], sizes = [1, 8], strides = [1, 1]} : vector<9x8xf32> to vector<1x8xf32>
    %1229 = vector.broadcast %1228 : vector<1x8xf32> to vector<16x8xf32>
    %1230 = arith.mulf %1227, %1229 : vector<16x8xf32>
    %1231 = arith.addf %1225, %1230 : vector<16x8xf32>
    %1232 = vector.broadcast %6 : vector<1x8xf32> to vector<16x8xf32>
    %1233 = arith.addf %1231, %1232 : vector<16x8xf32>
    %c1_74 = arith.constant 1 : index
    %c4_75 = arith.constant 4 : index
    %c0_76 = arith.constant 0 : index
    %c0_77 = arith.constant 0 : index
    %1234 = vector.load %arg5[%c1_74, %c4_75, %c0_76, %c0_77] : memref<2x16x16x8xf32, #tpu.memory_space<vmem>>, vector<1x1x16x8xf32>
    %1235 = vector.shape_cast %1234 : vector<1x1x16x8xf32> to vector<16x8xf32>
    %1236 = vector.shape_cast %1233 : vector<16x8xf32> to vector<1x1x16x8xf32>
    tpu.vector_store %arg5[%c1_74, %c4_75, %c0_76, %c0_77], %1236 {strides = array<i32>} : memref<2x16x16x8xf32, #tpu.memory_space<vmem>>, vector<1x1x16x8xf32>,
    %1237 = vector.extract_strided_slice %942 {offsets = [5, 0, 0], sizes = [1, 16, 8], strides = [1, 1, 1]} : vector<18x16x8xf32> to vector<1x16x8xf32>
    %1238 = vector.shape_cast %1237 : vector<1x16x8xf32> to vector<16x8xf32>
    %1239 = vector.extract_strided_slice %5 {offsets = [0, 0], sizes = [1, 8], strides = [1, 1]} : vector<9x8xf32> to vector<1x8xf32>
    %1240 = vector.broadcast %1239 : vector<1x8xf32> to vector<16x8xf32>
    %1241 = arith.mulf %1238, %1240 : vector<16x8xf32>
    %1242 = vector.extract_strided_slice %944 {offsets = [5, 0, 0], sizes = [1, 16, 8], strides = [1, 1, 1]} : vector<18x16x8xf32> to vector<1x16x8xf32>
    %1243 = vector.shape_cast %1242 : vector<1x16x8xf32> to vector<16x8xf32>
    %1244 = vector.extract_strided_slice %5 {offsets = [1, 0], sizes = [1, 8], strides = [1, 1]} : vector<9x8xf32> to vector<1x8xf32>
    %1245 = vector.broadcast %1244 : vector<1x8xf32> to vector<16x8xf32>
    %1246 = arith.mulf %1243, %1245 : vector<16x8xf32>
    %1247 = arith.addf %1241, %1246 : vector<16x8xf32>
    %1248 = vector.extract_strided_slice %946 {offsets = [5, 0, 0], sizes = [1, 16, 8], strides = [1, 1, 1]} : vector<18x16x8xf32> to vector<1x16x8xf32>
    %1249 = vector.shape_cast %1248 : vector<1x16x8xf32> to vector<16x8xf32>
    %1250 = vector.extract_strided_slice %5 {offsets = [2, 0], sizes = [1, 8], strides = [1, 1]} : vector<9x8xf32> to vector<1x8xf32>
    %1251 = vector.broadcast %1250 : vector<1x8xf32> to vector<16x8xf32>
    %1252 = arith.mulf %1249, %1251 : vector<16x8xf32>
    %1253 = arith.addf %1247, %1252 : vector<16x8xf32>
    %1254 = vector.extract_strided_slice %942 {offsets = [6, 0, 0], sizes = [1, 16, 8], strides = [1, 1, 1]} : vector<18x16x8xf32> to vector<1x16x8xf32>
    %1255 = vector.shape_cast %1254 : vector<1x16x8xf32> to vector<16x8xf32>
    %1256 = vector.extract_strided_slice %5 {offsets = [3, 0], sizes = [1, 8], strides = [1, 1]} : vector<9x8xf32> to vector<1x8xf32>
    %1257 = vector.broadcast %1256 : vector<1x8xf32> to vector<16x8xf32>
    %1258 = arith.mulf %1255, %1257 : vector<16x8xf32>
    %1259 = arith.addf %1253, %1258 : vector<16x8xf32>
    %1260 = vector.extract_strided_slice %944 {offsets = [6, 0, 0], sizes = [1, 16, 8], strides = [1, 1, 1]} : vector<18x16x8xf32> to vector<1x16x8xf32>
    %1261 = vector.shape_cast %1260 : vector<1x16x8xf32> to vector<16x8xf32>
    %1262 = vector.extract_strided_slice %5 {offsets = [4, 0], sizes = [1, 8], strides = [1, 1]} : vector<9x8xf32> to vector<1x8xf32>
    %1263 = vector.broadcast %1262 : vector<1x8xf32> to vector<16x8xf32>
    %1264 = arith.mulf %1261, %1263 : vector<16x8xf32>
    %1265 = arith.addf %1259, %1264 : vector<16x8xf32>
    %1266 = vector.extract_strided_slice %946 {offsets = [6, 0, 0], sizes = [1, 16, 8], strides = [1, 1, 1]} : vector<18x16x8xf32> to vector<1x16x8xf32>
    %1267 = vector.shape_cast %1266 : vector<1x16x8xf32> to vector<16x8xf32>
    %1268 = vector.extract_strided_slice %5 {offsets = [5, 0], sizes = [1, 8], strides = [1, 1]} : vector<9x8xf32> to vector<1x8xf32>
    %1269 = vector.broadcast %1268 : vector<1x8xf32> to vector<16x8xf32>
    %1270 = arith.mulf %1267, %1269 : vector<16x8xf32>
    %1271 = arith.addf %1265, %1270 : vector<16x8xf32>
    %1272 = vector.extract_strided_slice %942 {offsets = [7, 0, 0], sizes = [1, 16, 8], strides = [1, 1, 1]} : vector<18x16x8xf32> to vector<1x16x8xf32>
    %1273 = vector.shape_cast %1272 : vector<1x16x8xf32> to vector<16x8xf32>
    %1274 = vector.extract_strided_slice %5 {offsets = [6, 0], sizes = [1, 8], strides = [1, 1]} : vector<9x8xf32> to vector<1x8xf32>
    %1275 = vector.broadcast %1274 : vector<1x8xf32> to vector<16x8xf32>
    %1276 = arith.mulf %1273, %1275 : vector<16x8xf32>
    %1277 = arith.addf %1271, %1276 : vector<16x8xf32>
    %1278 = vector.extract_strided_slice %944 {offsets = [7, 0, 0], sizes = [1, 16, 8], strides = [1, 1, 1]} : vector<18x16x8xf32> to vector<1x16x8xf32>
    %1279 = vector.shape_cast %1278 : vector<1x16x8xf32> to vector<16x8xf32>
    %1280 = vector.extract_strided_slice %5 {offsets = [7, 0], sizes = [1, 8], strides = [1, 1]} : vector<9x8xf32> to vector<1x8xf32>
    %1281 = vector.broadcast %1280 : vector<1x8xf32> to vector<16x8xf32>
    %1282 = arith.mulf %1279, %1281 : vector<16x8xf32>
    %1283 = arith.addf %1277, %1282 : vector<16x8xf32>
    %1284 = vector.extract_strided_slice %946 {offsets = [7, 0, 0], sizes = [1, 16, 8], strides = [1, 1, 1]} : vector<18x16x8xf32> to vector<1x16x8xf32>
    %1285 = vector.shape_cast %1284 : vector<1x16x8xf32> to vector<16x8xf32>
    %1286 = vector.extract_strided_slice %5 {offsets = [8, 0], sizes = [1, 8], strides = [1, 1]} : vector<9x8xf32> to vector<1x8xf32>
    %1287 = vector.broadcast %1286 : vector<1x8xf32> to vector<16x8xf32>
    %1288 = arith.mulf %1285, %1287 : vector<16x8xf32>
    %1289 = arith.addf %1283, %1288 : vector<16x8xf32>
    %1290 = vector.broadcast %6 : vector<1x8xf32> to vector<16x8xf32>
    %1291 = arith.addf %1289, %1290 : vector<16x8xf32>
    %c1_78 = arith.constant 1 : index
    %c5_79 = arith.constant 5 : index
    %c0_80 = arith.constant 0 : index
    %c0_81 = arith.constant 0 : index
    %1292 = vector.load %arg5[%c1_78, %c5_79, %c0_80, %c0_81] : memref<2x16x16x8xf32, #tpu.memory_space<vmem>>, vector<1x1x16x8xf32>
    %1293 = vector.shape_cast %1292 : vector<1x1x16x8xf32> to vector<16x8xf32>
    %1294 = vector.shape_cast %1291 : vector<16x8xf32> to vector<1x1x16x8xf32>
    tpu.vector_store %arg5[%c1_78, %c5_79, %c0_80, %c0_81], %1294 {strides = array<i32>} : memref<2x16x16x8xf32, #tpu.memory_space<vmem>>, vector<1x1x16x8xf32>,
    %1295 = vector.extract_strided_slice %942 {offsets = [6, 0, 0], sizes = [1, 16, 8], strides = [1, 1, 1]} : vector<18x16x8xf32> to vector<1x16x8xf32>
    %1296 = vector.shape_cast %1295 : vector<1x16x8xf32> to vector<16x8xf32>
    %1297 = vector.extract_strided_slice %5 {offsets = [0, 0], sizes = [1, 8], strides = [1, 1]} : vector<9x8xf32> to vector<1x8xf32>
    %1298 = vector.broadcast %1297 : vector<1x8xf32> to vector<16x8xf32>
    %1299 = arith.mulf %1296, %1298 : vector<16x8xf32>
    %1300 = vector.extract_strided_slice %944 {offsets = [6, 0, 0], sizes = [1, 16, 8], strides = [1, 1, 1]} : vector<18x16x8xf32> to vector<1x16x8xf32>
    %1301 = vector.shape_cast %1300 : vector<1x16x8xf32> to vector<16x8xf32>
    %1302 = vector.extract_strided_slice %5 {offsets = [1, 0], sizes = [1, 8], strides = [1, 1]} : vector<9x8xf32> to vector<1x8xf32>
    %1303 = vector.broadcast %1302 : vector<1x8xf32> to vector<16x8xf32>
    %1304 = arith.mulf %1301, %1303 : vector<16x8xf32>
    %1305 = arith.addf %1299, %1304 : vector<16x8xf32>
    %1306 = vector.extract_strided_slice %946 {offsets = [6, 0, 0], sizes = [1, 16, 8], strides = [1, 1, 1]} : vector<18x16x8xf32> to vector<1x16x8xf32>
    %1307 = vector.shape_cast %1306 : vector<1x16x8xf32> to vector<16x8xf32>
    %1308 = vector.extract_strided_slice %5 {offsets = [2, 0], sizes = [1, 8], strides = [1, 1]} : vector<9x8xf32> to vector<1x8xf32>
    %1309 = vector.broadcast %1308 : vector<1x8xf32> to vector<16x8xf32>
    %1310 = arith.mulf %1307, %1309 : vector<16x8xf32>
    %1311 = arith.addf %1305, %1310 : vector<16x8xf32>
    %1312 = vector.extract_strided_slice %942 {offsets = [7, 0, 0], sizes = [1, 16, 8], strides = [1, 1, 1]} : vector<18x16x8xf32> to vector<1x16x8xf32>
    %1313 = vector.shape_cast %1312 : vector<1x16x8xf32> to vector<16x8xf32>
    %1314 = vector.extract_strided_slice %5 {offsets = [3, 0], sizes = [1, 8], strides = [1, 1]} : vector<9x8xf32> to vector<1x8xf32>
    %1315 = vector.broadcast %1314 : vector<1x8xf32> to vector<16x8xf32>
    %1316 = arith.mulf %1313, %1315 : vector<16x8xf32>
    %1317 = arith.addf %1311, %1316 : vector<16x8xf32>
    %1318 = vector.extract_strided_slice %944 {offsets = [7, 0, 0], sizes = [1, 16, 8], strides = [1, 1, 1]} : vector<18x16x8xf32> to vector<1x16x8xf32>
    %1319 = vector.shape_cast %1318 : vector<1x16x8xf32> to vector<16x8xf32>
    %1320 = vector.extract_strided_slice %5 {offsets = [4, 0], sizes = [1, 8], strides = [1, 1]} : vector<9x8xf32> to vector<1x8xf32>
    %1321 = vector.broadcast %1320 : vector<1x8xf32> to vector<16x8xf32>
    %1322 = arith.mulf %1319, %1321 : vector<16x8xf32>
    %1323 = arith.addf %1317, %1322 : vector<16x8xf32>
    %1324 = vector.extract_strided_slice %946 {offsets = [7, 0, 0], sizes = [1, 16, 8], strides = [1, 1, 1]} : vector<18x16x8xf32> to vector<1x16x8xf32>
    %1325 = vector.shape_cast %1324 : vector<1x16x8xf32> to vector<16x8xf32>
    %1326 = vector.extract_strided_slice %5 {offsets = [5, 0], sizes = [1, 8], strides = [1, 1]} : vector<9x8xf32> to vector<1x8xf32>
    %1327 = vector.broadcast %1326 : vector<1x8xf32> to vector<16x8xf32>
    %1328 = arith.mulf %1325, %1327 : vector<16x8xf32>
    %1329 = arith.addf %1323, %1328 : vector<16x8xf32>
    %1330 = vector.extract_strided_slice %942 {offsets = [8, 0, 0], sizes = [1, 16, 8], strides = [1, 1, 1]} : vector<18x16x8xf32> to vector<1x16x8xf32>
    %1331 = vector.shape_cast %1330 : vector<1x16x8xf32> to vector<16x8xf32>
    %1332 = vector.extract_strided_slice %5 {offsets = [6, 0], sizes = [1, 8], strides = [1, 1]} : vector<9x8xf32> to vector<1x8xf32>
    %1333 = vector.broadcast %1332 : vector<1x8xf32> to vector<16x8xf32>
    %1334 = arith.mulf %1331, %1333 : vector<16x8xf32>
    %1335 = arith.addf %1329, %1334 : vector<16x8xf32>
    %1336 = vector.extract_strided_slice %944 {offsets = [8, 0, 0], sizes = [1, 16, 8], strides = [1, 1, 1]} : vector<18x16x8xf32> to vector<1x16x8xf32>
    %1337 = vector.shape_cast %1336 : vector<1x16x8xf32> to vector<16x8xf32>
    %1338 = vector.extract_strided_slice %5 {offsets = [7, 0], sizes = [1, 8], strides = [1, 1]} : vector<9x8xf32> to vector<1x8xf32>
    %1339 = vector.broadcast %1338 : vector<1x8xf32> to vector<16x8xf32>
    %1340 = arith.mulf %1337, %1339 : vector<16x8xf32>
    %1341 = arith.addf %1335, %1340 : vector<16x8xf32>
    %1342 = vector.extract_strided_slice %946 {offsets = [8, 0, 0], sizes = [1, 16, 8], strides = [1, 1, 1]} : vector<18x16x8xf32> to vector<1x16x8xf32>
    %1343 = vector.shape_cast %1342 : vector<1x16x8xf32> to vector<16x8xf32>
    %1344 = vector.extract_strided_slice %5 {offsets = [8, 0], sizes = [1, 8], strides = [1, 1]} : vector<9x8xf32> to vector<1x8xf32>
    %1345 = vector.broadcast %1344 : vector<1x8xf32> to vector<16x8xf32>
    %1346 = arith.mulf %1343, %1345 : vector<16x8xf32>
    %1347 = arith.addf %1341, %1346 : vector<16x8xf32>
    %1348 = vector.broadcast %6 : vector<1x8xf32> to vector<16x8xf32>
    %1349 = arith.addf %1347, %1348 : vector<16x8xf32>
    %c1_82 = arith.constant 1 : index
    %c6_83 = arith.constant 6 : index
    %c0_84 = arith.constant 0 : index
    %c0_85 = arith.constant 0 : index
    %1350 = vector.load %arg5[%c1_82, %c6_83, %c0_84, %c0_85] : memref<2x16x16x8xf32, #tpu.memory_space<vmem>>, vector<1x1x16x8xf32>
    %1351 = vector.shape_cast %1350 : vector<1x1x16x8xf32> to vector<16x8xf32>
    %1352 = vector.shape_cast %1349 : vector<16x8xf32> to vector<1x1x16x8xf32>
    tpu.vector_store %arg5[%c1_82, %c6_83, %c0_84, %c0_85], %1352 {strides = array<i32>} : memref<2x16x16x8xf32, #tpu.memory_space<vmem>>, vector<1x1x16x8xf32>,
    %1353 = vector.extract_strided_slice %942 {offsets = [7, 0, 0], sizes = [1, 16, 8], strides = [1, 1, 1]} : vector<18x16x8xf32> to vector<1x16x8xf32>
    %1354 = vector.shape_cast %1353 : vector<1x16x8xf32> to vector<16x8xf32>
    %1355 = vector.extract_strided_slice %5 {offsets = [0, 0], sizes = [1, 8], strides = [1, 1]} : vector<9x8xf32> to vector<1x8xf32>
    %1356 = vector.broadcast %1355 : vector<1x8xf32> to vector<16x8xf32>
    %1357 = arith.mulf %1354, %1356 : vector<16x8xf32>
    %1358 = vector.extract_strided_slice %944 {offsets = [7, 0, 0], sizes = [1, 16, 8], strides = [1, 1, 1]} : vector<18x16x8xf32> to vector<1x16x8xf32>
    %1359 = vector.shape_cast %1358 : vector<1x16x8xf32> to vector<16x8xf32>
    %1360 = vector.extract_strided_slice %5 {offsets = [1, 0], sizes = [1, 8], strides = [1, 1]} : vector<9x8xf32> to vector<1x8xf32>
    %1361 = vector.broadcast %1360 : vector<1x8xf32> to vector<16x8xf32>
    %1362 = arith.mulf %1359, %1361 : vector<16x8xf32>
    %1363 = arith.addf %1357, %1362 : vector<16x8xf32>
    %1364 = vector.extract_strided_slice %946 {offsets = [7, 0, 0], sizes = [1, 16, 8], strides = [1, 1, 1]} : vector<18x16x8xf32> to vector<1x16x8xf32>
    %1365 = vector.shape_cast %1364 : vector<1x16x8xf32> to vector<16x8xf32>
    %1366 = vector.extract_strided_slice %5 {offsets = [2, 0], sizes = [1, 8], strides = [1, 1]} : vector<9x8xf32> to vector<1x8xf32>
    %1367 = vector.broadcast %1366 : vector<1x8xf32> to vector<16x8xf32>
    %1368 = arith.mulf %1365, %1367 : vector<16x8xf32>
    %1369 = arith.addf %1363, %1368 : vector<16x8xf32>
    %1370 = vector.extract_strided_slice %942 {offsets = [8, 0, 0], sizes = [1, 16, 8], strides = [1, 1, 1]} : vector<18x16x8xf32> to vector<1x16x8xf32>
    %1371 = vector.shape_cast %1370 : vector<1x16x8xf32> to vector<16x8xf32>
    %1372 = vector.extract_strided_slice %5 {offsets = [3, 0], sizes = [1, 8], strides = [1, 1]} : vector<9x8xf32> to vector<1x8xf32>
    %1373 = vector.broadcast %1372 : vector<1x8xf32> to vector<16x8xf32>
    %1374 = arith.mulf %1371, %1373 : vector<16x8xf32>
    %1375 = arith.addf %1369, %1374 : vector<16x8xf32>
    %1376 = vector.extract_strided_slice %944 {offsets = [8, 0, 0], sizes = [1, 16, 8], strides = [1, 1, 1]} : vector<18x16x8xf32> to vector<1x16x8xf32>
    %1377 = vector.shape_cast %1376 : vector<1x16x8xf32> to vector<16x8xf32>
    %1378 = vector.extract_strided_slice %5 {offsets = [4, 0], sizes = [1, 8], strides = [1, 1]} : vector<9x8xf32> to vector<1x8xf32>
    %1379 = vector.broadcast %1378 : vector<1x8xf32> to vector<16x8xf32>
    %1380 = arith.mulf %1377, %1379 : vector<16x8xf32>
    %1381 = arith.addf %1375, %1380 : vector<16x8xf32>
    %1382 = vector.extract_strided_slice %946 {offsets = [8, 0, 0], sizes = [1, 16, 8], strides = [1, 1, 1]} : vector<18x16x8xf32> to vector<1x16x8xf32>
    %1383 = vector.shape_cast %1382 : vector<1x16x8xf32> to vector<16x8xf32>
    %1384 = vector.extract_strided_slice %5 {offsets = [5, 0], sizes = [1, 8], strides = [1, 1]} : vector<9x8xf32> to vector<1x8xf32>
    %1385 = vector.broadcast %1384 : vector<1x8xf32> to vector<16x8xf32>
    %1386 = arith.mulf %1383, %1385 : vector<16x8xf32>
    %1387 = arith.addf %1381, %1386 : vector<16x8xf32>
    %1388 = vector.extract_strided_slice %942 {offsets = [9, 0, 0], sizes = [1, 16, 8], strides = [1, 1, 1]} : vector<18x16x8xf32> to vector<1x16x8xf32>
    %1389 = vector.shape_cast %1388 : vector<1x16x8xf32> to vector<16x8xf32>
    %1390 = vector.extract_strided_slice %5 {offsets = [6, 0], sizes = [1, 8], strides = [1, 1]} : vector<9x8xf32> to vector<1x8xf32>
    %1391 = vector.broadcast %1390 : vector<1x8xf32> to vector<16x8xf32>
    %1392 = arith.mulf %1389, %1391 : vector<16x8xf32>
    %1393 = arith.addf %1387, %1392 : vector<16x8xf32>
    %1394 = vector.extract_strided_slice %944 {offsets = [9, 0, 0], sizes = [1, 16, 8], strides = [1, 1, 1]} : vector<18x16x8xf32> to vector<1x16x8xf32>
    %1395 = vector.shape_cast %1394 : vector<1x16x8xf32> to vector<16x8xf32>
    %1396 = vector.extract_strided_slice %5 {offsets = [7, 0], sizes = [1, 8], strides = [1, 1]} : vector<9x8xf32> to vector<1x8xf32>
    %1397 = vector.broadcast %1396 : vector<1x8xf32> to vector<16x8xf32>
    %1398 = arith.mulf %1395, %1397 : vector<16x8xf32>
    %1399 = arith.addf %1393, %1398 : vector<16x8xf32>
    %1400 = vector.extract_strided_slice %946 {offsets = [9, 0, 0], sizes = [1, 16, 8], strides = [1, 1, 1]} : vector<18x16x8xf32> to vector<1x16x8xf32>
    %1401 = vector.shape_cast %1400 : vector<1x16x8xf32> to vector<16x8xf32>
    %1402 = vector.extract_strided_slice %5 {offsets = [8, 0], sizes = [1, 8], strides = [1, 1]} : vector<9x8xf32> to vector<1x8xf32>
    %1403 = vector.broadcast %1402 : vector<1x8xf32> to vector<16x8xf32>
    %1404 = arith.mulf %1401, %1403 : vector<16x8xf32>
    %1405 = arith.addf %1399, %1404 : vector<16x8xf32>
    %1406 = vector.broadcast %6 : vector<1x8xf32> to vector<16x8xf32>
    %1407 = arith.addf %1405, %1406 : vector<16x8xf32>
    %c1_86 = arith.constant 1 : index
    %c7_87 = arith.constant 7 : index
    %c0_88 = arith.constant 0 : index
    %c0_89 = arith.constant 0 : index
    %1408 = vector.load %arg5[%c1_86, %c7_87, %c0_88, %c0_89] : memref<2x16x16x8xf32, #tpu.memory_space<vmem>>, vector<1x1x16x8xf32>
    %1409 = vector.shape_cast %1408 : vector<1x1x16x8xf32> to vector<16x8xf32>
    %1410 = vector.shape_cast %1407 : vector<16x8xf32> to vector<1x1x16x8xf32>
    tpu.vector_store %arg5[%c1_86, %c7_87, %c0_88, %c0_89], %1410 {strides = array<i32>} : memref<2x16x16x8xf32, #tpu.memory_space<vmem>>, vector<1x1x16x8xf32>,
    %1411 = vector.extract_strided_slice %942 {offsets = [8, 0, 0], sizes = [1, 16, 8], strides = [1, 1, 1]} : vector<18x16x8xf32> to vector<1x16x8xf32>
    %1412 = vector.shape_cast %1411 : vector<1x16x8xf32> to vector<16x8xf32>
    %1413 = vector.extract_strided_slice %5 {offsets = [0, 0], sizes = [1, 8], strides = [1, 1]} : vector<9x8xf32> to vector<1x8xf32>
    %1414 = vector.broadcast %1413 : vector<1x8xf32> to vector<16x8xf32>
    %1415 = arith.mulf %1412, %1414 : vector<16x8xf32>
    %1416 = vector.extract_strided_slice %944 {offsets = [8, 0, 0], sizes = [1, 16, 8], strides = [1, 1, 1]} : vector<18x16x8xf32> to vector<1x16x8xf32>
    %1417 = vector.shape_cast %1416 : vector<1x16x8xf32> to vector<16x8xf32>
    %1418 = vector.extract_strided_slice %5 {offsets = [1, 0], sizes = [1, 8], strides = [1, 1]} : vector<9x8xf32> to vector<1x8xf32>
    %1419 = vector.broadcast %1418 : vector<1x8xf32> to vector<16x8xf32>
    %1420 = arith.mulf %1417, %1419 : vector<16x8xf32>
    %1421 = arith.addf %1415, %1420 : vector<16x8xf32>
    %1422 = vector.extract_strided_slice %946 {offsets = [8, 0, 0], sizes = [1, 16, 8], strides = [1, 1, 1]} : vector<18x16x8xf32> to vector<1x16x8xf32>
    %1423 = vector.shape_cast %1422 : vector<1x16x8xf32> to vector<16x8xf32>
    %1424 = vector.extract_strided_slice %5 {offsets = [2, 0], sizes = [1, 8], strides = [1, 1]} : vector<9x8xf32> to vector<1x8xf32>
    %1425 = vector.broadcast %1424 : vector<1x8xf32> to vector<16x8xf32>
    %1426 = arith.mulf %1423, %1425 : vector<16x8xf32>
    %1427 = arith.addf %1421, %1426 : vector<16x8xf32>
    %1428 = vector.extract_strided_slice %942 {offsets = [9, 0, 0], sizes = [1, 16, 8], strides = [1, 1, 1]} : vector<18x16x8xf32> to vector<1x16x8xf32>
    %1429 = vector.shape_cast %1428 : vector<1x16x8xf32> to vector<16x8xf32>
    %1430 = vector.extract_strided_slice %5 {offsets = [3, 0], sizes = [1, 8], strides = [1, 1]} : vector<9x8xf32> to vector<1x8xf32>
    %1431 = vector.broadcast %1430 : vector<1x8xf32> to vector<16x8xf32>
    %1432 = arith.mulf %1429, %1431 : vector<16x8xf32>
    %1433 = arith.addf %1427, %1432 : vector<16x8xf32>
    %1434 = vector.extract_strided_slice %944 {offsets = [9, 0, 0], sizes = [1, 16, 8], strides = [1, 1, 1]} : vector<18x16x8xf32> to vector<1x16x8xf32>
    %1435 = vector.shape_cast %1434 : vector<1x16x8xf32> to vector<16x8xf32>
    %1436 = vector.extract_strided_slice %5 {offsets = [4, 0], sizes = [1, 8], strides = [1, 1]} : vector<9x8xf32> to vector<1x8xf32>
    %1437 = vector.broadcast %1436 : vector<1x8xf32> to vector<16x8xf32>
    %1438 = arith.mulf %1435, %1437 : vector<16x8xf32>
    %1439 = arith.addf %1433, %1438 : vector<16x8xf32>
    %1440 = vector.extract_strided_slice %946 {offsets = [9, 0, 0], sizes = [1, 16, 8], strides = [1, 1, 1]} : vector<18x16x8xf32> to vector<1x16x8xf32>
    %1441 = vector.shape_cast %1440 : vector<1x16x8xf32> to vector<16x8xf32>
    %1442 = vector.extract_strided_slice %5 {offsets = [5, 0], sizes = [1, 8], strides = [1, 1]} : vector<9x8xf32> to vector<1x8xf32>
    %1443 = vector.broadcast %1442 : vector<1x8xf32> to vector<16x8xf32>
    %1444 = arith.mulf %1441, %1443 : vector<16x8xf32>
    %1445 = arith.addf %1439, %1444 : vector<16x8xf32>
    %1446 = vector.extract_strided_slice %942 {offsets = [10, 0, 0], sizes = [1, 16, 8], strides = [1, 1, 1]} : vector<18x16x8xf32> to vector<1x16x8xf32>
    %1447 = vector.shape_cast %1446 : vector<1x16x8xf32> to vector<16x8xf32>
    %1448 = vector.extract_strided_slice %5 {offsets = [6, 0], sizes = [1, 8], strides = [1, 1]} : vector<9x8xf32> to vector<1x8xf32>
    %1449 = vector.broadcast %1448 : vector<1x8xf32> to vector<16x8xf32>
    %1450 = arith.mulf %1447, %1449 : vector<16x8xf32>
    %1451 = arith.addf %1445, %1450 : vector<16x8xf32>
    %1452 = vector.extract_strided_slice %944 {offsets = [10, 0, 0], sizes = [1, 16, 8], strides = [1, 1, 1]} : vector<18x16x8xf32> to vector<1x16x8xf32>
    %1453 = vector.shape_cast %1452 : vector<1x16x8xf32> to vector<16x8xf32>
    %1454 = vector.extract_strided_slice %5 {offsets = [7, 0], sizes = [1, 8], strides = [1, 1]} : vector<9x8xf32> to vector<1x8xf32>
    %1455 = vector.broadcast %1454 : vector<1x8xf32> to vector<16x8xf32>
    %1456 = arith.mulf %1453, %1455 : vector<16x8xf32>
    %1457 = arith.addf %1451, %1456 : vector<16x8xf32>
    %1458 = vector.extract_strided_slice %946 {offsets = [10, 0, 0], sizes = [1, 16, 8], strides = [1, 1, 1]} : vector<18x16x8xf32> to vector<1x16x8xf32>
    %1459 = vector.shape_cast %1458 : vector<1x16x8xf32> to vector<16x8xf32>
    %1460 = vector.extract_strided_slice %5 {offsets = [8, 0], sizes = [1, 8], strides = [1, 1]} : vector<9x8xf32> to vector<1x8xf32>
    %1461 = vector.broadcast %1460 : vector<1x8xf32> to vector<16x8xf32>
    %1462 = arith.mulf %1459, %1461 : vector<16x8xf32>
    %1463 = arith.addf %1457, %1462 : vector<16x8xf32>
    %1464 = vector.broadcast %6 : vector<1x8xf32> to vector<16x8xf32>
    %1465 = arith.addf %1463, %1464 : vector<16x8xf32>
    %c1_90 = arith.constant 1 : index
    %c8_91 = arith.constant 8 : index
    %c0_92 = arith.constant 0 : index
    %c0_93 = arith.constant 0 : index
    %1466 = vector.load %arg5[%c1_90, %c8_91, %c0_92, %c0_93] : memref<2x16x16x8xf32, #tpu.memory_space<vmem>>, vector<1x1x16x8xf32>
    %1467 = vector.shape_cast %1466 : vector<1x1x16x8xf32> to vector<16x8xf32>
    %1468 = vector.shape_cast %1465 : vector<16x8xf32> to vector<1x1x16x8xf32>
    tpu.vector_store %arg5[%c1_90, %c8_91, %c0_92, %c0_93], %1468 {strides = array<i32>} : memref<2x16x16x8xf32, #tpu.memory_space<vmem>>, vector<1x1x16x8xf32>,
    %1469 = vector.extract_strided_slice %942 {offsets = [9, 0, 0], sizes = [1, 16, 8], strides = [1, 1, 1]} : vector<18x16x8xf32> to vector<1x16x8xf32>
    %1470 = vector.shape_cast %1469 : vector<1x16x8xf32> to vector<16x8xf32>
    %1471 = vector.extract_strided_slice %5 {offsets = [0, 0], sizes = [1, 8], strides = [1, 1]} : vector<9x8xf32> to vector<1x8xf32>
    %1472 = vector.broadcast %1471 : vector<1x8xf32> to vector<16x8xf32>
    %1473 = arith.mulf %1470, %1472 : vector<16x8xf32>
    %1474 = vector.extract_strided_slice %944 {offsets = [9, 0, 0], sizes = [1, 16, 8], strides = [1, 1, 1]} : vector<18x16x8xf32> to vector<1x16x8xf32>
    %1475 = vector.shape_cast %1474 : vector<1x16x8xf32> to vector<16x8xf32>
    %1476 = vector.extract_strided_slice %5 {offsets = [1, 0], sizes = [1, 8], strides = [1, 1]} : vector<9x8xf32> to vector<1x8xf32>
    %1477 = vector.broadcast %1476 : vector<1x8xf32> to vector<16x8xf32>
    %1478 = arith.mulf %1475, %1477 : vector<16x8xf32>
    %1479 = arith.addf %1473, %1478 : vector<16x8xf32>
    %1480 = vector.extract_strided_slice %946 {offsets = [9, 0, 0], sizes = [1, 16, 8], strides = [1, 1, 1]} : vector<18x16x8xf32> to vector<1x16x8xf32>
    %1481 = vector.shape_cast %1480 : vector<1x16x8xf32> to vector<16x8xf32>
    %1482 = vector.extract_strided_slice %5 {offsets = [2, 0], sizes = [1, 8], strides = [1, 1]} : vector<9x8xf32> to vector<1x8xf32>
    %1483 = vector.broadcast %1482 : vector<1x8xf32> to vector<16x8xf32>
    %1484 = arith.mulf %1481, %1483 : vector<16x8xf32>
    %1485 = arith.addf %1479, %1484 : vector<16x8xf32>
    %1486 = vector.extract_strided_slice %942 {offsets = [10, 0, 0], sizes = [1, 16, 8], strides = [1, 1, 1]} : vector<18x16x8xf32> to vector<1x16x8xf32>
    %1487 = vector.shape_cast %1486 : vector<1x16x8xf32> to vector<16x8xf32>
    %1488 = vector.extract_strided_slice %5 {offsets = [3, 0], sizes = [1, 8], strides = [1, 1]} : vector<9x8xf32> to vector<1x8xf32>
    %1489 = vector.broadcast %1488 : vector<1x8xf32> to vector<16x8xf32>
    %1490 = arith.mulf %1487, %1489 : vector<16x8xf32>
    %1491 = arith.addf %1485, %1490 : vector<16x8xf32>
    %1492 = vector.extract_strided_slice %944 {offsets = [10, 0, 0], sizes = [1, 16, 8], strides = [1, 1, 1]} : vector<18x16x8xf32> to vector<1x16x8xf32>
    %1493 = vector.shape_cast %1492 : vector<1x16x8xf32> to vector<16x8xf32>
    %1494 = vector.extract_strided_slice %5 {offsets = [4, 0], sizes = [1, 8], strides = [1, 1]} : vector<9x8xf32> to vector<1x8xf32>
    %1495 = vector.broadcast %1494 : vector<1x8xf32> to vector<16x8xf32>
    %1496 = arith.mulf %1493, %1495 : vector<16x8xf32>
    %1497 = arith.addf %1491, %1496 : vector<16x8xf32>
    %1498 = vector.extract_strided_slice %946 {offsets = [10, 0, 0], sizes = [1, 16, 8], strides = [1, 1, 1]} : vector<18x16x8xf32> to vector<1x16x8xf32>
    %1499 = vector.shape_cast %1498 : vector<1x16x8xf32> to vector<16x8xf32>
    %1500 = vector.extract_strided_slice %5 {offsets = [5, 0], sizes = [1, 8], strides = [1, 1]} : vector<9x8xf32> to vector<1x8xf32>
    %1501 = vector.broadcast %1500 : vector<1x8xf32> to vector<16x8xf32>
    %1502 = arith.mulf %1499, %1501 : vector<16x8xf32>
    %1503 = arith.addf %1497, %1502 : vector<16x8xf32>
    %1504 = vector.extract_strided_slice %942 {offsets = [11, 0, 0], sizes = [1, 16, 8], strides = [1, 1, 1]} : vector<18x16x8xf32> to vector<1x16x8xf32>
    %1505 = vector.shape_cast %1504 : vector<1x16x8xf32> to vector<16x8xf32>
    %1506 = vector.extract_strided_slice %5 {offsets = [6, 0], sizes = [1, 8], strides = [1, 1]} : vector<9x8xf32> to vector<1x8xf32>
    %1507 = vector.broadcast %1506 : vector<1x8xf32> to vector<16x8xf32>
    %1508 = arith.mulf %1505, %1507 : vector<16x8xf32>
    %1509 = arith.addf %1503, %1508 : vector<16x8xf32>
    %1510 = vector.extract_strided_slice %944 {offsets = [11, 0, 0], sizes = [1, 16, 8], strides = [1, 1, 1]} : vector<18x16x8xf32> to vector<1x16x8xf32>
    %1511 = vector.shape_cast %1510 : vector<1x16x8xf32> to vector<16x8xf32>
    %1512 = vector.extract_strided_slice %5 {offsets = [7, 0], sizes = [1, 8], strides = [1, 1]} : vector<9x8xf32> to vector<1x8xf32>
    %1513 = vector.broadcast %1512 : vector<1x8xf32> to vector<16x8xf32>
    %1514 = arith.mulf %1511, %1513 : vector<16x8xf32>
    %1515 = arith.addf %1509, %1514 : vector<16x8xf32>
    %1516 = vector.extract_strided_slice %946 {offsets = [11, 0, 0], sizes = [1, 16, 8], strides = [1, 1, 1]} : vector<18x16x8xf32> to vector<1x16x8xf32>
    %1517 = vector.shape_cast %1516 : vector<1x16x8xf32> to vector<16x8xf32>
    %1518 = vector.extract_strided_slice %5 {offsets = [8, 0], sizes = [1, 8], strides = [1, 1]} : vector<9x8xf32> to vector<1x8xf32>
    %1519 = vector.broadcast %1518 : vector<1x8xf32> to vector<16x8xf32>
    %1520 = arith.mulf %1517, %1519 : vector<16x8xf32>
    %1521 = arith.addf %1515, %1520 : vector<16x8xf32>
    %1522 = vector.broadcast %6 : vector<1x8xf32> to vector<16x8xf32>
    %1523 = arith.addf %1521, %1522 : vector<16x8xf32>
    %c1_94 = arith.constant 1 : index
    %c9_95 = arith.constant 9 : index
    %c0_96 = arith.constant 0 : index
    %c0_97 = arith.constant 0 : index
    %1524 = vector.load %arg5[%c1_94, %c9_95, %c0_96, %c0_97] : memref<2x16x16x8xf32, #tpu.memory_space<vmem>>, vector<1x1x16x8xf32>
    %1525 = vector.shape_cast %1524 : vector<1x1x16x8xf32> to vector<16x8xf32>
    %1526 = vector.shape_cast %1523 : vector<16x8xf32> to vector<1x1x16x8xf32>
    tpu.vector_store %arg5[%c1_94, %c9_95, %c0_96, %c0_97], %1526 {strides = array<i32>} : memref<2x16x16x8xf32, #tpu.memory_space<vmem>>, vector<1x1x16x8xf32>,
    %1527 = vector.extract_strided_slice %942 {offsets = [10, 0, 0], sizes = [1, 16, 8], strides = [1, 1, 1]} : vector<18x16x8xf32> to vector<1x16x8xf32>
    %1528 = vector.shape_cast %1527 : vector<1x16x8xf32> to vector<16x8xf32>
    %1529 = vector.extract_strided_slice %5 {offsets = [0, 0], sizes = [1, 8], strides = [1, 1]} : vector<9x8xf32> to vector<1x8xf32>
    %1530 = vector.broadcast %1529 : vector<1x8xf32> to vector<16x8xf32>
    %1531 = arith.mulf %1528, %1530 : vector<16x8xf32>
    %1532 = vector.extract_strided_slice %944 {offsets = [10, 0, 0], sizes = [1, 16, 8], strides = [1, 1, 1]} : vector<18x16x8xf32> to vector<1x16x8xf32>
    %1533 = vector.shape_cast %1532 : vector<1x16x8xf32> to vector<16x8xf32>
    %1534 = vector.extract_strided_slice %5 {offsets = [1, 0], sizes = [1, 8], strides = [1, 1]} : vector<9x8xf32> to vector<1x8xf32>
    %1535 = vector.broadcast %1534 : vector<1x8xf32> to vector<16x8xf32>
    %1536 = arith.mulf %1533, %1535 : vector<16x8xf32>
    %1537 = arith.addf %1531, %1536 : vector<16x8xf32>
    %1538 = vector.extract_strided_slice %946 {offsets = [10, 0, 0], sizes = [1, 16, 8], strides = [1, 1, 1]} : vector<18x16x8xf32> to vector<1x16x8xf32>
    %1539 = vector.shape_cast %1538 : vector<1x16x8xf32> to vector<16x8xf32>
    %1540 = vector.extract_strided_slice %5 {offsets = [2, 0], sizes = [1, 8], strides = [1, 1]} : vector<9x8xf32> to vector<1x8xf32>
    %1541 = vector.broadcast %1540 : vector<1x8xf32> to vector<16x8xf32>
    %1542 = arith.mulf %1539, %1541 : vector<16x8xf32>
    %1543 = arith.addf %1537, %1542 : vector<16x8xf32>
    %1544 = vector.extract_strided_slice %942 {offsets = [11, 0, 0], sizes = [1, 16, 8], strides = [1, 1, 1]} : vector<18x16x8xf32> to vector<1x16x8xf32>
    %1545 = vector.shape_cast %1544 : vector<1x16x8xf32> to vector<16x8xf32>
    %1546 = vector.extract_strided_slice %5 {offsets = [3, 0], sizes = [1, 8], strides = [1, 1]} : vector<9x8xf32> to vector<1x8xf32>
    %1547 = vector.broadcast %1546 : vector<1x8xf32> to vector<16x8xf32>
    %1548 = arith.mulf %1545, %1547 : vector<16x8xf32>
    %1549 = arith.addf %1543, %1548 : vector<16x8xf32>
    %1550 = vector.extract_strided_slice %944 {offsets = [11, 0, 0], sizes = [1, 16, 8], strides = [1, 1, 1]} : vector<18x16x8xf32> to vector<1x16x8xf32>
    %1551 = vector.shape_cast %1550 : vector<1x16x8xf32> to vector<16x8xf32>
    %1552 = vector.extract_strided_slice %5 {offsets = [4, 0], sizes = [1, 8], strides = [1, 1]} : vector<9x8xf32> to vector<1x8xf32>
    %1553 = vector.broadcast %1552 : vector<1x8xf32> to vector<16x8xf32>
    %1554 = arith.mulf %1551, %1553 : vector<16x8xf32>
    %1555 = arith.addf %1549, %1554 : vector<16x8xf32>
    %1556 = vector.extract_strided_slice %946 {offsets = [11, 0, 0], sizes = [1, 16, 8], strides = [1, 1, 1]} : vector<18x16x8xf32> to vector<1x16x8xf32>
    %1557 = vector.shape_cast %1556 : vector<1x16x8xf32> to vector<16x8xf32>
    %1558 = vector.extract_strided_slice %5 {offsets = [5, 0], sizes = [1, 8], strides = [1, 1]} : vector<9x8xf32> to vector<1x8xf32>
    %1559 = vector.broadcast %1558 : vector<1x8xf32> to vector<16x8xf32>
    %1560 = arith.mulf %1557, %1559 : vector<16x8xf32>
    %1561 = arith.addf %1555, %1560 : vector<16x8xf32>
    %1562 = vector.extract_strided_slice %942 {offsets = [12, 0, 0], sizes = [1, 16, 8], strides = [1, 1, 1]} : vector<18x16x8xf32> to vector<1x16x8xf32>
    %1563 = vector.shape_cast %1562 : vector<1x16x8xf32> to vector<16x8xf32>
    %1564 = vector.extract_strided_slice %5 {offsets = [6, 0], sizes = [1, 8], strides = [1, 1]} : vector<9x8xf32> to vector<1x8xf32>
    %1565 = vector.broadcast %1564 : vector<1x8xf32> to vector<16x8xf32>
    %1566 = arith.mulf %1563, %1565 : vector<16x8xf32>
    %1567 = arith.addf %1561, %1566 : vector<16x8xf32>
    %1568 = vector.extract_strided_slice %944 {offsets = [12, 0, 0], sizes = [1, 16, 8], strides = [1, 1, 1]} : vector<18x16x8xf32> to vector<1x16x8xf32>
    %1569 = vector.shape_cast %1568 : vector<1x16x8xf32> to vector<16x8xf32>
    %1570 = vector.extract_strided_slice %5 {offsets = [7, 0], sizes = [1, 8], strides = [1, 1]} : vector<9x8xf32> to vector<1x8xf32>
    %1571 = vector.broadcast %1570 : vector<1x8xf32> to vector<16x8xf32>
    %1572 = arith.mulf %1569, %1571 : vector<16x8xf32>
    %1573 = arith.addf %1567, %1572 : vector<16x8xf32>
    %1574 = vector.extract_strided_slice %946 {offsets = [12, 0, 0], sizes = [1, 16, 8], strides = [1, 1, 1]} : vector<18x16x8xf32> to vector<1x16x8xf32>
    %1575 = vector.shape_cast %1574 : vector<1x16x8xf32> to vector<16x8xf32>
    %1576 = vector.extract_strided_slice %5 {offsets = [8, 0], sizes = [1, 8], strides = [1, 1]} : vector<9x8xf32> to vector<1x8xf32>
    %1577 = vector.broadcast %1576 : vector<1x8xf32> to vector<16x8xf32>
    %1578 = arith.mulf %1575, %1577 : vector<16x8xf32>
    %1579 = arith.addf %1573, %1578 : vector<16x8xf32>
    %1580 = vector.broadcast %6 : vector<1x8xf32> to vector<16x8xf32>
    %1581 = arith.addf %1579, %1580 : vector<16x8xf32>
    %c1_98 = arith.constant 1 : index
    %c10_99 = arith.constant 10 : index
    %c0_100 = arith.constant 0 : index
    %c0_101 = arith.constant 0 : index
    %1582 = vector.load %arg5[%c1_98, %c10_99, %c0_100, %c0_101] : memref<2x16x16x8xf32, #tpu.memory_space<vmem>>, vector<1x1x16x8xf32>
    %1583 = vector.shape_cast %1582 : vector<1x1x16x8xf32> to vector<16x8xf32>
    %1584 = vector.shape_cast %1581 : vector<16x8xf32> to vector<1x1x16x8xf32>
    tpu.vector_store %arg5[%c1_98, %c10_99, %c0_100, %c0_101], %1584 {strides = array<i32>} : memref<2x16x16x8xf32, #tpu.memory_space<vmem>>, vector<1x1x16x8xf32>,
    %1585 = vector.extract_strided_slice %942 {offsets = [11, 0, 0], sizes = [1, 16, 8], strides = [1, 1, 1]} : vector<18x16x8xf32> to vector<1x16x8xf32>
    %1586 = vector.shape_cast %1585 : vector<1x16x8xf32> to vector<16x8xf32>
    %1587 = vector.extract_strided_slice %5 {offsets = [0, 0], sizes = [1, 8], strides = [1, 1]} : vector<9x8xf32> to vector<1x8xf32>
    %1588 = vector.broadcast %1587 : vector<1x8xf32> to vector<16x8xf32>
    %1589 = arith.mulf %1586, %1588 : vector<16x8xf32>
    %1590 = vector.extract_strided_slice %944 {offsets = [11, 0, 0], sizes = [1, 16, 8], strides = [1, 1, 1]} : vector<18x16x8xf32> to vector<1x16x8xf32>
    %1591 = vector.shape_cast %1590 : vector<1x16x8xf32> to vector<16x8xf32>
    %1592 = vector.extract_strided_slice %5 {offsets = [1, 0], sizes = [1, 8], strides = [1, 1]} : vector<9x8xf32> to vector<1x8xf32>
    %1593 = vector.broadcast %1592 : vector<1x8xf32> to vector<16x8xf32>
    %1594 = arith.mulf %1591, %1593 : vector<16x8xf32>
    %1595 = arith.addf %1589, %1594 : vector<16x8xf32>
    %1596 = vector.extract_strided_slice %946 {offsets = [11, 0, 0], sizes = [1, 16, 8], strides = [1, 1, 1]} : vector<18x16x8xf32> to vector<1x16x8xf32>
    %1597 = vector.shape_cast %1596 : vector<1x16x8xf32> to vector<16x8xf32>
    %1598 = vector.extract_strided_slice %5 {offsets = [2, 0], sizes = [1, 8], strides = [1, 1]} : vector<9x8xf32> to vector<1x8xf32>
    %1599 = vector.broadcast %1598 : vector<1x8xf32> to vector<16x8xf32>
    %1600 = arith.mulf %1597, %1599 : vector<16x8xf32>
    %1601 = arith.addf %1595, %1600 : vector<16x8xf32>
    %1602 = vector.extract_strided_slice %942 {offsets = [12, 0, 0], sizes = [1, 16, 8], strides = [1, 1, 1]} : vector<18x16x8xf32> to vector<1x16x8xf32>
    %1603 = vector.shape_cast %1602 : vector<1x16x8xf32> to vector<16x8xf32>
    %1604 = vector.extract_strided_slice %5 {offsets = [3, 0], sizes = [1, 8], strides = [1, 1]} : vector<9x8xf32> to vector<1x8xf32>
    %1605 = vector.broadcast %1604 : vector<1x8xf32> to vector<16x8xf32>
    %1606 = arith.mulf %1603, %1605 : vector<16x8xf32>
    %1607 = arith.addf %1601, %1606 : vector<16x8xf32>
    %1608 = vector.extract_strided_slice %944 {offsets = [12, 0, 0], sizes = [1, 16, 8], strides = [1, 1, 1]} : vector<18x16x8xf32> to vector<1x16x8xf32>
    %1609 = vector.shape_cast %1608 : vector<1x16x8xf32> to vector<16x8xf32>
    %1610 = vector.extract_strided_slice %5 {offsets = [4, 0], sizes = [1, 8], strides = [1, 1]} : vector<9x8xf32> to vector<1x8xf32>
    %1611 = vector.broadcast %1610 : vector<1x8xf32> to vector<16x8xf32>
    %1612 = arith.mulf %1609, %1611 : vector<16x8xf32>
    %1613 = arith.addf %1607, %1612 : vector<16x8xf32>
    %1614 = vector.extract_strided_slice %946 {offsets = [12, 0, 0], sizes = [1, 16, 8], strides = [1, 1, 1]} : vector<18x16x8xf32> to vector<1x16x8xf32>
    %1615 = vector.shape_cast %1614 : vector<1x16x8xf32> to vector<16x8xf32>
    %1616 = vector.extract_strided_slice %5 {offsets = [5, 0], sizes = [1, 8], strides = [1, 1]} : vector<9x8xf32> to vector<1x8xf32>
    %1617 = vector.broadcast %1616 : vector<1x8xf32> to vector<16x8xf32>
    %1618 = arith.mulf %1615, %1617 : vector<16x8xf32>
    %1619 = arith.addf %1613, %1618 : vector<16x8xf32>
    %1620 = vector.extract_strided_slice %942 {offsets = [13, 0, 0], sizes = [1, 16, 8], strides = [1, 1, 1]} : vector<18x16x8xf32> to vector<1x16x8xf32>
    %1621 = vector.shape_cast %1620 : vector<1x16x8xf32> to vector<16x8xf32>
    %1622 = vector.extract_strided_slice %5 {offsets = [6, 0], sizes = [1, 8], strides = [1, 1]} : vector<9x8xf32> to vector<1x8xf32>
    %1623 = vector.broadcast %1622 : vector<1x8xf32> to vector<16x8xf32>
    %1624 = arith.mulf %1621, %1623 : vector<16x8xf32>
    %1625 = arith.addf %1619, %1624 : vector<16x8xf32>
    %1626 = vector.extract_strided_slice %944 {offsets = [13, 0, 0], sizes = [1, 16, 8], strides = [1, 1, 1]} : vector<18x16x8xf32> to vector<1x16x8xf32>
    %1627 = vector.shape_cast %1626 : vector<1x16x8xf32> to vector<16x8xf32>
    %1628 = vector.extract_strided_slice %5 {offsets = [7, 0], sizes = [1, 8], strides = [1, 1]} : vector<9x8xf32> to vector<1x8xf32>
    %1629 = vector.broadcast %1628 : vector<1x8xf32> to vector<16x8xf32>
    %1630 = arith.mulf %1627, %1629 : vector<16x8xf32>
    %1631 = arith.addf %1625, %1630 : vector<16x8xf32>
    %1632 = vector.extract_strided_slice %946 {offsets = [13, 0, 0], sizes = [1, 16, 8], strides = [1, 1, 1]} : vector<18x16x8xf32> to vector<1x16x8xf32>
    %1633 = vector.shape_cast %1632 : vector<1x16x8xf32> to vector<16x8xf32>
    %1634 = vector.extract_strided_slice %5 {offsets = [8, 0], sizes = [1, 8], strides = [1, 1]} : vector<9x8xf32> to vector<1x8xf32>
    %1635 = vector.broadcast %1634 : vector<1x8xf32> to vector<16x8xf32>
    %1636 = arith.mulf %1633, %1635 : vector<16x8xf32>
    %1637 = arith.addf %1631, %1636 : vector<16x8xf32>
    %1638 = vector.broadcast %6 : vector<1x8xf32> to vector<16x8xf32>
    %1639 = arith.addf %1637, %1638 : vector<16x8xf32>
    %c1_102 = arith.constant 1 : index
    %c11_103 = arith.constant 11 : index
    %c0_104 = arith.constant 0 : index
    %c0_105 = arith.constant 0 : index
    %1640 = vector.load %arg5[%c1_102, %c11_103, %c0_104, %c0_105] : memref<2x16x16x8xf32, #tpu.memory_space<vmem>>, vector<1x1x16x8xf32>
    %1641 = vector.shape_cast %1640 : vector<1x1x16x8xf32> to vector<16x8xf32>
    %1642 = vector.shape_cast %1639 : vector<16x8xf32> to vector<1x1x16x8xf32>
    tpu.vector_store %arg5[%c1_102, %c11_103, %c0_104, %c0_105], %1642 {strides = array<i32>} : memref<2x16x16x8xf32, #tpu.memory_space<vmem>>, vector<1x1x16x8xf32>,
    %1643 = vector.extract_strided_slice %942 {offsets = [12, 0, 0], sizes = [1, 16, 8], strides = [1, 1, 1]} : vector<18x16x8xf32> to vector<1x16x8xf32>
    %1644 = vector.shape_cast %1643 : vector<1x16x8xf32> to vector<16x8xf32>
    %1645 = vector.extract_strided_slice %5 {offsets = [0, 0], sizes = [1, 8], strides = [1, 1]} : vector<9x8xf32> to vector<1x8xf32>
    %1646 = vector.broadcast %1645 : vector<1x8xf32> to vector<16x8xf32>
    %1647 = arith.mulf %1644, %1646 : vector<16x8xf32>
    %1648 = vector.extract_strided_slice %944 {offsets = [12, 0, 0], sizes = [1, 16, 8], strides = [1, 1, 1]} : vector<18x16x8xf32> to vector<1x16x8xf32>
    %1649 = vector.shape_cast %1648 : vector<1x16x8xf32> to vector<16x8xf32>
    %1650 = vector.extract_strided_slice %5 {offsets = [1, 0], sizes = [1, 8], strides = [1, 1]} : vector<9x8xf32> to vector<1x8xf32>
    %1651 = vector.broadcast %1650 : vector<1x8xf32> to vector<16x8xf32>
    %1652 = arith.mulf %1649, %1651 : vector<16x8xf32>
    %1653 = arith.addf %1647, %1652 : vector<16x8xf32>
    %1654 = vector.extract_strided_slice %946 {offsets = [12, 0, 0], sizes = [1, 16, 8], strides = [1, 1, 1]} : vector<18x16x8xf32> to vector<1x16x8xf32>
    %1655 = vector.shape_cast %1654 : vector<1x16x8xf32> to vector<16x8xf32>
    %1656 = vector.extract_strided_slice %5 {offsets = [2, 0], sizes = [1, 8], strides = [1, 1]} : vector<9x8xf32> to vector<1x8xf32>
    %1657 = vector.broadcast %1656 : vector<1x8xf32> to vector<16x8xf32>
    %1658 = arith.mulf %1655, %1657 : vector<16x8xf32>
    %1659 = arith.addf %1653, %1658 : vector<16x8xf32>
    %1660 = vector.extract_strided_slice %942 {offsets = [13, 0, 0], sizes = [1, 16, 8], strides = [1, 1, 1]} : vector<18x16x8xf32> to vector<1x16x8xf32>
    %1661 = vector.shape_cast %1660 : vector<1x16x8xf32> to vector<16x8xf32>
    %1662 = vector.extract_strided_slice %5 {offsets = [3, 0], sizes = [1, 8], strides = [1, 1]} : vector<9x8xf32> to vector<1x8xf32>
    %1663 = vector.broadcast %1662 : vector<1x8xf32> to vector<16x8xf32>
    %1664 = arith.mulf %1661, %1663 : vector<16x8xf32>
    %1665 = arith.addf %1659, %1664 : vector<16x8xf32>
    %1666 = vector.extract_strided_slice %944 {offsets = [13, 0, 0], sizes = [1, 16, 8], strides = [1, 1, 1]} : vector<18x16x8xf32> to vector<1x16x8xf32>
    %1667 = vector.shape_cast %1666 : vector<1x16x8xf32> to vector<16x8xf32>
    %1668 = vector.extract_strided_slice %5 {offsets = [4, 0], sizes = [1, 8], strides = [1, 1]} : vector<9x8xf32> to vector<1x8xf32>
    %1669 = vector.broadcast %1668 : vector<1x8xf32> to vector<16x8xf32>
    %1670 = arith.mulf %1667, %1669 : vector<16x8xf32>
    %1671 = arith.addf %1665, %1670 : vector<16x8xf32>
    %1672 = vector.extract_strided_slice %946 {offsets = [13, 0, 0], sizes = [1, 16, 8], strides = [1, 1, 1]} : vector<18x16x8xf32> to vector<1x16x8xf32>
    %1673 = vector.shape_cast %1672 : vector<1x16x8xf32> to vector<16x8xf32>
    %1674 = vector.extract_strided_slice %5 {offsets = [5, 0], sizes = [1, 8], strides = [1, 1]} : vector<9x8xf32> to vector<1x8xf32>
    %1675 = vector.broadcast %1674 : vector<1x8xf32> to vector<16x8xf32>
    %1676 = arith.mulf %1673, %1675 : vector<16x8xf32>
    %1677 = arith.addf %1671, %1676 : vector<16x8xf32>
    %1678 = vector.extract_strided_slice %942 {offsets = [14, 0, 0], sizes = [1, 16, 8], strides = [1, 1, 1]} : vector<18x16x8xf32> to vector<1x16x8xf32>
    %1679 = vector.shape_cast %1678 : vector<1x16x8xf32> to vector<16x8xf32>
    %1680 = vector.extract_strided_slice %5 {offsets = [6, 0], sizes = [1, 8], strides = [1, 1]} : vector<9x8xf32> to vector<1x8xf32>
    %1681 = vector.broadcast %1680 : vector<1x8xf32> to vector<16x8xf32>
    %1682 = arith.mulf %1679, %1681 : vector<16x8xf32>
    %1683 = arith.addf %1677, %1682 : vector<16x8xf32>
    %1684 = vector.extract_strided_slice %944 {offsets = [14, 0, 0], sizes = [1, 16, 8], strides = [1, 1, 1]} : vector<18x16x8xf32> to vector<1x16x8xf32>
    %1685 = vector.shape_cast %1684 : vector<1x16x8xf32> to vector<16x8xf32>
    %1686 = vector.extract_strided_slice %5 {offsets = [7, 0], sizes = [1, 8], strides = [1, 1]} : vector<9x8xf32> to vector<1x8xf32>
    %1687 = vector.broadcast %1686 : vector<1x8xf32> to vector<16x8xf32>
    %1688 = arith.mulf %1685, %1687 : vector<16x8xf32>
    %1689 = arith.addf %1683, %1688 : vector<16x8xf32>
    %1690 = vector.extract_strided_slice %946 {offsets = [14, 0, 0], sizes = [1, 16, 8], strides = [1, 1, 1]} : vector<18x16x8xf32> to vector<1x16x8xf32>
    %1691 = vector.shape_cast %1690 : vector<1x16x8xf32> to vector<16x8xf32>
    %1692 = vector.extract_strided_slice %5 {offsets = [8, 0], sizes = [1, 8], strides = [1, 1]} : vector<9x8xf32> to vector<1x8xf32>
    %1693 = vector.broadcast %1692 : vector<1x8xf32> to vector<16x8xf32>
    %1694 = arith.mulf %1691, %1693 : vector<16x8xf32>
    %1695 = arith.addf %1689, %1694 : vector<16x8xf32>
    %1696 = vector.broadcast %6 : vector<1x8xf32> to vector<16x8xf32>
    %1697 = arith.addf %1695, %1696 : vector<16x8xf32>
    %c1_106 = arith.constant 1 : index
    %c12_107 = arith.constant 12 : index
    %c0_108 = arith.constant 0 : index
    %c0_109 = arith.constant 0 : index
    %1698 = vector.load %arg5[%c1_106, %c12_107, %c0_108, %c0_109] : memref<2x16x16x8xf32, #tpu.memory_space<vmem>>, vector<1x1x16x8xf32>
    %1699 = vector.shape_cast %1698 : vector<1x1x16x8xf32> to vector<16x8xf32>
    %1700 = vector.shape_cast %1697 : vector<16x8xf32> to vector<1x1x16x8xf32>
    tpu.vector_store %arg5[%c1_106, %c12_107, %c0_108, %c0_109], %1700 {strides = array<i32>} : memref<2x16x16x8xf32, #tpu.memory_space<vmem>>, vector<1x1x16x8xf32>,
    %1701 = vector.extract_strided_slice %942 {offsets = [13, 0, 0], sizes = [1, 16, 8], strides = [1, 1, 1]} : vector<18x16x8xf32> to vector<1x16x8xf32>
    %1702 = vector.shape_cast %1701 : vector<1x16x8xf32> to vector<16x8xf32>
    %1703 = vector.extract_strided_slice %5 {offsets = [0, 0], sizes = [1, 8], strides = [1, 1]} : vector<9x8xf32> to vector<1x8xf32>
    %1704 = vector.broadcast %1703 : vector<1x8xf32> to vector<16x8xf32>
    %1705 = arith.mulf %1702, %1704 : vector<16x8xf32>
    %1706 = vector.extract_strided_slice %944 {offsets = [13, 0, 0], sizes = [1, 16, 8], strides = [1, 1, 1]} : vector<18x16x8xf32> to vector<1x16x8xf32>
    %1707 = vector.shape_cast %1706 : vector<1x16x8xf32> to vector<16x8xf32>
    %1708 = vector.extract_strided_slice %5 {offsets = [1, 0], sizes = [1, 8], strides = [1, 1]} : vector<9x8xf32> to vector<1x8xf32>
    %1709 = vector.broadcast %1708 : vector<1x8xf32> to vector<16x8xf32>
    %1710 = arith.mulf %1707, %1709 : vector<16x8xf32>
    %1711 = arith.addf %1705, %1710 : vector<16x8xf32>
    %1712 = vector.extract_strided_slice %946 {offsets = [13, 0, 0], sizes = [1, 16, 8], strides = [1, 1, 1]} : vector<18x16x8xf32> to vector<1x16x8xf32>
    %1713 = vector.shape_cast %1712 : vector<1x16x8xf32> to vector<16x8xf32>
    %1714 = vector.extract_strided_slice %5 {offsets = [2, 0], sizes = [1, 8], strides = [1, 1]} : vector<9x8xf32> to vector<1x8xf32>
    %1715 = vector.broadcast %1714 : vector<1x8xf32> to vector<16x8xf32>
    %1716 = arith.mulf %1713, %1715 : vector<16x8xf32>
    %1717 = arith.addf %1711, %1716 : vector<16x8xf32>
    %1718 = vector.extract_strided_slice %942 {offsets = [14, 0, 0], sizes = [1, 16, 8], strides = [1, 1, 1]} : vector<18x16x8xf32> to vector<1x16x8xf32>
    %1719 = vector.shape_cast %1718 : vector<1x16x8xf32> to vector<16x8xf32>
    %1720 = vector.extract_strided_slice %5 {offsets = [3, 0], sizes = [1, 8], strides = [1, 1]} : vector<9x8xf32> to vector<1x8xf32>
    %1721 = vector.broadcast %1720 : vector<1x8xf32> to vector<16x8xf32>
    %1722 = arith.mulf %1719, %1721 : vector<16x8xf32>
    %1723 = arith.addf %1717, %1722 : vector<16x8xf32>
    %1724 = vector.extract_strided_slice %944 {offsets = [14, 0, 0], sizes = [1, 16, 8], strides = [1, 1, 1]} : vector<18x16x8xf32> to vector<1x16x8xf32>
    %1725 = vector.shape_cast %1724 : vector<1x16x8xf32> to vector<16x8xf32>
    %1726 = vector.extract_strided_slice %5 {offsets = [4, 0], sizes = [1, 8], strides = [1, 1]} : vector<9x8xf32> to vector<1x8xf32>
    %1727 = vector.broadcast %1726 : vector<1x8xf32> to vector<16x8xf32>
    %1728 = arith.mulf %1725, %1727 : vector<16x8xf32>
    %1729 = arith.addf %1723, %1728 : vector<16x8xf32>
    %1730 = vector.extract_strided_slice %946 {offsets = [14, 0, 0], sizes = [1, 16, 8], strides = [1, 1, 1]} : vector<18x16x8xf32> to vector<1x16x8xf32>
    %1731 = vector.shape_cast %1730 : vector<1x16x8xf32> to vector<16x8xf32>
    %1732 = vector.extract_strided_slice %5 {offsets = [5, 0], sizes = [1, 8], strides = [1, 1]} : vector<9x8xf32> to vector<1x8xf32>
    %1733 = vector.broadcast %1732 : vector<1x8xf32> to vector<16x8xf32>
    %1734 = arith.mulf %1731, %1733 : vector<16x8xf32>
    %1735 = arith.addf %1729, %1734 : vector<16x8xf32>
    %1736 = vector.extract_strided_slice %942 {offsets = [15, 0, 0], sizes = [1, 16, 8], strides = [1, 1, 1]} : vector<18x16x8xf32> to vector<1x16x8xf32>
    %1737 = vector.shape_cast %1736 : vector<1x16x8xf32> to vector<16x8xf32>
    %1738 = vector.extract_strided_slice %5 {offsets = [6, 0], sizes = [1, 8], strides = [1, 1]} : vector<9x8xf32> to vector<1x8xf32>
    %1739 = vector.broadcast %1738 : vector<1x8xf32> to vector<16x8xf32>
    %1740 = arith.mulf %1737, %1739 : vector<16x8xf32>
    %1741 = arith.addf %1735, %1740 : vector<16x8xf32>
    %1742 = vector.extract_strided_slice %944 {offsets = [15, 0, 0], sizes = [1, 16, 8], strides = [1, 1, 1]} : vector<18x16x8xf32> to vector<1x16x8xf32>
    %1743 = vector.shape_cast %1742 : vector<1x16x8xf32> to vector<16x8xf32>
    %1744 = vector.extract_strided_slice %5 {offsets = [7, 0], sizes = [1, 8], strides = [1, 1]} : vector<9x8xf32> to vector<1x8xf32>
    %1745 = vector.broadcast %1744 : vector<1x8xf32> to vector<16x8xf32>
    %1746 = arith.mulf %1743, %1745 : vector<16x8xf32>
    %1747 = arith.addf %1741, %1746 : vector<16x8xf32>
    %1748 = vector.extract_strided_slice %946 {offsets = [15, 0, 0], sizes = [1, 16, 8], strides = [1, 1, 1]} : vector<18x16x8xf32> to vector<1x16x8xf32>
    %1749 = vector.shape_cast %1748 : vector<1x16x8xf32> to vector<16x8xf32>
    %1750 = vector.extract_strided_slice %5 {offsets = [8, 0], sizes = [1, 8], strides = [1, 1]} : vector<9x8xf32> to vector<1x8xf32>
    %1751 = vector.broadcast %1750 : vector<1x8xf32> to vector<16x8xf32>
    %1752 = arith.mulf %1749, %1751 : vector<16x8xf32>
    %1753 = arith.addf %1747, %1752 : vector<16x8xf32>
    %1754 = vector.broadcast %6 : vector<1x8xf32> to vector<16x8xf32>
    %1755 = arith.addf %1753, %1754 : vector<16x8xf32>
    %c1_110 = arith.constant 1 : index
    %c13_111 = arith.constant 13 : index
    %c0_112 = arith.constant 0 : index
    %c0_113 = arith.constant 0 : index
    %1756 = vector.load %arg5[%c1_110, %c13_111, %c0_112, %c0_113] : memref<2x16x16x8xf32, #tpu.memory_space<vmem>>, vector<1x1x16x8xf32>
    %1757 = vector.shape_cast %1756 : vector<1x1x16x8xf32> to vector<16x8xf32>
    %1758 = vector.shape_cast %1755 : vector<16x8xf32> to vector<1x1x16x8xf32>
    tpu.vector_store %arg5[%c1_110, %c13_111, %c0_112, %c0_113], %1758 {strides = array<i32>} : memref<2x16x16x8xf32, #tpu.memory_space<vmem>>, vector<1x1x16x8xf32>,
    %1759 = vector.extract_strided_slice %942 {offsets = [14, 0, 0], sizes = [1, 16, 8], strides = [1, 1, 1]} : vector<18x16x8xf32> to vector<1x16x8xf32>
    %1760 = vector.shape_cast %1759 : vector<1x16x8xf32> to vector<16x8xf32>
    %1761 = vector.extract_strided_slice %5 {offsets = [0, 0], sizes = [1, 8], strides = [1, 1]} : vector<9x8xf32> to vector<1x8xf32>
    %1762 = vector.broadcast %1761 : vector<1x8xf32> to vector<16x8xf32>
    %1763 = arith.mulf %1760, %1762 : vector<16x8xf32>
    %1764 = vector.extract_strided_slice %944 {offsets = [14, 0, 0], sizes = [1, 16, 8], strides = [1, 1, 1]} : vector<18x16x8xf32> to vector<1x16x8xf32>
    %1765 = vector.shape_cast %1764 : vector<1x16x8xf32> to vector<16x8xf32>
    %1766 = vector.extract_strided_slice %5 {offsets = [1, 0], sizes = [1, 8], strides = [1, 1]} : vector<9x8xf32> to vector<1x8xf32>
    %1767 = vector.broadcast %1766 : vector<1x8xf32> to vector<16x8xf32>
    %1768 = arith.mulf %1765, %1767 : vector<16x8xf32>
    %1769 = arith.addf %1763, %1768 : vector<16x8xf32>
    %1770 = vector.extract_strided_slice %946 {offsets = [14, 0, 0], sizes = [1, 16, 8], strides = [1, 1, 1]} : vector<18x16x8xf32> to vector<1x16x8xf32>
    %1771 = vector.shape_cast %1770 : vector<1x16x8xf32> to vector<16x8xf32>
    %1772 = vector.extract_strided_slice %5 {offsets = [2, 0], sizes = [1, 8], strides = [1, 1]} : vector<9x8xf32> to vector<1x8xf32>
    %1773 = vector.broadcast %1772 : vector<1x8xf32> to vector<16x8xf32>
    %1774 = arith.mulf %1771, %1773 : vector<16x8xf32>
    %1775 = arith.addf %1769, %1774 : vector<16x8xf32>
    %1776 = vector.extract_strided_slice %942 {offsets = [15, 0, 0], sizes = [1, 16, 8], strides = [1, 1, 1]} : vector<18x16x8xf32> to vector<1x16x8xf32>
    %1777 = vector.shape_cast %1776 : vector<1x16x8xf32> to vector<16x8xf32>
    %1778 = vector.extract_strided_slice %5 {offsets = [3, 0], sizes = [1, 8], strides = [1, 1]} : vector<9x8xf32> to vector<1x8xf32>
    %1779 = vector.broadcast %1778 : vector<1x8xf32> to vector<16x8xf32>
    %1780 = arith.mulf %1777, %1779 : vector<16x8xf32>
    %1781 = arith.addf %1775, %1780 : vector<16x8xf32>
    %1782 = vector.extract_strided_slice %944 {offsets = [15, 0, 0], sizes = [1, 16, 8], strides = [1, 1, 1]} : vector<18x16x8xf32> to vector<1x16x8xf32>
    %1783 = vector.shape_cast %1782 : vector<1x16x8xf32> to vector<16x8xf32>
    %1784 = vector.extract_strided_slice %5 {offsets = [4, 0], sizes = [1, 8], strides = [1, 1]} : vector<9x8xf32> to vector<1x8xf32>
    %1785 = vector.broadcast %1784 : vector<1x8xf32> to vector<16x8xf32>
    %1786 = arith.mulf %1783, %1785 : vector<16x8xf32>
    %1787 = arith.addf %1781, %1786 : vector<16x8xf32>
    %1788 = vector.extract_strided_slice %946 {offsets = [15, 0, 0], sizes = [1, 16, 8], strides = [1, 1, 1]} : vector<18x16x8xf32> to vector<1x16x8xf32>
    %1789 = vector.shape_cast %1788 : vector<1x16x8xf32> to vector<16x8xf32>
    %1790 = vector.extract_strided_slice %5 {offsets = [5, 0], sizes = [1, 8], strides = [1, 1]} : vector<9x8xf32> to vector<1x8xf32>
    %1791 = vector.broadcast %1790 : vector<1x8xf32> to vector<16x8xf32>
    %1792 = arith.mulf %1789, %1791 : vector<16x8xf32>
    %1793 = arith.addf %1787, %1792 : vector<16x8xf32>
    %1794 = vector.extract_strided_slice %942 {offsets = [16, 0, 0], sizes = [1, 16, 8], strides = [1, 1, 1]} : vector<18x16x8xf32> to vector<1x16x8xf32>
    %1795 = vector.shape_cast %1794 : vector<1x16x8xf32> to vector<16x8xf32>
    %1796 = vector.extract_strided_slice %5 {offsets = [6, 0], sizes = [1, 8], strides = [1, 1]} : vector<9x8xf32> to vector<1x8xf32>
    %1797 = vector.broadcast %1796 : vector<1x8xf32> to vector<16x8xf32>
    %1798 = arith.mulf %1795, %1797 : vector<16x8xf32>
    %1799 = arith.addf %1793, %1798 : vector<16x8xf32>
    %1800 = vector.extract_strided_slice %944 {offsets = [16, 0, 0], sizes = [1, 16, 8], strides = [1, 1, 1]} : vector<18x16x8xf32> to vector<1x16x8xf32>
    %1801 = vector.shape_cast %1800 : vector<1x16x8xf32> to vector<16x8xf32>
    %1802 = vector.extract_strided_slice %5 {offsets = [7, 0], sizes = [1, 8], strides = [1, 1]} : vector<9x8xf32> to vector<1x8xf32>
    %1803 = vector.broadcast %1802 : vector<1x8xf32> to vector<16x8xf32>
    %1804 = arith.mulf %1801, %1803 : vector<16x8xf32>
    %1805 = arith.addf %1799, %1804 : vector<16x8xf32>
    %1806 = vector.extract_strided_slice %946 {offsets = [16, 0, 0], sizes = [1, 16, 8], strides = [1, 1, 1]} : vector<18x16x8xf32> to vector<1x16x8xf32>
    %1807 = vector.shape_cast %1806 : vector<1x16x8xf32> to vector<16x8xf32>
    %1808 = vector.extract_strided_slice %5 {offsets = [8, 0], sizes = [1, 8], strides = [1, 1]} : vector<9x8xf32> to vector<1x8xf32>
    %1809 = vector.broadcast %1808 : vector<1x8xf32> to vector<16x8xf32>
    %1810 = arith.mulf %1807, %1809 : vector<16x8xf32>
    %1811 = arith.addf %1805, %1810 : vector<16x8xf32>
    %1812 = vector.broadcast %6 : vector<1x8xf32> to vector<16x8xf32>
    %1813 = arith.addf %1811, %1812 : vector<16x8xf32>
    %c1_114 = arith.constant 1 : index
    %c14_115 = arith.constant 14 : index
    %c0_116 = arith.constant 0 : index
    %c0_117 = arith.constant 0 : index
    %1814 = vector.load %arg5[%c1_114, %c14_115, %c0_116, %c0_117] : memref<2x16x16x8xf32, #tpu.memory_space<vmem>>, vector<1x1x16x8xf32>
    %1815 = vector.shape_cast %1814 : vector<1x1x16x8xf32> to vector<16x8xf32>
    %1816 = vector.shape_cast %1813 : vector<16x8xf32> to vector<1x1x16x8xf32>
    tpu.vector_store %arg5[%c1_114, %c14_115, %c0_116, %c0_117], %1816 {strides = array<i32>} : memref<2x16x16x8xf32, #tpu.memory_space<vmem>>, vector<1x1x16x8xf32>,
    %1817 = vector.extract_strided_slice %942 {offsets = [15, 0, 0], sizes = [1, 16, 8], strides = [1, 1, 1]} : vector<18x16x8xf32> to vector<1x16x8xf32>
    %1818 = vector.shape_cast %1817 : vector<1x16x8xf32> to vector<16x8xf32>
    %1819 = vector.extract_strided_slice %5 {offsets = [0, 0], sizes = [1, 8], strides = [1, 1]} : vector<9x8xf32> to vector<1x8xf32>
    %1820 = vector.broadcast %1819 : vector<1x8xf32> to vector<16x8xf32>
    %1821 = arith.mulf %1818, %1820 : vector<16x8xf32>
    %1822 = vector.extract_strided_slice %944 {offsets = [15, 0, 0], sizes = [1, 16, 8], strides = [1, 1, 1]} : vector<18x16x8xf32> to vector<1x16x8xf32>
    %1823 = vector.shape_cast %1822 : vector<1x16x8xf32> to vector<16x8xf32>
    %1824 = vector.extract_strided_slice %5 {offsets = [1, 0], sizes = [1, 8], strides = [1, 1]} : vector<9x8xf32> to vector<1x8xf32>
    %1825 = vector.broadcast %1824 : vector<1x8xf32> to vector<16x8xf32>
    %1826 = arith.mulf %1823, %1825 : vector<16x8xf32>
    %1827 = arith.addf %1821, %1826 : vector<16x8xf32>
    %1828 = vector.extract_strided_slice %946 {offsets = [15, 0, 0], sizes = [1, 16, 8], strides = [1, 1, 1]} : vector<18x16x8xf32> to vector<1x16x8xf32>
    %1829 = vector.shape_cast %1828 : vector<1x16x8xf32> to vector<16x8xf32>
    %1830 = vector.extract_strided_slice %5 {offsets = [2, 0], sizes = [1, 8], strides = [1, 1]} : vector<9x8xf32> to vector<1x8xf32>
    %1831 = vector.broadcast %1830 : vector<1x8xf32> to vector<16x8xf32>
    %1832 = arith.mulf %1829, %1831 : vector<16x8xf32>
    %1833 = arith.addf %1827, %1832 : vector<16x8xf32>
    %1834 = vector.extract_strided_slice %942 {offsets = [16, 0, 0], sizes = [1, 16, 8], strides = [1, 1, 1]} : vector<18x16x8xf32> to vector<1x16x8xf32>
    %1835 = vector.shape_cast %1834 : vector<1x16x8xf32> to vector<16x8xf32>
    %1836 = vector.extract_strided_slice %5 {offsets = [3, 0], sizes = [1, 8], strides = [1, 1]} : vector<9x8xf32> to vector<1x8xf32>
    %1837 = vector.broadcast %1836 : vector<1x8xf32> to vector<16x8xf32>
    %1838 = arith.mulf %1835, %1837 : vector<16x8xf32>
    %1839 = arith.addf %1833, %1838 : vector<16x8xf32>
    %1840 = vector.extract_strided_slice %944 {offsets = [16, 0, 0], sizes = [1, 16, 8], strides = [1, 1, 1]} : vector<18x16x8xf32> to vector<1x16x8xf32>
    %1841 = vector.shape_cast %1840 : vector<1x16x8xf32> to vector<16x8xf32>
    %1842 = vector.extract_strided_slice %5 {offsets = [4, 0], sizes = [1, 8], strides = [1, 1]} : vector<9x8xf32> to vector<1x8xf32>
    %1843 = vector.broadcast %1842 : vector<1x8xf32> to vector<16x8xf32>
    %1844 = arith.mulf %1841, %1843 : vector<16x8xf32>
    %1845 = arith.addf %1839, %1844 : vector<16x8xf32>
    %1846 = vector.extract_strided_slice %946 {offsets = [16, 0, 0], sizes = [1, 16, 8], strides = [1, 1, 1]} : vector<18x16x8xf32> to vector<1x16x8xf32>
    %1847 = vector.shape_cast %1846 : vector<1x16x8xf32> to vector<16x8xf32>
    %1848 = vector.extract_strided_slice %5 {offsets = [5, 0], sizes = [1, 8], strides = [1, 1]} : vector<9x8xf32> to vector<1x8xf32>
    %1849 = vector.broadcast %1848 : vector<1x8xf32> to vector<16x8xf32>
    %1850 = arith.mulf %1847, %1849 : vector<16x8xf32>
    %1851 = arith.addf %1845, %1850 : vector<16x8xf32>
    %1852 = vector.extract_strided_slice %942 {offsets = [17, 0, 0], sizes = [1, 16, 8], strides = [1, 1, 1]} : vector<18x16x8xf32> to vector<1x16x8xf32>
    %1853 = vector.shape_cast %1852 : vector<1x16x8xf32> to vector<16x8xf32>
    %1854 = vector.extract_strided_slice %5 {offsets = [6, 0], sizes = [1, 8], strides = [1, 1]} : vector<9x8xf32> to vector<1x8xf32>
    %1855 = vector.broadcast %1854 : vector<1x8xf32> to vector<16x8xf32>
    %1856 = arith.mulf %1853, %1855 : vector<16x8xf32>
    %1857 = arith.addf %1851, %1856 : vector<16x8xf32>
    %1858 = vector.extract_strided_slice %944 {offsets = [17, 0, 0], sizes = [1, 16, 8], strides = [1, 1, 1]} : vector<18x16x8xf32> to vector<1x16x8xf32>
    %1859 = vector.shape_cast %1858 : vector<1x16x8xf32> to vector<16x8xf32>
    %1860 = vector.extract_strided_slice %5 {offsets = [7, 0], sizes = [1, 8], strides = [1, 1]} : vector<9x8xf32> to vector<1x8xf32>
    %1861 = vector.broadcast %1860 : vector<1x8xf32> to vector<16x8xf32>
    %1862 = arith.mulf %1859, %1861 : vector<16x8xf32>
    %1863 = arith.addf %1857, %1862 : vector<16x8xf32>
    %1864 = vector.extract_strided_slice %946 {offsets = [17, 0, 0], sizes = [1, 16, 8], strides = [1, 1, 1]} : vector<18x16x8xf32> to vector<1x16x8xf32>
    %1865 = vector.shape_cast %1864 : vector<1x16x8xf32> to vector<16x8xf32>
    %1866 = vector.extract_strided_slice %5 {offsets = [8, 0], sizes = [1, 8], strides = [1, 1]} : vector<9x8xf32> to vector<1x8xf32>
    %1867 = vector.broadcast %1866 : vector<1x8xf32> to vector<16x8xf32>
    %1868 = arith.mulf %1865, %1867 : vector<16x8xf32>
    %1869 = arith.addf %1863, %1868 : vector<16x8xf32>
    %1870 = vector.broadcast %6 : vector<1x8xf32> to vector<16x8xf32>
    %1871 = arith.addf %1869, %1870 : vector<16x8xf32>
    %c1_118 = arith.constant 1 : index
    %c15_119 = arith.constant 15 : index
    %c0_120 = arith.constant 0 : index
    %c0_121 = arith.constant 0 : index
    %1872 = vector.load %arg5[%c1_118, %c15_119, %c0_120, %c0_121] : memref<2x16x16x8xf32, #tpu.memory_space<vmem>>, vector<1x1x16x8xf32>
    %1873 = vector.shape_cast %1872 : vector<1x1x16x8xf32> to vector<16x8xf32>
    %1874 = vector.shape_cast %1871 : vector<16x8xf32> to vector<1x1x16x8xf32>
    tpu.vector_store %arg5[%c1_118, %c15_119, %c0_120, %c0_121], %1874 {strides = array<i32>} : memref<2x16x16x8xf32, #tpu.memory_space<vmem>>, vector<1x1x16x8xf32>,
    return
  }
  func.func @transform_0(%arg0: i32) -> (i32, i32, i32, i32) {
    %c0_i32 = arith.constant 0 : i32
    %c0_i32_0 = arith.constant 0 : i32
    %c0_i32_1 = arith.constant 0 : i32
    %c0_i32_2 = arith.constant 0 : i32
    return %arg0, %c0_i32, %c0_i32_0, %c0_i32_1 : i32, i32, i32, i32
  }
  func.func @transform_1(%arg0: i32) -> (i32, i32) {
    %c0_i32 = arith.constant 0 : i32
    %c0_i32_0 = arith.constant 0 : i32
    %c0_i32_1 = arith.constant 0 : i32
    return %c0_i32, %c0_i32_0 : i32, i32
  }
  func.func @transform_2(%arg0: i32) -> (i32, i32) {
    %c0_i32 = arith.constant 0 : i32
    %c0_i32_0 = arith.constant 0 : i32
    %c0_i32_1 = arith.constant 0 : i32
    return %c0_i32, %c0_i32_0 : i32, i32
  }
  func.func @transform_3(%arg0: i32) -> (i32, i32) {
    %c0_i32 = arith.constant 0 : i32
    %c0_i32_0 = arith.constant 0 : i32
    %c0_i32_1 = arith.constant 0 : i32
    return %c0_i32, %c0_i32_0 : i32, i32
  }
  func.func @transform_4(%arg0: i32) -> (i32, i32, i32, i32) {
    %c0_i32 = arith.constant 0 : i32
    %c0_i32_0 = arith.constant 0 : i32
    %c0_i32_1 = arith.constant 0 : i32
    %c0_i32_2 = arith.constant 0 : i32
    return %arg0, %c0_i32, %c0_i32_0, %c0_i32_1 : i32, i32, i32, i32
  }
}

</mosaic_0001>

<llo_original>
// kernel: tpu_custom_call.1
$region0: #{tpu_custom_call.1}
  #allocation0 [shape = 'u32[]', space=smem, size = 0x4, offset = 0x4, fixed_abs, tag = 'smem constant byte address 0x4 - core index']
  #allocation1 [shape = 'u32[144,128]{1,0:T(1,128)}', space=vmem, size = 0x12000, scoped, tag = 'internal scratch']
  %s0 = inlined_call_operand.vmem [shape: bf16[2,18,32,16], index: 0, kind: input, shape index: {}]
  %s1 = inlined_call_operand.vmem [shape: bf16[16,128], index: 1, kind: input, shape index: {}]
  %s2 = inlined_call_operand.vmem [shape: f32[9,8], index: 2, kind: input, shape index: {}]
  %s3 = inlined_call_operand.vmem [shape: f32[1,8], index: 3, kind: input, shape index: {}]
  %s4 = inlined_call_operand.vmem [shape: f32[2,16,16,8], index: 4, kind: output, shape index: {}]
  %s5 = sld [smem:[#allocation0]]
  $region26: #{tpu_custom_call.1} parent=0
    _
  %s7 = ssub.s32 1, %s5
  %s8 = scalar_select 0, %s7, %s5
  // Predicated region
  $region2: #{tpu_custom_call.1} parent=0 // pred_check
    _
  $region3: #{tpu_custom_call.1} parent=0 // pred_check_branch
    %10 = sbr.rel (0) target = $region5
  $region4: #{tpu_custom_call.1} parent=0 // pred_region
    _
  $region5: #{tpu_custom_call.1} parent=0 // pred_fallthru
    _
  // Predicated region
  $region6: #{tpu_custom_call.1} parent=0 // pred_check
    _
  $region7: #{tpu_custom_call.1} parent=0 // pred_check_branch
    %12 = sbr.rel (0) target = $region9
  $region8: #{tpu_custom_call.1} parent=0 // pred_region
    _
  $region9: #{tpu_custom_call.1} parent=0 // pred_fallthru
    _
  // Predicated region
  $region10: #{tpu_custom_call.1} parent=0 // pred_check
    _
  $region11: #{tpu_custom_call.1} parent=0 // pred_check_branch
    %14 = sbr.rel (0) target = $region13
  $region12: #{tpu_custom_call.1} parent=0 // pred_region
    _
  $region13: #{tpu_custom_call.1} parent=0 // pred_fallthru
    _
  // Predicated region
  $region14: #{tpu_custom_call.1} parent=0 // pred_check
    _
  $region15: #{tpu_custom_call.1} parent=0 // pred_check_branch
    %16 = sbr.rel (0) target = $region17
  $region16: #{tpu_custom_call.1} parent=0 // pred_region
    _
  $region17: #{tpu_custom_call.1} parent=0 // pred_fallthru
    _
  %v18 = vld [vmem:[%s0] sm:$0xf]
  %v19 = vld [vmem:[%s0 + $0x4] sm:$0xf]
  %v20 = vld [vmem:[%s0 + $0x8] sm:$0xf]
  %v21 = vld [vmem:[%s0 + $0xc] sm:$0xf]
  %v22 = vld [vmem:[%s0 + $0x10] sm:$0xf]
  %v23 = vld [vmem:[%s0 + $0x14] sm:$0xf]
  %v24 = vld [vmem:[%s0 + $0x18] sm:$0xf]
  %v25 = vld [vmem:[%s0 + $0x1c] sm:$0xf]
  %v26 = vld [vmem:[%s0 + $0x20] sm:$0xf]
  %v27 = vld [vmem:[%s0 + $0x24] sm:$0xf]
  %v28 = vld [vmem:[%s0 + $0x28] sm:$0xf]
  %v29 = vld [vmem:[%s0 + $0x2c] sm:$0xf]
  %v30 = vld [vmem:[%s0 + $0x30] sm:$0xf]
  %v31 = vld [vmem:[%s0 + $0x34] sm:$0xf]
  %v32 = vld [vmem:[%s0 + $0x38] sm:$0xf]
  %v33 = vld [vmem:[%s0 + $0x3c] sm:$0xf]
  %v34 = vld [vmem:[%s0 + $0x40] sm:$0xf]
  %v35 = vld [vmem:[%s0 + $0x44] sm:$0xf]
  %v36 = vld [vmem:[%s0 + $0x48] sm:$0xf]
  %v37 = vld [vmem:[%s0 + $0x4c] sm:$0xf]
  %v38 = vld [vmem:[%s0 + $0x50] sm:$0xf]
  %v39 = vld [vmem:[%s0 + $0x54] sm:$0xf]
  %v40 = vld [vmem:[%s0 + $0x58] sm:$0xf]
  %v41 = vld [vmem:[%s0 + $0x5c] sm:$0xf]
  %v42 = vld [vmem:[%s0 + $0x60] sm:$0xf]
  %v43 = vld [vmem:[%s0 + $0x64] sm:$0xf]
  %v44 = vld [vmem:[%s0 + $0x68] sm:$0xf]
  %v45 = vld [vmem:[%s0 + $0x6c] sm:$0xf]
  %v46 = vld [vmem:[%s0 + $0x70] sm:$0xf]
  %v47 = vld [vmem:[%s0 + $0x74] sm:$0xf]
  %v48 = vld [vmem:[%s0 + $0x78] sm:$0xf]
  %v49 = vld [vmem:[%s0 + $0x7c] sm:$0xf]
  %v50 = vld [vmem:[%s0 + $0x80] sm:$0xf]
  %v51 = vld [vmem:[%s0 + $0x84] sm:$0xf]
  %v52 = vld [vmem:[%s0 + $0x88] sm:$0xf]
  %v53 = vld [vmem:[%s0 + $0x8c] sm:$0xf]
  %v54 = vld [vmem:[%s0 + $0x90] sm:$0xf]
  %v55 = vld [vmem:[%s0 + $0x94] sm:$0xf]
  %v56 = vld [vmem:[%s0 + $0x98] sm:$0xf]
  %v57 = vld [vmem:[%s0 + $0x9c] sm:$0xf]
  %v58 = vld [vmem:[%s0 + $0xa0] sm:$0xf]
  %v59 = vld [vmem:[%s0 + $0xa4] sm:$0xf]
  %v60 = vld [vmem:[%s0 + $0xa8] sm:$0xf]
  %v61 = vld [vmem:[%s0 + $0xac] sm:$0xf]
  %v62 = vld [vmem:[%s0 + $0xb0] sm:$0xf]
  %v63 = vld [vmem:[%s0 + $0xb4] sm:$0xf]
  %v64 = vld [vmem:[%s0 + $0xb8] sm:$0xf]
  %v65 = vld [vmem:[%s0 + $0xbc] sm:$0xf]
  %v66 = vld [vmem:[%s0 + $0xc0] sm:$0xf]
  %v67 = vld [vmem:[%s0 + $0xc4] sm:$0xf]
  %v68 = vld [vmem:[%s0 + $0xc8] sm:$0xf]
  %v69 = vld [vmem:[%s0 + $0xcc] sm:$0xf]
  %v70 = vld [vmem:[%s0 + $0xd0] sm:$0xf]
  %v71 = vld [vmem:[%s0 + $0xd4] sm:$0xf]
  %v72 = vld [vmem:[%s0 + $0xd8] sm:$0xf]
  %v73 = vld [vmem:[%s0 + $0xdc] sm:$0xf]
  %v74 = vld [vmem:[%s0 + $0xe0] sm:$0xf]
  %v75 = vld [vmem:[%s0 + $0xe4] sm:$0xf]
  %v76 = vld [vmem:[%s0 + $0xe8] sm:$0xf]
  %v77 = vld [vmem:[%s0 + $0xec] sm:$0xf]
  %v78 = vld [vmem:[%s0 + $0xf0] sm:$0xf]
  %v79 = vld [vmem:[%s0 + $0xf4] sm:$0xf]
  %v80 = vld [vmem:[%s0 + $0xf8] sm:$0xf]
  %v81 = vld [vmem:[%s0 + $0xfc] sm:$0xf]
  %v82 = vld [vmem:[%s0 + $0x100] sm:$0xf]
  %v83 = vld [vmem:[%s0 + $0x104] sm:$0xf]
  %v84 = vld [vmem:[%s0 + $0x108] sm:$0xf]
  %v85 = vld [vmem:[%s0 + $0x10c] sm:$0xf]
  %v86 = vld [vmem:[%s0 + $0x110] sm:$0xf]
  %v87 = vld [vmem:[%s0 + $0x114] sm:$0xf]
  %v88 = vld [vmem:[%s0 + $0x118] sm:$0xf]
  %v89 = vld [vmem:[%s0 + $0x11c] sm:$0xf]
  %v90 = vld [vmem:[%s0 + $0x120] sm:$0xf]
  %v91 = vld [vmem:[%s0 + $0x124] sm:$0xf]
  %v92 = vld [vmem:[%s0 + $0x128] sm:$0xf]
  %v93 = vld [vmem:[%s0 + $0x12c] sm:$0xf]
  %v94 = vld [vmem:[%s0 + $0x130] sm:$0xf]
  %v95 = vld [vmem:[%s0 + $0x134] sm:$0xf]
  %v96 = vld [vmem:[%s0 + $0x138] sm:$0xf]
  %v97 = vld [vmem:[%s0 + $0x13c] sm:$0xf]
  %v98 = vld [vmem:[%s0 + $0x140] sm:$0xf]
  %v99 = vld [vmem:[%s0 + $0x144] sm:$0xf]
  %v100 = vld [vmem:[%s0 + $0x148] sm:$0xf]
  %v101 = vld [vmem:[%s0 + $0x14c] sm:$0xf]
  %v102 = vld [vmem:[%s0 + $0x150] sm:$0xf]
  %v103 = vld [vmem:[%s0 + $0x154] sm:$0xf]
  %v104 = vld [vmem:[%s0 + $0x158] sm:$0xf]
  %v105 = vld [vmem:[%s0 + $0x15c] sm:$0xf]
  %v106 = vld [vmem:[%s0 + $0x160] sm:$0xf]
  %v107 = vld [vmem:[%s0 + $0x164] sm:$0xf]
  %v108 = vld [vmem:[%s0 + $0x168] sm:$0xf]
  %v109 = vld [vmem:[%s0 + $0x16c] sm:$0xf]
  %v110 = vld [vmem:[%s0 + $0x170] sm:$0xf]
  %v111 = vld [vmem:[%s0 + $0x174] sm:$0xf]
  %v112 = vld [vmem:[%s0 + $0x178] sm:$0xf]
  %v113 = vld [vmem:[%s0 + $0x17c] sm:$0xf]
  %v114 = vld [vmem:[%s0 + $0x180] sm:$0xf]
  %v115 = vld [vmem:[%s0 + $0x184] sm:$0xf]
  %v116 = vld [vmem:[%s0 + $0x188] sm:$0xf]
  %v117 = vld [vmem:[%s0 + $0x18c] sm:$0xf]
  %v118 = vld [vmem:[%s0 + $0x190] sm:$0xf]
  %v119 = vld [vmem:[%s0 + $0x194] sm:$0xf]
  %v120 = vld [vmem:[%s0 + $0x198] sm:$0xf]
  %v121 = vld [vmem:[%s0 + $0x19c] sm:$0xf]
  %v122 = vld [vmem:[%s0 + $0x1a0] sm:$0xf]
  %v123 = vld [vmem:[%s0 + $0x1a4] sm:$0xf]
  %v124 = vld [vmem:[%s0 + $0x1a8] sm:$0xf]
  %v125 = vld [vmem:[%s0 + $0x1ac] sm:$0xf]
  %v126 = vld [vmem:[%s0 + $0x1b0] sm:$0xf]
  %v127 = vld [vmem:[%s0 + $0x1b4] sm:$0xf]
  %v128 = vld [vmem:[%s0 + $0x1b8] sm:$0xf]
  %v129 = vld [vmem:[%s0 + $0x1bc] sm:$0xf]
  %v130 = vld [vmem:[%s0 + $0x1c0] sm:$0xf]
  %v131 = vld [vmem:[%s0 + $0x1c4] sm:$0xf]
  %v132 = vld [vmem:[%s0 + $0x1c8] sm:$0xf]
  %v133 = vld [vmem:[%s0 + $0x1cc] sm:$0xf]
  %v134 = vld [vmem:[%s0 + $0x1d0] sm:$0xf]
  %v135 = vld [vmem:[%s0 + $0x1d4] sm:$0xf]
  %v136 = vld [vmem:[%s0 + $0x1d8] sm:$0xf]
  %v137 = vld [vmem:[%s0 + $0x1dc] sm:$0xf]
  %v138 = vld [vmem:[%s0 + $0x1e0] sm:$0xf]
  %v139 = vld [vmem:[%s0 + $0x1e4] sm:$0xf]
  %v140 = vld [vmem:[%s0 + $0x1e8] sm:$0xf]
  %v141 = vld [vmem:[%s0 + $0x1ec] sm:$0xf]
  %v142 = vld [vmem:[%s0 + $0x1f0] sm:$0xf]
  %v143 = vld [vmem:[%s0 + $0x1f4] sm:$0xf]
  %v144 = vld [vmem:[%s0 + $0x1f8] sm:$0xf]
  %v145 = vld [vmem:[%s0 + $0x1fc] sm:$0xf]
  %v146 = vld [vmem:[%s0 + $0x200] sm:$0xf]
  %v147 = vld [vmem:[%s0 + $0x204] sm:$0xf]
  %v148 = vld [vmem:[%s0 + $0x208] sm:$0xf]
  %v149 = vld [vmem:[%s0 + $0x20c] sm:$0xf]
  %v150 = vld [vmem:[%s0 + $0x210] sm:$0xf]
  %v151 = vld [vmem:[%s0 + $0x214] sm:$0xf]
  %v152 = vld [vmem:[%s0 + $0x218] sm:$0xf]
  %v153 = vld [vmem:[%s0 + $0x21c] sm:$0xf]
  %v154 = vld [vmem:[%s0 + $0x220] sm:$0xf]
  %v155 = vld [vmem:[%s0 + $0x224] sm:$0xf]
  %v156 = vld [vmem:[%s0 + $0x228] sm:$0xf]
  %v157 = vld [vmem:[%s0 + $0x22c] sm:$0xf]
  %v158 = vld [vmem:[%s0 + $0x230] sm:$0xf]
  %v159 = vld [vmem:[%s0 + $0x234] sm:$0xf]
  %v160 = vld [vmem:[%s0 + $0x238] sm:$0xf]
  %v161 = vld [vmem:[%s0 + $0x23c] sm:$0xf]
  %v162 = vld [vmem:[%s1] sm:$0xf]
  %v163 = vld [vmem:[%s1 + $0x4] sm:$0xf]
  %v308 = vunpack.c.l.b16 %v18
  %v309 = vunpack.c.l.b16 %v19
  %v310 = vunpack.c.l.b16 %v20
  %v311 = vunpack.c.l.b16 %v21
  %v312 = vunpack.c.l.b16 %v22
  %v313 = vunpack.c.l.b16 %v23
  %v314 = vunpack.c.l.b16 %v24
  %v315 = vunpack.c.l.b16 %v25
  %v316 = vunpack.c.l.b16 %v26
  %v317 = vunpack.c.l.b16 %v27
  %v318 = vunpack.c.l.b16 %v28
  %v319 = vunpack.c.l.b16 %v29
  %v320 = vunpack.c.l.b16 %v30
  %v321 = vunpack.c.l.b16 %v31
  %v322 = vunpack.c.l.b16 %v32
  %v323 = vunpack.c.l.b16 %v33
  %v324 = vunpack.c.l.b16 %v34
  %v325 = vunpack.c.l.b16 %v35
  %v326 = vunpack.c.l.b16 %v36
  %v327 = vunpack.c.l.b16 %v37
  %v328 = vunpack.c.l.b16 %v38
  %v329 = vunpack.c.l.b16 %v39
  %v330 = vunpack.c.l.b16 %v40
  %v331 = vunpack.c.l.b16 %v41
  %v332 = vunpack.c.l.b16 %v42
  %v333 = vunpack.c.l.b16 %v43
  %v334 = vunpack.c.l.b16 %v44
  %v335 = vunpack.c.l.b16 %v45
  %v336 = vunpack.c.l.b16 %v46
  %v337 = vunpack.c.l.b16 %v47
  %v338 = vunpack.c.l.b16 %v48
  %v339 = vunpack.c.l.b16 %v49
  %v340 = vunpack.c.l.b16 %v50
  %v341 = vunpack.c.l.b16 %v51
  %v342 = vunpack.c.l.b16 %v52
  %v343 = vunpack.c.l.b16 %v53
  %v344 = vunpack.c.l.b16 %v54
  %v345 = vunpack.c.l.b16 %v55
  %v346 = vunpack.c.l.b16 %v56
  %v347 = vunpack.c.l.b16 %v57
  %v348 = vunpack.c.l.b16 %v58
  %v349 = vunpack.c.l.b16 %v59
  %v350 = vunpack.c.l.b16 %v60
  %v351 = vunpack.c.l.b16 %v61
  %v352 = vunpack.c.l.b16 %v62
  %v353 = vunpack.c.l.b16 %v63
  %v354 = vunpack.c.l.b16 %v64
  %v355 = vunpack.c.l.b16 %v65
  %v356 = vunpack.c.l.b16 %v66
  %v357 = vunpack.c.l.b16 %v67
  %v358 = vunpack.c.l.b16 %v68
  %v359 = vunpack.c.l.b16 %v69
  %v360 = vunpack.c.l.b16 %v70
  %v361 = vunpack.c.l.b16 %v71
  %v362 = vunpack.c.l.b16 %v72
  %v363 = vunpack.c.l.b16 %v73
  %v364 = vunpack.c.l.b16 %v74
  %v365 = vunpack.c.l.b16 %v75
  %v366 = vunpack.c.l.b16 %v76
  %v367 = vunpack.c.l.b16 %v77
  %v368 = vunpack.c.l.b16 %v78
  %v369 = vunpack.c.l.b16 %v79
  %v370 = vunpack.c.l.b16 %v80
  %v371 = vunpack.c.l.b16 %v81
  %v372 = vunpack.c.l.b16 %v82
  %v373 = vunpack.c.l.b16 %v83
  %v374 = vunpack.c.l.b16 %v84
  %v375 = vunpack.c.l.b16 %v85
  %v376 = vunpack.c.l.b16 %v86
  %v377 = vunpack.c.l.b16 %v87
  %v378 = vunpack.c.l.b16 %v88
  %v379 = vunpack.c.l.b16 %v89
  %v380 = vunpack.c.l.b16 %v90
  %v381 = vunpack.c.l.b16 %v91
  %v382 = vunpack.c.l.b16 %v92
  %v383 = vunpack.c.l.b16 %v93
  %v384 = vunpack.c.l.b16 %v94
  %v385 = vunpack.c.l.b16 %v95
  %v386 = vunpack.c.l.b16 %v96
  %v387 = vunpack.c.l.b16 %v97
  %v388 = vunpack.c.l.b16 %v98
  %v389 = vunpack.c.l.b16 %v99
  %v390 = vunpack.c.l.b16 %v100
  %v391 = vunpack.c.l.b16 %v101
  %v392 = vunpack.c.l.b16 %v102
  %v393 = vunpack.c.l.b16 %v103
  %v394 = vunpack.c.l.b16 %v104
  %v395 = vunpack.c.l.b16 %v105
  %v396 = vunpack.c.l.b16 %v106
  %v397 = vunpack.c.l.b16 %v107
  %v398 = vunpack.c.l.b16 %v108
  %v399 = vunpack.c.l.b16 %v109
  %v400 = vunpack.c.l.b16 %v110
  %v401 = vunpack.c.l.b16 %v111
  %v402 = vunpack.c.l.b16 %v112
  %v403 = vunpack.c.l.b16 %v113
  %v404 = vunpack.c.l.b16 %v114
  %v405 = vunpack.c.l.b16 %v115
  %v406 = vunpack.c.l.b16 %v116
  %v407 = vunpack.c.l.b16 %v117
  %v408 = vunpack.c.l.b16 %v118
  %v409 = vunpack.c.l.b16 %v119
  %v410 = vunpack.c.l.b16 %v120
  %v411 = vunpack.c.l.b16 %v121
  %v412 = vunpack.c.l.b16 %v122
  %v413 = vunpack.c.l.b16 %v123
  %v414 = vunpack.c.l.b16 %v124
  %v415 = vunpack.c.l.b16 %v125
  %v416 = vunpack.c.l.b16 %v126
  %v417 = vunpack.c.l.b16 %v127
  %v418 = vunpack.c.l.b16 %v128
  %v419 = vunpack.c.l.b16 %v129
  %v420 = vunpack.c.l.b16 %v130
  %v421 = vunpack.c.l.b16 %v131
  %v422 = vunpack.c.l.b16 %v132
  %v423 = vunpack.c.l.b16 %v133
  %v424 = vunpack.c.l.b16 %v134
  %v425 = vunpack.c.l.b16 %v135
  %v426 = vunpack.c.l.b16 %v136
  %v427 = vunpack.c.l.b16 %v137
  %v428 = vunpack.c.l.b16 %v138
  %v429 = vunpack.c.l.b16 %v139
  %v430 = vunpack.c.l.b16 %v140
  %v431 = vunpack.c.l.b16 %v141
  %v432 = vunpack.c.l.b16 %v142
  %v433 = vunpack.c.l.b16 %v143
  %v434 = vunpack.c.l.b16 %v144
  %v435 = vunpack.c.l.b16 %v145
  %v436 = vunpack.c.l.b16 %v146
  %v437 = vunpack.c.l.b16 %v147
  %v438 = vunpack.c.l.b16 %v148
  %v439 = vunpack.c.l.b16 %v149
  %v440 = vunpack.c.l.b16 %v150
  %v441 = vunpack.c.l.b16 %v151
  %v442 = vunpack.c.l.b16 %v152
  %v443 = vunpack.c.l.b16 %v153
  %v444 = vunpack.c.l.b16 %v154
  %v445 = vunpack.c.l.b16 %v155
  %v446 = vunpack.c.l.b16 %v156
  %v447 = vunpack.c.l.b16 %v157
  %v448 = vunpack.c.l.b16 %v158
  %v449 = vunpack.c.l.b16 %v159
  %v450 = vunpack.c.l.b16 %v160
  %v451 = vunpack.c.l.b16 %v161
  %v452 = vpack.c.b16 %v309, %v308
  %v453 = vpack.c.b16 %v311, %v310
  %v454 = vpack.c.b16 %v313, %v312
  %v455 = vpack.c.b16 %v315, %v314
  %v456 = vpack.c.b16 %v317, %v316
  %v457 = vpack.c.b16 %v319, %v318
  %v458 = vpack.c.b16 %v321, %v320
  %v459 = vpack.c.b16 %v323, %v322
  %v460 = vpack.c.b16 %v325, %v324
  %v461 = vpack.c.b16 %v327, %v326
  %v462 = vpack.c.b16 %v329, %v328
  %v463 = vpack.c.b16 %v331, %v330
  %v464 = vpack.c.b16 %v333, %v332
  %v465 = vpack.c.b16 %v335, %v334
  %v466 = vpack.c.b16 %v337, %v336
  %v467 = vpack.c.b16 %v339, %v338
  %v468 = vpack.c.b16 %v341, %v340
  %v469 = vpack.c.b16 %v343, %v342
  %v470 = vpack.c.b16 %v345, %v344
  %v471 = vpack.c.b16 %v347, %v346
  %v472 = vpack.c.b16 %v349, %v348
  %v473 = vpack.c.b16 %v351, %v350
  %v474 = vpack.c.b16 %v353, %v352
  %v475 = vpack.c.b16 %v355, %v354
  %v476 = vpack.c.b16 %v357, %v356
  %v477 = vpack.c.b16 %v359, %v358
  %v478 = vpack.c.b16 %v361, %v360
  %v479 = vpack.c.b16 %v363, %v362
  %v480 = vpack.c.b16 %v365, %v364
  %v481 = vpack.c.b16 %v367, %v366
  %v482 = vpack.c.b16 %v369, %v368
  %v483 = vpack.c.b16 %v371, %v370
  %v484 = vpack.c.b16 %v373, %v372
  %v485 = vpack.c.b16 %v375, %v374
  %v486 = vpack.c.b16 %v377, %v376
  %v487 = vpack.c.b16 %v379, %v378
  %v488 = vpack.c.b16 %v381, %v380
  %v489 = vpack.c.b16 %v383, %v382
  %v490 = vpack.c.b16 %v385, %v384
  %v491 = vpack.c.b16 %v387, %v386
  %v492 = vpack.c.b16 %v389, %v388
  %v493 = vpack.c.b16 %v391, %v390
  %v494 = vpack.c.b16 %v393, %v392
  %v495 = vpack.c.b16 %v395, %v394
  %v496 = vpack.c.b16 %v397, %v396
  %v497 = vpack.c.b16 %v399, %v398
  %v498 = vpack.c.b16 %v401, %v400
  %v499 = vpack.c.b16 %v403, %v402
  %v500 = vpack.c.b16 %v405, %v404
  %v501 = vpack.c.b16 %v407, %v406
  %v502 = vpack.c.b16 %v409, %v408
  %v503 = vpack.c.b16 %v411, %v410
  %v504 = vpack.c.b16 %v413, %v412
  %v505 = vpack.c.b16 %v415, %v414
  %v506 = vpack.c.b16 %v417, %v416
  %v507 = vpack.c.b16 %v419, %v418
  %v508 = vpack.c.b16 %v421, %v420
  %v509 = vpack.c.b16 %v423, %v422
  %v510 = vpack.c.b16 %v425, %v424
  %v511 = vpack.c.b16 %v427, %v426
  %v512 = vpack.c.b16 %v429, %v428
  %v513 = vpack.c.b16 %v431, %v430
  %v514 = vpack.c.b16 %v433, %v432
  %v515 = vpack.c.b16 %v435, %v434
  %v516 = vpack.c.b16 %v437, %v436
  %v517 = vpack.c.b16 %v439, %v438
  %v518 = vpack.c.b16 %v441, %v440
  %v519 = vpack.c.b16 %v443, %v442
  %v520 = vpack.c.b16 %v445, %v444
  %v521 = vpack.c.b16 %v447, %v446
  %v522 = vpack.c.b16 %v449, %v448
  %v523 = vpack.c.b16 %v451, %v450
  %v526 = vunpack.c.l.b16 %v162
  %v527 = vunpack.c.l.b16 %v163
  %v528 = vpack.c.b16 %v527, %v526
  %vm530 = vcmask 130048
  %v532 = vsel %vm530, %v452, 0
  %v535 = vsel %vm530, %v453, 0
  %v538 = vsel %vm530, %v454, 0
  %v541 = vsel %vm530, %v455, 0
  %v544 = vsel %vm530, %v456, 0
  %v547 = vsel %vm530, %v457, 0
  %v550 = vsel %vm530, %v458, 0
  %v553 = vsel %vm530, %v459, 0
  %v556 = vsel %vm530, %v460, 0
  %v559 = vsel %vm530, %v461, 0
  %v562 = vsel %vm530, %v462, 0
  %v565 = vsel %vm530, %v463, 0
  %v568 = vsel %vm530, %v464, 0
  %v571 = vsel %vm530, %v465, 0
  %v574 = vsel %vm530, %v466, 0
  %v577 = vsel %vm530, %v467, 0
  %v580 = vsel %vm530, %v468, 0
  %v583 = vsel %vm530, %v469, 0
  %v586 = vsel %vm530, %v470, 0
  %v589 = vsel %vm530, %v471, 0
  %v592 = vsel %vm530, %v472, 0
  %v595 = vsel %vm530, %v473, 0
  %v598 = vsel %vm530, %v474, 0
  %v601 = vsel %vm530, %v475, 0
  %v604 = vsel %vm530, %v476, 0
  %v607 = vsel %vm530, %v477, 0
  %v610 = vsel %vm530, %v478, 0
  %v613 = vsel %vm530, %v479, 0
  %v616 = vsel %vm530, %v480, 0
  %v619 = vsel %vm530, %v481, 0
  %v622 = vsel %vm530, %v482, 0
  %v625 = vsel %vm530, %v483, 0
  %v628 = vsel %vm530, %v484, 0
  %v631 = vsel %vm530, %v485, 0
  %v634 = vsel %vm530, %v486, 0
  %v637 = vsel %vm530, %v487, 0
  %v640 = vsel %vm530, %v488, 0
  %v643 = vsel %vm530, %v489, 0
  %v646 = vsel %vm530, %v490, 0
  %v649 = vsel %vm530, %v491, 0
  %v652 = vsel %vm530, %v492, 0
  %v655 = vsel %vm530, %v493, 0
  %v658 = vsel %vm530, %v494, 0
  %v661 = vsel %vm530, %v495, 0
  %v664 = vsel %vm530, %v496, 0
  %v667 = vsel %vm530, %v497, 0
  %v670 = vsel %vm530, %v498, 0
  %v673 = vsel %vm530, %v499, 0
  %v676 = vsel %vm530, %v500, 0
  %v679 = vsel %vm530, %v501, 0
  %v682 = vsel %vm530, %v502, 0
  %v685 = vsel %vm530, %v503, 0
  %v688 = vsel %vm530, %v504, 0
  %v691 = vsel %vm530, %v505, 0
  %v694 = vsel %vm530, %v506, 0
  %v697 = vsel %vm530, %v507, 0
  %v700 = vsel %vm530, %v508, 0
  %v703 = vsel %vm530, %v509, 0
  %v706 = vsel %vm530, %v510, 0
  %v709 = vsel %vm530, %v511, 0
  %v712 = vsel %vm530, %v512, 0
  %v715 = vsel %vm530, %v513, 0
  %v718 = vsel %vm530, %v514, 0
  %v721 = vsel %vm530, %v515, 0
  %v724 = vsel %vm530, %v516, 0
  %v727 = vsel %vm530, %v517, 0
  %v730 = vsel %vm530, %v518, 0
  %v733 = vsel %vm530, %v519, 0
  %v736 = vsel %vm530, %v520, 0
  %v739 = vsel %vm530, %v521, 0
  %v742 = vsel %vm530, %v522, 0
  %v745 = vsel %vm530, %v523, 0
  %747 = vmatprep.subr.bf16.mxu0 0
  %748 = vmatpush1.bf16.msra.mxu0 %v528
  %749 = vmatprep.subr.bf16.mxu0 0
  %750 = vmatpush1.bf16.msra.mxu0 0
  %751 = vmatprep.subr.bf16.mxu0 0
  %752 = vmatpush1.bf16.msra.mxu0 0
  %753 = vmatprep.subr.bf16.mxu0 0
  %754 = vmatpush1.bf16.msra.mxu0 0
  %755 = vmatprep.subr.bf16.mxu0 0
  %756 = vmatpush1.bf16.msra.mxu0 0
  %757 = vmatprep.subr.bf16.mxu0 0
  %758 = vmatpush1.bf16.msra.mxu0 0
  %759 = vmatprep.subr.bf16.mxu0 0
  %760 = vmatpush1.bf16.msra.mxu0 0
  %761 = vmatprep.subr.bf16.mxu0 0
  %762 = vmatpush1.bf16.msra.mxu0 0
  %763 = vmatprep.subr.bf16.mxu0 0
  %764 = vmatpush1.bf16.msra.mxu0 0
  %765 = vmatprep.subr.bf16.mxu0 0
  %766 = vmatpush1.bf16.msra.mxu0 0
  %767 = vmatprep.subr.bf16.mxu0 0
  %768 = vmatpush1.bf16.msra.mxu0 0
  %769 = vmatprep.subr.bf16.mxu0 0
  %770 = vmatpush1.bf16.msra.mxu0 0
  %771 = vmatprep.subr.bf16.mxu0 0
  %772 = vmatpush1.bf16.msra.mxu0 0
  %773 = vmatprep.subr.bf16.mxu0 0
  %774 = vmatpush1.bf16.msra.mxu0 0
  %775 = vmatprep.subr.bf16.mxu0 0
  %776 = vmatpush1.bf16.msra.mxu0 0
  %777 = vmatprep.subr.bf16.mxu0 0
  %778 = vmatpush1.bf16.msra.mxu0 0
  %779 = vmatprep.mubr.bf16.mxu0 0
  %780 = vmatmul.mubr.bf16.gmra.mrb[0].mxu0 %v532
  %v781 = vpop.f32.mrb[0].mxu0
  %v782 = vadd.f32 0.0, %v781
  %v783 = vpop.f32.mrb[0].mxu0
  %v784 = vpop.f32.mrb[0].mxu0
  %v785 = vadd.f32 0.0, %v784
  %v786 = vpop.f32.mrb[0].mxu0
  %787 = vmatprep.mubr.bf16.mxu0 0
  %788 = vmatmul.mubr.bf16.gmra.mrb[0].mxu0 %v535
  %v789 = vpop.f32.mrb[0].mxu0
  %v790 = vadd.f32 0.0, %v789
  %v791 = vpop.f32.mrb[0].mxu0
  %v792 = vpop.f32.mrb[0].mxu0
  %v793 = vpop.f32.mrb[0].mxu0
  %794 = vmatprep.mubr.bf16.mxu0 0
  %795 = vmatmul.mubr.bf16.gmra.mrb[0].mxu0 %v538
  %v796 = vpop.f32.mrb[0].mxu0
  %v797 = vadd.f32 0.0, %v796
  %v798 = vpop.f32.mrb[0].mxu0
  %v799 = vpop.f32.mrb[0].mxu0
  %v800 = vadd.f32 0.0, %v799
  %v801 = vpop.f32.mrb[0].mxu0
  %802 = vmatprep.mubr.bf16.mxu0 0
  %803 = vmatmul.mubr.bf16.gmra.mrb[0].mxu0 %v541
  %v804 = vpop.f32.mrb[0].mxu0
  %v805 = vadd.f32 0.0, %v804
  %v806 = vpop.f32.mrb[0].mxu0
  %v807 = vpop.f32.mrb[0].mxu0
  %v808 = vpop.f32.mrb[0].mxu0
  %809 = vmatprep.mubr.bf16.mxu0 0
  %810 = vmatmul.mubr.bf16.gmra.mrb[0].mxu0 %v544
  %v811 = vpop.f32.mrb[0].mxu0
  %v812 = vadd.f32 0.0, %v811
  %v813 = vpop.f32.mrb[0].mxu0
  %v814 = vpop.f32.mrb[0].mxu0
  %v815 = vadd.f32 0.0, %v814
  %v816 = vpop.f32.mrb[0].mxu0
  %817 = vmatprep.mubr.bf16.mxu0 0
  %818 = vmatmul.mubr.bf16.gmra.mrb[0].mxu0 %v547
  %v819 = vpop.f32.mrb[0].mxu0
  %v820 = vadd.f32 0.0, %v819
  %v821 = vpop.f32.mrb[0].mxu0
  %v822 = vpop.f32.mrb[0].mxu0
  %v823 = vpop.f32.mrb[0].mxu0
  %824 = vmatprep.mubr.bf16.mxu0 0
  %825 = vmatmul.mubr.bf16.gmra.mrb[0].mxu0 %v550
  %v826 = vpop.f32.mrb[0].mxu0
  %v827 = vadd.f32 0.0, %v826
  %v828 = vpop.f32.mrb[0].mxu0
  %v829 = vpop.f32.mrb[0].mxu0
  %v830 = vadd.f32 0.0, %v829
  %v831 = vpop.f32.mrb[0].mxu0
  %832 = vmatprep.mubr.bf16.mxu0 0
  %833 = vmatmul.mubr.bf16.gmra.mrb[0].mxu0 %v553
  %v834 = vpop.f32.mrb[0].mxu0
  %v835 = vadd.f32 0.0, %v834
  %v836 = vpop.f32.mrb[0].mxu0
  %v837 = vpop.f32.mrb[0].mxu0
  %v838 = vpop.f32.mrb[0].mxu0
  %839 = vmatprep.mubr.bf16.mxu0 0
  %840 = vmatmul.mubr.bf16.gmra.mrb[0].mxu0 %v556
  %v841 = vpop.f32.mrb[0].mxu0
  %v842 = vadd.f32 0.0, %v841
  %v843 = vpop.f32.mrb[0].mxu0
  %v844 = vpop.f32.mrb[0].mxu0
  %v845 = vadd.f32 0.0, %v844
  %v846 = vpop.f32.mrb[0].mxu0
  %847 = vmatprep.mubr.bf16.mxu0 0
  %848 = vmatmul.mubr.bf16.gmra.mrb[0].mxu0 %v559
  %v849 = vpop.f32.mrb[0].mxu0
  %v850 = vadd.f32 0.0, %v849
  %v851 = vpop.f32.mrb[0].mxu0
  %v852 = vpop.f32.mrb[0].mxu0
  %v853 = vpop.f32.mrb[0].mxu0
  %854 = vmatprep.mubr.bf16.mxu0 0
  %855 = vmatmul.mubr.bf16.gmra.mrb[0].mxu0 %v562
  %v856 = vpop.f32.mrb[0].mxu0
  %v857 = vadd.f32 0.0, %v856
  %v858 = vpop.f32.mrb[0].mxu0
  %v859 = vpop.f32.mrb[0].mxu0
  %v860 = vadd.f32 0.0, %v859
  %v861 = vpop.f32.mrb[0].mxu0
  %862 = vmatprep.mubr.bf16.mxu0 0
  %863 = vmatmul.mubr.bf16.gmra.mrb[0].mxu0 %v565
  %v864 = vpop.f32.mrb[0].mxu0
  %v865 = vadd.f32 0.0, %v864
  %v866 = vpop.f32.mrb[0].mxu0
  %v867 = vpop.f32.mrb[0].mxu0
  %v868 = vpop.f32.mrb[0].mxu0
  %869 = vmatprep.mubr.bf16.mxu0 0
  %870 = vmatmul.mubr.bf16.gmra.mrb[0].mxu0 %v568
  %v871 = vpop.f32.mrb[0].mxu0
  %v872 = vadd.f32 0.0, %v871
  %v873 = vpop.f32.mrb[0].mxu0
  %v874 = vpop.f32.mrb[0].mxu0
  %v875 = vadd.f32 0.0, %v874
  %v876 = vpop.f32.mrb[0].mxu0
  %877 = vmatprep.mubr.bf16.mxu0 0
  %878 = vmatmul.mubr.bf16.gmra.mrb[0].mxu0 %v571
  %v879 = vpop.f32.mrb[0].mxu0
  %v880 = vadd.f32 0.0, %v879
  %v881 = vpop.f32.mrb[0].mxu0
  %v882 = vpop.f32.mrb[0].mxu0
  %v883 = vpop.f32.mrb[0].mxu0
  %884 = vmatprep.mubr.bf16.mxu0 0
  %885 = vmatmul.mubr.bf16.gmra.mrb[0].mxu0 %v574
  %v886 = vpop.f32.mrb[0].mxu0
  %v887 = vadd.f32 0.0, %v886
  %v888 = vpop.f32.mrb[0].mxu0
  %v889 = vpop.f32.mrb[0].mxu0
  %v890 = vadd.f32 0.0, %v889
  %v891 = vpop.f32.mrb[0].mxu0
  %892 = vmatprep.mubr.bf16.mxu0 0
  %893 = vmatmul.mubr.bf16.gmra.mrb[0].mxu0 %v577
  %v894 = vpop.f32.mrb[0].mxu0
  %v895 = vadd.f32 0.0, %v894
  %v896 = vpop.f32.mrb[0].mxu0
  %v897 = vpop.f32.mrb[0].mxu0
  %v898 = vpop.f32.mrb[0].mxu0
  %899 = vmatprep.mubr.bf16.mxu0 0
  %900 = vmatmul.mubr.bf16.gmra.mrb[0].mxu0 %v580
  %v901 = vpop.f32.mrb[0].mxu0
  %v902 = vadd.f32 0.0, %v901
  %v903 = vpop.f32.mrb[0].mxu0
  %v904 = vpop.f32.mrb[0].mxu0
  %v905 = vadd.f32 0.0, %v904
  %v906 = vpop.f32.mrb[0].mxu0
  %907 = vmatprep.mubr.bf16.mxu0 0
  %908 = vmatmul.mubr.bf16.gmra.mrb[0].mxu0 %v583
  %v909 = vpop.f32.mrb[0].mxu0
  %v910 = vadd.f32 0.0, %v909
  %v911 = vpop.f32.mrb[0].mxu0
  %v912 = vpop.f32.mrb[0].mxu0
  %v913 = vpop.f32.mrb[0].mxu0
  %914 = vmatprep.mubr.bf16.mxu0 0
  %915 = vmatmul.mubr.bf16.gmra.mrb[0].mxu0 %v586
  %v916 = vpop.f32.mrb[0].mxu0
  %v917 = vadd.f32 0.0, %v916
  %v918 = vpop.f32.mrb[0].mxu0
  %v919 = vpop.f32.mrb[0].mxu0
  %v920 = vadd.f32 0.0, %v919
  %v921 = vpop.f32.mrb[0].mxu0
  %922 = vmatprep.mubr.bf16.mxu0 0
  %923 = vmatmul.mubr.bf16.gmra.mrb[0].mxu0 %v589
  %v924 = vpop.f32.mrb[0].mxu0
  %v925 = vadd.f32 0.0, %v924
  %v926 = vpop.f32.mrb[0].mxu0
  %v927 = vpop.f32.mrb[0].mxu0
  %v928 = vpop.f32.mrb[0].mxu0
  %929 = vmatprep.mubr.bf16.mxu0 0
  %930 = vmatmul.mubr.bf16.gmra.mrb[0].mxu0 %v592
  %v931 = vpop.f32.mrb[0].mxu0
  %v932 = vadd.f32 0.0, %v931
  %v933 = vpop.f32.mrb[0].mxu0
  %v934 = vpop.f32.mrb[0].mxu0
  %v935 = vadd.f32 0.0, %v934
  %v936 = vpop.f32.mrb[0].mxu0
  %937 = vmatprep.mubr.bf16.mxu0 0
  %938 = vmatmul.mubr.bf16.gmra.mrb[0].mxu0 %v595
  %v939 = vpop.f32.mrb[0].mxu0
  %v940 = vadd.f32 0.0, %v939
  %v941 = vpop.f32.mrb[0].mxu0
  %v942 = vpop.f32.mrb[0].mxu0
  %v943 = vpop.f32.mrb[0].mxu0
  %944 = vmatprep.mubr.bf16.mxu0 0
  %945 = vmatmul.mubr.bf16.gmra.mrb[0].mxu0 %v598
  %v946 = vpop.f32.mrb[0].mxu0
  %v947 = vadd.f32 0.0, %v946
  %v948 = vpop.f32.mrb[0].mxu0
  %v949 = vpop.f32.mrb[0].mxu0
  %v950 = vadd.f32 0.0, %v949
  %v951 = vpop.f32.mrb[0].mxu0
  %952 = vmatprep.mubr.bf16.mxu0 0
  %953 = vmatmul.mubr.bf16.gmra.mrb[0].mxu0 %v601
  %v954 = vpop.f32.mrb[0].mxu0
  %v955 = vadd.f32 0.0, %v954
  %v956 = vpop.f32.mrb[0].mxu0
  %v957 = vpop.f32.mrb[0].mxu0
  %v958 = vpop.f32.mrb[0].mxu0
  %959 = vmatprep.mubr.bf16.mxu0 0
  %960 = vmatmul.mubr.bf16.gmra.mrb[0].mxu0 %v604
  %v961 = vpop.f32.mrb[0].mxu0
  %v962 = vadd.f32 0.0, %v961
  %v963 = vpop.f32.mrb[0].mxu0
  %v964 = vpop.f32.mrb[0].mxu0
  %v965 = vadd.f32 0.0, %v964
  %v966 = vpop.f32.mrb[0].mxu0
  %967 = vmatprep.mubr.bf16.mxu0 0
  %968 = vmatmul.mubr.bf16.gmra.mrb[0].mxu0 %v607
  %v969 = vpop.f32.mrb[0].mxu0
  %v970 = vadd.f32 0.0, %v969
  %v971 = vpop.f32.mrb[0].mxu0
  %v972 = vpop.f32.mrb[0].mxu0
  %v973 = vpop.f32.mrb[0].mxu0
  %974 = vmatprep.mubr.bf16.mxu0 0
  %975 = vmatmul.mubr.bf16.gmra.mrb[0].mxu0 %v610
  %v976 = vpop.f32.mrb[0].mxu0
  %v977 = vadd.f32 0.0, %v976
  %v978 = vpop.f32.mrb[0].mxu0
  %v979 = vpop.f32.mrb[0].mxu0
  %v980 = vadd.f32 0.0, %v979
  %v981 = vpop.f32.mrb[0].mxu0
  %982 = vmatprep.mubr.bf16.mxu0 0
  %983 = vmatmul.mubr.bf16.gmra.mrb[0].mxu0 %v613
  %v984 = vpop.f32.mrb[0].mxu0
  %v985 = vadd.f32 0.0, %v984
  %v986 = vpop.f32.mrb[0].mxu0
  %v987 = vpop.f32.mrb[0].mxu0
  %v988 = vpop.f32.mrb[0].mxu0
  %989 = vmatprep.mubr.bf16.mxu0 0
  %990 = vmatmul.mubr.bf16.gmra.mrb[0].mxu0 %v616
  %v991 = vpop.f32.mrb[0].mxu0
  %v992 = vadd.f32 0.0, %v991
  %v993 = vpop.f32.mrb[0].mxu0
  %v994 = vpop.f32.mrb[0].mxu0
  %v995 = vadd.f32 0.0, %v994
  %v996 = vpop.f32.mrb[0].mxu0
  %997 = vmatprep.mubr.bf16.mxu0 0
  %998 = vmatmul.mubr.bf16.gmra.mrb[0].mxu0 %v619
  %v999 = vpop.f32.mrb[0].mxu0
  %v1000 = vadd.f32 0.0, %v999
  %v1001 = vpop.f32.mrb[0].mxu0
  %v1002 = vpop.f32.mrb[0].mxu0
  %v1003 = vpop.f32.mrb[0].mxu0
  %1004 = vmatprep.mubr.bf16.mxu0 0
  %1005 = vmatmul.mubr.bf16.gmra.mrb[0].mxu0 %v622
  %v1006 = vpop.f32.mrb[0].mxu0
  %v1007 = vadd.f32 0.0, %v1006
  %v1008 = vpop.f32.mrb[0].mxu0
  %v1009 = vpop.f32.mrb[0].mxu0
  %v1010 = vadd.f32 0.0, %v1009
  %v1011 = vpop.f32.mrb[0].mxu0
  %1012 = vmatprep.mubr.bf16.mxu0 0
  %1013 = vmatmul.mubr.bf16.gmra.mrb[0].mxu0 %v625
  %v1014 = vpop.f32.mrb[0].mxu0
  %v1015 = vadd.f32 0.0, %v1014
  %v1016 = vpop.f32.mrb[0].mxu0
  %v1017 = vpop.f32.mrb[0].mxu0
  %v1018 = vpop.f32.mrb[0].mxu0
  %1019 = vmatprep.mubr.bf16.mxu0 0
  %1020 = vmatmul.mubr.bf16.gmra.mrb[0].mxu0 %v628
  %v1021 = vpop.f32.mrb[0].mxu0
  %v1022 = vadd.f32 0.0, %v1021
  %v1023 = vpop.f32.mrb[0].mxu0
  %v1024 = vpop.f32.mrb[0].mxu0
  %v1025 = vadd.f32 0.0, %v1024
  %v1026 = vpop.f32.mrb[0].mxu0
  %1027 = vmatprep.mubr.bf16.mxu0 0
  %1028 = vmatmul.mubr.bf16.gmra.mrb[0].mxu0 %v631
  %v1029 = vpop.f32.mrb[0].mxu0
  %v1030 = vadd.f32 0.0, %v1029
  %v1031 = vpop.f32.mrb[0].mxu0
  %v1032 = vpop.f32.mrb[0].mxu0
  %v1033 = vpop.f32.mrb[0].mxu0
  %1034 = vmatprep.mubr.bf16.mxu0 0
  %1035 = vmatmul.mubr.bf16.gmra.mrb[0].mxu0 %v634
  %v1036 = vpop.f32.mrb[0].mxu0
  %v1037 = vadd.f32 0.0, %v1036
  %v1038 = vpop.f32.mrb[0].mxu0
  %v1039 = vpop.f32.mrb[0].mxu0
  %v1040 = vadd.f32 0.0, %v1039
  %v1041 = vpop.f32.mrb[0].mxu0
  %1042 = vmatprep.mubr.bf16.mxu0 0
  %1043 = vmatmul.mubr.bf16.gmra.mrb[0].mxu0 %v637
  %v1044 = vpop.f32.mrb[0].mxu0
  %v1045 = vadd.f32 0.0, %v1044
  %v1046 = vpop.f32.mrb[0].mxu0
  %v1047 = vpop.f32.mrb[0].mxu0
  %v1048 = vpop.f32.mrb[0].mxu0
  %1049 = vmatprep.mubr.bf16.mxu0 0
  %1050 = vmatmul.mubr.bf16.gmra.mrb[0].mxu0 %v640
  %v1051 = vpop.f32.mrb[0].mxu0
  %v1052 = vadd.f32 0.0, %v1051
  %v1053 = vpop.f32.mrb[0].mxu0
  %v1054 = vpop.f32.mrb[0].mxu0
  %v1055 = vadd.f32 0.0, %v1054
  %v1056 = vpop.f32.mrb[0].mxu0
  %1057 = vmatprep.mubr.bf16.mxu0 0
  %1058 = vmatmul.mubr.bf16.gmra.mrb[0].mxu0 %v643
  %v1059 = vpop.f32.mrb[0].mxu0
  %v1060 = vadd.f32 0.0, %v1059
  %v1061 = vpop.f32.mrb[0].mxu0
  %v1062 = vpop.f32.mrb[0].mxu0
  %v1063 = vpop.f32.mrb[0].mxu0
  %1064 = vmatprep.mubr.bf16.mxu0 0
  %1065 = vmatmul.mubr.bf16.gmra.mrb[0].mxu0 %v646
  %v1066 = vpop.f32.mrb[0].mxu0
  %v1067 = vadd.f32 0.0, %v1066
  %v1068 = vpop.f32.mrb[0].mxu0
  %v1069 = vpop.f32.mrb[0].mxu0
  %v1070 = vadd.f32 0.0, %v1069
  %v1071 = vpop.f32.mrb[0].mxu0
  %1072 = vmatprep.mubr.bf16.mxu0 0
  %1073 = vmatmul.mubr.bf16.gmra.mrb[0].mxu0 %v649
  %v1074 = vpop.f32.mrb[0].mxu0
  %v1075 = vadd.f32 0.0, %v1074
  %v1076 = vpop.f32.mrb[0].mxu0
  %v1077 = vpop.f32.mrb[0].mxu0
  %v1078 = vpop.f32.mrb[0].mxu0
  %1079 = vmatprep.mubr.bf16.mxu0 0
  %1080 = vmatmul.mubr.bf16.gmra.mrb[0].mxu0 %v652
  %v1081 = vpop.f32.mrb[0].mxu0
  %v1082 = vadd.f32 0.0, %v1081
  %v1083 = vpop.f32.mrb[0].mxu0
  %v1084 = vpop.f32.mrb[0].mxu0
  %v1085 = vadd.f32 0.0, %v1084
  %v1086 = vpop.f32.mrb[0].mxu0
  %1087 = vmatprep.mubr.bf16.mxu0 0
  %1088 = vmatmul.mubr.bf16.gmra.mrb[0].mxu0 %v655
  %v1089 = vpop.f32.mrb[0].mxu0
  %v1090 = vadd.f32 0.0, %v1089
  %v1091 = vpop.f32.mrb[0].mxu0
  %v1092 = vpop.f32.mrb[0].mxu0
  %v1093 = vpop.f32.mrb[0].mxu0
  %1094 = vmatprep.mubr.bf16.mxu0 0
  %1095 = vmatmul.mubr.bf16.gmra.mrb[0].mxu0 %v658
  %v1096 = vpop.f32.mrb[0].mxu0
  %v1097 = vadd.f32 0.0, %v1096
  %v1098 = vpop.f32.mrb[0].mxu0
  %v1099 = vpop.f32.mrb[0].mxu0
  %v1100 = vadd.f32 0.0, %v1099
  %v1101 = vpop.f32.mrb[0].mxu0
  %1102 = vmatprep.mubr.bf16.mxu0 0
  %1103 = vmatmul.mubr.bf16.gmra.mrb[0].mxu0 %v661
  %v1104 = vpop.f32.mrb[0].mxu0
  %v1105 = vadd.f32 0.0, %v1104
  %v1106 = vpop.f32.mrb[0].mxu0
  %v1107 = vpop.f32.mrb[0].mxu0
  %v1108 = vpop.f32.mrb[0].mxu0
  %1109 = vmatprep.mubr.bf16.mxu0 0
  %1110 = vmatmul.mubr.bf16.gmra.mrb[0].mxu0 %v664
  %v1111 = vpop.f32.mrb[0].mxu0
  %v1112 = vadd.f32 0.0, %v1111
  %v1113 = vpop.f32.mrb[0].mxu0
  %v1114 = vpop.f32.mrb[0].mxu0
  %v1115 = vadd.f32 0.0, %v1114
  %v1116 = vpop.f32.mrb[0].mxu0
  %1117 = vmatprep.mubr.bf16.mxu0 0
  %1118 = vmatmul.mubr.bf16.gmra.mrb[0].mxu0 %v667
  %v1119 = vpop.f32.mrb[0].mxu0
  %v1120 = vadd.f32 0.0, %v1119
  %v1121 = vpop.f32.mrb[0].mxu0
  %v1122 = vpop.f32.mrb[0].mxu0
  %v1123 = vpop.f32.mrb[0].mxu0
  %1124 = vmatprep.mubr.bf16.mxu0 0
  %1125 = vmatmul.mubr.bf16.gmra.mrb[0].mxu0 %v670
  %v1126 = vpop.f32.mrb[0].mxu0
  %v1127 = vadd.f32 0.0, %v1126
  %v1128 = vpop.f32.mrb[0].mxu0
  %v1129 = vpop.f32.mrb[0].mxu0
  %v1130 = vadd.f32 0.0, %v1129
  %v1131 = vpop.f32.mrb[0].mxu0
  %1132 = vmatprep.mubr.bf16.mxu0 0
  %1133 = vmatmul.mubr.bf16.gmra.mrb[0].mxu0 %v673
  %v1134 = vpop.f32.mrb[0].mxu0
  %v1135 = vadd.f32 0.0, %v1134
  %v1136 = vpop.f32.mrb[0].mxu0
  %v1137 = vpop.f32.mrb[0].mxu0
  %v1138 = vpop.f32.mrb[0].mxu0
  %1139 = vmatprep.mubr.bf16.mxu0 0
  %1140 = vmatmul.mubr.bf16.gmra.mrb[0].mxu0 %v676
  %v1141 = vpop.f32.mrb[0].mxu0
  %v1142 = vadd.f32 0.0, %v1141
  %v1143 = vpop.f32.mrb[0].mxu0
  %v1144 = vpop.f32.mrb[0].mxu0
  %v1145 = vadd.f32 0.0, %v1144
  %v1146 = vpop.f32.mrb[0].mxu0
  %1147 = vmatprep.mubr.bf16.mxu0 0
  %1148 = vmatmul.mubr.bf16.gmra.mrb[0].mxu0 %v679
  %v1149 = vpop.f32.mrb[0].mxu0
  %v1150 = vadd.f32 0.0, %v1149
  %v1151 = vpop.f32.mrb[0].mxu0
  %v1152 = vpop.f32.mrb[0].mxu0
  %v1153 = vpop.f32.mrb[0].mxu0
  %1154 = vmatprep.mubr.bf16.mxu0 0
  %1155 = vmatmul.mubr.bf16.gmra.mrb[0].mxu0 %v682
  %v1156 = vpop.f32.mrb[0].mxu0
  %v1157 = vadd.f32 0.0, %v1156
  %v1158 = vpop.f32.mrb[0].mxu0
  %v1159 = vpop.f32.mrb[0].mxu0
  %v1160 = vadd.f32 0.0, %v1159
  %v1161 = vpop.f32.mrb[0].mxu0
  %1162 = vmatprep.mubr.bf16.mxu0 0
  %1163 = vmatmul.mubr.bf16.gmra.mrb[0].mxu0 %v685
  %v1164 = vpop.f32.mrb[0].mxu0
  %v1165 = vadd.f32 0.0, %v1164
  %v1166 = vpop.f32.mrb[0].mxu0
  %v1167 = vpop.f32.mrb[0].mxu0
  %v1168 = vpop.f32.mrb[0].mxu0
  %1169 = vmatprep.mubr.bf16.mxu0 0
  %1170 = vmatmul.mubr.bf16.gmra.mrb[0].mxu0 %v688
  %v1171 = vpop.f32.mrb[0].mxu0
  %v1172 = vadd.f32 0.0, %v1171
  %v1173 = vpop.f32.mrb[0].mxu0
  %v1174 = vpop.f32.mrb[0].mxu0
  %v1175 = vadd.f32 0.0, %v1174
  %v1176 = vpop.f32.mrb[0].mxu0
  %1177 = vmatprep.mubr.bf16.mxu0 0
  %1178 = vmatmul.mubr.bf16.gmra.mrb[0].mxu0 %v691
  %v1179 = vpop.f32.mrb[0].mxu0
  %v1180 = vadd.f32 0.0, %v1179
  %v1181 = vpop.f32.mrb[0].mxu0
  %v1182 = vpop.f32.mrb[0].mxu0
  %v1183 = vpop.f32.mrb[0].mxu0
  %1184 = vmatprep.mubr.bf16.mxu0 0
  %1185 = vmatmul.mubr.bf16.gmra.mrb[0].mxu0 %v694
  %v1186 = vpop.f32.mrb[0].mxu0
  %v1187 = vadd.f32 0.0, %v1186
  %v1188 = vpop.f32.mrb[0].mxu0
  %v1189 = vpop.f32.mrb[0].mxu0
  %v1190 = vadd.f32 0.0, %v1189
  %v1191 = vpop.f32.mrb[0].mxu0
  %1192 = vmatprep.mubr.bf16.mxu0 0
  %1193 = vmatmul.mubr.bf16.gmra.mrb[0].mxu0 %v697
  %v1194 = vpop.f32.mrb[0].mxu0
  %v1195 = vadd.f32 0.0, %v1194
  %v1196 = vpop.f32.mrb[0].mxu0
  %v1197 = vpop.f32.mrb[0].mxu0
  %v1198 = vpop.f32.mrb[0].mxu0
  %1199 = vmatprep.mubr.bf16.mxu0 0
  %1200 = vmatmul.mubr.bf16.gmra.mrb[0].mxu0 %v700
  %v1201 = vpop.f32.mrb[0].mxu0
  %v1202 = vadd.f32 0.0, %v1201
  %v1203 = vpop.f32.mrb[0].mxu0
  %v1204 = vpop.f32.mrb[0].mxu0
  %v1205 = vadd.f32 0.0, %v1204
  %v1206 = vpop.f32.mrb[0].mxu0
  %1207 = vmatprep.mubr.bf16.mxu0 0
  %1208 = vmatmul.mubr.bf16.gmra.mrb[0].mxu0 %v703
  %v1209 = vpop.f32.mrb[0].mxu0
  %v1210 = vadd.f32 0.0, %v1209
  %v1211 = vpop.f32.mrb[0].mxu0
  %v1212 = vpop.f32.mrb[0].mxu0
  %v1213 = vpop.f32.mrb[0].mxu0
  %1214 = vmatprep.mubr.bf16.mxu0 0
  %1215 = vmatmul.mubr.bf16.gmra.mrb[0].mxu0 %v706
  %v1216 = vpop.f32.mrb[0].mxu0
  %v1217 = vadd.f32 0.0, %v1216
  %v1218 = vpop.f32.mrb[0].mxu0
  %v1219 = vpop.f32.mrb[0].mxu0
  %v1220 = vadd.f32 0.0, %v1219
  %v1221 = vpop.f32.mrb[0].mxu0
  %1222 = vmatprep.mubr.bf16.mxu0 0
  %1223 = vmatmul.mubr.bf16.gmra.mrb[0].mxu0 %v709
  %v1224 = vpop.f32.mrb[0].mxu0
  %v1225 = vadd.f32 0.0, %v1224
  %v1226 = vpop.f32.mrb[0].mxu0
  %v1227 = vpop.f32.mrb[0].mxu0
  %v1228 = vpop.f32.mrb[0].mxu0
  %1229 = vmatprep.mubr.bf16.mxu0 0
  %1230 = vmatmul.mubr.bf16.gmra.mrb[0].mxu0 %v712
  %v1231 = vpop.f32.mrb[0].mxu0
  %v1232 = vadd.f32 0.0, %v1231
  %v1233 = vpop.f32.mrb[0].mxu0
  %v1234 = vpop.f32.mrb[0].mxu0
  %v1235 = vadd.f32 0.0, %v1234
  %v1236 = vpop.f32.mrb[0].mxu0
  %1237 = vmatprep.mubr.bf16.mxu0 0
  %1238 = vmatmul.mubr.bf16.gmra.mrb[0].mxu0 %v715
  %v1239 = vpop.f32.mrb[0].mxu0
  %v1240 = vadd.f32 0.0, %v1239
  %v1241 = vpop.f32.mrb[0].mxu0
  %v1242 = vpop.f32.mrb[0].mxu0
  %v1243 = vpop.f32.mrb[0].mxu0
  %1244 = vmatprep.mubr.bf16.mxu0 0
  %1245 = vmatmul.mubr.bf16.gmra.mrb[0].mxu0 %v718
  %v1246 = vpop.f32.mrb[0].mxu0
  %v1247 = vadd.f32 0.0, %v1246
  %v1248 = vpop.f32.mrb[0].mxu0
  %v1249 = vpop.f32.mrb[0].mxu0
  %v1250 = vadd.f32 0.0, %v1249
  %v1251 = vpop.f32.mrb[0].mxu0
  %1252 = vmatprep.mubr.bf16.mxu0 0
  %1253 = vmatmul.mubr.bf16.gmra.mrb[0].mxu0 %v721
  %v1254 = vpop.f32.mrb[0].mxu0
  %v1255 = vadd.f32 0.0, %v1254
  %v1256 = vpop.f32.mrb[0].mxu0
  %v1257 = vpop.f32.mrb[0].mxu0
  %v1258 = vpop.f32.mrb[0].mxu0
  %1259 = vmatprep.mubr.bf16.mxu0 0
  %1260 = vmatmul.mubr.bf16.gmra.mrb[0].mxu0 %v724
  %v1261 = vpop.f32.mrb[0].mxu0
  %v1262 = vadd.f32 0.0, %v1261
  %v1263 = vpop.f32.mrb[0].mxu0
  %v1264 = vpop.f32.mrb[0].mxu0
  %v1265 = vadd.f32 0.0, %v1264
  %v1266 = vpop.f32.mrb[0].mxu0
  %1267 = vmatprep.mubr.bf16.mxu0 0
  %1268 = vmatmul.mubr.bf16.gmra.mrb[0].mxu0 %v727
  %v1269 = vpop.f32.mrb[0].mxu0
  %v1270 = vadd.f32 0.0, %v1269
  %v1271 = vpop.f32.mrb[0].mxu0
  %v1272 = vpop.f32.mrb[0].mxu0
  %v1273 = vpop.f32.mrb[0].mxu0
  %1274 = vmatprep.mubr.bf16.mxu0 0
  %1275 = vmatmul.mubr.bf16.gmra.mrb[0].mxu0 %v730
  %v1276 = vpop.f32.mrb[0].mxu0
  %v1277 = vadd.f32 0.0, %v1276
  %v1278 = vpop.f32.mrb[0].mxu0
  %v1279 = vpop.f32.mrb[0].mxu0
  %v1280 = vadd.f32 0.0, %v1279
  %v1281 = vpop.f32.mrb[0].mxu0
  %1282 = vmatprep.mubr.bf16.mxu0 0
  %1283 = vmatmul.mubr.bf16.gmra.mrb[0].mxu0 %v733
  %v1284 = vpop.f32.mrb[0].mxu0
  %v1285 = vadd.f32 0.0, %v1284
  %v1286 = vpop.f32.mrb[0].mxu0
  %v1287 = vpop.f32.mrb[0].mxu0
  %v1288 = vpop.f32.mrb[0].mxu0
  %1289 = vmatprep.mubr.bf16.mxu0 0
  %1290 = vmatmul.mubr.bf16.gmra.mrb[0].mxu0 %v736
  %v1291 = vpop.f32.mrb[0].mxu0
  %v1292 = vadd.f32 0.0, %v1291
  %v1293 = vpop.f32.mrb[0].mxu0
  %v1294 = vpop.f32.mrb[0].mxu0
  %v1295 = vadd.f32 0.0, %v1294
  %v1296 = vpop.f32.mrb[0].mxu0
  %1297 = vmatprep.mubr.bf16.mxu0 0
  %1298 = vmatmul.mubr.bf16.gmra.mrb[0].mxu0 %v739
  %v1299 = vpop.f32.mrb[0].mxu0
  %v1300 = vadd.f32 0.0, %v1299
  %v1301 = vpop.f32.mrb[0].mxu0
  %v1302 = vpop.f32.mrb[0].mxu0
  %v1303 = vpop.f32.mrb[0].mxu0
  %1304 = vmatprep.mubr.bf16.mxu0 0
  %1305 = vmatmul.mubr.bf16.gmra.mrb[0].mxu0 %v742
  %v1306 = vpop.f32.mrb[0].mxu0
  %v1307 = vadd.f32 0.0, %v1306
  %v1308 = vpop.f32.mrb[0].mxu0
  %v1309 = vpop.f32.mrb[0].mxu0
  %v1310 = vadd.f32 0.0, %v1309
  %v1311 = vpop.f32.mrb[0].mxu0
  %1312 = vmatprep.mubr.bf16.mxu0 0
  %1313 = vmatmul.mubr.bf16.gmra.mrb[0].mxu0 %v745
  %v1314 = vpop.f32.mrb[0].mxu0
  %v1315 = vadd.f32 0.0, %v1314
  %v1316 = vpop.f32.mrb[0].mxu0
  %v1317 = vpop.f32.mrb[0].mxu0
  %v1318 = vpop.f32.mrb[0].mxu0
  %1319 = vdwg.mxu0
  %v1320 = vld [vmem:[%s2] sm:$0xff]
  %v1321 = vld [vmem:[%s2 + $0x8] sm:$0x1]
  %v1322 = vld [vmem:[%s3] sm:$0x1]
  %v1323 = vlaneseq
  %v1324 = vshrl.u32 %v1323, 7
  %v1325 = vsub.s32 0, %v1324
  %v1326 = vrot.slane %v1320, %v1325
  %v1327 = vmul.f32 %v782, %v1326
  %v1328 = vmul.f32 %v785, %v1326
  %v1329 = vlaneseq
  %v1330 = vshrl.u32 %v1329, 7
  %v1331 = vsub.s32 1, %v1330
  %v1332 = vrot.slane %v1320, %v1331
  %v1333 = vmul.f32 %v782, %v1332
  %v1334 = vmul.f32 %v785, %v1332
  %v1335 = vmul.f32 %v790, %v1332
  %vm1339 = vcmask 1046528
  %v1340 = vrot.slane %v1333, 1
  %v1341 = vrot.slane %v1334, 1
  %v1342 = vsel %vm1339, %v1340, %v1341
  %v1343 = vrot.slane %v1335, 1
  %v1344 = vsel %vm1339, %v1341, %v1343
  %v1347 = vadd.f32 %v1327, %v1342
  %v1348 = vadd.f32 %v1328, %v1344
  %v1349 = vlaneseq
  %v1350 = vshrl.u32 %v1349, 7
  %v1351 = vsub.s32 2, %v1350
  %v1352 = vrot.slane %v1320, %v1351
  %v1353 = vmul.f32 %v782, %v1352
  %v1354 = vmul.f32 %v785, %v1352
  %v1355 = vmul.f32 %v790, %v1352
  %vm1359 = vcmask 1045504
  %v1360 = vrot.slane %v1353, 2
  %v1361 = vrot.slane %v1354, 2
  %v1362 = vsel %vm1359, %v1360, %v1361
  %v1363 = vrot.slane %v1355, 2
  %v1364 = vsel %vm1359, %v1361, %v1363
  %v1367 = vadd.f32 %v1347, %v1362
  %v1368 = vadd.f32 %v1348, %v1364
  %v1369 = vlaneseq
  %v1370 = vshrl.u32 %v1369, 7
  %v1371 = vsub.s32 3, %v1370
  %v1372 = vrot.slane %v1320, %v1371
  %v1373 = vmul.f32 %v797, %v1372
  %v1374 = vmul.f32 %v800, %v1372
  %v1375 = vadd.f32 %v1367, %v1373
  %v1376 = vadd.f32 %v1368, %v1374
  %v1377 = vlaneseq
  %v1378 = vshrl.u32 %v1377, 7
  %v1379 = vsub.s32 4, %v1378
  %v1380 = vrot.slane %v1320, %v1379
  %v1381 = vmul.f32 %v797, %v1380
  %v1382 = vmul.f32 %v800, %v1380
  %v1383 = vmul.f32 %v805, %v1380
  %v1387 = vrot.slane %v1381, 1
  %v1388 = vrot.slane %v1382, 1
  %v1389 = vsel %vm1339, %v1387, %v1388
  %v1390 = vrot.slane %v1383, 1
  %v1391 = vsel %vm1339, %v1388, %v1390
  %v1394 = vadd.f32 %v1375, %v1389
  %v1395 = vadd.f32 %v1376, %v1391
  %v1396 = vlaneseq
  %v1397 = vshrl.u32 %v1396, 7
  %v1398 = vsub.s32 5, %v1397
  %v1399 = vrot.slane %v1320, %v1398
  %v1400 = vmul.f32 %v797, %v1399
  %v1401 = vmul.f32 %v800, %v1399
  %v1402 = vmul.f32 %v805, %v1399
  %v1406 = vrot.slane %v1400, 2
  %v1407 = vrot.slane %v1401, 2
  %v1408 = vsel %vm1359, %v1406, %v1407
  %v1409 = vrot.slane %v1402, 2
  %v1410 = vsel %vm1359, %v1407, %v1409
  %v1413 = vadd.f32 %v1394, %v1408
  %v1414 = vadd.f32 %v1395, %v1410
  %v1415 = vlaneseq
  %v1416 = vshrl.u32 %v1415, 7
  %v1417 = vsub.s32 6, %v1416
  %v1418 = vrot.slane %v1320, %v1417
  %v1419 = vmul.f32 %v812, %v1418
  %v1420 = vmul.f32 %v815, %v1418
  %v1421 = vadd.f32 %v1413, %v1419
  %v1422 = vadd.f32 %v1414, %v1420
  %v1423 = vlaneseq
  %v1424 = vshrl.u32 %v1423, 7
  %v1425 = vsub.s32 7, %v1424
  %v1426 = vrot.slane %v1320, %v1425
  %v1427 = vmul.f32 %v812, %v1426
  %v1428 = vmul.f32 %v815, %v1426
  %v1429 = vmul.f32 %v820, %v1426
  %v1433 = vrot.slane %v1427, 1
  %v1434 = vrot.slane %v1428, 1
  %v1435 = vsel %vm1339, %v1433, %v1434
  %v1436 = vrot.slane %v1429, 1
  %v1437 = vsel %vm1339, %v1434, %v1436
  %v1440 = vadd.f32 %v1421, %v1435
  %v1441 = vadd.f32 %v1422, %v1437
  %v1442 = vlaneseq
  %v1443 = vshrl.u32 %v1442, 7
  %v1444 = vsub.s32 0, %v1443
  %v1445 = vrot.slane %v1321, %v1444
  %v1446 = vmul.f32 %v812, %v1445
  %v1447 = vmul.f32 %v815, %v1445
  %v1448 = vmul.f32 %v820, %v1445
  %v1452 = vrot.slane %v1446, 2
  %v1453 = vrot.slane %v1447, 2
  %v1454 = vsel %vm1359, %v1452, %v1453
  %v1455 = vrot.slane %v1448, 2
  %v1456 = vsel %vm1359, %v1453, %v1455
  %v1459 = vadd.f32 %v1440, %v1454
  %v1460 = vadd.f32 %v1441, %v1456
  %v1462 = vlaneseq
  %v1463 = vshrl.u32 %v1462, 7
  %v1464 = vsub.s32 0, %v1463
  %v1465 = vrot.slane %v1322, %v1464
  %v1467 = vadd.f32 %v1459, %v1465
  %v1468 = vadd.f32 %v1460, %v1465
  %vm1469 = vcmask 64512
  %1470 = vst.msk [vmem:[%s4] sm:$0xff] %vm1469, %v1467
  %1471 = vst.msk [vmem:[%s4 + $0x8] sm:$0xff] %vm1469, %v1468
  %v1472 = vmul.f32 %v797, %v1326
  %v1473 = vmul.f32 %v800, %v1326
  %v1474 = vmul.f32 %v797, %v1332
  %v1475 = vmul.f32 %v800, %v1332
  %v1476 = vmul.f32 %v805, %v1332
  %v1480 = vrot.slane %v1474, 1
  %v1481 = vrot.slane %v1475, 1
  %v1482 = vsel %vm1339, %v1480, %v1481
  %v1483 = vrot.slane %v1476, 1
  %v1484 = vsel %vm1339, %v1481, %v1483
  %v1487 = vadd.f32 %v1472, %v1482
  %v1488 = vadd.f32 %v1473, %v1484
  %v1489 = vmul.f32 %v797, %v1352
  %v1490 = vmul.f32 %v800, %v1352
  %v1491 = vmul.f32 %v805, %v1352
  %v1495 = vrot.slane %v1489, 2
  %v1496 = vrot.slane %v1490, 2
  %v1497 = vsel %vm1359, %v1495, %v1496
  %v1498 = vrot.slane %v1491, 2
  %v1499 = vsel %vm1359, %v1496, %v1498
  %v1502 = vadd.f32 %v1487, %v1497
  %v1503 = vadd.f32 %v1488, %v1499
  %v1504 = vmul.f32 %v812, %v1372
  %v1505 = vmul.f32 %v815, %v1372
  %v1506 = vadd.f32 %v1502, %v1504
  %v1507 = vadd.f32 %v1503, %v1505
  %v1508 = vmul.f32 %v812, %v1380
  %v1509 = vmul.f32 %v815, %v1380
  %v1510 = vmul.f32 %v820, %v1380
  %v1514 = vrot.slane %v1508, 1
  %v1515 = vrot.slane %v1509, 1
  %v1516 = vsel %vm1339, %v1514, %v1515
  %v1517 = vrot.slane %v1510, 1
  %v1518 = vsel %vm1339, %v1515, %v1517
  %v1521 = vadd.f32 %v1506, %v1516
  %v1522 = vadd.f32 %v1507, %v1518
  %v1523 = vmul.f32 %v812, %v1399
  %v1524 = vmul.f32 %v815, %v1399
  %v1525 = vmul.f32 %v820, %v1399
  %v1529 = vrot.slane %v1523, 2
  %v1530 = vrot.slane %v1524, 2
  %v1531 = vsel %vm1359, %v1529, %v1530
  %v1532 = vrot.slane %v1525, 2
  %v1533 = vsel %vm1359, %v1530, %v1532
  %v1536 = vadd.f32 %v1521, %v1531
  %v1537 = vadd.f32 %v1522, %v1533
  %v1538 = vmul.f32 %v827, %v1418
  %v1539 = vmul.f32 %v830, %v1418
  %v1540 = vadd.f32 %v1536, %v1538
  %v1541 = vadd.f32 %v1537, %v1539
  %v1542 = vmul.f32 %v827, %v1426
  %v1543 = vmul.f32 %v830, %v1426
  %v1544 = vmul.f32 %v835, %v1426
  %v1548 = vrot.slane %v1542, 1
  %v1549 = vrot.slane %v1543, 1
  %v1550 = vsel %vm1339, %v1548, %v1549
  %v1551 = vrot.slane %v1544, 1
  %v1552 = vsel %vm1339, %v1549, %v1551
  %v1555 = vadd.f32 %v1540, %v1550
  %v1556 = vadd.f32 %v1541, %v1552
  %v1557 = vmul.f32 %v827, %v1445
  %v1558 = vmul.f32 %v830, %v1445
  %v1559 = vmul.f32 %v835, %v1445
  %v1563 = vrot.slane %v1557, 2
  %v1564 = vrot.slane %v1558, 2
  %v1565 = vsel %vm1359, %v1563, %v1564
  %v1566 = vrot.slane %v1559, 2
  %v1567 = vsel %vm1359, %v1564, %v1566
  %v1570 = vadd.f32 %v1555, %v1565
  %v1571 = vadd.f32 %v1556, %v1567
  %v1572 = vadd.f32 %v1570, %v1465
  %v1573 = vadd.f32 %v1571, %v1465
  %s1574 = scalar_lea.vmem %s4, 16
  %1575 = vst.msk [vmem:[%s1574] sm:$0xff] %vm1469, %v1572
  %1576 = vst.msk [vmem:[%s1574 + $0x8] sm:$0xff] %vm1469, %v1573
  %v1577 = vmul.f32 %v812, %v1326
  %v1578 = vmul.f32 %v815, %v1326
  %v1579 = vmul.f32 %v812, %v1332
  %v1580 = vmul.f32 %v815, %v1332
  %v1581 = vmul.f32 %v820, %v1332
  %v1585 = vrot.slane %v1579, 1
  %v1586 = vrot.slane %v1580, 1
  %v1587 = vsel %vm1339, %v1585, %v1586
  %v1588 = vrot.slane %v1581, 1
  %v1589 = vsel %vm1339, %v1586, %v1588
  %v1592 = vadd.f32 %v1577, %v1587
  %v1593 = vadd.f32 %v1578, %v1589
  %v1594 = vmul.f32 %v812, %v1352
  %v1595 = vmul.f32 %v815, %v1352
  %v1596 = vmul.f32 %v820, %v1352
  %v1600 = vrot.slane %v1594, 2
  %v1601 = vrot.slane %v1595, 2
  %v1602 = vsel %vm1359, %v1600, %v1601
  %v1603 = vrot.slane %v1596, 2
  %v1604 = vsel %vm1359, %v1601, %v1603
  %v1607 = vadd.f32 %v1592, %v1602
  %v1608 = vadd.f32 %v1593, %v1604
  %v1609 = vmul.f32 %v827, %v1372
  %v1610 = vmul.f32 %v830, %v1372
  %v1611 = vadd.f32 %v1607, %v1609
  %v1612 = vadd.f32 %v1608, %v1610
  %v1613 = vmul.f32 %v827, %v1380
  %v1614 = vmul.f32 %v830, %v1380
  %v1615 = vmul.f32 %v835, %v1380
  %v1619 = vrot.slane %v1613, 1
  %v1620 = vrot.slane %v1614, 1
  %v1621 = vsel %vm1339, %v1619, %v1620
  %v1622 = vrot.slane %v1615, 1
  %v1623 = vsel %vm1339, %v1620, %v1622
  %v1626 = vadd.f32 %v1611, %v1621
  %v1627 = vadd.f32 %v1612, %v1623
  %v1628 = vmul.f32 %v827, %v1399
  %v1629 = vmul.f32 %v830, %v1399
  %v1630 = vmul.f32 %v835, %v1399
  %v1634 = vrot.slane %v1628, 2
  %v1635 = vrot.slane %v1629, 2
  %v1636 = vsel %vm1359, %v1634, %v1635
  %v1637 = vrot.slane %v1630, 2
  %v1638 = vsel %vm1359, %v1635, %v1637
  %v1641 = vadd.f32 %v1626, %v1636
  %v1642 = vadd.f32 %v1627, %v1638
  %v1643 = vmul.f32 %v842, %v1418
  %v1644 = vmul.f32 %v845, %v1418
  %v1645 = vadd.f32 %v1641, %v1643
  %v1646 = vadd.f32 %v1642, %v1644
  %v1647 = vmul.f32 %v842, %v1426
  %v1648 = vmul.f32 %v845, %v1426
  %v1649 = vmul.f32 %v850, %v1426
  %v1653 = vrot.slane %v1647, 1
  %v1654 = vrot.slane %v1648, 1
  %v1655 = vsel %vm1339, %v1653, %v1654
  %v1656 = vrot.slane %v1649, 1
  %v1657 = vsel %vm1339, %v1654, %v1656
  %v1660 = vadd.f32 %v1645, %v1655
  %v1661 = vadd.f32 %v1646, %v1657
  %v1662 = vmul.f32 %v842, %v1445
  %v1663 = vmul.f32 %v845, %v1445
  %v1664 = vmul.f32 %v850, %v1445
  %v1668 = vrot.slane %v1662, 2
  %v1669 = vrot.slane %v1663, 2
  %v1670 = vsel %vm1359, %v1668, %v1669
  %v1671 = vrot.slane %v1664, 2
  %v1672 = vsel %vm1359, %v1669, %v1671
  %v1675 = vadd.f32 %v1660, %v1670
  %v1676 = vadd.f32 %v1661, %v1672
  %v1677 = vadd.f32 %v1675, %v1465
  %v1678 = vadd.f32 %v1676, %v1465
  %s1679 = scalar_lea.vmem %s4, 32
  %1680 = vst.msk [vmem:[%s1679] sm:$0xff] %vm1469, %v1677
  %1681 = vst.msk [vmem:[%s1679 + $0x8] sm:$0xff] %vm1469, %v1678
  %v1682 = vmul.f32 %v827, %v1326
  %v1683 = vmul.f32 %v830, %v1326
  %v1684 = vmul.f32 %v827, %v1332
  %v1685 = vmul.f32 %v830, %v1332
  %v1686 = vmul.f32 %v835, %v1332
  %v1690 = vrot.slane %v1684, 1
  %v1691 = vrot.slane %v1685, 1
  %v1692 = vsel %vm1339, %v1690, %v1691
  %v1693 = vrot.slane %v1686, 1
  %v1694 = vsel %vm1339, %v1691, %v1693
  %v1697 = vadd.f32 %v1682, %v1692
  %v1698 = vadd.f32 %v1683, %v1694
  %v1699 = vmul.f32 %v827, %v1352
  %v1700 = vmul.f32 %v830, %v1352
  %v1701 = vmul.f32 %v835, %v1352
  %v1705 = vrot.slane %v1699, 2
  %v1706 = vrot.slane %v1700, 2
  %v1707 = vsel %vm1359, %v1705, %v1706
  %v1708 = vrot.slane %v1701, 2
  %v1709 = vsel %vm1359, %v1706, %v1708
  %v1712 = vadd.f32 %v1697, %v1707
  %v1713 = vadd.f32 %v1698, %v1709
  %v1714 = vmul.f32 %v842, %v1372
  %v1715 = vmul.f32 %v845, %v1372
  %v1716 = vadd.f32 %v1712, %v1714
  %v1717 = vadd.f32 %v1713, %v1715
  %v1718 = vmul.f32 %v842, %v1380
  %v1719 = vmul.f32 %v845, %v1380
  %v1720 = vmul.f32 %v850, %v1380
  %v1724 = vrot.slane %v1718, 1
  %v1725 = vrot.slane %v1719, 1
  %v1726 = vsel %vm1339, %v1724, %v1725
  %v1727 = vrot.slane %v1720, 1
  %v1728 = vsel %vm1339, %v1725, %v1727
  %v1731 = vadd.f32 %v1716, %v1726
  %v1732 = vadd.f32 %v1717, %v1728
  %v1733 = vmul.f32 %v842, %v1399
  %v1734 = vmul.f32 %v845, %v1399
  %v1735 = vmul.f32 %v850, %v1399
  %v1739 = vrot.slane %v1733, 2
  %v1740 = vrot.slane %v1734, 2
  %v1741 = vsel %vm1359, %v1739, %v1740
  %v1742 = vrot.slane %v1735, 2
  %v1743 = vsel %vm1359, %v1740, %v1742
  %v1746 = vadd.f32 %v1731, %v1741
  %v1747 = vadd.f32 %v1732, %v1743
  %v1748 = vmul.f32 %v857, %v1418
  %v1749 = vmul.f32 %v860, %v1418
  %v1750 = vadd.f32 %v1746, %v1748
  %v1751 = vadd.f32 %v1747, %v1749
  %v1752 = vmul.f32 %v857, %v1426
  %v1753 = vmul.f32 %v860, %v1426
  %v1754 = vmul.f32 %v865, %v1426
  %v1758 = vrot.slane %v1752, 1
  %v1759 = vrot.slane %v1753, 1
  %v1760 = vsel %vm1339, %v1758, %v1759
  %v1761 = vrot.slane %v1754, 1
  %v1762 = vsel %vm1339, %v1759, %v1761
  %v1765 = vadd.f32 %v1750, %v1760
  %v1766 = vadd.f32 %v1751, %v1762
  %v1767 = vmul.f32 %v857, %v1445
  %v1768 = vmul.f32 %v860, %v1445
  %v1769 = vmul.f32 %v865, %v1445
  %v1773 = vrot.slane %v1767, 2
  %v1774 = vrot.slane %v1768, 2
  %v1775 = vsel %vm1359, %v1773, %v1774
  %v1776 = vrot.slane %v1769, 2
  %v1777 = vsel %vm1359, %v1774, %v1776
  %v1780 = vadd.f32 %v1765, %v1775
  %v1781 = vadd.f32 %v1766, %v1777
  %v1782 = vadd.f32 %v1780, %v1465
  %v1783 = vadd.f32 %v1781, %v1465
  %s1784 = scalar_lea.vmem %s4, 48
  %1785 = vst.msk [vmem:[%s1784] sm:$0xff] %vm1469, %v1782
  %1786 = vst.msk [vmem:[%s1784 + $0x8] sm:$0xff] %vm1469, %v1783
  %v1787 = vmul.f32 %v842, %v1326
  %v1788 = vmul.f32 %v845, %v1326
  %v1789 = vmul.f32 %v842, %v1332
  %v1790 = vmul.f32 %v845, %v1332
  %v1791 = vmul.f32 %v850, %v1332
  %v1795 = vrot.slane %v1789, 1
  %v1796 = vrot.slane %v1790, 1
  %v1797 = vsel %vm1339, %v1795, %v1796
  %v1798 = vrot.slane %v1791, 1
  %v1799 = vsel %vm1339, %v1796, %v1798
  %v1802 = vadd.f32 %v1787, %v1797
  %v1803 = vadd.f32 %v1788, %v1799
  %v1804 = vmul.f32 %v842, %v1352
  %v1805 = vmul.f32 %v845, %v1352
  %v1806 = vmul.f32 %v850, %v1352
  %v1810 = vrot.slane %v1804, 2
  %v1811 = vrot.slane %v1805, 2
  %v1812 = vsel %vm1359, %v1810, %v1811
  %v1813 = vrot.slane %v1806, 2
  %v1814 = vsel %vm1359, %v1811, %v1813
  %v1817 = vadd.f32 %v1802, %v1812
  %v1818 = vadd.f32 %v1803, %v1814
  %v1819 = vmul.f32 %v857, %v1372
  %v1820 = vmul.f32 %v860, %v1372
  %v1821 = vadd.f32 %v1817, %v1819
  %v1822 = vadd.f32 %v1818, %v1820
  %v1823 = vmul.f32 %v857, %v1380
  %v1824 = vmul.f32 %v860, %v1380
  %v1825 = vmul.f32 %v865, %v1380
  %v1829 = vrot.slane %v1823, 1
  %v1830 = vrot.slane %v1824, 1
  %v1831 = vsel %vm1339, %v1829, %v1830
  %v1832 = vrot.slane %v1825, 1
  %v1833 = vsel %vm1339, %v1830, %v1832
  %v1836 = vadd.f32 %v1821, %v1831
  %v1837 = vadd.f32 %v1822, %v1833
  %v1838 = vmul.f32 %v857, %v1399
  %v1839 = vmul.f32 %v860, %v1399
  %v1840 = vmul.f32 %v865, %v1399
  %v1844 = vrot.slane %v1838, 2
  %v1845 = vrot.slane %v1839, 2
  %v1846 = vsel %vm1359, %v1844, %v1845
  %v1847 = vrot.slane %v1840, 2
  %v1848 = vsel %vm1359, %v1845, %v1847
  %v1851 = vadd.f32 %v1836, %v1846
  %v1852 = vadd.f32 %v1837, %v1848
  %v1853 = vmul.f32 %v872, %v1418
  %v1854 = vmul.f32 %v875, %v1418
  %v1855 = vadd.f32 %v1851, %v1853
  %v1856 = vadd.f32 %v1852, %v1854
  %v1857 = vmul.f32 %v872, %v1426
  %v1858 = vmul.f32 %v875, %v1426
  %v1859 = vmul.f32 %v880, %v1426
  %v1863 = vrot.slane %v1857, 1
  %v1864 = vrot.slane %v1858, 1
  %v1865 = vsel %vm1339, %v1863, %v1864
  %v1866 = vrot.slane %v1859, 1
  %v1867 = vsel %vm1339, %v1864, %v1866
  %v1870 = vadd.f32 %v1855, %v1865
  %v1871 = vadd.f32 %v1856, %v1867
  %v1872 = vmul.f32 %v872, %v1445
  %v1873 = vmul.f32 %v875, %v1445
  %v1874 = vmul.f32 %v880, %v1445
  %v1878 = vrot.slane %v1872, 2
  %v1879 = vrot.slane %v1873, 2
  %v1880 = vsel %vm1359, %v1878, %v1879
  %v1881 = vrot.slane %v1874, 2
  %v1882 = vsel %vm1359, %v1879, %v1881
  %v1885 = vadd.f32 %v1870, %v1880
  %v1886 = vadd.f32 %v1871, %v1882
  %v1887 = vadd.f32 %v1885, %v1465
  %v1888 = vadd.f32 %v1886, %v1465
  %s1889 = scalar_lea.vmem %s4, 64
  %1890 = vst.msk [vmem:[%s1889] sm:$0xff] %vm1469, %v1887
  %1891 = vst.msk [vmem:[%s1889 + $0x8] sm:$0xff] %vm1469, %v1888
  %v1892 = vmul.f32 %v857, %v1326
  %v1893 = vmul.f32 %v860, %v1326
  %v1894 = vmul.f32 %v857, %v1332
  %v1895 = vmul.f32 %v860, %v1332
  %v1896 = vmul.f32 %v865, %v1332
  %v1900 = vrot.slane %v1894, 1
  %v1901 = vrot.slane %v1895, 1
  %v1902 = vsel %vm1339, %v1900, %v1901
  %v1903 = vrot.slane %v1896, 1
  %v1904 = vsel %vm1339, %v1901, %v1903
  %v1907 = vadd.f32 %v1892, %v1902
  %v1908 = vadd.f32 %v1893, %v1904
  %v1909 = vmul.f32 %v857, %v1352
  %v1910 = vmul.f32 %v860, %v1352
  %v1911 = vmul.f32 %v865, %v1352
  %v1915 = vrot.slane %v1909, 2
  %v1916 = vrot.slane %v1910, 2
  %v1917 = vsel %vm1359, %v1915, %v1916
  %v1918 = vrot.slane %v1911, 2
  %v1919 = vsel %vm1359, %v1916, %v1918
  %v1922 = vadd.f32 %v1907, %v1917
  %v1923 = vadd.f32 %v1908, %v1919
  %v1924 = vmul.f32 %v872, %v1372
  %v1925 = vmul.f32 %v875, %v1372
  %v1926 = vadd.f32 %v1922, %v1924
  %v1927 = vadd.f32 %v1923, %v1925
  %v1928 = vmul.f32 %v872, %v1380
  %v1929 = vmul.f32 %v875, %v1380
  %v1930 = vmul.f32 %v880, %v1380
  %v1934 = vrot.slane %v1928, 1
  %v1935 = vrot.slane %v1929, 1
  %v1936 = vsel %vm1339, %v1934, %v1935
  %v1937 = vrot.slane %v1930, 1
  %v1938 = vsel %vm1339, %v1935, %v1937
  %v1941 = vadd.f32 %v1926, %v1936
  %v1942 = vadd.f32 %v1927, %v1938
  %v1943 = vmul.f32 %v872, %v1399
  %v1944 = vmul.f32 %v875, %v1399
  %v1945 = vmul.f32 %v880, %v1399
  %v1949 = vrot.slane %v1943, 2
  %v1950 = vrot.slane %v1944, 2
  %v1951 = vsel %vm1359, %v1949, %v1950
  %v1952 = vrot.slane %v1945, 2
  %v1953 = vsel %vm1359, %v1950, %v1952
  %v1956 = vadd.f32 %v1941, %v1951
  %v1957 = vadd.f32 %v1942, %v1953
  %v1958 = vmul.f32 %v887, %v1418
  %v1959 = vmul.f32 %v890, %v1418
  %v1960 = vadd.f32 %v1956, %v1958
  %v1961 = vadd.f32 %v1957, %v1959
  %v1962 = vmul.f32 %v887, %v1426
  %v1963 = vmul.f32 %v890, %v1426
  %v1964 = vmul.f32 %v895, %v1426
  %v1968 = vrot.slane %v1962, 1
  %v1969 = vrot.slane %v1963, 1
  %v1970 = vsel %vm1339, %v1968, %v1969
  %v1971 = vrot.slane %v1964, 1
  %v1972 = vsel %vm1339, %v1969, %v1971
  %v1975 = vadd.f32 %v1960, %v1970
  %v1976 = vadd.f32 %v1961, %v1972
  %v1977 = vmul.f32 %v887, %v1445
  %v1978 = vmul.f32 %v890, %v1445
  %v1979 = vmul.f32 %v895, %v1445
  %v1983 = vrot.slane %v1977, 2
  %v1984 = vrot.slane %v1978, 2
  %v1985 = vsel %vm1359, %v1983, %v1984
  %v1986 = vrot.slane %v1979, 2
  %v1987 = vsel %vm1359, %v1984, %v1986
  %v1990 = vadd.f32 %v1975, %v1985
  %v1991 = vadd.f32 %v1976, %v1987
  %v1992 = vadd.f32 %v1990, %v1465
  %v1993 = vadd.f32 %v1991, %v1465
  %s1994 = scalar_lea.vmem %s4, 80
  %1995 = vst.msk [vmem:[%s1994] sm:$0xff] %vm1469, %v1992
  %1996 = vst.msk [vmem:[%s1994 + $0x8] sm:$0xff] %vm1469, %v1993
  %v1997 = vmul.f32 %v872, %v1326
  %v1998 = vmul.f32 %v875, %v1326
  %v1999 = vmul.f32 %v872, %v1332
  %v2000 = vmul.f32 %v875, %v1332
  %v2001 = vmul.f32 %v880, %v1332
  %v2005 = vrot.slane %v1999, 1
  %v2006 = vrot.slane %v2000, 1
  %v2007 = vsel %vm1339, %v2005, %v2006
  %v2008 = vrot.slane %v2001, 1
  %v2009 = vsel %vm1339, %v2006, %v2008
  %v2012 = vadd.f32 %v1997, %v2007
  %v2013 = vadd.f32 %v1998, %v2009
  %v2014 = vmul.f32 %v872, %v1352
  %v2015 = vmul.f32 %v875, %v1352
  %v2016 = vmul.f32 %v880, %v1352
  %v2020 = vrot.slane %v2014, 2
  %v2021 = vrot.slane %v2015, 2
  %v2022 = vsel %vm1359, %v2020, %v2021
  %v2023 = vrot.slane %v2016, 2
  %v2024 = vsel %vm1359, %v2021, %v2023
  %v2027 = vadd.f32 %v2012, %v2022
  %v2028 = vadd.f32 %v2013, %v2024
  %v2029 = vmul.f32 %v887, %v1372
  %v2030 = vmul.f32 %v890, %v1372
  %v2031 = vadd.f32 %v2027, %v2029
  %v2032 = vadd.f32 %v2028, %v2030
  %v2033 = vmul.f32 %v887, %v1380
  %v2034 = vmul.f32 %v890, %v1380
  %v2035 = vmul.f32 %v895, %v1380
  %v2039 = vrot.slane %v2033, 1
  %v2040 = vrot.slane %v2034, 1
  %v2041 = vsel %vm1339, %v2039, %v2040
  %v2042 = vrot.slane %v2035, 1
  %v2043 = vsel %vm1339, %v2040, %v2042
  %v2046 = vadd.f32 %v2031, %v2041
  %v2047 = vadd.f32 %v2032, %v2043
  %v2048 = vmul.f32 %v887, %v1399
  %v2049 = vmul.f32 %v890, %v1399
  %v2050 = vmul.f32 %v895, %v1399
  %v2054 = vrot.slane %v2048, 2
  %v2055 = vrot.slane %v2049, 2
  %v2056 = vsel %vm1359, %v2054, %v2055
  %v2057 = vrot.slane %v2050, 2
  %v2058 = vsel %vm1359, %v2055, %v2057
  %v2061 = vadd.f32 %v2046, %v2056
  %v2062 = vadd.f32 %v2047, %v2058
  %v2063 = vmul.f32 %v902, %v1418
  %v2064 = vmul.f32 %v905, %v1418
  %v2065 = vadd.f32 %v2061, %v2063
  %v2066 = vadd.f32 %v2062, %v2064
  %v2067 = vmul.f32 %v902, %v1426
  %v2068 = vmul.f32 %v905, %v1426
  %v2069 = vmul.f32 %v910, %v1426
  %v2073 = vrot.slane %v2067, 1
  %v2074 = vrot.slane %v2068, 1
  %v2075 = vsel %vm1339, %v2073, %v2074
  %v2076 = vrot.slane %v2069, 1
  %v2077 = vsel %vm1339, %v2074, %v2076
  %v2080 = vadd.f32 %v2065, %v2075
  %v2081 = vadd.f32 %v2066, %v2077
  %v2082 = vmul.f32 %v902, %v1445
  %v2083 = vmul.f32 %v905, %v1445
  %v2084 = vmul.f32 %v910, %v1445
  %v2088 = vrot.slane %v2082, 2
  %v2089 = vrot.slane %v2083, 2
  %v2090 = vsel %vm1359, %v2088, %v2089
  %v2091 = vrot.slane %v2084, 2
  %v2092 = vsel %vm1359, %v2089, %v2091
  %v2095 = vadd.f32 %v2080, %v2090
  %v2096 = vadd.f32 %v2081, %v2092
  %v2097 = vadd.f32 %v2095, %v1465
  %v2098 = vadd.f32 %v2096, %v1465
  %s2099 = scalar_lea.vmem %s4, 96
  %2100 = vst.msk [vmem:[%s2099] sm:$0xff] %vm1469, %v2097
  %2101 = vst.msk [vmem:[%s2099 + $0x8] sm:$0xff] %vm1469, %v2098
  %v2102 = vmul.f32 %v887, %v1326
  %v2103 = vmul.f32 %v890, %v1326
  %v2104 = vmul.f32 %v887, %v1332
  %v2105 = vmul.f32 %v890, %v1332
  %v2106 = vmul.f32 %v895, %v1332
  %v2110 = vrot.slane %v2104, 1
  %v2111 = vrot.slane %v2105, 1
  %v2112 = vsel %vm1339, %v2110, %v2111
  %v2113 = vrot.slane %v2106, 1
  %v2114 = vsel %vm1339, %v2111, %v2113
  %v2117 = vadd.f32 %v2102, %v2112
  %v2118 = vadd.f32 %v2103, %v2114
  %v2119 = vmul.f32 %v887, %v1352
  %v2120 = vmul.f32 %v890, %v1352
  %v2121 = vmul.f32 %v895, %v1352
  %v2125 = vrot.slane %v2119, 2
  %v2126 = vrot.slane %v2120, 2
  %v2127 = vsel %vm1359, %v2125, %v2126
  %v2128 = vrot.slane %v2121, 2
  %v2129 = vsel %vm1359, %v2126, %v2128
  %v2132 = vadd.f32 %v2117, %v2127
  %v2133 = vadd.f32 %v2118, %v2129
  %v2134 = vmul.f32 %v902, %v1372
  %v2135 = vmul.f32 %v905, %v1372
  %v2136 = vadd.f32 %v2132, %v2134
  %v2137 = vadd.f32 %v2133, %v2135
  %v2138 = vmul.f32 %v902, %v1380
  %v2139 = vmul.f32 %v905, %v1380
  %v2140 = vmul.f32 %v910, %v1380
  %v2144 = vrot.slane %v2138, 1
  %v2145 = vrot.slane %v2139, 1
  %v2146 = vsel %vm1339, %v2144, %v2145
  %v2147 = vrot.slane %v2140, 1
  %v2148 = vsel %vm1339, %v2145, %v2147
  %v2151 = vadd.f32 %v2136, %v2146
  %v2152 = vadd.f32 %v2137, %v2148
  %v2153 = vmul.f32 %v902, %v1399
  %v2154 = vmul.f32 %v905, %v1399
  %v2155 = vmul.f32 %v910, %v1399
  %v2159 = vrot.slane %v2153, 2
  %v2160 = vrot.slane %v2154, 2
  %v2161 = vsel %vm1359, %v2159, %v2160
  %v2162 = vrot.slane %v2155, 2
  %v2163 = vsel %vm1359, %v2160, %v2162
  %v2166 = vadd.f32 %v2151, %v2161
  %v2167 = vadd.f32 %v2152, %v2163
  %v2168 = vmul.f32 %v917, %v1418
  %v2169 = vmul.f32 %v920, %v1418
  %v2170 = vadd.f32 %v2166, %v2168
  %v2171 = vadd.f32 %v2167, %v2169
  %v2172 = vmul.f32 %v917, %v1426
  %v2173 = vmul.f32 %v920, %v1426
  %v2174 = vmul.f32 %v925, %v1426
  %v2178 = vrot.slane %v2172, 1
  %v2179 = vrot.slane %v2173, 1
  %v2180 = vsel %vm1339, %v2178, %v2179
  %v2181 = vrot.slane %v2174, 1
  %v2182 = vsel %vm1339, %v2179, %v2181
  %v2185 = vadd.f32 %v2170, %v2180
  %v2186 = vadd.f32 %v2171, %v2182
  %v2187 = vmul.f32 %v917, %v1445
  %v2188 = vmul.f32 %v920, %v1445
  %v2189 = vmul.f32 %v925, %v1445
  %v2193 = vrot.slane %v2187, 2
  %v2194 = vrot.slane %v2188, 2
  %v2195 = vsel %vm1359, %v2193, %v2194
  %v2196 = vrot.slane %v2189, 2
  %v2197 = vsel %vm1359, %v2194, %v2196
  %v2200 = vadd.f32 %v2185, %v2195
  %v2201 = vadd.f32 %v2186, %v2197
  %v2202 = vadd.f32 %v2200, %v1465
  %v2203 = vadd.f32 %v2201, %v1465
  %s2204 = scalar_lea.vmem %s4, 112
  %2205 = vst.msk [vmem:[%s2204] sm:$0xff] %vm1469, %v2202
  %2206 = vst.msk [vmem:[%s2204 + $0x8] sm:$0xff] %vm1469, %v2203
  %v2207 = vmul.f32 %v902, %v1326
  %v2208 = vmul.f32 %v905, %v1326
  %v2209 = vmul.f32 %v902, %v1332
  %v2210 = vmul.f32 %v905, %v1332
  %v2211 = vmul.f32 %v910, %v1332
  %v2215 = vrot.slane %v2209, 1
  %v2216 = vrot.slane %v2210, 1
  %v2217 = vsel %vm1339, %v2215, %v2216
  %v2218 = vrot.slane %v2211, 1
  %v2219 = vsel %vm1339, %v2216, %v2218
  %v2222 = vadd.f32 %v2207, %v2217
  %v2223 = vadd.f32 %v2208, %v2219
  %v2224 = vmul.f32 %v902, %v1352
  %v2225 = vmul.f32 %v905, %v1352
  %v2226 = vmul.f32 %v910, %v1352
  %v2230 = vrot.slane %v2224, 2
  %v2231 = vrot.slane %v2225, 2
  %v2232 = vsel %vm1359, %v2230, %v2231
  %v2233 = vrot.slane %v2226, 2
  %v2234 = vsel %vm1359, %v2231, %v2233
  %v2237 = vadd.f32 %v2222, %v2232
  %v2238 = vadd.f32 %v2223, %v2234
  %v2239 = vmul.f32 %v917, %v1372
  %v2240 = vmul.f32 %v920, %v1372
  %v2241 = vadd.f32 %v2237, %v2239
  %v2242 = vadd.f32 %v2238, %v2240
  %v2243 = vmul.f32 %v917, %v1380
  %v2244 = vmul.f32 %v920, %v1380
  %v2245 = vmul.f32 %v925, %v1380
  %v2249 = vrot.slane %v2243, 1
  %v2250 = vrot.slane %v2244, 1
  %v2251 = vsel %vm1339, %v2249, %v2250
  %v2252 = vrot.slane %v2245, 1
  %v2253 = vsel %vm1339, %v2250, %v2252
  %v2256 = vadd.f32 %v2241, %v2251
  %v2257 = vadd.f32 %v2242, %v2253
  %v2258 = vmul.f32 %v917, %v1399
  %v2259 = vmul.f32 %v920, %v1399
  %v2260 = vmul.f32 %v925, %v1399
  %v2264 = vrot.slane %v2258, 2
  %v2265 = vrot.slane %v2259, 2
  %v2266 = vsel %vm1359, %v2264, %v2265
  %v2267 = vrot.slane %v2260, 2
  %v2268 = vsel %vm1359, %v2265, %v2267
  %v2271 = vadd.f32 %v2256, %v2266
  %v2272 = vadd.f32 %v2257, %v2268
  %v2273 = vmul.f32 %v932, %v1418
  %v2274 = vmul.f32 %v935, %v1418
  %v2275 = vadd.f32 %v2271, %v2273
  %v2276 = vadd.f32 %v2272, %v2274
  %v2277 = vmul.f32 %v932, %v1426
  %v2278 = vmul.f32 %v935, %v1426
  %v2279 = vmul.f32 %v940, %v1426
  %v2283 = vrot.slane %v2277, 1
  %v2284 = vrot.slane %v2278, 1
  %v2285 = vsel %vm1339, %v2283, %v2284
  %v2286 = vrot.slane %v2279, 1
  %v2287 = vsel %vm1339, %v2284, %v2286
  %v2290 = vadd.f32 %v2275, %v2285
  %v2291 = vadd.f32 %v2276, %v2287
  %v2292 = vmul.f32 %v932, %v1445
  %v2293 = vmul.f32 %v935, %v1445
  %v2294 = vmul.f32 %v940, %v1445
  %v2298 = vrot.slane %v2292, 2
  %v2299 = vrot.slane %v2293, 2
  %v2300 = vsel %vm1359, %v2298, %v2299
  %v2301 = vrot.slane %v2294, 2
  %v2302 = vsel %vm1359, %v2299, %v2301
  %v2305 = vadd.f32 %v2290, %v2300
  %v2306 = vadd.f32 %v2291, %v2302
  %v2307 = vadd.f32 %v2305, %v1465
  %v2308 = vadd.f32 %v2306, %v1465
  %s2309 = scalar_lea.vmem %s4, 128
  %2310 = vst.msk [vmem:[%s2309] sm:$0xff] %vm1469, %v2307
  %2311 = vst.msk [vmem:[%s2309 + $0x8] sm:$0xff] %vm1469, %v2308
  %v2312 = vmul.f32 %v917, %v1326
  %v2313 = vmul.f32 %v920, %v1326
  %v2314 = vmul.f32 %v917, %v1332
  %v2315 = vmul.f32 %v920, %v1332
  %v2316 = vmul.f32 %v925, %v1332
  %v2320 = vrot.slane %v2314, 1
  %v2321 = vrot.slane %v2315, 1
  %v2322 = vsel %vm1339, %v2320, %v2321
  %v2323 = vrot.slane %v2316, 1
  %v2324 = vsel %vm1339, %v2321, %v2323
  %v2327 = vadd.f32 %v2312, %v2322
  %v2328 = vadd.f32 %v2313, %v2324
  %v2329 = vmul.f32 %v917, %v1352
  %v2330 = vmul.f32 %v920, %v1352
  %v2331 = vmul.f32 %v925, %v1352
  %v2335 = vrot.slane %v2329, 2
  %v2336 = vrot.slane %v2330, 2
  %v2337 = vsel %vm1359, %v2335, %v2336
  %v2338 = vrot.slane %v2331, 2
  %v2339 = vsel %vm1359, %v2336, %v2338
  %v2342 = vadd.f32 %v2327, %v2337
  %v2343 = vadd.f32 %v2328, %v2339
  %v2344 = vmul.f32 %v932, %v1372
  %v2345 = vmul.f32 %v935, %v1372
  %v2346 = vadd.f32 %v2342, %v2344
  %v2347 = vadd.f32 %v2343, %v2345
  %v2348 = vmul.f32 %v932, %v1380
  %v2349 = vmul.f32 %v935, %v1380
  %v2350 = vmul.f32 %v940, %v1380
  %v2354 = vrot.slane %v2348, 1
  %v2355 = vrot.slane %v2349, 1
  %v2356 = vsel %vm1339, %v2354, %v2355
  %v2357 = vrot.slane %v2350, 1
  %v2358 = vsel %vm1339, %v2355, %v2357
  %v2361 = vadd.f32 %v2346, %v2356
  %v2362 = vadd.f32 %v2347, %v2358
  %v2363 = vmul.f32 %v932, %v1399
  %v2364 = vmul.f32 %v935, %v1399
  %v2365 = vmul.f32 %v940, %v1399
  %v2369 = vrot.slane %v2363, 2
  %v2370 = vrot.slane %v2364, 2
  %v2371 = vsel %vm1359, %v2369, %v2370
  %v2372 = vrot.slane %v2365, 2
  %v2373 = vsel %vm1359, %v2370, %v2372
  %v2376 = vadd.f32 %v2361, %v2371
  %v2377 = vadd.f32 %v2362, %v2373
  %v2378 = vmul.f32 %v947, %v1418
  %v2379 = vmul.f32 %v950, %v1418
  %v2380 = vadd.f32 %v2376, %v2378
  %v2381 = vadd.f32 %v2377, %v2379
  %v2382 = vmul.f32 %v947, %v1426
  %v2383 = vmul.f32 %v950, %v1426
  %v2384 = vmul.f32 %v955, %v1426
  %v2388 = vrot.slane %v2382, 1
  %v2389 = vrot.slane %v2383, 1
  %v2390 = vsel %vm1339, %v2388, %v2389
  %v2391 = vrot.slane %v2384, 1
  %v2392 = vsel %vm1339, %v2389, %v2391
  %v2395 = vadd.f32 %v2380, %v2390
  %v2396 = vadd.f32 %v2381, %v2392
  %v2397 = vmul.f32 %v947, %v1445
  %v2398 = vmul.f32 %v950, %v1445
  %v2399 = vmul.f32 %v955, %v1445
  %v2403 = vrot.slane %v2397, 2
  %v2404 = vrot.slane %v2398, 2
  %v2405 = vsel %vm1359, %v2403, %v2404
  %v2406 = vrot.slane %v2399, 2
  %v2407 = vsel %vm1359, %v2404, %v2406
  %v2410 = vadd.f32 %v2395, %v2405
  %v2411 = vadd.f32 %v2396, %v2407
  %v2412 = vadd.f32 %v2410, %v1465
  %v2413 = vadd.f32 %v2411, %v1465
  %s2414 = scalar_lea.vmem %s4, 144
  %2415 = vst.msk [vmem:[%s2414] sm:$0xff] %vm1469, %v2412
  %2416 = vst.msk [vmem:[%s2414 + $0x8] sm:$0xff] %vm1469, %v2413
  %v2417 = vmul.f32 %v932, %v1326
  %v2418 = vmul.f32 %v935, %v1326
  %v2419 = vmul.f32 %v932, %v1332
  %v2420 = vmul.f32 %v935, %v1332
  %v2421 = vmul.f32 %v940, %v1332
  %v2425 = vrot.slane %v2419, 1
  %v2426 = vrot.slane %v2420, 1
  %v2427 = vsel %vm1339, %v2425, %v2426
  %v2428 = vrot.slane %v2421, 1
  %v2429 = vsel %vm1339, %v2426, %v2428
  %v2432 = vadd.f32 %v2417, %v2427
  %v2433 = vadd.f32 %v2418, %v2429
  %v2434 = vmul.f32 %v932, %v1352
  %v2435 = vmul.f32 %v935, %v1352
  %v2436 = vmul.f32 %v940, %v1352
  %v2440 = vrot.slane %v2434, 2
  %v2441 = vrot.slane %v2435, 2
  %v2442 = vsel %vm1359, %v2440, %v2441
  %v2443 = vrot.slane %v2436, 2
  %v2444 = vsel %vm1359, %v2441, %v2443
  %v2447 = vadd.f32 %v2432, %v2442
  %v2448 = vadd.f32 %v2433, %v2444
  %v2449 = vmul.f32 %v947, %v1372
  %v2450 = vmul.f32 %v950, %v1372
  %v2451 = vadd.f32 %v2447, %v2449
  %v2452 = vadd.f32 %v2448, %v2450
  %v2453 = vmul.f32 %v947, %v1380
  %v2454 = vmul.f32 %v950, %v1380
  %v2455 = vmul.f32 %v955, %v1380
  %v2459 = vrot.slane %v2453, 1
  %v2460 = vrot.slane %v2454, 1
  %v2461 = vsel %vm1339, %v2459, %v2460
  %v2462 = vrot.slane %v2455, 1
  %v2463 = vsel %vm1339, %v2460, %v2462
  %v2466 = vadd.f32 %v2451, %v2461
  %v2467 = vadd.f32 %v2452, %v2463
  %v2468 = vmul.f32 %v947, %v1399
  %v2469 = vmul.f32 %v950, %v1399
  %v2470 = vmul.f32 %v955, %v1399
  %v2474 = vrot.slane %v2468, 2
  %v2475 = vrot.slane %v2469, 2
  %v2476 = vsel %vm1359, %v2474, %v2475
  %v2477 = vrot.slane %v2470, 2
  %v2478 = vsel %vm1359, %v2475, %v2477
  %v2481 = vadd.f32 %v2466, %v2476
  %v2482 = vadd.f32 %v2467, %v2478
  %v2483 = vmul.f32 %v962, %v1418
  %v2484 = vmul.f32 %v965, %v1418
  %v2485 = vadd.f32 %v2481, %v2483
  %v2486 = vadd.f32 %v2482, %v2484
  %v2487 = vmul.f32 %v962, %v1426
  %v2488 = vmul.f32 %v965, %v1426
  %v2489 = vmul.f32 %v970, %v1426
  %v2493 = vrot.slane %v2487, 1
  %v2494 = vrot.slane %v2488, 1
  %v2495 = vsel %vm1339, %v2493, %v2494
  %v2496 = vrot.slane %v2489, 1
  %v2497 = vsel %vm1339, %v2494, %v2496
  %v2500 = vadd.f32 %v2485, %v2495
  %v2501 = vadd.f32 %v2486, %v2497
  %v2502 = vmul.f32 %v962, %v1445
  %v2503 = vmul.f32 %v965, %v1445
  %v2504 = vmul.f32 %v970, %v1445
  %v2508 = vrot.slane %v2502, 2
  %v2509 = vrot.slane %v2503, 2
  %v2510 = vsel %vm1359, %v2508, %v2509
  %v2511 = vrot.slane %v2504, 2
  %v2512 = vsel %vm1359, %v2509, %v2511
  %v2515 = vadd.f32 %v2500, %v2510
  %v2516 = vadd.f32 %v2501, %v2512
  %v2517 = vadd.f32 %v2515, %v1465
  %v2518 = vadd.f32 %v2516, %v1465
  %s2519 = scalar_lea.vmem %s4, 160
  %2520 = vst.msk [vmem:[%s2519] sm:$0xff] %vm1469, %v2517
  %2521 = vst.msk [vmem:[%s2519 + $0x8] sm:$0xff] %vm1469, %v2518
  %v2522 = vmul.f32 %v947, %v1326
  %v2523 = vmul.f32 %v950, %v1326
  %v2524 = vmul.f32 %v947, %v1332
  %v2525 = vmul.f32 %v950, %v1332
  %v2526 = vmul.f32 %v955, %v1332
  %v2530 = vrot.slane %v2524, 1
  %v2531 = vrot.slane %v2525, 1
  %v2532 = vsel %vm1339, %v2530, %v2531
  %v2533 = vrot.slane %v2526, 1
  %v2534 = vsel %vm1339, %v2531, %v2533
  %v2537 = vadd.f32 %v2522, %v2532
  %v2538 = vadd.f32 %v2523, %v2534
  %v2539 = vmul.f32 %v947, %v1352
  %v2540 = vmul.f32 %v950, %v1352
  %v2541 = vmul.f32 %v955, %v1352
  %v2545 = vrot.slane %v2539, 2
  %v2546 = vrot.slane %v2540, 2
  %v2547 = vsel %vm1359, %v2545, %v2546
  %v2548 = vrot.slane %v2541, 2
  %v2549 = vsel %vm1359, %v2546, %v2548
  %v2552 = vadd.f32 %v2537, %v2547
  %v2553 = vadd.f32 %v2538, %v2549
  %v2554 = vmul.f32 %v962, %v1372
  %v2555 = vmul.f32 %v965, %v1372
  %v2556 = vadd.f32 %v2552, %v2554
  %v2557 = vadd.f32 %v2553, %v2555
  %v2558 = vmul.f32 %v962, %v1380
  %v2559 = vmul.f32 %v965, %v1380
  %v2560 = vmul.f32 %v970, %v1380
  %v2564 = vrot.slane %v2558, 1
  %v2565 = vrot.slane %v2559, 1
  %v2566 = vsel %vm1339, %v2564, %v2565
  %v2567 = vrot.slane %v2560, 1
  %v2568 = vsel %vm1339, %v2565, %v2567
  %v2571 = vadd.f32 %v2556, %v2566
  %v2572 = vadd.f32 %v2557, %v2568
  %v2573 = vmul.f32 %v962, %v1399
  %v2574 = vmul.f32 %v965, %v1399
  %v2575 = vmul.f32 %v970, %v1399
  %v2579 = vrot.slane %v2573, 2
  %v2580 = vrot.slane %v2574, 2
  %v2581 = vsel %vm1359, %v2579, %v2580
  %v2582 = vrot.slane %v2575, 2
  %v2583 = vsel %vm1359, %v2580, %v2582
  %v2586 = vadd.f32 %v2571, %v2581
  %v2587 = vadd.f32 %v2572, %v2583
  %v2588 = vmul.f32 %v977, %v1418
  %v2589 = vmul.f32 %v980, %v1418
  %v2590 = vadd.f32 %v2586, %v2588
  %v2591 = vadd.f32 %v2587, %v2589
  %v2592 = vmul.f32 %v977, %v1426
  %v2593 = vmul.f32 %v980, %v1426
  %v2594 = vmul.f32 %v985, %v1426
  %v2598 = vrot.slane %v2592, 1
  %v2599 = vrot.slane %v2593, 1
  %v2600 = vsel %vm1339, %v2598, %v2599
  %v2601 = vrot.slane %v2594, 1
  %v2602 = vsel %vm1339, %v2599, %v2601
  %v2605 = vadd.f32 %v2590, %v2600
  %v2606 = vadd.f32 %v2591, %v2602
  %v2607 = vmul.f32 %v977, %v1445
  %v2608 = vmul.f32 %v980, %v1445
  %v2609 = vmul.f32 %v985, %v1445
  %v2613 = vrot.slane %v2607, 2
  %v2614 = vrot.slane %v2608, 2
  %v2615 = vsel %vm1359, %v2613, %v2614
  %v2616 = vrot.slane %v2609, 2
  %v2617 = vsel %vm1359, %v2614, %v2616
  %v2620 = vadd.f32 %v2605, %v2615
  %v2621 = vadd.f32 %v2606, %v2617
  %v2622 = vadd.f32 %v2620, %v1465
  %v2623 = vadd.f32 %v2621, %v1465
  %s2624 = scalar_lea.vmem %s4, 176
  %2625 = vst.msk [vmem:[%s2624] sm:$0xff] %vm1469, %v2622
  %2626 = vst.msk [vmem:[%s2624 + $0x8] sm:$0xff] %vm1469, %v2623
  %v2627 = vmul.f32 %v962, %v1326
  %v2628 = vmul.f32 %v965, %v1326
  %v2629 = vmul.f32 %v962, %v1332
  %v2630 = vmul.f32 %v965, %v1332
  %v2631 = vmul.f32 %v970, %v1332
  %v2635 = vrot.slane %v2629, 1
  %v2636 = vrot.slane %v2630, 1
  %v2637 = vsel %vm1339, %v2635, %v2636
  %v2638 = vrot.slane %v2631, 1
  %v2639 = vsel %vm1339, %v2636, %v2638
  %v2642 = vadd.f32 %v2627, %v2637
  %v2643 = vadd.f32 %v2628, %v2639
  %v2644 = vmul.f32 %v962, %v1352
  %v2645 = vmul.f32 %v965, %v1352
  %v2646 = vmul.f32 %v970, %v1352
  %v2650 = vrot.slane %v2644, 2
  %v2651 = vrot.slane %v2645, 2
  %v2652 = vsel %vm1359, %v2650, %v2651
  %v2653 = vrot.slane %v2646, 2
  %v2654 = vsel %vm1359, %v2651, %v2653
  %v2657 = vadd.f32 %v2642, %v2652
  %v2658 = vadd.f32 %v2643, %v2654
  %v2659 = vmul.f32 %v977, %v1372
  %v2660 = vmul.f32 %v980, %v1372
  %v2661 = vadd.f32 %v2657, %v2659
  %v2662 = vadd.f32 %v2658, %v2660
  %v2663 = vmul.f32 %v977, %v1380
  %v2664 = vmul.f32 %v980, %v1380
  %v2665 = vmul.f32 %v985, %v1380
  %v2669 = vrot.slane %v2663, 1
  %v2670 = vrot.slane %v2664, 1
  %v2671 = vsel %vm1339, %v2669, %v2670
  %v2672 = vrot.slane %v2665, 1
  %v2673 = vsel %vm1339, %v2670, %v2672
  %v2676 = vadd.f32 %v2661, %v2671
  %v2677 = vadd.f32 %v2662, %v2673
  %v2678 = vmul.f32 %v977, %v1399
  %v2679 = vmul.f32 %v980, %v1399
  %v2680 = vmul.f32 %v985, %v1399
  %v2684 = vrot.slane %v2678, 2
  %v2685 = vrot.slane %v2679, 2
  %v2686 = vsel %vm1359, %v2684, %v2685
  %v2687 = vrot.slane %v2680, 2
  %v2688 = vsel %vm1359, %v2685, %v2687
  %v2691 = vadd.f32 %v2676, %v2686
  %v2692 = vadd.f32 %v2677, %v2688
  %v2693 = vmul.f32 %v992, %v1418
  %v2694 = vmul.f32 %v995, %v1418
  %v2695 = vadd.f32 %v2691, %v2693
  %v2696 = vadd.f32 %v2692, %v2694
  %v2697 = vmul.f32 %v992, %v1426
  %v2698 = vmul.f32 %v995, %v1426
  %v2699 = vmul.f32 %v1000, %v1426
  %v2703 = vrot.slane %v2697, 1
  %v2704 = vrot.slane %v2698, 1
  %v2705 = vsel %vm1339, %v2703, %v2704
  %v2706 = vrot.slane %v2699, 1
  %v2707 = vsel %vm1339, %v2704, %v2706
  %v2710 = vadd.f32 %v2695, %v2705
  %v2711 = vadd.f32 %v2696, %v2707
  %v2712 = vmul.f32 %v992, %v1445
  %v2713 = vmul.f32 %v995, %v1445
  %v2714 = vmul.f32 %v1000, %v1445
  %v2718 = vrot.slane %v2712, 2
  %v2719 = vrot.slane %v2713, 2
  %v2720 = vsel %vm1359, %v2718, %v2719
  %v2721 = vrot.slane %v2714, 2
  %v2722 = vsel %vm1359, %v2719, %v2721
  %v2725 = vadd.f32 %v2710, %v2720
  %v2726 = vadd.f32 %v2711, %v2722
  %v2727 = vadd.f32 %v2725, %v1465
  %v2728 = vadd.f32 %v2726, %v1465
  %s2729 = scalar_lea.vmem %s4, 192
  %2730 = vst.msk [vmem:[%s2729] sm:$0xff] %vm1469, %v2727
  %2731 = vst.msk [vmem:[%s2729 + $0x8] sm:$0xff] %vm1469, %v2728
  %v2732 = vmul.f32 %v977, %v1326
  %v2733 = vmul.f32 %v980, %v1326
  %v2734 = vmul.f32 %v977, %v1332
  %v2735 = vmul.f32 %v980, %v1332
  %v2736 = vmul.f32 %v985, %v1332
  %v2740 = vrot.slane %v2734, 1
  %v2741 = vrot.slane %v2735, 1
  %v2742 = vsel %vm1339, %v2740, %v2741
  %v2743 = vrot.slane %v2736, 1
  %v2744 = vsel %vm1339, %v2741, %v2743
  %v2747 = vadd.f32 %v2732, %v2742
  %v2748 = vadd.f32 %v2733, %v2744
  %v2749 = vmul.f32 %v977, %v1352
  %v2750 = vmul.f32 %v980, %v1352
  %v2751 = vmul.f32 %v985, %v1352
  %v2755 = vrot.slane %v2749, 2
  %v2756 = vrot.slane %v2750, 2
  %v2757 = vsel %vm1359, %v2755, %v2756
  %v2758 = vrot.slane %v2751, 2
  %v2759 = vsel %vm1359, %v2756, %v2758
  %v2762 = vadd.f32 %v2747, %v2757
  %v2763 = vadd.f32 %v2748, %v2759
  %v2764 = vmul.f32 %v992, %v1372
  %v2765 = vmul.f32 %v995, %v1372
  %v2766 = vadd.f32 %v2762, %v2764
  %v2767 = vadd.f32 %v2763, %v2765
  %v2768 = vmul.f32 %v992, %v1380
  %v2769 = vmul.f32 %v995, %v1380
  %v2770 = vmul.f32 %v1000, %v1380
  %v2774 = vrot.slane %v2768, 1
  %v2775 = vrot.slane %v2769, 1
  %v2776 = vsel %vm1339, %v2774, %v2775
  %v2777 = vrot.slane %v2770, 1
  %v2778 = vsel %vm1339, %v2775, %v2777
  %v2781 = vadd.f32 %v2766, %v2776
  %v2782 = vadd.f32 %v2767, %v2778
  %v2783 = vmul.f32 %v992, %v1399
  %v2784 = vmul.f32 %v995, %v1399
  %v2785 = vmul.f32 %v1000, %v1399
  %v2789 = vrot.slane %v2783, 2
  %v2790 = vrot.slane %v2784, 2
  %v2791 = vsel %vm1359, %v2789, %v2790
  %v2792 = vrot.slane %v2785, 2
  %v2793 = vsel %vm1359, %v2790, %v2792
  %v2796 = vadd.f32 %v2781, %v2791
  %v2797 = vadd.f32 %v2782, %v2793
  %v2798 = vmul.f32 %v1007, %v1418
  %v2799 = vmul.f32 %v1010, %v1418
  %v2800 = vadd.f32 %v2796, %v2798
  %v2801 = vadd.f32 %v2797, %v2799
  %v2802 = vmul.f32 %v1007, %v1426
  %v2803 = vmul.f32 %v1010, %v1426
  %v2804 = vmul.f32 %v1015, %v1426
  %v2808 = vrot.slane %v2802, 1
  %v2809 = vrot.slane %v2803, 1
  %v2810 = vsel %vm1339, %v2808, %v2809
  %v2811 = vrot.slane %v2804, 1
  %v2812 = vsel %vm1339, %v2809, %v2811
  %v2815 = vadd.f32 %v2800, %v2810
  %v2816 = vadd.f32 %v2801, %v2812
  %v2817 = vmul.f32 %v1007, %v1445
  %v2818 = vmul.f32 %v1010, %v1445
  %v2819 = vmul.f32 %v1015, %v1445
  %v2823 = vrot.slane %v2817, 2
  %v2824 = vrot.slane %v2818, 2
  %v2825 = vsel %vm1359, %v2823, %v2824
  %v2826 = vrot.slane %v2819, 2
  %v2827 = vsel %vm1359, %v2824, %v2826
  %v2830 = vadd.f32 %v2815, %v2825
  %v2831 = vadd.f32 %v2816, %v2827
  %v2832 = vadd.f32 %v2830, %v1465
  %v2833 = vadd.f32 %v2831, %v1465
  %s2834 = scalar_lea.vmem %s4, 208
  %2835 = vst.msk [vmem:[%s2834] sm:$0xff] %vm1469, %v2832
  %2836 = vst.msk [vmem:[%s2834 + $0x8] sm:$0xff] %vm1469, %v2833
  %v2837 = vmul.f32 %v992, %v1326
  %v2838 = vmul.f32 %v995, %v1326
  %v2839 = vmul.f32 %v992, %v1332
  %v2840 = vmul.f32 %v995, %v1332
  %v2841 = vmul.f32 %v1000, %v1332
  %v2845 = vrot.slane %v2839, 1
  %v2846 = vrot.slane %v2840, 1
  %v2847 = vsel %vm1339, %v2845, %v2846
  %v2848 = vrot.slane %v2841, 1
  %v2849 = vsel %vm1339, %v2846, %v2848
  %v2852 = vadd.f32 %v2837, %v2847
  %v2853 = vadd.f32 %v2838, %v2849
  %v2854 = vmul.f32 %v992, %v1352
  %v2855 = vmul.f32 %v995, %v1352
  %v2856 = vmul.f32 %v1000, %v1352
  %v2860 = vrot.slane %v2854, 2
  %v2861 = vrot.slane %v2855, 2
  %v2862 = vsel %vm1359, %v2860, %v2861
  %v2863 = vrot.slane %v2856, 2
  %v2864 = vsel %vm1359, %v2861, %v2863
  %v2867 = vadd.f32 %v2852, %v2862
  %v2868 = vadd.f32 %v2853, %v2864
  %v2869 = vmul.f32 %v1007, %v1372
  %v2870 = vmul.f32 %v1010, %v1372
  %v2871 = vadd.f32 %v2867, %v2869
  %v2872 = vadd.f32 %v2868, %v2870
  %v2873 = vmul.f32 %v1007, %v1380
  %v2874 = vmul.f32 %v1010, %v1380
  %v2875 = vmul.f32 %v1015, %v1380
  %v2879 = vrot.slane %v2873, 1
  %v2880 = vrot.slane %v2874, 1
  %v2881 = vsel %vm1339, %v2879, %v2880
  %v2882 = vrot.slane %v2875, 1
  %v2883 = vsel %vm1339, %v2880, %v2882
  %v2886 = vadd.f32 %v2871, %v2881
  %v2887 = vadd.f32 %v2872, %v2883
  %v2888 = vmul.f32 %v1007, %v1399
  %v2889 = vmul.f32 %v1010, %v1399
  %v2890 = vmul.f32 %v1015, %v1399
  %v2894 = vrot.slane %v2888, 2
  %v2895 = vrot.slane %v2889, 2
  %v2896 = vsel %vm1359, %v2894, %v2895
  %v2897 = vrot.slane %v2890, 2
  %v2898 = vsel %vm1359, %v2895, %v2897
  %v2901 = vadd.f32 %v2886, %v2896
  %v2902 = vadd.f32 %v2887, %v2898
  %v2903 = vmul.f32 %v1022, %v1418
  %v2904 = vmul.f32 %v1025, %v1418
  %v2905 = vadd.f32 %v2901, %v2903
  %v2906 = vadd.f32 %v2902, %v2904
  %v2907 = vmul.f32 %v1022, %v1426
  %v2908 = vmul.f32 %v1025, %v1426
  %v2909 = vmul.f32 %v1030, %v1426
  %v2913 = vrot.slane %v2907, 1
  %v2914 = vrot.slane %v2908, 1
  %v2915 = vsel %vm1339, %v2913, %v2914
  %v2916 = vrot.slane %v2909, 1
  %v2917 = vsel %vm1339, %v2914, %v2916
  %v2920 = vadd.f32 %v2905, %v2915
  %v2921 = vadd.f32 %v2906, %v2917
  %v2922 = vmul.f32 %v1022, %v1445
  %v2923 = vmul.f32 %v1025, %v1445
  %v2924 = vmul.f32 %v1030, %v1445
  %v2928 = vrot.slane %v2922, 2
  %v2929 = vrot.slane %v2923, 2
  %v2930 = vsel %vm1359, %v2928, %v2929
  %v2931 = vrot.slane %v2924, 2
  %v2932 = vsel %vm1359, %v2929, %v2931
  %v2935 = vadd.f32 %v2920, %v2930
  %v2936 = vadd.f32 %v2921, %v2932
  %v2937 = vadd.f32 %v2935, %v1465
  %v2938 = vadd.f32 %v2936, %v1465
  %s2939 = scalar_lea.vmem %s4, 224
  %2940 = vst.msk [vmem:[%s2939] sm:$0xff] %vm1469, %v2937
  %2941 = vst.msk [vmem:[%s2939 + $0x8] sm:$0xff] %vm1469, %v2938
  %v2942 = vmul.f32 %v1007, %v1326
  %v2943 = vmul.f32 %v1010, %v1326
  %v2944 = vmul.f32 %v1007, %v1332
  %v2945 = vmul.f32 %v1010, %v1332
  %v2946 = vmul.f32 %v1015, %v1332
  %v2950 = vrot.slane %v2944, 1
  %v2951 = vrot.slane %v2945, 1
  %v2952 = vsel %vm1339, %v2950, %v2951
  %v2953 = vrot.slane %v2946, 1
  %v2954 = vsel %vm1339, %v2951, %v2953
  %v2957 = vadd.f32 %v2942, %v2952
  %v2958 = vadd.f32 %v2943, %v2954
  %v2959 = vmul.f32 %v1007, %v1352
  %v2960 = vmul.f32 %v1010, %v1352
  %v2961 = vmul.f32 %v1015, %v1352
  %v2965 = vrot.slane %v2959, 2
  %v2966 = vrot.slane %v2960, 2
  %v2967 = vsel %vm1359, %v2965, %v2966
  %v2968 = vrot.slane %v2961, 2
  %v2969 = vsel %vm1359, %v2966, %v2968
  %v2972 = vadd.f32 %v2957, %v2967
  %v2973 = vadd.f32 %v2958, %v2969
  %v2974 = vmul.f32 %v1022, %v1372
  %v2975 = vmul.f32 %v1025, %v1372
  %v2976 = vadd.f32 %v2972, %v2974
  %v2977 = vadd.f32 %v2973, %v2975
  %v2978 = vmul.f32 %v1022, %v1380
  %v2979 = vmul.f32 %v1025, %v1380
  %v2980 = vmul.f32 %v1030, %v1380
  %v2984 = vrot.slane %v2978, 1
  %v2985 = vrot.slane %v2979, 1
  %v2986 = vsel %vm1339, %v2984, %v2985
  %v2987 = vrot.slane %v2980, 1
  %v2988 = vsel %vm1339, %v2985, %v2987
  %v2991 = vadd.f32 %v2976, %v2986
  %v2992 = vadd.f32 %v2977, %v2988
  %v2993 = vmul.f32 %v1022, %v1399
  %v2994 = vmul.f32 %v1025, %v1399
  %v2995 = vmul.f32 %v1030, %v1399
  %v2999 = vrot.slane %v2993, 2
  %v3000 = vrot.slane %v2994, 2
  %v3001 = vsel %vm1359, %v2999, %v3000
  %v3002 = vrot.slane %v2995, 2
  %v3003 = vsel %vm1359, %v3000, %v3002
  %v3006 = vadd.f32 %v2991, %v3001
  %v3007 = vadd.f32 %v2992, %v3003
  %v3008 = vmul.f32 %v1037, %v1418
  %v3009 = vmul.f32 %v1040, %v1418
  %v3010 = vadd.f32 %v3006, %v3008
  %v3011 = vadd.f32 %v3007, %v3009
  %v3012 = vmul.f32 %v1037, %v1426
  %v3013 = vmul.f32 %v1040, %v1426
  %v3014 = vmul.f32 %v1045, %v1426
  %v3018 = vrot.slane %v3012, 1
  %v3019 = vrot.slane %v3013, 1
  %v3020 = vsel %vm1339, %v3018, %v3019
  %v3021 = vrot.slane %v3014, 1
  %v3022 = vsel %vm1339, %v3019, %v3021
  %v3025 = vadd.f32 %v3010, %v3020
  %v3026 = vadd.f32 %v3011, %v3022
  %v3027 = vmul.f32 %v1037, %v1445
  %v3028 = vmul.f32 %v1040, %v1445
  %v3029 = vmul.f32 %v1045, %v1445
  %v3033 = vrot.slane %v3027, 2
  %v3034 = vrot.slane %v3028, 2
  %v3035 = vsel %vm1359, %v3033, %v3034
  %v3036 = vrot.slane %v3029, 2
  %v3037 = vsel %vm1359, %v3034, %v3036
  %v3040 = vadd.f32 %v3025, %v3035
  %v3041 = vadd.f32 %v3026, %v3037
  %v3042 = vadd.f32 %v3040, %v1465
  %v3043 = vadd.f32 %v3041, %v1465
  %s3044 = scalar_lea.vmem %s4, 240
  %3045 = vst.msk [vmem:[%s3044] sm:$0xff] %vm1469, %v3042
  %3046 = vst.msk [vmem:[%s3044 + $0x8] sm:$0xff] %vm1469, %v3043
  %v3047 = vmul.f32 %v1052, %v1326
  %v3048 = vmul.f32 %v1055, %v1326
  %v3049 = vmul.f32 %v1052, %v1332
  %v3050 = vmul.f32 %v1055, %v1332
  %v3051 = vmul.f32 %v1060, %v1332
  %v3055 = vrot.slane %v3049, 1
  %v3056 = vrot.slane %v3050, 1
  %v3057 = vsel %vm1339, %v3055, %v3056
  %v3058 = vrot.slane %v3051, 1
  %v3059 = vsel %vm1339, %v3056, %v3058
  %v3062 = vadd.f32 %v3047, %v3057
  %v3063 = vadd.f32 %v3048, %v3059
  %v3064 = vmul.f32 %v1052, %v1352
  %v3065 = vmul.f32 %v1055, %v1352
  %v3066 = vmul.f32 %v1060, %v1352
  %v3070 = vrot.slane %v3064, 2
  %v3071 = vrot.slane %v3065, 2
  %v3072 = vsel %vm1359, %v3070, %v3071
  %v3073 = vrot.slane %v3066, 2
  %v3074 = vsel %vm1359, %v3071, %v3073
  %v3077 = vadd.f32 %v3062, %v3072
  %v3078 = vadd.f32 %v3063, %v3074
  %v3079 = vmul.f32 %v1067, %v1372
  %v3080 = vmul.f32 %v1070, %v1372
  %v3081 = vadd.f32 %v3077, %v3079
  %v3082 = vadd.f32 %v3078, %v3080
  %v3083 = vmul.f32 %v1067, %v1380
  %v3084 = vmul.f32 %v1070, %v1380
  %v3085 = vmul.f32 %v1075, %v1380
  %v3089 = vrot.slane %v3083, 1
  %v3090 = vrot.slane %v3084, 1
  %v3091 = vsel %vm1339, %v3089, %v3090
  %v3092 = vrot.slane %v3085, 1
  %v3093 = vsel %vm1339, %v3090, %v3092
  %v3096 = vadd.f32 %v3081, %v3091
  %v3097 = vadd.f32 %v3082, %v3093
  %v3098 = vmul.f32 %v1067, %v1399
  %v3099 = vmul.f32 %v1070, %v1399
  %v3100 = vmul.f32 %v1075, %v1399
  %v3104 = vrot.slane %v3098, 2
  %v3105 = vrot.slane %v3099, 2
  %v3106 = vsel %vm1359, %v3104, %v3105
  %v3107 = vrot.slane %v3100, 2
  %v3108 = vsel %vm1359, %v3105, %v3107
  %v3111 = vadd.f32 %v3096, %v3106
  %v3112 = vadd.f32 %v3097, %v3108
  %v3113 = vmul.f32 %v1082, %v1418
  %v3114 = vmul.f32 %v1085, %v1418
  %v3115 = vadd.f32 %v3111, %v3113
  %v3116 = vadd.f32 %v3112, %v3114
  %v3117 = vmul.f32 %v1082, %v1426
  %v3118 = vmul.f32 %v1085, %v1426
  %v3119 = vmul.f32 %v1090, %v1426
  %v3123 = vrot.slane %v3117, 1
  %v3124 = vrot.slane %v3118, 1
  %v3125 = vsel %vm1339, %v3123, %v3124
  %v3126 = vrot.slane %v3119, 1
  %v3127 = vsel %vm1339, %v3124, %v3126
  %v3130 = vadd.f32 %v3115, %v3125
  %v3131 = vadd.f32 %v3116, %v3127
  %v3132 = vmul.f32 %v1082, %v1445
  %v3133 = vmul.f32 %v1085, %v1445
  %v3134 = vmul.f32 %v1090, %v1445
  %v3138 = vrot.slane %v3132, 2
  %v3139 = vrot.slane %v3133, 2
  %v3140 = vsel %vm1359, %v3138, %v3139
  %v3141 = vrot.slane %v3134, 2
  %v3142 = vsel %vm1359, %v3139, %v3141
  %v3145 = vadd.f32 %v3130, %v3140
  %v3146 = vadd.f32 %v3131, %v3142
  %v3147 = vadd.f32 %v3145, %v1465
  %v3148 = vadd.f32 %v3146, %v1465
  %s3149 = scalar_lea.vmem %s4, 256
  %3150 = vst.msk [vmem:[%s3149] sm:$0xff] %vm1469, %v3147
  %3151 = vst.msk [vmem:[%s3149 + $0x8] sm:$0xff] %vm1469, %v3148
  %v3152 = vmul.f32 %v1067, %v1326
  %v3153 = vmul.f32 %v1070, %v1326
  %v3154 = vmul.f32 %v1067, %v1332
  %v3155 = vmul.f32 %v1070, %v1332
  %v3156 = vmul.f32 %v1075, %v1332
  %v3160 = vrot.slane %v3154, 1
  %v3161 = vrot.slane %v3155, 1
  %v3162 = vsel %vm1339, %v3160, %v3161
  %v3163 = vrot.slane %v3156, 1
  %v3164 = vsel %vm1339, %v3161, %v3163
  %v3167 = vadd.f32 %v3152, %v3162
  %v3168 = vadd.f32 %v3153, %v3164
  %v3169 = vmul.f32 %v1067, %v1352
  %v3170 = vmul.f32 %v1070, %v1352
  %v3171 = vmul.f32 %v1075, %v1352
  %v3175 = vrot.slane %v3169, 2
  %v3176 = vrot.slane %v3170, 2
  %v3177 = vsel %vm1359, %v3175, %v3176
  %v3178 = vrot.slane %v3171, 2
  %v3179 = vsel %vm1359, %v3176, %v3178
  %v3182 = vadd.f32 %v3167, %v3177
  %v3183 = vadd.f32 %v3168, %v3179
  %v3184 = vmul.f32 %v1082, %v1372
  %v3185 = vmul.f32 %v1085, %v1372
  %v3186 = vadd.f32 %v3182, %v3184
  %v3187 = vadd.f32 %v3183, %v3185
  %v3188 = vmul.f32 %v1082, %v1380
  %v3189 = vmul.f32 %v1085, %v1380
  %v3190 = vmul.f32 %v1090, %v1380
  %v3194 = vrot.slane %v3188, 1
  %v3195 = vrot.slane %v3189, 1
  %v3196 = vsel %vm1339, %v3194, %v3195
  %v3197 = vrot.slane %v3190, 1
  %v3198 = vsel %vm1339, %v3195, %v3197
  %v3201 = vadd.f32 %v3186, %v3196
  %v3202 = vadd.f32 %v3187, %v3198
  %v3203 = vmul.f32 %v1082, %v1399
  %v3204 = vmul.f32 %v1085, %v1399
  %v3205 = vmul.f32 %v1090, %v1399
  %v3209 = vrot.slane %v3203, 2
  %v3210 = vrot.slane %v3204, 2
  %v3211 = vsel %vm1359, %v3209, %v3210
  %v3212 = vrot.slane %v3205, 2
  %v3213 = vsel %vm1359, %v3210, %v3212
  %v3216 = vadd.f32 %v3201, %v3211
  %v3217 = vadd.f32 %v3202, %v3213
  %v3218 = vmul.f32 %v1097, %v1418
  %v3219 = vmul.f32 %v1100, %v1418
  %v3220 = vadd.f32 %v3216, %v3218
  %v3221 = vadd.f32 %v3217, %v3219
  %v3222 = vmul.f32 %v1097, %v1426
  %v3223 = vmul.f32 %v1100, %v1426
  %v3224 = vmul.f32 %v1105, %v1426
  %v3228 = vrot.slane %v3222, 1
  %v3229 = vrot.slane %v3223, 1
  %v3230 = vsel %vm1339, %v3228, %v3229
  %v3231 = vrot.slane %v3224, 1
  %v3232 = vsel %vm1339, %v3229, %v3231
  %v3235 = vadd.f32 %v3220, %v3230
  %v3236 = vadd.f32 %v3221, %v3232
  %v3237 = vmul.f32 %v1097, %v1445
  %v3238 = vmul.f32 %v1100, %v1445
  %v3239 = vmul.f32 %v1105, %v1445
  %v3243 = vrot.slane %v3237, 2
  %v3244 = vrot.slane %v3238, 2
  %v3245 = vsel %vm1359, %v3243, %v3244
  %v3246 = vrot.slane %v3239, 2
  %v3247 = vsel %vm1359, %v3244, %v3246
  %v3250 = vadd.f32 %v3235, %v3245
  %v3251 = vadd.f32 %v3236, %v3247
  %v3252 = vadd.f32 %v3250, %v1465
  %v3253 = vadd.f32 %v3251, %v1465
  %s3254 = scalar_lea.vmem %s4, 272
  %3255 = vst.msk [vmem:[%s3254] sm:$0xff] %vm1469, %v3252
  %3256 = vst.msk [vmem:[%s3254 + $0x8] sm:$0xff] %vm1469, %v3253
  %v3257 = vmul.f32 %v1082, %v1326
  %v3258 = vmul.f32 %v1085, %v1326
  %v3259 = vmul.f32 %v1082, %v1332
  %v3260 = vmul.f32 %v1085, %v1332
  %v3261 = vmul.f32 %v1090, %v1332
  %v3265 = vrot.slane %v3259, 1
  %v3266 = vrot.slane %v3260, 1
  %v3267 = vsel %vm1339, %v3265, %v3266
  %v3268 = vrot.slane %v3261, 1
  %v3269 = vsel %vm1339, %v3266, %v3268
  %v3272 = vadd.f32 %v3257, %v3267
  %v3273 = vadd.f32 %v3258, %v3269
  %v3274 = vmul.f32 %v1082, %v1352
  %v3275 = vmul.f32 %v1085, %v1352
  %v3276 = vmul.f32 %v1090, %v1352
  %v3280 = vrot.slane %v3274, 2
  %v3281 = vrot.slane %v3275, 2
  %v3282 = vsel %vm1359, %v3280, %v3281
  %v3283 = vrot.slane %v3276, 2
  %v3284 = vsel %vm1359, %v3281, %v3283
  %v3287 = vadd.f32 %v3272, %v3282
  %v3288 = vadd.f32 %v3273, %v3284
  %v3289 = vmul.f32 %v1097, %v1372
  %v3290 = vmul.f32 %v1100, %v1372
  %v3291 = vadd.f32 %v3287, %v3289
  %v3292 = vadd.f32 %v3288, %v3290
  %v3293 = vmul.f32 %v1097, %v1380
  %v3294 = vmul.f32 %v1100, %v1380
  %v3295 = vmul.f32 %v1105, %v1380
  %v3299 = vrot.slane %v3293, 1
  %v3300 = vrot.slane %v3294, 1
  %v3301 = vsel %vm1339, %v3299, %v3300
  %v3302 = vrot.slane %v3295, 1
  %v3303 = vsel %vm1339, %v3300, %v3302
  %v3306 = vadd.f32 %v3291, %v3301
  %v3307 = vadd.f32 %v3292, %v3303
  %v3308 = vmul.f32 %v1097, %v1399
  %v3309 = vmul.f32 %v1100, %v1399
  %v3310 = vmul.f32 %v1105, %v1399
  %v3314 = vrot.slane %v3308, 2
  %v3315 = vrot.slane %v3309, 2
  %v3316 = vsel %vm1359, %v3314, %v3315
  %v3317 = vrot.slane %v3310, 2
  %v3318 = vsel %vm1359, %v3315, %v3317
  %v3321 = vadd.f32 %v3306, %v3316
  %v3322 = vadd.f32 %v3307, %v3318
  %v3323 = vmul.f32 %v1112, %v1418
  %v3324 = vmul.f32 %v1115, %v1418
  %v3325 = vadd.f32 %v3321, %v3323
  %v3326 = vadd.f32 %v3322, %v3324
  %v3327 = vmul.f32 %v1112, %v1426
  %v3328 = vmul.f32 %v1115, %v1426
  %v3329 = vmul.f32 %v1120, %v1426
  %v3333 = vrot.slane %v3327, 1
  %v3334 = vrot.slane %v3328, 1
  %v3335 = vsel %vm1339, %v3333, %v3334
  %v3336 = vrot.slane %v3329, 1
  %v3337 = vsel %vm1339, %v3334, %v3336
  %v3340 = vadd.f32 %v3325, %v3335
  %v3341 = vadd.f32 %v3326, %v3337
  %v3342 = vmul.f32 %v1112, %v1445
  %v3343 = vmul.f32 %v1115, %v1445
  %v3344 = vmul.f32 %v1120, %v1445
  %v3348 = vrot.slane %v3342, 2
  %v3349 = vrot.slane %v3343, 2
  %v3350 = vsel %vm1359, %v3348, %v3349
  %v3351 = vrot.slane %v3344, 2
  %v3352 = vsel %vm1359, %v3349, %v3351
  %v3355 = vadd.f32 %v3340, %v3350
  %v3356 = vadd.f32 %v3341, %v3352
  %v3357 = vadd.f32 %v3355, %v1465
  %v3358 = vadd.f32 %v3356, %v1465
  %s3359 = scalar_lea.vmem %s4, 288
  %3360 = vst.msk [vmem:[%s3359] sm:$0xff] %vm1469, %v3357
  %3361 = vst.msk [vmem:[%s3359 + $0x8] sm:$0xff] %vm1469, %v3358
  %v3362 = vmul.f32 %v1097, %v1326
  %v3363 = vmul.f32 %v1100, %v1326
  %v3364 = vmul.f32 %v1097, %v1332
  %v3365 = vmul.f32 %v1100, %v1332
  %v3366 = vmul.f32 %v1105, %v1332
  %v3370 = vrot.slane %v3364, 1
  %v3371 = vrot.slane %v3365, 1
  %v3372 = vsel %vm1339, %v3370, %v3371
  %v3373 = vrot.slane %v3366, 1
  %v3374 = vsel %vm1339, %v3371, %v3373
  %v3377 = vadd.f32 %v3362, %v3372
  %v3378 = vadd.f32 %v3363, %v3374
  %v3379 = vmul.f32 %v1097, %v1352
  %v3380 = vmul.f32 %v1100, %v1352
  %v3381 = vmul.f32 %v1105, %v1352
  %v3385 = vrot.slane %v3379, 2
  %v3386 = vrot.slane %v3380, 2
  %v3387 = vsel %vm1359, %v3385, %v3386
  %v3388 = vrot.slane %v3381, 2
  %v3389 = vsel %vm1359, %v3386, %v3388
  %v3392 = vadd.f32 %v3377, %v3387
  %v3393 = vadd.f32 %v3378, %v3389
  %v3394 = vmul.f32 %v1112, %v1372
  %v3395 = vmul.f32 %v1115, %v1372
  %v3396 = vadd.f32 %v3392, %v3394
  %v3397 = vadd.f32 %v3393, %v3395
  %v3398 = vmul.f32 %v1112, %v1380
  %v3399 = vmul.f32 %v1115, %v1380
  %v3400 = vmul.f32 %v1120, %v1380
  %v3404 = vrot.slane %v3398, 1
  %v3405 = vrot.slane %v3399, 1
  %v3406 = vsel %vm1339, %v3404, %v3405
  %v3407 = vrot.slane %v3400, 1
  %v3408 = vsel %vm1339, %v3405, %v3407
  %v3411 = vadd.f32 %v3396, %v3406
  %v3412 = vadd.f32 %v3397, %v3408
  %v3413 = vmul.f32 %v1112, %v1399
  %v3414 = vmul.f32 %v1115, %v1399
  %v3415 = vmul.f32 %v1120, %v1399
  %v3419 = vrot.slane %v3413, 2
  %v3420 = vrot.slane %v3414, 2
  %v3421 = vsel %vm1359, %v3419, %v3420
  %v3422 = vrot.slane %v3415, 2
  %v3423 = vsel %vm1359, %v3420, %v3422
  %v3426 = vadd.f32 %v3411, %v3421
  %v3427 = vadd.f32 %v3412, %v3423
  %v3428 = vmul.f32 %v1127, %v1418
  %v3429 = vmul.f32 %v1130, %v1418
  %v3430 = vadd.f32 %v3426, %v3428
  %v3431 = vadd.f32 %v3427, %v3429
  %v3432 = vmul.f32 %v1127, %v1426
  %v3433 = vmul.f32 %v1130, %v1426
  %v3434 = vmul.f32 %v1135, %v1426
  %v3438 = vrot.slane %v3432, 1
  %v3439 = vrot.slane %v3433, 1
  %v3440 = vsel %vm1339, %v3438, %v3439
  %v3441 = vrot.slane %v3434, 1
  %v3442 = vsel %vm1339, %v3439, %v3441
  %v3445 = vadd.f32 %v3430, %v3440
  %v3446 = vadd.f32 %v3431, %v3442
  %v3447 = vmul.f32 %v1127, %v1445
  %v3448 = vmul.f32 %v1130, %v1445
  %v3449 = vmul.f32 %v1135, %v1445
  %v3453 = vrot.slane %v3447, 2
  %v3454 = vrot.slane %v3448, 2
  %v3455 = vsel %vm1359, %v3453, %v3454
  %v3456 = vrot.slane %v3449, 2
  %v3457 = vsel %vm1359, %v3454, %v3456
  %v3460 = vadd.f32 %v3445, %v3455
  %v3461 = vadd.f32 %v3446, %v3457
  %v3462 = vadd.f32 %v3460, %v1465
  %v3463 = vadd.f32 %v3461, %v1465
  %s3464 = scalar_lea.vmem %s4, 304
  %3465 = vst.msk [vmem:[%s3464] sm:$0xff] %vm1469, %v3462
  %3466 = vst.msk [vmem:[%s3464 + $0x8] sm:$0xff] %vm1469, %v3463
  %v3467 = vmul.f32 %v1112, %v1326
  %v3468 = vmul.f32 %v1115, %v1326
  %v3469 = vmul.f32 %v1112, %v1332
  %v3470 = vmul.f32 %v1115, %v1332
  %v3471 = vmul.f32 %v1120, %v1332
  %v3475 = vrot.slane %v3469, 1
  %v3476 = vrot.slane %v3470, 1
  %v3477 = vsel %vm1339, %v3475, %v3476
  %v3478 = vrot.slane %v3471, 1
  %v3479 = vsel %vm1339, %v3476, %v3478
  %v3482 = vadd.f32 %v3467, %v3477
  %v3483 = vadd.f32 %v3468, %v3479
  %v3484 = vmul.f32 %v1112, %v1352
  %v3485 = vmul.f32 %v1115, %v1352
  %v3486 = vmul.f32 %v1120, %v1352
  %v3490 = vrot.slane %v3484, 2
  %v3491 = vrot.slane %v3485, 2
  %v3492 = vsel %vm1359, %v3490, %v3491
  %v3493 = vrot.slane %v3486, 2
  %v3494 = vsel %vm1359, %v3491, %v3493
  %v3497 = vadd.f32 %v3482, %v3492
  %v3498 = vadd.f32 %v3483, %v3494
  %v3499 = vmul.f32 %v1127, %v1372
  %v3500 = vmul.f32 %v1130, %v1372
  %v3501 = vadd.f32 %v3497, %v3499
  %v3502 = vadd.f32 %v3498, %v3500
  %v3503 = vmul.f32 %v1127, %v1380
  %v3504 = vmul.f32 %v1130, %v1380
  %v3505 = vmul.f32 %v1135, %v1380
  %v3509 = vrot.slane %v3503, 1
  %v3510 = vrot.slane %v3504, 1
  %v3511 = vsel %vm1339, %v3509, %v3510
  %v3512 = vrot.slane %v3505, 1
  %v3513 = vsel %vm1339, %v3510, %v3512
  %v3516 = vadd.f32 %v3501, %v3511
  %v3517 = vadd.f32 %v3502, %v3513
  %v3518 = vmul.f32 %v1127, %v1399
  %v3519 = vmul.f32 %v1130, %v1399
  %v3520 = vmul.f32 %v1135, %v1399
  %v3524 = vrot.slane %v3518, 2
  %v3525 = vrot.slane %v3519, 2
  %v3526 = vsel %vm1359, %v3524, %v3525
  %v3527 = vrot.slane %v3520, 2
  %v3528 = vsel %vm1359, %v3525, %v3527
  %v3531 = vadd.f32 %v3516, %v3526
  %v3532 = vadd.f32 %v3517, %v3528
  %v3533 = vmul.f32 %v1142, %v1418
  %v3534 = vmul.f32 %v1145, %v1418
  %v3535 = vadd.f32 %v3531, %v3533
  %v3536 = vadd.f32 %v3532, %v3534
  %v3537 = vmul.f32 %v1142, %v1426
  %v3538 = vmul.f32 %v1145, %v1426
  %v3539 = vmul.f32 %v1150, %v1426
  %v3543 = vrot.slane %v3537, 1
  %v3544 = vrot.slane %v3538, 1
  %v3545 = vsel %vm1339, %v3543, %v3544
  %v3546 = vrot.slane %v3539, 1
  %v3547 = vsel %vm1339, %v3544, %v3546
  %v3550 = vadd.f32 %v3535, %v3545
  %v3551 = vadd.f32 %v3536, %v3547
  %v3552 = vmul.f32 %v1142, %v1445
  %v3553 = vmul.f32 %v1145, %v1445
  %v3554 = vmul.f32 %v1150, %v1445
  %v3558 = vrot.slane %v3552, 2
  %v3559 = vrot.slane %v3553, 2
  %v3560 = vsel %vm1359, %v3558, %v3559
  %v3561 = vrot.slane %v3554, 2
  %v3562 = vsel %vm1359, %v3559, %v3561
  %v3565 = vadd.f32 %v3550, %v3560
  %v3566 = vadd.f32 %v3551, %v3562
  %v3567 = vadd.f32 %v3565, %v1465
  %v3568 = vadd.f32 %v3566, %v1465
  %s3569 = scalar_lea.vmem %s4, 320
  %3570 = vst.msk [vmem:[%s3569] sm:$0xff] %vm1469, %v3567
  %3571 = vst.msk [vmem:[%s3569 + $0x8] sm:$0xff] %vm1469, %v3568
  %v3572 = vmul.f32 %v1127, %v1326
  %v3573 = vmul.f32 %v1130, %v1326
  %v3574 = vmul.f32 %v1127, %v1332
  %v3575 = vmul.f32 %v1130, %v1332
  %v3576 = vmul.f32 %v1135, %v1332
  %v3580 = vrot.slane %v3574, 1
  %v3581 = vrot.slane %v3575, 1
  %v3582 = vsel %vm1339, %v3580, %v3581
  %v3583 = vrot.slane %v3576, 1
  %v3584 = vsel %vm1339, %v3581, %v3583
  %v3587 = vadd.f32 %v3572, %v3582
  %v3588 = vadd.f32 %v3573, %v3584
  %v3589 = vmul.f32 %v1127, %v1352
  %v3590 = vmul.f32 %v1130, %v1352
  %v3591 = vmul.f32 %v1135, %v1352
  %v3595 = vrot.slane %v3589, 2
  %v3596 = vrot.slane %v3590, 2
  %v3597 = vsel %vm1359, %v3595, %v3596
  %v3598 = vrot.slane %v3591, 2
  %v3599 = vsel %vm1359, %v3596, %v3598
  %v3602 = vadd.f32 %v3587, %v3597
  %v3603 = vadd.f32 %v3588, %v3599
  %v3604 = vmul.f32 %v1142, %v1372
  %v3605 = vmul.f32 %v1145, %v1372
  %v3606 = vadd.f32 %v3602, %v3604
  %v3607 = vadd.f32 %v3603, %v3605
  %v3608 = vmul.f32 %v1142, %v1380
  %v3609 = vmul.f32 %v1145, %v1380
  %v3610 = vmul.f32 %v1150, %v1380
  %v3614 = vrot.slane %v3608, 1
  %v3615 = vrot.slane %v3609, 1
  %v3616 = vsel %vm1339, %v3614, %v3615
  %v3617 = vrot.slane %v3610, 1
  %v3618 = vsel %vm1339, %v3615, %v3617
  %v3621 = vadd.f32 %v3606, %v3616
  %v3622 = vadd.f32 %v3607, %v3618
  %v3623 = vmul.f32 %v1142, %v1399
  %v3624 = vmul.f32 %v1145, %v1399
  %v3625 = vmul.f32 %v1150, %v1399
  %v3629 = vrot.slane %v3623, 2
  %v3630 = vrot.slane %v3624, 2
  %v3631 = vsel %vm1359, %v3629, %v3630
  %v3632 = vrot.slane %v3625, 2
  %v3633 = vsel %vm1359, %v3630, %v3632
  %v3636 = vadd.f32 %v3621, %v3631
  %v3637 = vadd.f32 %v3622, %v3633
  %v3638 = vmul.f32 %v1157, %v1418
  %v3639 = vmul.f32 %v1160, %v1418
  %v3640 = vadd.f32 %v3636, %v3638
  %v3641 = vadd.f32 %v3637, %v3639
  %v3642 = vmul.f32 %v1157, %v1426
  %v3643 = vmul.f32 %v1160, %v1426
  %v3644 = vmul.f32 %v1165, %v1426
  %v3648 = vrot.slane %v3642, 1
  %v3649 = vrot.slane %v3643, 1
  %v3650 = vsel %vm1339, %v3648, %v3649
  %v3651 = vrot.slane %v3644, 1
  %v3652 = vsel %vm1339, %v3649, %v3651
  %v3655 = vadd.f32 %v3640, %v3650
  %v3656 = vadd.f32 %v3641, %v3652
  %v3657 = vmul.f32 %v1157, %v1445
  %v3658 = vmul.f32 %v1160, %v1445
  %v3659 = vmul.f32 %v1165, %v1445
  %v3663 = vrot.slane %v3657, 2
  %v3664 = vrot.slane %v3658, 2
  %v3665 = vsel %vm1359, %v3663, %v3664
  %v3666 = vrot.slane %v3659, 2
  %v3667 = vsel %vm1359, %v3664, %v3666
  %v3670 = vadd.f32 %v3655, %v3665
  %v3671 = vadd.f32 %v3656, %v3667
  %v3672 = vadd.f32 %v3670, %v1465
  %v3673 = vadd.f32 %v3671, %v1465
  %s3674 = scalar_lea.vmem %s4, 336
  %3675 = vst.msk [vmem:[%s3674] sm:$0xff] %vm1469, %v3672
  %3676 = vst.msk [vmem:[%s3674 + $0x8] sm:$0xff] %vm1469, %v3673
  %v3677 = vmul.f32 %v1142, %v1326
  %v3678 = vmul.f32 %v1145, %v1326
  %v3679 = vmul.f32 %v1142, %v1332
  %v3680 = vmul.f32 %v1145, %v1332
  %v3681 = vmul.f32 %v1150, %v1332
  %v3685 = vrot.slane %v3679, 1
  %v3686 = vrot.slane %v3680, 1
  %v3687 = vsel %vm1339, %v3685, %v3686
  %v3688 = vrot.slane %v3681, 1
  %v3689 = vsel %vm1339, %v3686, %v3688
  %v3692 = vadd.f32 %v3677, %v3687
  %v3693 = vadd.f32 %v3678, %v3689
  %v3694 = vmul.f32 %v1142, %v1352
  %v3695 = vmul.f32 %v1145, %v1352
  %v3696 = vmul.f32 %v1150, %v1352
  %v3700 = vrot.slane %v3694, 2
  %v3701 = vrot.slane %v3695, 2
  %v3702 = vsel %vm1359, %v3700, %v3701
  %v3703 = vrot.slane %v3696, 2
  %v3704 = vsel %vm1359, %v3701, %v3703
  %v3707 = vadd.f32 %v3692, %v3702
  %v3708 = vadd.f32 %v3693, %v3704
  %v3709 = vmul.f32 %v1157, %v1372
  %v3710 = vmul.f32 %v1160, %v1372
  %v3711 = vadd.f32 %v3707, %v3709
  %v3712 = vadd.f32 %v3708, %v3710
  %v3713 = vmul.f32 %v1157, %v1380
  %v3714 = vmul.f32 %v1160, %v1380
  %v3715 = vmul.f32 %v1165, %v1380
  %v3719 = vrot.slane %v3713, 1
  %v3720 = vrot.slane %v3714, 1
  %v3721 = vsel %vm1339, %v3719, %v3720
  %v3722 = vrot.slane %v3715, 1
  %v3723 = vsel %vm1339, %v3720, %v3722
  %v3726 = vadd.f32 %v3711, %v3721
  %v3727 = vadd.f32 %v3712, %v3723
  %v3728 = vmul.f32 %v1157, %v1399
  %v3729 = vmul.f32 %v1160, %v1399
  %v3730 = vmul.f32 %v1165, %v1399
  %v3734 = vrot.slane %v3728, 2
  %v3735 = vrot.slane %v3729, 2
  %v3736 = vsel %vm1359, %v3734, %v3735
  %v3737 = vrot.slane %v3730, 2
  %v3738 = vsel %vm1359, %v3735, %v3737
  %v3741 = vadd.f32 %v3726, %v3736
  %v3742 = vadd.f32 %v3727, %v3738
  %v3743 = vmul.f32 %v1172, %v1418
  %v3744 = vmul.f32 %v1175, %v1418
  %v3745 = vadd.f32 %v3741, %v3743
  %v3746 = vadd.f32 %v3742, %v3744
  %v3747 = vmul.f32 %v1172, %v1426
  %v3748 = vmul.f32 %v1175, %v1426
  %v3749 = vmul.f32 %v1180, %v1426
  %v3753 = vrot.slane %v3747, 1
  %v3754 = vrot.slane %v3748, 1
  %v3755 = vsel %vm1339, %v3753, %v3754
  %v3756 = vrot.slane %v3749, 1
  %v3757 = vsel %vm1339, %v3754, %v3756
  %v3760 = vadd.f32 %v3745, %v3755
  %v3761 = vadd.f32 %v3746, %v3757
  %v3762 = vmul.f32 %v1172, %v1445
  %v3763 = vmul.f32 %v1175, %v1445
  %v3764 = vmul.f32 %v1180, %v1445
  %v3768 = vrot.slane %v3762, 2
  %v3769 = vrot.slane %v3763, 2
  %v3770 = vsel %vm1359, %v3768, %v3769
  %v3771 = vrot.slane %v3764, 2
  %v3772 = vsel %vm1359, %v3769, %v3771
  %v3775 = vadd.f32 %v3760, %v3770
  %v3776 = vadd.f32 %v3761, %v3772
  %v3777 = vadd.f32 %v3775, %v1465
  %v3778 = vadd.f32 %v3776, %v1465
  %s3779 = scalar_lea.vmem %s4, 352
  %3780 = vst.msk [vmem:[%s3779] sm:$0xff] %vm1469, %v3777
  %3781 = vst.msk [vmem:[%s3779 + $0x8] sm:$0xff] %vm1469, %v3778
  %v3782 = vmul.f32 %v1157, %v1326
  %v3783 = vmul.f32 %v1160, %v1326
  %v3784 = vmul.f32 %v1157, %v1332
  %v3785 = vmul.f32 %v1160, %v1332
  %v3786 = vmul.f32 %v1165, %v1332
  %v3790 = vrot.slane %v3784, 1
  %v3791 = vrot.slane %v3785, 1
  %v3792 = vsel %vm1339, %v3790, %v3791
  %v3793 = vrot.slane %v3786, 1
  %v3794 = vsel %vm1339, %v3791, %v3793
  %v3797 = vadd.f32 %v3782, %v3792
  %v3798 = vadd.f32 %v3783, %v3794
  %v3799 = vmul.f32 %v1157, %v1352
  %v3800 = vmul.f32 %v1160, %v1352
  %v3801 = vmul.f32 %v1165, %v1352
  %v3805 = vrot.slane %v3799, 2
  %v3806 = vrot.slane %v3800, 2
  %v3807 = vsel %vm1359, %v3805, %v3806
  %v3808 = vrot.slane %v3801, 2
  %v3809 = vsel %vm1359, %v3806, %v3808
  %v3812 = vadd.f32 %v3797, %v3807
  %v3813 = vadd.f32 %v3798, %v3809
  %v3814 = vmul.f32 %v1172, %v1372
  %v3815 = vmul.f32 %v1175, %v1372
  %v3816 = vadd.f32 %v3812, %v3814
  %v3817 = vadd.f32 %v3813, %v3815
  %v3818 = vmul.f32 %v1172, %v1380
  %v3819 = vmul.f32 %v1175, %v1380
  %v3820 = vmul.f32 %v1180, %v1380
  %v3824 = vrot.slane %v3818, 1
  %v3825 = vrot.slane %v3819, 1
  %v3826 = vsel %vm1339, %v3824, %v3825
  %v3827 = vrot.slane %v3820, 1
  %v3828 = vsel %vm1339, %v3825, %v3827
  %v3831 = vadd.f32 %v3816, %v3826
  %v3832 = vadd.f32 %v3817, %v3828
  %v3833 = vmul.f32 %v1172, %v1399
  %v3834 = vmul.f32 %v1175, %v1399
  %v3835 = vmul.f32 %v1180, %v1399
  %v3839 = vrot.slane %v3833, 2
  %v3840 = vrot.slane %v3834, 2
  %v3841 = vsel %vm1359, %v3839, %v3840
  %v3842 = vrot.slane %v3835, 2
  %v3843 = vsel %vm1359, %v3840, %v3842
  %v3846 = vadd.f32 %v3831, %v3841
  %v3847 = vadd.f32 %v3832, %v3843
  %v3848 = vmul.f32 %v1187, %v1418
  %v3849 = vmul.f32 %v1190, %v1418
  %v3850 = vadd.f32 %v3846, %v3848
  %v3851 = vadd.f32 %v3847, %v3849
  %v3852 = vmul.f32 %v1187, %v1426
  %v3853 = vmul.f32 %v1190, %v1426
  %v3854 = vmul.f32 %v1195, %v1426
  %v3858 = vrot.slane %v3852, 1
  %v3859 = vrot.slane %v3853, 1
  %v3860 = vsel %vm1339, %v3858, %v3859
  %v3861 = vrot.slane %v3854, 1
  %v3862 = vsel %vm1339, %v3859, %v3861
  %v3865 = vadd.f32 %v3850, %v3860
  %v3866 = vadd.f32 %v3851, %v3862
  %v3867 = vmul.f32 %v1187, %v1445
  %v3868 = vmul.f32 %v1190, %v1445
  %v3869 = vmul.f32 %v1195, %v1445
  %v3873 = vrot.slane %v3867, 2
  %v3874 = vrot.slane %v3868, 2
  %v3875 = vsel %vm1359, %v3873, %v3874
  %v3876 = vrot.slane %v3869, 2
  %v3877 = vsel %vm1359, %v3874, %v3876
  %v3880 = vadd.f32 %v3865, %v3875
  %v3881 = vadd.f32 %v3866, %v3877
  %v3882 = vadd.f32 %v3880, %v1465
  %v3883 = vadd.f32 %v3881, %v1465
  %s3884 = scalar_lea.vmem %s4, 368
  %3885 = vst.msk [vmem:[%s3884] sm:$0xff] %vm1469, %v3882
  %3886 = vst.msk [vmem:[%s3884 + $0x8] sm:$0xff] %vm1469, %v3883
  %v3887 = vmul.f32 %v1172, %v1326
  %v3888 = vmul.f32 %v1175, %v1326
  %v3889 = vmul.f32 %v1172, %v1332
  %v3890 = vmul.f32 %v1175, %v1332
  %v3891 = vmul.f32 %v1180, %v1332
  %v3895 = vrot.slane %v3889, 1
  %v3896 = vrot.slane %v3890, 1
  %v3897 = vsel %vm1339, %v3895, %v3896
  %v3898 = vrot.slane %v3891, 1
  %v3899 = vsel %vm1339, %v3896, %v3898
  %v3902 = vadd.f32 %v3887, %v3897
  %v3903 = vadd.f32 %v3888, %v3899
  %v3904 = vmul.f32 %v1172, %v1352
  %v3905 = vmul.f32 %v1175, %v1352
  %v3906 = vmul.f32 %v1180, %v1352
  %v3910 = vrot.slane %v3904, 2
  %v3911 = vrot.slane %v3905, 2
  %v3912 = vsel %vm1359, %v3910, %v3911
  %v3913 = vrot.slane %v3906, 2
  %v3914 = vsel %vm1359, %v3911, %v3913
  %v3917 = vadd.f32 %v3902, %v3912
  %v3918 = vadd.f32 %v3903, %v3914
  %v3919 = vmul.f32 %v1187, %v1372
  %v3920 = vmul.f32 %v1190, %v1372
  %v3921 = vadd.f32 %v3917, %v3919
  %v3922 = vadd.f32 %v3918, %v3920
  %v3923 = vmul.f32 %v1187, %v1380
  %v3924 = vmul.f32 %v1190, %v1380
  %v3925 = vmul.f32 %v1195, %v1380
  %v3929 = vrot.slane %v3923, 1
  %v3930 = vrot.slane %v3924, 1
  %v3931 = vsel %vm1339, %v3929, %v3930
  %v3932 = vrot.slane %v3925, 1
  %v3933 = vsel %vm1339, %v3930, %v3932
  %v3936 = vadd.f32 %v3921, %v3931
  %v3937 = vadd.f32 %v3922, %v3933
  %v3938 = vmul.f32 %v1187, %v1399
  %v3939 = vmul.f32 %v1190, %v1399
  %v3940 = vmul.f32 %v1195, %v1399
  %v3944 = vrot.slane %v3938, 2
  %v3945 = vrot.slane %v3939, 2
  %v3946 = vsel %vm1359, %v3944, %v3945
  %v3947 = vrot.slane %v3940, 2
  %v3948 = vsel %vm1359, %v3945, %v3947
  %v3951 = vadd.f32 %v3936, %v3946
  %v3952 = vadd.f32 %v3937, %v3948
  %v3953 = vmul.f32 %v1202, %v1418
  %v3954 = vmul.f32 %v1205, %v1418
  %v3955 = vadd.f32 %v3951, %v3953
  %v3956 = vadd.f32 %v3952, %v3954
  %v3957 = vmul.f32 %v1202, %v1426
  %v3958 = vmul.f32 %v1205, %v1426
  %v3959 = vmul.f32 %v1210, %v1426
  %v3963 = vrot.slane %v3957, 1
  %v3964 = vrot.slane %v3958, 1
  %v3965 = vsel %vm1339, %v3963, %v3964
  %v3966 = vrot.slane %v3959, 1
  %v3967 = vsel %vm1339, %v3964, %v3966
  %v3970 = vadd.f32 %v3955, %v3965
  %v3971 = vadd.f32 %v3956, %v3967
  %v3972 = vmul.f32 %v1202, %v1445
  %v3973 = vmul.f32 %v1205, %v1445
  %v3974 = vmul.f32 %v1210, %v1445
  %v3978 = vrot.slane %v3972, 2
  %v3979 = vrot.slane %v3973, 2
  %v3980 = vsel %vm1359, %v3978, %v3979
  %v3981 = vrot.slane %v3974, 2
  %v3982 = vsel %vm1359, %v3979, %v3981
  %v3985 = vadd.f32 %v3970, %v3980
  %v3986 = vadd.f32 %v3971, %v3982
  %v3987 = vadd.f32 %v3985, %v1465
  %v3988 = vadd.f32 %v3986, %v1465
  %s3989 = scalar_lea.vmem %s4, 384
  %3990 = vst.msk [vmem:[%s3989] sm:$0xff] %vm1469, %v3987
  %3991 = vst.msk [vmem:[%s3989 + $0x8] sm:$0xff] %vm1469, %v3988
  %v3992 = vmul.f32 %v1187, %v1326
  %v3993 = vmul.f32 %v1190, %v1326
  %v3994 = vmul.f32 %v1187, %v1332
  %v3995 = vmul.f32 %v1190, %v1332
  %v3996 = vmul.f32 %v1195, %v1332
  %v4000 = vrot.slane %v3994, 1
  %v4001 = vrot.slane %v3995, 1
  %v4002 = vsel %vm1339, %v4000, %v4001
  %v4003 = vrot.slane %v3996, 1
  %v4004 = vsel %vm1339, %v4001, %v4003
  %v4007 = vadd.f32 %v3992, %v4002
  %v4008 = vadd.f32 %v3993, %v4004
  %v4009 = vmul.f32 %v1187, %v1352
  %v4010 = vmul.f32 %v1190, %v1352
  %v4011 = vmul.f32 %v1195, %v1352
  %v4015 = vrot.slane %v4009, 2
  %v4016 = vrot.slane %v4010, 2
  %v4017 = vsel %vm1359, %v4015, %v4016
  %v4018 = vrot.slane %v4011, 2
  %v4019 = vsel %vm1359, %v4016, %v4018
  %v4022 = vadd.f32 %v4007, %v4017
  %v4023 = vadd.f32 %v4008, %v4019
  %v4024 = vmul.f32 %v1202, %v1372
  %v4025 = vmul.f32 %v1205, %v1372
  %v4026 = vadd.f32 %v4022, %v4024
  %v4027 = vadd.f32 %v4023, %v4025
  %v4028 = vmul.f32 %v1202, %v1380
  %v4029 = vmul.f32 %v1205, %v1380
  %v4030 = vmul.f32 %v1210, %v1380
  %v4034 = vrot.slane %v4028, 1
  %v4035 = vrot.slane %v4029, 1
  %v4036 = vsel %vm1339, %v4034, %v4035
  %v4037 = vrot.slane %v4030, 1
  %v4038 = vsel %vm1339, %v4035, %v4037
  %v4041 = vadd.f32 %v4026, %v4036
  %v4042 = vadd.f32 %v4027, %v4038
  %v4043 = vmul.f32 %v1202, %v1399
  %v4044 = vmul.f32 %v1205, %v1399
  %v4045 = vmul.f32 %v1210, %v1399
  %v4049 = vrot.slane %v4043, 2
  %v4050 = vrot.slane %v4044, 2
  %v4051 = vsel %vm1359, %v4049, %v4050
  %v4052 = vrot.slane %v4045, 2
  %v4053 = vsel %vm1359, %v4050, %v4052
  %v4056 = vadd.f32 %v4041, %v4051
  %v4057 = vadd.f32 %v4042, %v4053
  %v4058 = vmul.f32 %v1217, %v1418
  %v4059 = vmul.f32 %v1220, %v1418
  %v4060 = vadd.f32 %v4056, %v4058
  %v4061 = vadd.f32 %v4057, %v4059
  %v4062 = vmul.f32 %v1217, %v1426
  %v4063 = vmul.f32 %v1220, %v1426
  %v4064 = vmul.f32 %v1225, %v1426
  %v4068 = vrot.slane %v4062, 1
  %v4069 = vrot.slane %v4063, 1
  %v4070 = vsel %vm1339, %v4068, %v4069
  %v4071 = vrot.slane %v4064, 1
  %v4072 = vsel %vm1339, %v4069, %v4071
  %v4075 = vadd.f32 %v4060, %v4070
  %v4076 = vadd.f32 %v4061, %v4072
  %v4077 = vmul.f32 %v1217, %v1445
  %v4078 = vmul.f32 %v1220, %v1445
  %v4079 = vmul.f32 %v1225, %v1445
  %v4083 = vrot.slane %v4077, 2
  %v4084 = vrot.slane %v4078, 2
  %v4085 = vsel %vm1359, %v4083, %v4084
  %v4086 = vrot.slane %v4079, 2
  %v4087 = vsel %vm1359, %v4084, %v4086
  %v4090 = vadd.f32 %v4075, %v4085
  %v4091 = vadd.f32 %v4076, %v4087
  %v4092 = vadd.f32 %v4090, %v1465
  %v4093 = vadd.f32 %v4091, %v1465
  %s4094 = scalar_lea.vmem %s4, 400
  %4095 = vst.msk [vmem:[%s4094] sm:$0xff] %vm1469, %v4092
  %4096 = vst.msk [vmem:[%s4094 + $0x8] sm:$0xff] %vm1469, %v4093
  %v4097 = vmul.f32 %v1202, %v1326
  %v4098 = vmul.f32 %v1205, %v1326
  %v4099 = vmul.f32 %v1202, %v1332
  %v4100 = vmul.f32 %v1205, %v1332
  %v4101 = vmul.f32 %v1210, %v1332
  %v4105 = vrot.slane %v4099, 1
  %v4106 = vrot.slane %v4100, 1
  %v4107 = vsel %vm1339, %v4105, %v4106
  %v4108 = vrot.slane %v4101, 1
  %v4109 = vsel %vm1339, %v4106, %v4108
  %v4112 = vadd.f32 %v4097, %v4107
  %v4113 = vadd.f32 %v4098, %v4109
  %v4114 = vmul.f32 %v1202, %v1352
  %v4115 = vmul.f32 %v1205, %v1352
  %v4116 = vmul.f32 %v1210, %v1352
  %v4120 = vrot.slane %v4114, 2
  %v4121 = vrot.slane %v4115, 2
  %v4122 = vsel %vm1359, %v4120, %v4121
  %v4123 = vrot.slane %v4116, 2
  %v4124 = vsel %vm1359, %v4121, %v4123
  %v4127 = vadd.f32 %v4112, %v4122
  %v4128 = vadd.f32 %v4113, %v4124
  %v4129 = vmul.f32 %v1217, %v1372
  %v4130 = vmul.f32 %v1220, %v1372
  %v4131 = vadd.f32 %v4127, %v4129
  %v4132 = vadd.f32 %v4128, %v4130
  %v4133 = vmul.f32 %v1217, %v1380
  %v4134 = vmul.f32 %v1220, %v1380
  %v4135 = vmul.f32 %v1225, %v1380
  %v4139 = vrot.slane %v4133, 1
  %v4140 = vrot.slane %v4134, 1
  %v4141 = vsel %vm1339, %v4139, %v4140
  %v4142 = vrot.slane %v4135, 1
  %v4143 = vsel %vm1339, %v4140, %v4142
  %v4146 = vadd.f32 %v4131, %v4141
  %v4147 = vadd.f32 %v4132, %v4143
  %v4148 = vmul.f32 %v1217, %v1399
  %v4149 = vmul.f32 %v1220, %v1399
  %v4150 = vmul.f32 %v1225, %v1399
  %v4154 = vrot.slane %v4148, 2
  %v4155 = vrot.slane %v4149, 2
  %v4156 = vsel %vm1359, %v4154, %v4155
  %v4157 = vrot.slane %v4150, 2
  %v4158 = vsel %vm1359, %v4155, %v4157
  %v4161 = vadd.f32 %v4146, %v4156
  %v4162 = vadd.f32 %v4147, %v4158
  %v4163 = vmul.f32 %v1232, %v1418
  %v4164 = vmul.f32 %v1235, %v1418
  %v4165 = vadd.f32 %v4161, %v4163
  %v4166 = vadd.f32 %v4162, %v4164
  %v4167 = vmul.f32 %v1232, %v1426
  %v4168 = vmul.f32 %v1235, %v1426
  %v4169 = vmul.f32 %v1240, %v1426
  %v4173 = vrot.slane %v4167, 1
  %v4174 = vrot.slane %v4168, 1
  %v4175 = vsel %vm1339, %v4173, %v4174
  %v4176 = vrot.slane %v4169, 1
  %v4177 = vsel %vm1339, %v4174, %v4176
  %v4180 = vadd.f32 %v4165, %v4175
  %v4181 = vadd.f32 %v4166, %v4177
  %v4182 = vmul.f32 %v1232, %v1445
  %v4183 = vmul.f32 %v1235, %v1445
  %v4184 = vmul.f32 %v1240, %v1445
  %v4188 = vrot.slane %v4182, 2
  %v4189 = vrot.slane %v4183, 2
  %v4190 = vsel %vm1359, %v4188, %v4189
  %v4191 = vrot.slane %v4184, 2
  %v4192 = vsel %vm1359, %v4189, %v4191
  %v4195 = vadd.f32 %v4180, %v4190
  %v4196 = vadd.f32 %v4181, %v4192
  %v4197 = vadd.f32 %v4195, %v1465
  %v4198 = vadd.f32 %v4196, %v1465
  %s4199 = scalar_lea.vmem %s4, 416
  %4200 = vst.msk [vmem:[%s4199] sm:$0xff] %vm1469, %v4197
  %4201 = vst.msk [vmem:[%s4199 + $0x8] sm:$0xff] %vm1469, %v4198
  %v4202 = vmul.f32 %v1217, %v1326
  %v4203 = vmul.f32 %v1220, %v1326
  %v4204 = vmul.f32 %v1217, %v1332
  %v4205 = vmul.f32 %v1220, %v1332
  %v4206 = vmul.f32 %v1225, %v1332
  %v4210 = vrot.slane %v4204, 1
  %v4211 = vrot.slane %v4205, 1
  %v4212 = vsel %vm1339, %v4210, %v4211
  %v4213 = vrot.slane %v4206, 1
  %v4214 = vsel %vm1339, %v4211, %v4213
  %v4217 = vadd.f32 %v4202, %v4212
  %v4218 = vadd.f32 %v4203, %v4214
  %v4219 = vmul.f32 %v1217, %v1352
  %v4220 = vmul.f32 %v1220, %v1352
  %v4221 = vmul.f32 %v1225, %v1352
  %v4225 = vrot.slane %v4219, 2
  %v4226 = vrot.slane %v4220, 2
  %v4227 = vsel %vm1359, %v4225, %v4226
  %v4228 = vrot.slane %v4221, 2
  %v4229 = vsel %vm1359, %v4226, %v4228
  %v4232 = vadd.f32 %v4217, %v4227
  %v4233 = vadd.f32 %v4218, %v4229
  %v4234 = vmul.f32 %v1232, %v1372
  %v4235 = vmul.f32 %v1235, %v1372
  %v4236 = vadd.f32 %v4232, %v4234
  %v4237 = vadd.f32 %v4233, %v4235
  %v4238 = vmul.f32 %v1232, %v1380
  %v4239 = vmul.f32 %v1235, %v1380
  %v4240 = vmul.f32 %v1240, %v1380
  %v4244 = vrot.slane %v4238, 1
  %v4245 = vrot.slane %v4239, 1
  %v4246 = vsel %vm1339, %v4244, %v4245
  %v4247 = vrot.slane %v4240, 1
  %v4248 = vsel %vm1339, %v4245, %v4247
  %v4251 = vadd.f32 %v4236, %v4246
  %v4252 = vadd.f32 %v4237, %v4248
  %v4253 = vmul.f32 %v1232, %v1399
  %v4254 = vmul.f32 %v1235, %v1399
  %v4255 = vmul.f32 %v1240, %v1399
  %v4259 = vrot.slane %v4253, 2
  %v4260 = vrot.slane %v4254, 2
  %v4261 = vsel %vm1359, %v4259, %v4260
  %v4262 = vrot.slane %v4255, 2
  %v4263 = vsel %vm1359, %v4260, %v4262
  %v4266 = vadd.f32 %v4251, %v4261
  %v4267 = vadd.f32 %v4252, %v4263
  %v4268 = vmul.f32 %v1247, %v1418
  %v4269 = vmul.f32 %v1250, %v1418
  %v4270 = vadd.f32 %v4266, %v4268
  %v4271 = vadd.f32 %v4267, %v4269
  %v4272 = vmul.f32 %v1247, %v1426
  %v4273 = vmul.f32 %v1250, %v1426
  %v4274 = vmul.f32 %v1255, %v1426
  %v4278 = vrot.slane %v4272, 1
  %v4279 = vrot.slane %v4273, 1
  %v4280 = vsel %vm1339, %v4278, %v4279
  %v4281 = vrot.slane %v4274, 1
  %v4282 = vsel %vm1339, %v4279, %v4281
  %v4285 = vadd.f32 %v4270, %v4280
  %v4286 = vadd.f32 %v4271, %v4282
  %v4287 = vmul.f32 %v1247, %v1445
  %v4288 = vmul.f32 %v1250, %v1445
  %v4289 = vmul.f32 %v1255, %v1445
  %v4293 = vrot.slane %v4287, 2
  %v4294 = vrot.slane %v4288, 2
  %v4295 = vsel %vm1359, %v4293, %v4294
  %v4296 = vrot.slane %v4289, 2
  %v4297 = vsel %vm1359, %v4294, %v4296
  %v4300 = vadd.f32 %v4285, %v4295
  %v4301 = vadd.f32 %v4286, %v4297
  %v4302 = vadd.f32 %v4300, %v1465
  %v4303 = vadd.f32 %v4301, %v1465
  %s4304 = scalar_lea.vmem %s4, 432
  %4305 = vst.msk [vmem:[%s4304] sm:$0xff] %vm1469, %v4302
  %4306 = vst.msk [vmem:[%s4304 + $0x8] sm:$0xff] %vm1469, %v4303
  %v4307 = vmul.f32 %v1232, %v1326
  %v4308 = vmul.f32 %v1235, %v1326
  %v4309 = vmul.f32 %v1232, %v1332
  %v4310 = vmul.f32 %v1235, %v1332
  %v4311 = vmul.f32 %v1240, %v1332
  %v4315 = vrot.slane %v4309, 1
  %v4316 = vrot.slane %v4310, 1
  %v4317 = vsel %vm1339, %v4315, %v4316
  %v4318 = vrot.slane %v4311, 1
  %v4319 = vsel %vm1339, %v4316, %v4318
  %v4322 = vadd.f32 %v4307, %v4317
  %v4323 = vadd.f32 %v4308, %v4319
  %v4324 = vmul.f32 %v1232, %v1352
  %v4325 = vmul.f32 %v1235, %v1352
  %v4326 = vmul.f32 %v1240, %v1352
  %v4330 = vrot.slane %v4324, 2
  %v4331 = vrot.slane %v4325, 2
  %v4332 = vsel %vm1359, %v4330, %v4331
  %v4333 = vrot.slane %v4326, 2
  %v4334 = vsel %vm1359, %v4331, %v4333
  %v4337 = vadd.f32 %v4322, %v4332
  %v4338 = vadd.f32 %v4323, %v4334
  %v4339 = vmul.f32 %v1247, %v1372
  %v4340 = vmul.f32 %v1250, %v1372
  %v4341 = vadd.f32 %v4337, %v4339
  %v4342 = vadd.f32 %v4338, %v4340
  %v4343 = vmul.f32 %v1247, %v1380
  %v4344 = vmul.f32 %v1250, %v1380
  %v4345 = vmul.f32 %v1255, %v1380
  %v4349 = vrot.slane %v4343, 1
  %v4350 = vrot.slane %v4344, 1
  %v4351 = vsel %vm1339, %v4349, %v4350
  %v4352 = vrot.slane %v4345, 1
  %v4353 = vsel %vm1339, %v4350, %v4352
  %v4356 = vadd.f32 %v4341, %v4351
  %v4357 = vadd.f32 %v4342, %v4353
  %v4358 = vmul.f32 %v1247, %v1399
  %v4359 = vmul.f32 %v1250, %v1399
  %v4360 = vmul.f32 %v1255, %v1399
  %v4364 = vrot.slane %v4358, 2
  %v4365 = vrot.slane %v4359, 2
  %v4366 = vsel %vm1359, %v4364, %v4365
  %v4367 = vrot.slane %v4360, 2
  %v4368 = vsel %vm1359, %v4365, %v4367
  %v4371 = vadd.f32 %v4356, %v4366
  %v4372 = vadd.f32 %v4357, %v4368
  %v4373 = vmul.f32 %v1262, %v1418
  %v4374 = vmul.f32 %v1265, %v1418
  %v4375 = vadd.f32 %v4371, %v4373
  %v4376 = vadd.f32 %v4372, %v4374
  %v4377 = vmul.f32 %v1262, %v1426
  %v4378 = vmul.f32 %v1265, %v1426
  %v4379 = vmul.f32 %v1270, %v1426
  %v4383 = vrot.slane %v4377, 1
  %v4384 = vrot.slane %v4378, 1
  %v4385 = vsel %vm1339, %v4383, %v4384
  %v4386 = vrot.slane %v4379, 1
  %v4387 = vsel %vm1339, %v4384, %v4386
  %v4390 = vadd.f32 %v4375, %v4385
  %v4391 = vadd.f32 %v4376, %v4387
  %v4392 = vmul.f32 %v1262, %v1445
  %v4393 = vmul.f32 %v1265, %v1445
  %v4394 = vmul.f32 %v1270, %v1445
  %v4398 = vrot.slane %v4392, 2
  %v4399 = vrot.slane %v4393, 2
  %v4400 = vsel %vm1359, %v4398, %v4399
  %v4401 = vrot.slane %v4394, 2
  %v4402 = vsel %vm1359, %v4399, %v4401
  %v4405 = vadd.f32 %v4390, %v4400
  %v4406 = vadd.f32 %v4391, %v4402
  %v4407 = vadd.f32 %v4405, %v1465
  %v4408 = vadd.f32 %v4406, %v1465
  %s4409 = scalar_lea.vmem %s4, 448
  %4410 = vst.msk [vmem:[%s4409] sm:$0xff] %vm1469, %v4407
  %4411 = vst.msk [vmem:[%s4409 + $0x8] sm:$0xff] %vm1469, %v4408
  %v4412 = vmul.f32 %v1247, %v1326
  %v4413 = vmul.f32 %v1250, %v1326
  %v4414 = vmul.f32 %v1247, %v1332
  %v4415 = vmul.f32 %v1250, %v1332
  %v4416 = vmul.f32 %v1255, %v1332
  %v4420 = vrot.slane %v4414, 1
  %v4421 = vrot.slane %v4415, 1
  %v4422 = vsel %vm1339, %v4420, %v4421
  %v4423 = vrot.slane %v4416, 1
  %v4424 = vsel %vm1339, %v4421, %v4423
  %v4427 = vadd.f32 %v4412, %v4422
  %v4428 = vadd.f32 %v4413, %v4424
  %v4429 = vmul.f32 %v1247, %v1352
  %v4430 = vmul.f32 %v1250, %v1352
  %v4431 = vmul.f32 %v1255, %v1352
  %v4435 = vrot.slane %v4429, 2
  %v4436 = vrot.slane %v4430, 2
  %v4437 = vsel %vm1359, %v4435, %v4436
  %v4438 = vrot.slane %v4431, 2
  %v4439 = vsel %vm1359, %v4436, %v4438
  %v4442 = vadd.f32 %v4427, %v4437
  %v4443 = vadd.f32 %v4428, %v4439
  %v4444 = vmul.f32 %v1262, %v1372
  %v4445 = vmul.f32 %v1265, %v1372
  %v4446 = vadd.f32 %v4442, %v4444
  %v4447 = vadd.f32 %v4443, %v4445
  %v4448 = vmul.f32 %v1262, %v1380
  %v4449 = vmul.f32 %v1265, %v1380
  %v4450 = vmul.f32 %v1270, %v1380
  %v4454 = vrot.slane %v4448, 1
  %v4455 = vrot.slane %v4449, 1
  %v4456 = vsel %vm1339, %v4454, %v4455
  %v4457 = vrot.slane %v4450, 1
  %v4458 = vsel %vm1339, %v4455, %v4457
  %v4461 = vadd.f32 %v4446, %v4456
  %v4462 = vadd.f32 %v4447, %v4458
  %v4463 = vmul.f32 %v1262, %v1399
  %v4464 = vmul.f32 %v1265, %v1399
  %v4465 = vmul.f32 %v1270, %v1399
  %v4469 = vrot.slane %v4463, 2
  %v4470 = vrot.slane %v4464, 2
  %v4471 = vsel %vm1359, %v4469, %v4470
  %v4472 = vrot.slane %v4465, 2
  %v4473 = vsel %vm1359, %v4470, %v4472
  %v4476 = vadd.f32 %v4461, %v4471
  %v4477 = vadd.f32 %v4462, %v4473
  %v4478 = vmul.f32 %v1277, %v1418
  %v4479 = vmul.f32 %v1280, %v1418
  %v4480 = vadd.f32 %v4476, %v4478
  %v4481 = vadd.f32 %v4477, %v4479
  %v4482 = vmul.f32 %v1277, %v1426
  %v4483 = vmul.f32 %v1280, %v1426
  %v4484 = vmul.f32 %v1285, %v1426
  %v4488 = vrot.slane %v4482, 1
  %v4489 = vrot.slane %v4483, 1
  %v4490 = vsel %vm1339, %v4488, %v4489
  %v4491 = vrot.slane %v4484, 1
  %v4492 = vsel %vm1339, %v4489, %v4491
  %v4495 = vadd.f32 %v4480, %v4490
  %v4496 = vadd.f32 %v4481, %v4492
  %v4497 = vmul.f32 %v1277, %v1445
  %v4498 = vmul.f32 %v1280, %v1445
  %v4499 = vmul.f32 %v1285, %v1445
  %v4503 = vrot.slane %v4497, 2
  %v4504 = vrot.slane %v4498, 2
  %v4505 = vsel %vm1359, %v4503, %v4504
  %v4506 = vrot.slane %v4499, 2
  %v4507 = vsel %vm1359, %v4504, %v4506
  %v4510 = vadd.f32 %v4495, %v4505
  %v4511 = vadd.f32 %v4496, %v4507
  %v4512 = vadd.f32 %v4510, %v1465
  %v4513 = vadd.f32 %v4511, %v1465
  %s4514 = scalar_lea.vmem %s4, 464
  %4515 = vst.msk [vmem:[%s4514] sm:$0xff] %vm1469, %v4512
  %4516 = vst.msk [vmem:[%s4514 + $0x8] sm:$0xff] %vm1469, %v4513
  %v4517 = vmul.f32 %v1262, %v1326
  %v4518 = vmul.f32 %v1265, %v1326
  %v4519 = vmul.f32 %v1262, %v1332
  %v4520 = vmul.f32 %v1265, %v1332
  %v4521 = vmul.f32 %v1270, %v1332
  %v4525 = vrot.slane %v4519, 1
  %v4526 = vrot.slane %v4520, 1
  %v4527 = vsel %vm1339, %v4525, %v4526
  %v4528 = vrot.slane %v4521, 1
  %v4529 = vsel %vm1339, %v4526, %v4528
  %v4532 = vadd.f32 %v4517, %v4527
  %v4533 = vadd.f32 %v4518, %v4529
  %v4534 = vmul.f32 %v1262, %v1352
  %v4535 = vmul.f32 %v1265, %v1352
  %v4536 = vmul.f32 %v1270, %v1352
  %v4540 = vrot.slane %v4534, 2
  %v4541 = vrot.slane %v4535, 2
  %v4542 = vsel %vm1359, %v4540, %v4541
  %v4543 = vrot.slane %v4536, 2
  %v4544 = vsel %vm1359, %v4541, %v4543
  %v4547 = vadd.f32 %v4532, %v4542
  %v4548 = vadd.f32 %v4533, %v4544
  %v4549 = vmul.f32 %v1277, %v1372
  %v4550 = vmul.f32 %v1280, %v1372
  %v4551 = vadd.f32 %v4547, %v4549
  %v4552 = vadd.f32 %v4548, %v4550
  %v4553 = vmul.f32 %v1277, %v1380
  %v4554 = vmul.f32 %v1280, %v1380
  %v4555 = vmul.f32 %v1285, %v1380
  %v4559 = vrot.slane %v4553, 1
  %v4560 = vrot.slane %v4554, 1
  %v4561 = vsel %vm1339, %v4559, %v4560
  %v4562 = vrot.slane %v4555, 1
  %v4563 = vsel %vm1339, %v4560, %v4562
  %v4566 = vadd.f32 %v4551, %v4561
  %v4567 = vadd.f32 %v4552, %v4563
  %v4568 = vmul.f32 %v1277, %v1399
  %v4569 = vmul.f32 %v1280, %v1399
  %v4570 = vmul.f32 %v1285, %v1399
  %v4574 = vrot.slane %v4568, 2
  %v4575 = vrot.slane %v4569, 2
  %v4576 = vsel %vm1359, %v4574, %v4575
  %v4577 = vrot.slane %v4570, 2
  %v4578 = vsel %vm1359, %v4575, %v4577
  %v4581 = vadd.f32 %v4566, %v4576
  %v4582 = vadd.f32 %v4567, %v4578
  %v4583 = vmul.f32 %v1292, %v1418
  %v4584 = vmul.f32 %v1295, %v1418
  %v4585 = vadd.f32 %v4581, %v4583
  %v4586 = vadd.f32 %v4582, %v4584
  %v4587 = vmul.f32 %v1292, %v1426
  %v4588 = vmul.f32 %v1295, %v1426
  %v4589 = vmul.f32 %v1300, %v1426
  %v4593 = vrot.slane %v4587, 1
  %v4594 = vrot.slane %v4588, 1
  %v4595 = vsel %vm1339, %v4593, %v4594
  %v4596 = vrot.slane %v4589, 1
  %v4597 = vsel %vm1339, %v4594, %v4596
  %v4600 = vadd.f32 %v4585, %v4595
  %v4601 = vadd.f32 %v4586, %v4597
  %v4602 = vmul.f32 %v1292, %v1445
  %v4603 = vmul.f32 %v1295, %v1445
  %v4604 = vmul.f32 %v1300, %v1445
  %v4608 = vrot.slane %v4602, 2
  %v4609 = vrot.slane %v4603, 2
  %v4610 = vsel %vm1359, %v4608, %v4609
  %v4611 = vrot.slane %v4604, 2
  %v4612 = vsel %vm1359, %v4609, %v4611
  %v4615 = vadd.f32 %v4600, %v4610
  %v4616 = vadd.f32 %v4601, %v4612
  %v4617 = vadd.f32 %v4615, %v1465
  %v4618 = vadd.f32 %v4616, %v1465
  %s4619 = scalar_lea.vmem %s4, 480
  %4620 = vst.msk [vmem:[%s4619] sm:$0xff] %vm1469, %v4617
  %4621 = vst.msk [vmem:[%s4619 + $0x8] sm:$0xff] %vm1469, %v4618
  %v4622 = vmul.f32 %v1277, %v1326
  %v4623 = vmul.f32 %v1280, %v1326
  %v4624 = vmul.f32 %v1277, %v1332
  %v4625 = vmul.f32 %v1280, %v1332
  %v4626 = vmul.f32 %v1285, %v1332
  %v4630 = vrot.slane %v4624, 1
  %v4631 = vrot.slane %v4625, 1
  %v4632 = vsel %vm1339, %v4630, %v4631
  %v4633 = vrot.slane %v4626, 1
  %v4634 = vsel %vm1339, %v4631, %v4633
  %v4637 = vadd.f32 %v4622, %v4632
  %v4638 = vadd.f32 %v4623, %v4634
  %v4639 = vmul.f32 %v1277, %v1352
  %v4640 = vmul.f32 %v1280, %v1352
  %v4641 = vmul.f32 %v1285, %v1352
  %v4645 = vrot.slane %v4639, 2
  %v4646 = vrot.slane %v4640, 2
  %v4647 = vsel %vm1359, %v4645, %v4646
  %v4648 = vrot.slane %v4641, 2
  %v4649 = vsel %vm1359, %v4646, %v4648
  %v4652 = vadd.f32 %v4637, %v4647
  %v4653 = vadd.f32 %v4638, %v4649
  %v4654 = vmul.f32 %v1292, %v1372
  %v4655 = vmul.f32 %v1295, %v1372
  %v4656 = vadd.f32 %v4652, %v4654
  %v4657 = vadd.f32 %v4653, %v4655
  %v4658 = vmul.f32 %v1292, %v1380
  %v4659 = vmul.f32 %v1295, %v1380
  %v4660 = vmul.f32 %v1300, %v1380
  %v4664 = vrot.slane %v4658, 1
  %v4665 = vrot.slane %v4659, 1
  %v4666 = vsel %vm1339, %v4664, %v4665
  %v4667 = vrot.slane %v4660, 1
  %v4668 = vsel %vm1339, %v4665, %v4667
  %v4671 = vadd.f32 %v4656, %v4666
  %v4672 = vadd.f32 %v4657, %v4668
  %v4673 = vmul.f32 %v1292, %v1399
  %v4674 = vmul.f32 %v1295, %v1399
  %v4675 = vmul.f32 %v1300, %v1399
  %v4679 = vrot.slane %v4673, 2
  %v4680 = vrot.slane %v4674, 2
  %v4681 = vsel %vm1359, %v4679, %v4680
  %v4682 = vrot.slane %v4675, 2
  %v4683 = vsel %vm1359, %v4680, %v4682
  %v4686 = vadd.f32 %v4671, %v4681
  %v4687 = vadd.f32 %v4672, %v4683
  %v4688 = vmul.f32 %v1307, %v1418
  %v4689 = vmul.f32 %v1310, %v1418
  %v4690 = vadd.f32 %v4686, %v4688
  %v4691 = vadd.f32 %v4687, %v4689
  %v4692 = vmul.f32 %v1307, %v1426
  %v4693 = vmul.f32 %v1310, %v1426
  %v4694 = vmul.f32 %v1315, %v1426
  %v4698 = vrot.slane %v4692, 1
  %v4699 = vrot.slane %v4693, 1
  %v4700 = vsel %vm1339, %v4698, %v4699
  %v4701 = vrot.slane %v4694, 1
  %v4702 = vsel %vm1339, %v4699, %v4701
  %v4705 = vadd.f32 %v4690, %v4700
  %v4706 = vadd.f32 %v4691, %v4702
  %v4707 = vmul.f32 %v1307, %v1445
  %v4708 = vmul.f32 %v1310, %v1445
  %v4709 = vmul.f32 %v1315, %v1445
  %v4713 = vrot.slane %v4707, 2
  %v4714 = vrot.slane %v4708, 2
  %v4715 = vsel %vm1359, %v4713, %v4714
  %v4716 = vrot.slane %v4709, 2
  %v4717 = vsel %vm1359, %v4714, %v4716
  %v4720 = vadd.f32 %v4705, %v4715
  %v4721 = vadd.f32 %v4706, %v4717
  %v4722 = vadd.f32 %v4720, %v1465
  %v4723 = vadd.f32 %v4721, %v1465
  %s4724 = scalar_lea.vmem %s4, 496
  %4725 = vst.msk [vmem:[%s4724] sm:$0xff] %vm1469, %v4722
  %4726 = vst.msk [vmem:[%s4724 + $0x8] sm:$0xff] %vm1469, %v4723
  // Predicated region
  $region18: #{tpu_custom_call.1} parent=0 // pred_check
    _
  $region19: #{tpu_custom_call.1} parent=0 // pred_check_branch
    %4728 = sbr.rel (0) target = $region21
  $region20: #{tpu_custom_call.1} parent=0 // pred_region
    _
  $region21: #{tpu_custom_call.1} parent=0 // pred_fallthru
    _
  // Predicated region
  $region22: #{tpu_custom_call.1} parent=0 // pred_check
    _
  $region23: #{tpu_custom_call.1} parent=0 // pred_check_branch
    %4730 = sbr.rel (0) target = $region25
  $region24: #{tpu_custom_call.1} parent=0 // pred_region
    _
  $region25: #{tpu_custom_call.1} parent=0 // pred_fallthru
    _

</llo_original>
